<compile_context>
chip_gen: v6e
topology: v6e:2x2x1
jax: 0.10.0
libtpu: 0.0.40
codegen_flags: <defaults>
</compile_context>

<pallas_src>
import jax
import jax.numpy as jnp
import numpy as np
from jax.experimental import pallas as pl
from jax.experimental.pallas import tpu as pltpu

# ----------------------------- hyper-parameters ------------------------------
IMG = 16            # img_size
PATCH = 4           # patch_size
C_IN = 3            # input channels (RGB)
EMBED = 32          # self.model.num_features
DEPTH = 4           # forward uses the first 4 intermediate features
HEADS = 4
DH = EMBED // HEADS
MLP_HIDDEN = 64
LN_EPS = 1e-6

N_PATCH = (IMG // PATCH) ** 2        # 16 patches per sample
T_TOK = N_PATCH + 1                  # 17 tokens per sample (CLS + patches)
KDIM = C_IN * PATCH * PATCH          # 48 im2col columns
K_PAD = 128                          # lane-padded im2col width (unmasked loads)


# ------------------------------ in-kernel helpers ----------------------------
def _ln(x, g, b):
    """Row-wise LayerNorm in f32 (g, b broadcast from (1, D))."""
    x = x.astype(jnp.float32)
    mu = jnp.mean(x, axis=-1, keepdims=True)
    xc = x - mu
    var = jnp.mean(xc * xc, axis=-1, keepdims=True)
    return xc * jax.lax.rsqrt(var + LN_EPS) * g + b


# ------------------------------ fully fused kernel ---------------------------
def _fused_kernel(cols_ref, patch_w_ref, base_ref, amask_ref,
                  ln1_g_ref, ln1_b_ref,
                  wq_ref, bq_ref, wk_ref, bk_ref, wv_ref, bv_ref,
                  proj_w_ref, proj_b_ref, ln2_g_ref, ln2_b_ref,
                  fc1_w_ref, fc1_b_ref, fc2_w_ref, fc2_b_ref,
                  norm_g_ref, norm_b_ref,
                  fpn1_w_ref, fpn1_b_ref, fpn2_w_ref, fpn2_b_ref,
                  sel4_ref, w4_ref, b4_ref,
                  y1_ref, y2_ref, y3_ref, y4_ref):
    """Whole forward (both samples) in one grid-less invocation; all values stay
    in vregs, all weights resident in VMEM."""
    depth = ln1_g_ref.shape[0]

    # ---- token assembly: patch-embed matmul + (pos / cls / bias) base.
    # CLS and padding rows have all-zero im2col columns, so `base` supplies their
    # full initial value.
    x = (jnp.dot(cols_ref[...], patch_w_ref[...],
                 preferred_element_type=jnp.float32) + base_ref[...])      # (T, D)

    amask = amask_ref[...]                                                 # (T, T)
    norm_g = norm_g_ref[...]
    norm_b = norm_b_ref[...]
    lane = jax.lax.broadcasted_iota(jnp.int32, (1, EMBED), 1)

    feats = []
    for d in range(depth):
        # ---------------- attention (pre-LN) ----------------
        h1 = _ln(x, ln1_g_ref[d], ln1_b_ref[d])
        # 1/sqrt(dh) is already folded into wq / bq on the host.
        q = jnp.dot(h1, wq_ref[d], preferred_element_type=jnp.float32) + bq_ref[d]
        k = jnp.dot(h1, wk_ref[d], preferred_element_type=jnp.float32) + bk_ref[d]
        v = jnp.dot(h1, wv_ref[d], preferred_element_type=jnp.float32) + bv_ref[d]

        o = None
        for hd in range(HEADS):
            # full-width lane mask instead of 8-lane slices: zeroed lanes contribute
            # nothing to the 32-lane contraction, so per-head math is exact.
            m = ((lane >= hd * DH) & (lane < (hd + 1) * DH)).astype(jnp.float32)
            s = jax.lax.dot_general(q * m, k, (((1,), (1,)), ((), ())),
                                    preferred_element_type=jnp.float32) + amask
            s = s - jnp.max(s, axis=-1, keepdims=True)
            prob = jnp.exp(s)
            prob = prob * pl.reciprocal(jnp.sum(prob, axis=-1, keepdims=True),
                                        approx=True)
            oh = jnp.dot(prob, v * m, preferred_element_type=jnp.float32)  # head lanes only
            o = oh if o is None else o + oh                                # lane-disjoint merge
        x = x + jnp.dot(o, proj_w_ref[d],
                        preferred_element_type=jnp.float32) + proj_b_ref[d]

        # ---------------- MLP ----------------
        h2 = _ln(x, ln2_g_ref[d], ln2_b_ref[d])
        # TODO(synk): PyTorch nn.GELU default is exact erf-GELU; tanh approximation
        # is used here (EUP-friendly transcendental).
        mm = jax.nn.gelu(jnp.dot(h2, fc1_w_ref[d],
                                 preferred_element_type=jnp.float32) + fc1_b_ref[d],
                         approximate=True)
        x = x + jnp.dot(mm, fc2_w_ref[d],
                        preferred_element_type=jnp.float32) + fc2_b_ref[d]

        # final backbone norm applied to this block's tokens (patch rows used later)
        feats.append(_ln(x, norm_g, norm_b))

    # ---------------- FPN heads (fused epilogue) ----------------
    # fpn1: ConvTranspose2d(4, stride=4) == per-row matmul -> 512-lane unmasked store
    y1_ref[...] = (jnp.dot(feats[0], fpn1_w_ref[...],
                           preferred_element_type=jnp.float32)
                   + fpn1_b_ref[...]).astype(y1_ref.dtype)
    # fpn2: ConvTranspose2d(2, stride=2) == per-row matmul -> 128-lane unmasked store
    y2_ref[...] = (jnp.dot(feats[1], fpn2_w_ref[...],
                           preferred_element_type=jnp.float32)
                   + fpn2_b_ref[...]).astype(y2_ref.dtype)
    # fpn3: Identity -- just the normalized feature
    y3_ref[...] = feats[2].astype(y3_ref.dtype)
    # fpn4: Conv2d(2, stride=2) == sum over kernel positions of
    #       (constant row-selection @ feature) @ W_p   (pure MXU, no gathers)
    f3 = feats[3]
    y4 = None
    for pidx in range(4):
        xp = jnp.dot(sel4_ref[pidx], f3, preferred_element_type=jnp.float32)
        yp = jnp.dot(xp, w4_ref[pidx], preferred_element_type=jnp.float32)
        y4 = yp if y4 is None else y4 + yp
    y4_ref[...] = (y4 + b4_ref[...]).astype(y4_ref.dtype)


# --------------------------- SelfSupViT.forward ------------------------------
def selfsup_vit_forward(p, x):
    B, C, H, W = x.shape
    hf, wf = H // PATCH, W // PATCH
    N = hf * wf
    D = EMBED
    BN = B * N
    n_real = BN + B                              # patch rows + one CLS row per sample
    T_ROWS = -(-n_real // 8) * 8                 # pad token rows to a sublane multiple

    # ---- glue: im2col for the patch-embed conv (rows ordered (b, h, w)),
    # zero rows for CLS / padding tokens, lanes zero-padded 48 -> 128 ----
    cols = (x.reshape(B, C, hf, PATCH, wf, PATCH)
             .transpose(0, 2, 4, 1, 3, 5)
             .reshape(BN, KDIM))
    cols = jnp.pad(cols, ((0, T_ROWS - BN), (0, K_PAD - KDIM)))
    patch_w = jnp.pad(p['patch_w'].reshape(D, KDIM).T,
                      ((0, K_PAD - KDIM), (0, 0)))                 # (K_PAD, D)

    # additive token base: pos(+patch bias) for patch rows, cls+pos[0] for CLS rows
    pos = p['pos'].reshape(N + 1, D)
    cls = p['cls'].reshape(1, D)
    base = jnp.concatenate([
        jnp.tile(pos[1:], (B, 1)) + p['patch_b'].reshape(1, D),    # patch rows
        jnp.broadcast_to(cls + pos[0:1], (B, D)),                  # CLS rows
        jnp.zeros((T_ROWS - n_real, D), jnp.float32)], axis=0)     # dummy rows

    # block-diagonal additive attention mask (per-sample attention inside the
    # folded batch; padding rows never act as keys for real queries)
    sid = np.full((T_ROWS,), -1, np.int64)
    sid[:BN] = np.repeat(np.arange(B), N)
    sid[BN:n_real] = np.arange(B)
    amask = jnp.asarray(np.where(sid[:, None] == sid[None, :],
                                 0.0, -1e30).astype(np.float32))

    # ---- transformer weights, stacked over depth; 1/sqrt(dh) folded into Wq / bq ----
    blocks = p['blocks']
    st = lambda name: jnp.stack([blk[name] for blk in blocks])
    scale = float(DH) ** -0.5
    qkv_w, qkv_b = st('qkv_w'), st('qkv_b')                        # (DEPTH,D,3D), (DEPTH,3D)
    wq = qkv_w[:, :, :D] * scale
    wk = qkv_w[:, :, D:2 * D]
    wv = qkv_w[:, :, 2 * D:]
    bq = (qkv_b[:, :D] * scale).reshape(DEPTH, 1, D)
    bk = qkv_b[:, D:2 * D].reshape(DEPTH, 1, D)
    bv = qkv_b[:, 2 * D:].reshape(DEPTH, 1, D)
    ln1_g = st('ln1_g').reshape(DEPTH, 1, D); ln1_b = st('ln1_b').reshape(DEPTH, 1, D)
    ln2_g = st('ln2_g').reshape(DEPTH, 1, D); ln2_b = st('ln2_b').reshape(DEPTH, 1, D)
    proj_w = st('proj_w'); proj_b = st('proj_b').reshape(DEPTH, 1, D)
    fc1_w = st('fc1_w'); fc1_b = st('fc1_b').reshape(DEPTH, 1, MLP_HIDDEN)
    fc2_w = st('fc2_w'); fc2_b = st('fc2_b').reshape(DEPTH, 1, D)
    norm_g = p['norm_g'].reshape(1, D); norm_b = p['norm_b'].reshape(1, D)

    # ---- FPN weights as row-wise matmuls ----
    w1 = p['fpn1_w'].reshape(D, D * 16)                            # (Ci, Co*4*4)
    b1 = jnp.repeat(p['fpn1_b'], 16).reshape(1, D * 16)
    w2 = p['fpn2_w'].reshape(D, D * 4)                             # (Ci, Co*2*2)
    b2 = jnp.repeat(p['fpn2_b'], 4).reshape(1, D * 4)

    # fpn4: Conv2d(2, stride=2) decomposed per kernel position; constant 0/1
    # row-selection matrices gather the strided input pixels via the MXU.
    ho, wo = hf // 2, wf // 2
    n4 = B * ho * wo
    sel4 = np.zeros((4, n4, T_ROWS), np.float32)
    for b in range(B):
        for i in range(ho):
            for j in range(wo):
                m = b * ho * wo + i * wo + j
                for kh in range(2):
                    for kw in range(2):
                        r = b * N + (2 * i + kh) * wf + (2 * j + kw)
                        sel4[kh * 2 + kw, m, r] = 1.0
    sel4 = jnp.asarray(sel4)
    w4 = jnp.stack([p['fpn4_w'][:, :, kh, kw].T
                    for kh in range(2) for kw in range(2)])        # (4, Ci, Co)
    b4 = p['fpn4_b'].reshape(1, D)

    # ---- single fused pallas_call (grid-less; everything resident in VMEM) ----
    vmem = pl.BlockSpec(memory_space=pltpu.MemorySpace.VMEM)
    y1, y2, y3, y4 = pl.pallas_call(
        _fused_kernel,
        out_shape=(jax.ShapeDtypeStruct((T_ROWS, D * 16), jnp.float32),
                   jax.ShapeDtypeStruct((T_ROWS, D * 4), jnp.float32),
                   jax.ShapeDtypeStruct((T_ROWS, D), jnp.float32),
                   jax.ShapeDtypeStruct((n4, D), jnp.float32)),
        in_specs=[vmem] * 29,
        out_specs=(vmem, vmem, vmem, vmem),
    )(cols, patch_w, base, amask,
      ln1_g, ln1_b, wq, bq, wk, bk, wv, bv, proj_w, proj_b, ln2_g, ln2_b,
      fc1_w, fc1_b, fc2_w, fc2_b, norm_g, norm_b,
      w1, b1, w2, b2, sel4, w4, b4)

    # ---- glue: drop CLS/pad rows, pixel-shuffle / NCHW assembly ----
    out1 = (y1[:BN].reshape(B, hf, wf, D, 4, 4)
              .transpose(0, 3, 1, 4, 2, 5)
              .reshape(B, D, hf * 4, wf * 4))                      # (B, D, 16, 16)
    out2 = (y2[:BN].reshape(B, hf, wf, D, 2, 2)
              .transpose(0, 3, 1, 4, 2, 5)
              .reshape(B, D, hf * 2, wf * 2))                      # (B, D, 8, 8)
    out3 = y3[:BN].reshape(B, hf, wf, D).transpose(0, 3, 1, 2)     # (B, D, 4, 4)
    out4 = y4.reshape(B, ho, wo, D).transpose(0, 3, 1, 2)          # (B, D, 2, 2)
    return (out1, out2, out3, out4)


# ------------------------------ parameter init -------------------------------
def init_params(key):
    def nrm(k, shape, std=0.02):
        return std * jax.random.normal(k, shape, jnp.float32)

    keys = iter(jax.random.split(key, 64))
    D = EMBED
    p = {
        'patch_w': nrm(next(keys), (D, C_IN, PATCH, PATCH)),
        'patch_b': jnp.zeros((D,), jnp.float32),
        'cls': nrm(next(keys), (1, 1, D)),
        'pos': nrm(next(keys), (1, T_TOK, D)),
        'norm_g': jnp.ones((D,), jnp.float32),
        'norm_b': jnp.zeros((D,), jnp.float32),
        'blocks': [],
        'fpn1_w': nrm(next(keys), (D, D, 4, 4)),   # ConvTranspose2d weight (Ci, Co, 4, 4)
        'fpn1_b': jnp.zeros((D,), jnp.float32),
        'fpn2_w': nrm(next(keys), (D, D, 2, 2)),   # ConvTranspose2d weight (Ci, Co, 2, 2)
        'fpn2_b': jnp.zeros((D,), jnp.float32),
        'fpn4_w': nrm(next(keys), (D, D, 2, 2)),   # Conv2d weight (Co, Ci, 2, 2)
        'fpn4_b': jnp.zeros((D,), jnp.float32),
    }
    for _ in range(DEPTH):
        p['blocks'].append({
            'ln1_g': jnp.ones((D,), jnp.float32), 'ln1_b': jnp.zeros((D,), jnp.float32),
            'qkv_w': nrm(next(keys), (D, 3 * D)), 'qkv_b': jnp.zeros((3 * D,), jnp.float32),
            'proj_w': nrm(next(keys), (D, D)), 'proj_b': jnp.zeros((D,), jnp.float32),
            'ln2_g': jnp.ones((D,), jnp.float32), 'ln2_b': jnp.zeros((D,), jnp.float32),
            'fc1_w': nrm(next(keys), (D, MLP_HIDDEN)), 'fc1_b': jnp.zeros((MLP_HIDDEN,), jnp.float32),
            'fc2_w': nrm(next(keys), (MLP_HIDDEN, D)), 'fc2_b': jnp.zeros((D,), jnp.float32),
        })
    return p


# ----------------------------------- main ------------------------------------
if __name__ == "__main__":
    key = jax.random.PRNGKey(0)
    kx, kp = jax.random.split(key)
    x = jax.random.normal(kx, (2, C_IN, IMG, IMG), jnp.float32)
    params = init_params(kp)

    fwd = jax.jit(selfsup_vit_forward)
    outs = fwd(params, x)
    for o in outs:
        jax.block_until_ready(o)

    # expected shapes: (2,32,16,16), (2,32,8,8), (2,32,4,4), (2,32,2,2)
    assert outs[0].shape == (2, EMBED, 16, 16)
    assert outs[1].shape == (2, EMBED, 8, 8)
    assert outs[2].shape == (2, EMBED, 4, 4)
    assert outs[3].shape == (2, EMBED, 2, 2)
    for o in outs:
        assert bool(jnp.all(jnp.isfinite(o)))
    print("KERNEL_OK")
</pallas_src>

<mosaic_0001>
module attributes {stable_mosaic.version = 11 : i64} {
  func.func @_fused_kernel(%arg0: memref<40x128xf32, #tpu.memory_space<vmem>>, %arg1: memref<128x32xf32, #tpu.memory_space<vmem>>, %arg2: memref<40x32xf32, #tpu.memory_space<vmem>>, %arg3: memref<40x40xf32, #tpu.memory_space<vmem>>, %arg4: memref<4x1x32xf32, #tpu.memory_space<vmem>>, %arg5: memref<4x1x32xf32, #tpu.memory_space<vmem>>, %arg6: memref<4x32x32xf32, #tpu.memory_space<vmem>>, %arg7: memref<4x1x32xf32, #tpu.memory_space<vmem>>, %arg8: memref<4x32x32xf32, #tpu.memory_space<vmem>>, %arg9: memref<4x1x32xf32, #tpu.memory_space<vmem>>, %arg10: memref<4x32x32xf32, #tpu.memory_space<vmem>>, %arg11: memref<4x1x32xf32, #tpu.memory_space<vmem>>, %arg12: memref<4x32x32xf32, #tpu.memory_space<vmem>>, %arg13: memref<4x1x32xf32, #tpu.memory_space<vmem>>, %arg14: memref<4x1x32xf32, #tpu.memory_space<vmem>>, %arg15: memref<4x1x32xf32, #tpu.memory_space<vmem>>, %arg16: memref<4x32x64xf32, #tpu.memory_space<vmem>>, %arg17: memref<4x1x64xf32, #tpu.memory_space<vmem>>, %arg18: memref<4x64x32xf32, #tpu.memory_space<vmem>>, %arg19: memref<4x1x32xf32, #tpu.memory_space<vmem>>, %arg20: memref<1x32xf32, #tpu.memory_space<vmem>>, %arg21: memref<1x32xf32, #tpu.memory_space<vmem>>, %arg22: memref<32x512xf32, #tpu.memory_space<vmem>>, %arg23: memref<1x512xf32, #tpu.memory_space<vmem>>, %arg24: memref<32x128xf32, #tpu.memory_space<vmem>>, %arg25: memref<1x128xf32, #tpu.memory_space<vmem>>, %arg26: memref<4x8x40xf32, #tpu.memory_space<vmem>>, %arg27: memref<4x32x32xf32, #tpu.memory_space<vmem>>, %arg28: memref<1x32xf32, #tpu.memory_space<vmem>>, %arg29: memref<40x512xf32, #tpu.memory_space<vmem>>, %arg30: memref<40x128xf32, #tpu.memory_space<vmem>>, %arg31: memref<40x32xf32, #tpu.memory_space<vmem>>, %arg32: memref<8x32xf32, #tpu.memory_space<vmem>>) attributes {dimension_semantics = [], scalar_prefetch = 0 : i64, scratch_operands = 0 : i64, tpu.core_type = #tpu.core_type<tc>} {
    %c0 = arith.constant 0 : index
    %c0_0 = arith.constant 0 : index
    %0 = vector.load %arg0[%c0, %c0_0] : memref<40x128xf32, #tpu.memory_space<vmem>>, vector<40x128xf32>
    %c0_1 = arith.constant 0 : index
    %c0_2 = arith.constant 0 : index
    %1 = vector.load %arg1[%c0_1, %c0_2] : memref<128x32xf32, #tpu.memory_space<vmem>>, vector<128x32xf32>
    %cst = arith.constant dense<0.000000e+00> : vector<40x32xf32>
    %2 = tpu.matmul %0, %1, %cst {dimension_numbers = #tpu.dot_dimension_numbers<[1], [0], [0], [1], [0, 0, 1, 1], [], []>} : vector<40x128xf32>, vector<128x32xf32>, vector<40x32xf32> -> vector<40x32xf32>
    %c0_3 = arith.constant 0 : index
    %c0_4 = arith.constant 0 : index
    %3 = vector.load %arg2[%c0_3, %c0_4] : memref<40x32xf32, #tpu.memory_space<vmem>>, vector<40x32xf32>
    %4 = arith.addf %2, %3 : vector<40x32xf32>
    %c0_5 = arith.constant 0 : index
    %c0_6 = arith.constant 0 : index
    %5 = vector.load %arg3[%c0_5, %c0_6] : memref<40x40xf32, #tpu.memory_space<vmem>>, vector<40x40xf32>
    %c0_7 = arith.constant 0 : index
    %c0_8 = arith.constant 0 : index
    %6 = vector.load %arg20[%c0_7, %c0_8] : memref<1x32xf32, #tpu.memory_space<vmem>>, vector<1x32xf32>
    %c0_9 = arith.constant 0 : index
    %c0_10 = arith.constant 0 : index
    %7 = vector.load %arg21[%c0_9, %c0_10] : memref<1x32xf32, #tpu.memory_space<vmem>>, vector<1x32xf32>
    %8 = tpu.iota {dimensions = array<i32: 1>} : vector<1x32xi32>
    %c0_11 = arith.constant 0 : index
    %c0_12 = arith.constant 0 : index
    %c0_13 = arith.constant 0 : index
    %9 = vector.load %arg4[%c0_11, %c0_12, %c0_13] : memref<4x1x32xf32, #tpu.memory_space<vmem>>, vector<1x1x32xf32>
    %10 = vector.shape_cast %9 : vector<1x1x32xf32> to vector<1x32xf32>
    %c0_14 = arith.constant 0 : index
    %c0_15 = arith.constant 0 : index
    %c0_16 = arith.constant 0 : index
    %11 = vector.load %arg5[%c0_14, %c0_15, %c0_16] : memref<4x1x32xf32, #tpu.memory_space<vmem>>, vector<1x1x32xf32>
    %12 = vector.shape_cast %11 : vector<1x1x32xf32> to vector<1x32xf32>
    %cst_17 = arith.constant dense<0.000000e+00> : vector<40xf32>
    %13 = vector.multi_reduction <add>, %4, %cst_17 [1] : vector<40x32xf32> to vector<40xf32>
    %14 = vector.shape_cast %13 : vector<40xf32> to vector<40x1xf32>
    %cst_18 = arith.constant 3.200000e+01 : f32
    %15 = vector.broadcast %cst_18 : f32 to vector<40x1xf32>
    %16 = arith.divf %14, %15 : vector<40x1xf32>
    %17 = vector.broadcast %16 : vector<40x1xf32> to vector<40x32xf32>
    %18 = arith.subf %4, %17 : vector<40x32xf32>
    %19 = arith.mulf %18, %18 : vector<40x32xf32>
    %cst_19 = arith.constant dense<0.000000e+00> : vector<40xf32>
    %20 = vector.multi_reduction <add>, %19, %cst_19 [1] : vector<40x32xf32> to vector<40xf32>
    %21 = vector.shape_cast %20 : vector<40xf32> to vector<40x1xf32>
    %cst_20 = arith.constant 3.200000e+01 : f32
    %22 = vector.broadcast %cst_20 : f32 to vector<40x1xf32>
    %23 = arith.divf %21, %22 : vector<40x1xf32>
    %cst_21 = arith.constant 9.99999997E-7 : f32
    %24 = vector.broadcast %cst_21 : f32 to vector<40x1xf32>
    %25 = arith.addf %23, %24 : vector<40x1xf32>
    %26 = math.rsqrt %25 : vector<40x1xf32>
    %27 = vector.broadcast %26 : vector<40x1xf32> to vector<40x32xf32>
    %28 = arith.mulf %18, %27 : vector<40x32xf32>
    %29 = vector.broadcast %10 : vector<1x32xf32> to vector<40x32xf32>
    %30 = arith.mulf %28, %29 : vector<40x32xf32>
    %31 = vector.broadcast %12 : vector<1x32xf32> to vector<40x32xf32>
    %32 = arith.addf %30, %31 : vector<40x32xf32>
    %c0_22 = arith.constant 0 : index
    %c0_23 = arith.constant 0 : index
    %c0_24 = arith.constant 0 : index
    %33 = vector.load %arg6[%c0_22, %c0_23, %c0_24] : memref<4x32x32xf32, #tpu.memory_space<vmem>>, vector<1x32x32xf32>
    %34 = vector.shape_cast %33 : vector<1x32x32xf32> to vector<32x32xf32>
    %cst_25 = arith.constant dense<0.000000e+00> : vector<40x32xf32>
    %35 = tpu.matmul %32, %34, %cst_25 {dimension_numbers = #tpu.dot_dimension_numbers<[1], [0], [0], [1], [0, 0, 1, 1], [], []>} : vector<40x32xf32>, vector<32x32xf32>, vector<40x32xf32> -> vector<40x32xf32>
    %c0_26 = arith.constant 0 : index
    %c0_27 = arith.constant 0 : index
    %c0_28 = arith.constant 0 : index
    %36 = vector.load %arg7[%c0_26, %c0_27, %c0_28] : memref<4x1x32xf32, #tpu.memory_space<vmem>>, vector<1x1x32xf32>
    %37 = vector.shape_cast %36 : vector<1x1x32xf32> to vector<1x32xf32>
    %38 = vector.broadcast %37 : vector<1x32xf32> to vector<40x32xf32>
    %39 = arith.addf %35, %38 : vector<40x32xf32>
    %c0_29 = arith.constant 0 : index
    %c0_30 = arith.constant 0 : index
    %c0_31 = arith.constant 0 : index
    %40 = vector.load %arg8[%c0_29, %c0_30, %c0_31] : memref<4x32x32xf32, #tpu.memory_space<vmem>>, vector<1x32x32xf32>
    %41 = vector.shape_cast %40 : vector<1x32x32xf32> to vector<32x32xf32>
    %cst_32 = arith.constant dense<0.000000e+00> : vector<40x32xf32>
    %42 = tpu.matmul %32, %41, %cst_32 {dimension_numbers = #tpu.dot_dimension_numbers<[1], [0], [0], [1], [0, 0, 1, 1], [], []>} : vector<40x32xf32>, vector<32x32xf32>, vector<40x32xf32> -> vector<40x32xf32>
    %c0_33 = arith.constant 0 : index
    %c0_34 = arith.constant 0 : index
    %c0_35 = arith.constant 0 : index
    %43 = vector.load %arg9[%c0_33, %c0_34, %c0_35] : memref<4x1x32xf32, #tpu.memory_space<vmem>>, vector<1x1x32xf32>
    %44 = vector.shape_cast %43 : vector<1x1x32xf32> to vector<1x32xf32>
    %45 = vector.broadcast %44 : vector<1x32xf32> to vector<40x32xf32>
    %46 = arith.addf %42, %45 : vector<40x32xf32>
    %c0_36 = arith.constant 0 : index
    %c0_37 = arith.constant 0 : index
    %c0_38 = arith.constant 0 : index
    %47 = vector.load %arg10[%c0_36, %c0_37, %c0_38] : memref<4x32x32xf32, #tpu.memory_space<vmem>>, vector<1x32x32xf32>
    %48 = vector.shape_cast %47 : vector<1x32x32xf32> to vector<32x32xf32>
    %cst_39 = arith.constant dense<0.000000e+00> : vector<40x32xf32>
    %49 = tpu.matmul %32, %48, %cst_39 {dimension_numbers = #tpu.dot_dimension_numbers<[1], [0], [0], [1], [0, 0, 1, 1], [], []>} : vector<40x32xf32>, vector<32x32xf32>, vector<40x32xf32> -> vector<40x32xf32>
    %c0_40 = arith.constant 0 : index
    %c0_41 = arith.constant 0 : index
    %c0_42 = arith.constant 0 : index
    %50 = vector.load %arg11[%c0_40, %c0_41, %c0_42] : memref<4x1x32xf32, #tpu.memory_space<vmem>>, vector<1x1x32xf32>
    %51 = vector.shape_cast %50 : vector<1x1x32xf32> to vector<1x32xf32>
    %52 = vector.broadcast %51 : vector<1x32xf32> to vector<40x32xf32>
    %53 = arith.addf %49, %52 : vector<40x32xf32>
    %c0_i32 = arith.constant 0 : i32
    %54 = vector.broadcast %c0_i32 : i32 to vector<1x32xi32>
    %55 = arith.cmpi sge, %8, %54 : vector<1x32xi32>
    %c8_i32 = arith.constant 8 : i32
    %56 = vector.broadcast %c8_i32 : i32 to vector<1x32xi32>
    %57 = arith.cmpi slt, %8, %56 : vector<1x32xi32>
    %58 = arith.andi %55, %57 : vector<1x32xi1>
    %59 = arith.extui %58 : vector<1x32xi1> to vector<1x32xi32>
    %60 = arith.sitofp %59 : vector<1x32xi32> to vector<1x32xf32>
    %61 = vector.broadcast %60 : vector<1x32xf32> to vector<40x32xf32>
    %62 = arith.mulf %39, %61 : vector<40x32xf32>
    %cst_43 = arith.constant dense<0.000000e+00> : vector<40x40xf32>
    %63 = tpu.matmul %62, %46, %cst_43 {dimension_numbers = #tpu.dot_dimension_numbers<[1], [1], [0], [0], [0, 0, 1, 0], [], []>} : vector<40x32xf32>, vector<40x32xf32>, vector<40x40xf32> -> vector<40x40xf32>
    %64 = arith.addf %63, %5 : vector<40x40xf32>
    %cst_44 = arith.constant dense<0xFF800000> : vector<40xf32>
    %65 = vector.multi_reduction <maximumf>, %64, %cst_44 [1] : vector<40x40xf32> to vector<40xf32>
    %66 = vector.shape_cast %65 : vector<40xf32> to vector<40x1xf32>
    %67 = vector.broadcast %66 : vector<40x1xf32> to vector<40x40xf32>
    %68 = arith.subf %64, %67 : vector<40x40xf32>
    %69 = math.exp %68 : vector<40x40xf32>
    %cst_45 = arith.constant dense<0.000000e+00> : vector<40xf32>
    %70 = vector.multi_reduction <add>, %69, %cst_45 [1] : vector<40x40xf32> to vector<40xf32>
    %71 = vector.shape_cast %70 : vector<40xf32> to vector<40x1xf32>
    %72 = tpu.reciprocal %71 {approx = true} : vector<40x1xf32> -> vector<40x1xf32>
    %73 = vector.broadcast %72 : vector<40x1xf32> to vector<40x40xf32>
    %74 = arith.mulf %69, %73 : vector<40x40xf32>
    %75 = vector.broadcast %60 : vector<1x32xf32> to vector<40x32xf32>
    %76 = arith.mulf %53, %75 : vector<40x32xf32>
    %cst_46 = arith.constant dense<0.000000e+00> : vector<40x32xf32>
    %77 = tpu.matmul %74, %76, %cst_46 {dimension_numbers = #tpu.dot_dimension_numbers<[1], [0], [0], [1], [0, 0, 1, 1], [], []>} : vector<40x40xf32>, vector<40x32xf32>, vector<40x32xf32> -> vector<40x32xf32>
    %c8_i32_47 = arith.constant 8 : i32
    %78 = vector.broadcast %c8_i32_47 : i32 to vector<1x32xi32>
    %79 = arith.cmpi sge, %8, %78 : vector<1x32xi32>
    %c16_i32 = arith.constant 16 : i32
    %80 = vector.broadcast %c16_i32 : i32 to vector<1x32xi32>
    %81 = arith.cmpi slt, %8, %80 : vector<1x32xi32>
    %82 = arith.andi %79, %81 : vector<1x32xi1>
    %83 = arith.extui %82 : vector<1x32xi1> to vector<1x32xi32>
    %84 = arith.sitofp %83 : vector<1x32xi32> to vector<1x32xf32>
    %85 = vector.broadcast %84 : vector<1x32xf32> to vector<40x32xf32>
    %86 = arith.mulf %39, %85 : vector<40x32xf32>
    %cst_48 = arith.constant dense<0.000000e+00> : vector<40x40xf32>
    %87 = tpu.matmul %86, %46, %cst_48 {dimension_numbers = #tpu.dot_dimension_numbers<[1], [1], [0], [0], [0, 0, 1, 0], [], []>} : vector<40x32xf32>, vector<40x32xf32>, vector<40x40xf32> -> vector<40x40xf32>
    %88 = arith.addf %87, %5 : vector<40x40xf32>
    %cst_49 = arith.constant dense<0xFF800000> : vector<40xf32>
    %89 = vector.multi_reduction <maximumf>, %88, %cst_49 [1] : vector<40x40xf32> to vector<40xf32>
    %90 = vector.shape_cast %89 : vector<40xf32> to vector<40x1xf32>
    %91 = vector.broadcast %90 : vector<40x1xf32> to vector<40x40xf32>
    %92 = arith.subf %88, %91 : vector<40x40xf32>
    %93 = math.exp %92 : vector<40x40xf32>
    %cst_50 = arith.constant dense<0.000000e+00> : vector<40xf32>
    %94 = vector.multi_reduction <add>, %93, %cst_50 [1] : vector<40x40xf32> to vector<40xf32>
    %95 = vector.shape_cast %94 : vector<40xf32> to vector<40x1xf32>
    %96 = tpu.reciprocal %95 {approx = true} : vector<40x1xf32> -> vector<40x1xf32>
    %97 = vector.broadcast %96 : vector<40x1xf32> to vector<40x40xf32>
    %98 = arith.mulf %93, %97 : vector<40x40xf32>
    %99 = vector.broadcast %84 : vector<1x32xf32> to vector<40x32xf32>
    %100 = arith.mulf %53, %99 : vector<40x32xf32>
    %cst_51 = arith.constant dense<0.000000e+00> : vector<40x32xf32>
    %101 = tpu.matmul %98, %100, %cst_51 {dimension_numbers = #tpu.dot_dimension_numbers<[1], [0], [0], [1], [0, 0, 1, 1], [], []>} : vector<40x40xf32>, vector<40x32xf32>, vector<40x32xf32> -> vector<40x32xf32>
    %102 = arith.addf %77, %101 : vector<40x32xf32>
    %c16_i32_52 = arith.constant 16 : i32
    %103 = vector.broadcast %c16_i32_52 : i32 to vector<1x32xi32>
    %104 = arith.cmpi sge, %8, %103 : vector<1x32xi32>
    %c24_i32 = arith.constant 24 : i32
    %105 = vector.broadcast %c24_i32 : i32 to vector<1x32xi32>
    %106 = arith.cmpi slt, %8, %105 : vector<1x32xi32>
    %107 = arith.andi %104, %106 : vector<1x32xi1>
    %108 = arith.extui %107 : vector<1x32xi1> to vector<1x32xi32>
    %109 = arith.sitofp %108 : vector<1x32xi32> to vector<1x32xf32>
    %110 = vector.broadcast %109 : vector<1x32xf32> to vector<40x32xf32>
    %111 = arith.mulf %39, %110 : vector<40x32xf32>
    %cst_53 = arith.constant dense<0.000000e+00> : vector<40x40xf32>
    %112 = tpu.matmul %111, %46, %cst_53 {dimension_numbers = #tpu.dot_dimension_numbers<[1], [1], [0], [0], [0, 0, 1, 0], [], []>} : vector<40x32xf32>, vector<40x32xf32>, vector<40x40xf32> -> vector<40x40xf32>
    %113 = arith.addf %112, %5 : vector<40x40xf32>
    %cst_54 = arith.constant dense<0xFF800000> : vector<40xf32>
    %114 = vector.multi_reduction <maximumf>, %113, %cst_54 [1] : vector<40x40xf32> to vector<40xf32>
    %115 = vector.shape_cast %114 : vector<40xf32> to vector<40x1xf32>
    %116 = vector.broadcast %115 : vector<40x1xf32> to vector<40x40xf32>
    %117 = arith.subf %113, %116 : vector<40x40xf32>
    %118 = math.exp %117 : vector<40x40xf32>
    %cst_55 = arith.constant dense<0.000000e+00> : vector<40xf32>
    %119 = vector.multi_reduction <add>, %118, %cst_55 [1] : vector<40x40xf32> to vector<40xf32>
    %120 = vector.shape_cast %119 : vector<40xf32> to vector<40x1xf32>
    %121 = tpu.reciprocal %120 {approx = true} : vector<40x1xf32> -> vector<40x1xf32>
    %122 = vector.broadcast %121 : vector<40x1xf32> to vector<40x40xf32>
    %123 = arith.mulf %118, %122 : vector<40x40xf32>
    %124 = vector.broadcast %109 : vector<1x32xf32> to vector<40x32xf32>
    %125 = arith.mulf %53, %124 : vector<40x32xf32>
    %cst_56 = arith.constant dense<0.000000e+00> : vector<40x32xf32>
    %126 = tpu.matmul %123, %125, %cst_56 {dimension_numbers = #tpu.dot_dimension_numbers<[1], [0], [0], [1], [0, 0, 1, 1], [], []>} : vector<40x40xf32>, vector<40x32xf32>, vector<40x32xf32> -> vector<40x32xf32>
    %127 = arith.addf %102, %126 : vector<40x32xf32>
    %c24_i32_57 = arith.constant 24 : i32
    %128 = vector.broadcast %c24_i32_57 : i32 to vector<1x32xi32>
    %129 = arith.cmpi sge, %8, %128 : vector<1x32xi32>
    %c32_i32 = arith.constant 32 : i32
    %130 = vector.broadcast %c32_i32 : i32 to vector<1x32xi32>
    %131 = arith.cmpi slt, %8, %130 : vector<1x32xi32>
    %132 = arith.andi %129, %131 : vector<1x32xi1>
    %133 = arith.extui %132 : vector<1x32xi1> to vector<1x32xi32>
    %134 = arith.sitofp %133 : vector<1x32xi32> to vector<1x32xf32>
    %135 = vector.broadcast %134 : vector<1x32xf32> to vector<40x32xf32>
    %136 = arith.mulf %39, %135 : vector<40x32xf32>
    %cst_58 = arith.constant dense<0.000000e+00> : vector<40x40xf32>
    %137 = tpu.matmul %136, %46, %cst_58 {dimension_numbers = #tpu.dot_dimension_numbers<[1], [1], [0], [0], [0, 0, 1, 0], [], []>} : vector<40x32xf32>, vector<40x32xf32>, vector<40x40xf32> -> vector<40x40xf32>
    %138 = arith.addf %137, %5 : vector<40x40xf32>
    %cst_59 = arith.constant dense<0xFF800000> : vector<40xf32>
    %139 = vector.multi_reduction <maximumf>, %138, %cst_59 [1] : vector<40x40xf32> to vector<40xf32>
    %140 = vector.shape_cast %139 : vector<40xf32> to vector<40x1xf32>
    %141 = vector.broadcast %140 : vector<40x1xf32> to vector<40x40xf32>
    %142 = arith.subf %138, %141 : vector<40x40xf32>
    %143 = math.exp %142 : vector<40x40xf32>
    %cst_60 = arith.constant dense<0.000000e+00> : vector<40xf32>
    %144 = vector.multi_reduction <add>, %143, %cst_60 [1] : vector<40x40xf32> to vector<40xf32>
    %145 = vector.shape_cast %144 : vector<40xf32> to vector<40x1xf32>
    %146 = tpu.reciprocal %145 {approx = true} : vector<40x1xf32> -> vector<40x1xf32>
    %147 = vector.broadcast %146 : vector<40x1xf32> to vector<40x40xf32>
    %148 = arith.mulf %143, %147 : vector<40x40xf32>
    %149 = vector.broadcast %134 : vector<1x32xf32> to vector<40x32xf32>
    %150 = arith.mulf %53, %149 : vector<40x32xf32>
    %cst_61 = arith.constant dense<0.000000e+00> : vector<40x32xf32>
    %151 = tpu.matmul %148, %150, %cst_61 {dimension_numbers = #tpu.dot_dimension_numbers<[1], [0], [0], [1], [0, 0, 1, 1], [], []>} : vector<40x40xf32>, vector<40x32xf32>, vector<40x32xf32> -> vector<40x32xf32>
    %152 = arith.addf %127, %151 : vector<40x32xf32>
    %c0_62 = arith.constant 0 : index
    %c0_63 = arith.constant 0 : index
    %c0_64 = arith.constant 0 : index
    %153 = vector.load %arg12[%c0_62, %c0_63, %c0_64] : memref<4x32x32xf32, #tpu.memory_space<vmem>>, vector<1x32x32xf32>
    %154 = vector.shape_cast %153 : vector<1x32x32xf32> to vector<32x32xf32>
    %cst_65 = arith.constant dense<0.000000e+00> : vector<40x32xf32>
    %155 = tpu.matmul %152, %154, %cst_65 {dimension_numbers = #tpu.dot_dimension_numbers<[1], [0], [0], [1], [0, 0, 1, 1], [], []>} : vector<40x32xf32>, vector<32x32xf32>, vector<40x32xf32> -> vector<40x32xf32>
    %156 = arith.addf %4, %155 : vector<40x32xf32>
    %c0_66 = arith.constant 0 : index
    %c0_67 = arith.constant 0 : index
    %c0_68 = arith.constant 0 : index
    %157 = vector.load %arg13[%c0_66, %c0_67, %c0_68] : memref<4x1x32xf32, #tpu.memory_space<vmem>>, vector<1x1x32xf32>
    %158 = vector.shape_cast %157 : vector<1x1x32xf32> to vector<1x32xf32>
    %159 = vector.broadcast %158 : vector<1x32xf32> to vector<40x32xf32>
    %160 = arith.addf %156, %159 : vector<40x32xf32>
    %c0_69 = arith.constant 0 : index
    %c0_70 = arith.constant 0 : index
    %c0_71 = arith.constant 0 : index
    %161 = vector.load %arg14[%c0_69, %c0_70, %c0_71] : memref<4x1x32xf32, #tpu.memory_space<vmem>>, vector<1x1x32xf32>
    %162 = vector.shape_cast %161 : vector<1x1x32xf32> to vector<1x32xf32>
    %c0_72 = arith.constant 0 : index
    %c0_73 = arith.constant 0 : index
    %c0_74 = arith.constant 0 : index
    %163 = vector.load %arg15[%c0_72, %c0_73, %c0_74] : memref<4x1x32xf32, #tpu.memory_space<vmem>>, vector<1x1x32xf32>
    %164 = vector.shape_cast %163 : vector<1x1x32xf32> to vector<1x32xf32>
    %cst_75 = arith.constant dense<0.000000e+00> : vector<40xf32>
    %165 = vector.multi_reduction <add>, %160, %cst_75 [1] : vector<40x32xf32> to vector<40xf32>
    %166 = vector.shape_cast %165 : vector<40xf32> to vector<40x1xf32>
    %cst_76 = arith.constant 3.200000e+01 : f32
    %167 = vector.broadcast %cst_76 : f32 to vector<40x1xf32>
    %168 = arith.divf %166, %167 : vector<40x1xf32>
    %169 = vector.broadcast %168 : vector<40x1xf32> to vector<40x32xf32>
    %170 = arith.subf %160, %169 : vector<40x32xf32>
    %171 = arith.mulf %170, %170 : vector<40x32xf32>
    %cst_77 = arith.constant dense<0.000000e+00> : vector<40xf32>
    %172 = vector.multi_reduction <add>, %171, %cst_77 [1] : vector<40x32xf32> to vector<40xf32>
    %173 = vector.shape_cast %172 : vector<40xf32> to vector<40x1xf32>
    %cst_78 = arith.constant 3.200000e+01 : f32
    %174 = vector.broadcast %cst_78 : f32 to vector<40x1xf32>
    %175 = arith.divf %173, %174 : vector<40x1xf32>
    %cst_79 = arith.constant 9.99999997E-7 : f32
    %176 = vector.broadcast %cst_79 : f32 to vector<40x1xf32>
    %177 = arith.addf %175, %176 : vector<40x1xf32>
    %178 = math.rsqrt %177 : vector<40x1xf32>
    %179 = vector.broadcast %178 : vector<40x1xf32> to vector<40x32xf32>
    %180 = arith.mulf %170, %179 : vector<40x32xf32>
    %181 = vector.broadcast %162 : vector<1x32xf32> to vector<40x32xf32>
    %182 = arith.mulf %180, %181 : vector<40x32xf32>
    %183 = vector.broadcast %164 : vector<1x32xf32> to vector<40x32xf32>
    %184 = arith.addf %182, %183 : vector<40x32xf32>
    %c0_80 = arith.constant 0 : index
    %c0_81 = arith.constant 0 : index
    %c0_82 = arith.constant 0 : index
    %185 = vector.load %arg16[%c0_80, %c0_81, %c0_82] : memref<4x32x64xf32, #tpu.memory_space<vmem>>, vector<1x32x64xf32>
    %186 = vector.shape_cast %185 : vector<1x32x64xf32> to vector<32x64xf32>
    %cst_83 = arith.constant dense<0.000000e+00> : vector<40x64xf32>
    %187 = tpu.matmul %184, %186, %cst_83 {dimension_numbers = #tpu.dot_dimension_numbers<[1], [0], [0], [1], [0, 0, 1, 1], [], []>} : vector<40x32xf32>, vector<32x64xf32>, vector<40x64xf32> -> vector<40x64xf32>
    %c0_84 = arith.constant 0 : index
    %c0_85 = arith.constant 0 : index
    %c0_86 = arith.constant 0 : index
    %188 = vector.load %arg17[%c0_84, %c0_85, %c0_86] : memref<4x1x64xf32, #tpu.memory_space<vmem>>, vector<1x1x64xf32>
    %189 = vector.shape_cast %188 : vector<1x1x64xf32> to vector<1x64xf32>
    %190 = vector.broadcast %189 : vector<1x64xf32> to vector<40x64xf32>
    %191 = arith.addf %187, %190 : vector<40x64xf32>
    %192 = arith.mulf %191, %191 : vector<40x64xf32>
    %193 = arith.mulf %191, %192 : vector<40x64xf32>
    %cst_87 = arith.constant 4.471500e-02 : f32
    %194 = vector.broadcast %cst_87 : f32 to vector<40x64xf32>
    %195 = arith.mulf %194, %193 : vector<40x64xf32>
    %196 = arith.addf %191, %195 : vector<40x64xf32>
    %cst_88 = arith.constant 0.797884583 : f32
    %197 = vector.broadcast %cst_88 : f32 to vector<40x64xf32>
    %198 = arith.mulf %197, %196 : vector<40x64xf32>
    %199 = math.tanh %198 : vector<40x64xf32>
    %cst_89 = arith.constant 1.000000e+00 : f32
    %200 = vector.broadcast %cst_89 : f32 to vector<40x64xf32>
    %201 = arith.addf %200, %199 : vector<40x64xf32>
    %cst_90 = arith.constant 5.000000e-01 : f32
    %202 = vector.broadcast %cst_90 : f32 to vector<40x64xf32>
    %203 = arith.mulf %202, %201 : vector<40x64xf32>
    %204 = arith.mulf %191, %203 : vector<40x64xf32>
    %c0_91 = arith.constant 0 : index
    %c0_92 = arith.constant 0 : index
    %c0_93 = arith.constant 0 : index
    %205 = vector.load %arg18[%c0_91, %c0_92, %c0_93] : memref<4x64x32xf32, #tpu.memory_space<vmem>>, vector<1x64x32xf32>
    %206 = vector.shape_cast %205 : vector<1x64x32xf32> to vector<64x32xf32>
    %cst_94 = arith.constant dense<0.000000e+00> : vector<40x32xf32>
    %207 = tpu.matmul %204, %206, %cst_94 {dimension_numbers = #tpu.dot_dimension_numbers<[1], [0], [0], [1], [0, 0, 1, 1], [], []>} : vector<40x64xf32>, vector<64x32xf32>, vector<40x32xf32> -> vector<40x32xf32>
    %208 = arith.addf %160, %207 : vector<40x32xf32>
    %c0_95 = arith.constant 0 : index
    %c0_96 = arith.constant 0 : index
    %c0_97 = arith.constant 0 : index
    %209 = vector.load %arg19[%c0_95, %c0_96, %c0_97] : memref<4x1x32xf32, #tpu.memory_space<vmem>>, vector<1x1x32xf32>
    %210 = vector.shape_cast %209 : vector<1x1x32xf32> to vector<1x32xf32>
    %211 = vector.broadcast %210 : vector<1x32xf32> to vector<40x32xf32>
    %212 = arith.addf %208, %211 : vector<40x32xf32>
    %cst_98 = arith.constant dense<0.000000e+00> : vector<40xf32>
    %213 = vector.multi_reduction <add>, %212, %cst_98 [1] : vector<40x32xf32> to vector<40xf32>
    %214 = vector.shape_cast %213 : vector<40xf32> to vector<40x1xf32>
    %cst_99 = arith.constant 3.200000e+01 : f32
    %215 = vector.broadcast %cst_99 : f32 to vector<40x1xf32>
    %216 = arith.divf %214, %215 : vector<40x1xf32>
    %217 = vector.broadcast %216 : vector<40x1xf32> to vector<40x32xf32>
    %218 = arith.subf %212, %217 : vector<40x32xf32>
    %219 = arith.mulf %218, %218 : vector<40x32xf32>
    %cst_100 = arith.constant dense<0.000000e+00> : vector<40xf32>
    %220 = vector.multi_reduction <add>, %219, %cst_100 [1] : vector<40x32xf32> to vector<40xf32>
    %221 = vector.shape_cast %220 : vector<40xf32> to vector<40x1xf32>
    %cst_101 = arith.constant 3.200000e+01 : f32
    %222 = vector.broadcast %cst_101 : f32 to vector<40x1xf32>
    %223 = arith.divf %221, %222 : vector<40x1xf32>
    %cst_102 = arith.constant 9.99999997E-7 : f32
    %224 = vector.broadcast %cst_102 : f32 to vector<40x1xf32>
    %225 = arith.addf %223, %224 : vector<40x1xf32>
    %226 = math.rsqrt %225 : vector<40x1xf32>
    %227 = vector.broadcast %226 : vector<40x1xf32> to vector<40x32xf32>
    %228 = arith.mulf %218, %227 : vector<40x32xf32>
    %229 = vector.broadcast %6 : vector<1x32xf32> to vector<40x32xf32>
    %230 = arith.mulf %228, %229 : vector<40x32xf32>
    %231 = vector.broadcast %7 : vector<1x32xf32> to vector<40x32xf32>
    %232 = arith.addf %230, %231 : vector<40x32xf32>
    %c1 = arith.constant 1 : index
    %c0_103 = arith.constant 0 : index
    %c0_104 = arith.constant 0 : index
    %233 = vector.load %arg4[%c1, %c0_103, %c0_104] : memref<4x1x32xf32, #tpu.memory_space<vmem>>, vector<1x1x32xf32>
    %234 = vector.shape_cast %233 : vector<1x1x32xf32> to vector<1x32xf32>
    %c1_105 = arith.constant 1 : index
    %c0_106 = arith.constant 0 : index
    %c0_107 = arith.constant 0 : index
    %235 = vector.load %arg5[%c1_105, %c0_106, %c0_107] : memref<4x1x32xf32, #tpu.memory_space<vmem>>, vector<1x1x32xf32>
    %236 = vector.shape_cast %235 : vector<1x1x32xf32> to vector<1x32xf32>
    %cst_108 = arith.constant dense<0.000000e+00> : vector<40xf32>
    %237 = vector.multi_reduction <add>, %212, %cst_108 [1] : vector<40x32xf32> to vector<40xf32>
    %238 = vector.shape_cast %237 : vector<40xf32> to vector<40x1xf32>
    %cst_109 = arith.constant 3.200000e+01 : f32
    %239 = vector.broadcast %cst_109 : f32 to vector<40x1xf32>
    %240 = arith.divf %238, %239 : vector<40x1xf32>
    %241 = vector.broadcast %240 : vector<40x1xf32> to vector<40x32xf32>
    %242 = arith.subf %212, %241 : vector<40x32xf32>
    %243 = arith.mulf %242, %242 : vector<40x32xf32>
    %cst_110 = arith.constant dense<0.000000e+00> : vector<40xf32>
    %244 = vector.multi_reduction <add>, %243, %cst_110 [1] : vector<40x32xf32> to vector<40xf32>
    %245 = vector.shape_cast %244 : vector<40xf32> to vector<40x1xf32>
    %cst_111 = arith.constant 3.200000e+01 : f32
    %246 = vector.broadcast %cst_111 : f32 to vector<40x1xf32>
    %247 = arith.divf %245, %246 : vector<40x1xf32>
    %cst_112 = arith.constant 9.99999997E-7 : f32
    %248 = vector.broadcast %cst_112 : f32 to vector<40x1xf32>
    %249 = arith.addf %247, %248 : vector<40x1xf32>
    %250 = math.rsqrt %249 : vector<40x1xf32>
    %251 = vector.broadcast %250 : vector<40x1xf32> to vector<40x32xf32>
    %252 = arith.mulf %242, %251 : vector<40x32xf32>
    %253 = vector.broadcast %234 : vector<1x32xf32> to vector<40x32xf32>
    %254 = arith.mulf %252, %253 : vector<40x32xf32>
    %255 = vector.broadcast %236 : vector<1x32xf32> to vector<40x32xf32>
    %256 = arith.addf %254, %255 : vector<40x32xf32>
    %c1_113 = arith.constant 1 : index
    %c0_114 = arith.constant 0 : index
    %c0_115 = arith.constant 0 : index
    %257 = vector.load %arg6[%c1_113, %c0_114, %c0_115] : memref<4x32x32xf32, #tpu.memory_space<vmem>>, vector<1x32x32xf32>
    %258 = vector.shape_cast %257 : vector<1x32x32xf32> to vector<32x32xf32>
    %cst_116 = arith.constant dense<0.000000e+00> : vector<40x32xf32>
    %259 = tpu.matmul %256, %258, %cst_116 {dimension_numbers = #tpu.dot_dimension_numbers<[1], [0], [0], [1], [0, 0, 1, 1], [], []>} : vector<40x32xf32>, vector<32x32xf32>, vector<40x32xf32> -> vector<40x32xf32>
    %c1_117 = arith.constant 1 : index
    %c0_118 = arith.constant 0 : index
    %c0_119 = arith.constant 0 : index
    %260 = vector.load %arg7[%c1_117, %c0_118, %c0_119] : memref<4x1x32xf32, #tpu.memory_space<vmem>>, vector<1x1x32xf32>
    %261 = vector.shape_cast %260 : vector<1x1x32xf32> to vector<1x32xf32>
    %262 = vector.broadcast %261 : vector<1x32xf32> to vector<40x32xf32>
    %263 = arith.addf %259, %262 : vector<40x32xf32>
    %c1_120 = arith.constant 1 : index
    %c0_121 = arith.constant 0 : index
    %c0_122 = arith.constant 0 : index
    %264 = vector.load %arg8[%c1_120, %c0_121, %c0_122] : memref<4x32x32xf32, #tpu.memory_space<vmem>>, vector<1x32x32xf32>
    %265 = vector.shape_cast %264 : vector<1x32x32xf32> to vector<32x32xf32>
    %cst_123 = arith.constant dense<0.000000e+00> : vector<40x32xf32>
    %266 = tpu.matmul %256, %265, %cst_123 {dimension_numbers = #tpu.dot_dimension_numbers<[1], [0], [0], [1], [0, 0, 1, 1], [], []>} : vector<40x32xf32>, vector<32x32xf32>, vector<40x32xf32> -> vector<40x32xf32>
    %c1_124 = arith.constant 1 : index
    %c0_125 = arith.constant 0 : index
    %c0_126 = arith.constant 0 : index
    %267 = vector.load %arg9[%c1_124, %c0_125, %c0_126] : memref<4x1x32xf32, #tpu.memory_space<vmem>>, vector<1x1x32xf32>
    %268 = vector.shape_cast %267 : vector<1x1x32xf32> to vector<1x32xf32>
    %269 = vector.broadcast %268 : vector<1x32xf32> to vector<40x32xf32>
    %270 = arith.addf %266, %269 : vector<40x32xf32>
    %c1_127 = arith.constant 1 : index
    %c0_128 = arith.constant 0 : index
    %c0_129 = arith.constant 0 : index
    %271 = vector.load %arg10[%c1_127, %c0_128, %c0_129] : memref<4x32x32xf32, #tpu.memory_space<vmem>>, vector<1x32x32xf32>
    %272 = vector.shape_cast %271 : vector<1x32x32xf32> to vector<32x32xf32>
    %cst_130 = arith.constant dense<0.000000e+00> : vector<40x32xf32>
    %273 = tpu.matmul %256, %272, %cst_130 {dimension_numbers = #tpu.dot_dimension_numbers<[1], [0], [0], [1], [0, 0, 1, 1], [], []>} : vector<40x32xf32>, vector<32x32xf32>, vector<40x32xf32> -> vector<40x32xf32>
    %c1_131 = arith.constant 1 : index
    %c0_132 = arith.constant 0 : index
    %c0_133 = arith.constant 0 : index
    %274 = vector.load %arg11[%c1_131, %c0_132, %c0_133] : memref<4x1x32xf32, #tpu.memory_space<vmem>>, vector<1x1x32xf32>
    %275 = vector.shape_cast %274 : vector<1x1x32xf32> to vector<1x32xf32>
    %276 = vector.broadcast %275 : vector<1x32xf32> to vector<40x32xf32>
    %277 = arith.addf %273, %276 : vector<40x32xf32>
    %c0_i32_134 = arith.constant 0 : i32
    %278 = vector.broadcast %c0_i32_134 : i32 to vector<1x32xi32>
    %279 = arith.cmpi sge, %8, %278 : vector<1x32xi32>
    %c8_i32_135 = arith.constant 8 : i32
    %280 = vector.broadcast %c8_i32_135 : i32 to vector<1x32xi32>
    %281 = arith.cmpi slt, %8, %280 : vector<1x32xi32>
    %282 = arith.andi %279, %281 : vector<1x32xi1>
    %283 = arith.extui %282 : vector<1x32xi1> to vector<1x32xi32>
    %284 = arith.sitofp %283 : vector<1x32xi32> to vector<1x32xf32>
    %285 = vector.broadcast %284 : vector<1x32xf32> to vector<40x32xf32>
    %286 = arith.mulf %263, %285 : vector<40x32xf32>
    %cst_136 = arith.constant dense<0.000000e+00> : vector<40x40xf32>
    %287 = tpu.matmul %286, %270, %cst_136 {dimension_numbers = #tpu.dot_dimension_numbers<[1], [1], [0], [0], [0, 0, 1, 0], [], []>} : vector<40x32xf32>, vector<40x32xf32>, vector<40x40xf32> -> vector<40x40xf32>
    %288 = arith.addf %287, %5 : vector<40x40xf32>
    %cst_137 = arith.constant dense<0xFF800000> : vector<40xf32>
    %289 = vector.multi_reduction <maximumf>, %288, %cst_137 [1] : vector<40x40xf32> to vector<40xf32>
    %290 = vector.shape_cast %289 : vector<40xf32> to vector<40x1xf32>
    %291 = vector.broadcast %290 : vector<40x1xf32> to vector<40x40xf32>
    %292 = arith.subf %288, %291 : vector<40x40xf32>
    %293 = math.exp %292 : vector<40x40xf32>
    %cst_138 = arith.constant dense<0.000000e+00> : vector<40xf32>
    %294 = vector.multi_reduction <add>, %293, %cst_138 [1] : vector<40x40xf32> to vector<40xf32>
    %295 = vector.shape_cast %294 : vector<40xf32> to vector<40x1xf32>
    %296 = tpu.reciprocal %295 {approx = true} : vector<40x1xf32> -> vector<40x1xf32>
    %297 = vector.broadcast %296 : vector<40x1xf32> to vector<40x40xf32>
    %298 = arith.mulf %293, %297 : vector<40x40xf32>
    %299 = vector.broadcast %284 : vector<1x32xf32> to vector<40x32xf32>
    %300 = arith.mulf %277, %299 : vector<40x32xf32>
    %cst_139 = arith.constant dense<0.000000e+00> : vector<40x32xf32>
    %301 = tpu.matmul %298, %300, %cst_139 {dimension_numbers = #tpu.dot_dimension_numbers<[1], [0], [0], [1], [0, 0, 1, 1], [], []>} : vector<40x40xf32>, vector<40x32xf32>, vector<40x32xf32> -> vector<40x32xf32>
    %c8_i32_140 = arith.constant 8 : i32
    %302 = vector.broadcast %c8_i32_140 : i32 to vector<1x32xi32>
    %303 = arith.cmpi sge, %8, %302 : vector<1x32xi32>
    %c16_i32_141 = arith.constant 16 : i32
    %304 = vector.broadcast %c16_i32_141 : i32 to vector<1x32xi32>
    %305 = arith.cmpi slt, %8, %304 : vector<1x32xi32>
    %306 = arith.andi %303, %305 : vector<1x32xi1>
    %307 = arith.extui %306 : vector<1x32xi1> to vector<1x32xi32>
    %308 = arith.sitofp %307 : vector<1x32xi32> to vector<1x32xf32>
    %309 = vector.broadcast %308 : vector<1x32xf32> to vector<40x32xf32>
    %310 = arith.mulf %263, %309 : vector<40x32xf32>
    %cst_142 = arith.constant dense<0.000000e+00> : vector<40x40xf32>
    %311 = tpu.matmul %310, %270, %cst_142 {dimension_numbers = #tpu.dot_dimension_numbers<[1], [1], [0], [0], [0, 0, 1, 0], [], []>} : vector<40x32xf32>, vector<40x32xf32>, vector<40x40xf32> -> vector<40x40xf32>
    %312 = arith.addf %311, %5 : vector<40x40xf32>
    %cst_143 = arith.constant dense<0xFF800000> : vector<40xf32>
    %313 = vector.multi_reduction <maximumf>, %312, %cst_143 [1] : vector<40x40xf32> to vector<40xf32>
    %314 = vector.shape_cast %313 : vector<40xf32> to vector<40x1xf32>
    %315 = vector.broadcast %314 : vector<40x1xf32> to vector<40x40xf32>
    %316 = arith.subf %312, %315 : vector<40x40xf32>
    %317 = math.exp %316 : vector<40x40xf32>
    %cst_144 = arith.constant dense<0.000000e+00> : vector<40xf32>
    %318 = vector.multi_reduction <add>, %317, %cst_144 [1] : vector<40x40xf32> to vector<40xf32>
    %319 = vector.shape_cast %318 : vector<40xf32> to vector<40x1xf32>
    %320 = tpu.reciprocal %319 {approx = true} : vector<40x1xf32> -> vector<40x1xf32>
    %321 = vector.broadcast %320 : vector<40x1xf32> to vector<40x40xf32>
    %322 = arith.mulf %317, %321 : vector<40x40xf32>
    %323 = vector.broadcast %308 : vector<1x32xf32> to vector<40x32xf32>
    %324 = arith.mulf %277, %323 : vector<40x32xf32>
    %cst_145 = arith.constant dense<0.000000e+00> : vector<40x32xf32>
    %325 = tpu.matmul %322, %324, %cst_145 {dimension_numbers = #tpu.dot_dimension_numbers<[1], [0], [0], [1], [0, 0, 1, 1], [], []>} : vector<40x40xf32>, vector<40x32xf32>, vector<40x32xf32> -> vector<40x32xf32>
    %326 = arith.addf %301, %325 : vector<40x32xf32>
    %c16_i32_146 = arith.constant 16 : i32
    %327 = vector.broadcast %c16_i32_146 : i32 to vector<1x32xi32>
    %328 = arith.cmpi sge, %8, %327 : vector<1x32xi32>
    %c24_i32_147 = arith.constant 24 : i32
    %329 = vector.broadcast %c24_i32_147 : i32 to vector<1x32xi32>
    %330 = arith.cmpi slt, %8, %329 : vector<1x32xi32>
    %331 = arith.andi %328, %330 : vector<1x32xi1>
    %332 = arith.extui %331 : vector<1x32xi1> to vector<1x32xi32>
    %333 = arith.sitofp %332 : vector<1x32xi32> to vector<1x32xf32>
    %334 = vector.broadcast %333 : vector<1x32xf32> to vector<40x32xf32>
    %335 = arith.mulf %263, %334 : vector<40x32xf32>
    %cst_148 = arith.constant dense<0.000000e+00> : vector<40x40xf32>
    %336 = tpu.matmul %335, %270, %cst_148 {dimension_numbers = #tpu.dot_dimension_numbers<[1], [1], [0], [0], [0, 0, 1, 0], [], []>} : vector<40x32xf32>, vector<40x32xf32>, vector<40x40xf32> -> vector<40x40xf32>
    %337 = arith.addf %336, %5 : vector<40x40xf32>
    %cst_149 = arith.constant dense<0xFF800000> : vector<40xf32>
    %338 = vector.multi_reduction <maximumf>, %337, %cst_149 [1] : vector<40x40xf32> to vector<40xf32>
    %339 = vector.shape_cast %338 : vector<40xf32> to vector<40x1xf32>
    %340 = vector.broadcast %339 : vector<40x1xf32> to vector<40x40xf32>
    %341 = arith.subf %337, %340 : vector<40x40xf32>
    %342 = math.exp %341 : vector<40x40xf32>
    %cst_150 = arith.constant dense<0.000000e+00> : vector<40xf32>
    %343 = vector.multi_reduction <add>, %342, %cst_150 [1] : vector<40x40xf32> to vector<40xf32>
    %344 = vector.shape_cast %343 : vector<40xf32> to vector<40x1xf32>
    %345 = tpu.reciprocal %344 {approx = true} : vector<40x1xf32> -> vector<40x1xf32>
    %346 = vector.broadcast %345 : vector<40x1xf32> to vector<40x40xf32>
    %347 = arith.mulf %342, %346 : vector<40x40xf32>
    %348 = vector.broadcast %333 : vector<1x32xf32> to vector<40x32xf32>
    %349 = arith.mulf %277, %348 : vector<40x32xf32>
    %cst_151 = arith.constant dense<0.000000e+00> : vector<40x32xf32>
    %350 = tpu.matmul %347, %349, %cst_151 {dimension_numbers = #tpu.dot_dimension_numbers<[1], [0], [0], [1], [0, 0, 1, 1], [], []>} : vector<40x40xf32>, vector<40x32xf32>, vector<40x32xf32> -> vector<40x32xf32>
    %351 = arith.addf %326, %350 : vector<40x32xf32>
    %c24_i32_152 = arith.constant 24 : i32
    %352 = vector.broadcast %c24_i32_152 : i32 to vector<1x32xi32>
    %353 = arith.cmpi sge, %8, %352 : vector<1x32xi32>
    %c32_i32_153 = arith.constant 32 : i32
    %354 = vector.broadcast %c32_i32_153 : i32 to vector<1x32xi32>
    %355 = arith.cmpi slt, %8, %354 : vector<1x32xi32>
    %356 = arith.andi %353, %355 : vector<1x32xi1>
    %357 = arith.extui %356 : vector<1x32xi1> to vector<1x32xi32>
    %358 = arith.sitofp %357 : vector<1x32xi32> to vector<1x32xf32>
    %359 = vector.broadcast %358 : vector<1x32xf32> to vector<40x32xf32>
    %360 = arith.mulf %263, %359 : vector<40x32xf32>
    %cst_154 = arith.constant dense<0.000000e+00> : vector<40x40xf32>
    %361 = tpu.matmul %360, %270, %cst_154 {dimension_numbers = #tpu.dot_dimension_numbers<[1], [1], [0], [0], [0, 0, 1, 0], [], []>} : vector<40x32xf32>, vector<40x32xf32>, vector<40x40xf32> -> vector<40x40xf32>
    %362 = arith.addf %361, %5 : vector<40x40xf32>
    %cst_155 = arith.constant dense<0xFF800000> : vector<40xf32>
    %363 = vector.multi_reduction <maximumf>, %362, %cst_155 [1] : vector<40x40xf32> to vector<40xf32>
    %364 = vector.shape_cast %363 : vector<40xf32> to vector<40x1xf32>
    %365 = vector.broadcast %364 : vector<40x1xf32> to vector<40x40xf32>
    %366 = arith.subf %362, %365 : vector<40x40xf32>
    %367 = math.exp %366 : vector<40x40xf32>
    %cst_156 = arith.constant dense<0.000000e+00> : vector<40xf32>
    %368 = vector.multi_reduction <add>, %367, %cst_156 [1] : vector<40x40xf32> to vector<40xf32>
    %369 = vector.shape_cast %368 : vector<40xf32> to vector<40x1xf32>
    %370 = tpu.reciprocal %369 {approx = true} : vector<40x1xf32> -> vector<40x1xf32>
    %371 = vector.broadcast %370 : vector<40x1xf32> to vector<40x40xf32>
    %372 = arith.mulf %367, %371 : vector<40x40xf32>
    %373 = vector.broadcast %358 : vector<1x32xf32> to vector<40x32xf32>
    %374 = arith.mulf %277, %373 : vector<40x32xf32>
    %cst_157 = arith.constant dense<0.000000e+00> : vector<40x32xf32>
    %375 = tpu.matmul %372, %374, %cst_157 {dimension_numbers = #tpu.dot_dimension_numbers<[1], [0], [0], [1], [0, 0, 1, 1], [], []>} : vector<40x40xf32>, vector<40x32xf32>, vector<40x32xf32> -> vector<40x32xf32>
    %376 = arith.addf %351, %375 : vector<40x32xf32>
    %c1_158 = arith.constant 1 : index
    %c0_159 = arith.constant 0 : index
    %c0_160 = arith.constant 0 : index
    %377 = vector.load %arg12[%c1_158, %c0_159, %c0_160] : memref<4x32x32xf32, #tpu.memory_space<vmem>>, vector<1x32x32xf32>
    %378 = vector.shape_cast %377 : vector<1x32x32xf32> to vector<32x32xf32>
    %cst_161 = arith.constant dense<0.000000e+00> : vector<40x32xf32>
    %379 = tpu.matmul %376, %378, %cst_161 {dimension_numbers = #tpu.dot_dimension_numbers<[1], [0], [0], [1], [0, 0, 1, 1], [], []>} : vector<40x32xf32>, vector<32x32xf32>, vector<40x32xf32> -> vector<40x32xf32>
    %380 = arith.addf %212, %379 : vector<40x32xf32>
    %c1_162 = arith.constant 1 : index
    %c0_163 = arith.constant 0 : index
    %c0_164 = arith.constant 0 : index
    %381 = vector.load %arg13[%c1_162, %c0_163, %c0_164] : memref<4x1x32xf32, #tpu.memory_space<vmem>>, vector<1x1x32xf32>
    %382 = vector.shape_cast %381 : vector<1x1x32xf32> to vector<1x32xf32>
    %383 = vector.broadcast %382 : vector<1x32xf32> to vector<40x32xf32>
    %384 = arith.addf %380, %383 : vector<40x32xf32>
    %c1_165 = arith.constant 1 : index
    %c0_166 = arith.constant 0 : index
    %c0_167 = arith.constant 0 : index
    %385 = vector.load %arg14[%c1_165, %c0_166, %c0_167] : memref<4x1x32xf32, #tpu.memory_space<vmem>>, vector<1x1x32xf32>
    %386 = vector.shape_cast %385 : vector<1x1x32xf32> to vector<1x32xf32>
    %c1_168 = arith.constant 1 : index
    %c0_169 = arith.constant 0 : index
    %c0_170 = arith.constant 0 : index
    %387 = vector.load %arg15[%c1_168, %c0_169, %c0_170] : memref<4x1x32xf32, #tpu.memory_space<vmem>>, vector<1x1x32xf32>
    %388 = vector.shape_cast %387 : vector<1x1x32xf32> to vector<1x32xf32>
    %cst_171 = arith.constant dense<0.000000e+00> : vector<40xf32>
    %389 = vector.multi_reduction <add>, %384, %cst_171 [1] : vector<40x32xf32> to vector<40xf32>
    %390 = vector.shape_cast %389 : vector<40xf32> to vector<40x1xf32>
    %cst_172 = arith.constant 3.200000e+01 : f32
    %391 = vector.broadcast %cst_172 : f32 to vector<40x1xf32>
    %392 = arith.divf %390, %391 : vector<40x1xf32>
    %393 = vector.broadcast %392 : vector<40x1xf32> to vector<40x32xf32>
    %394 = arith.subf %384, %393 : vector<40x32xf32>
    %395 = arith.mulf %394, %394 : vector<40x32xf32>
    %cst_173 = arith.constant dense<0.000000e+00> : vector<40xf32>
    %396 = vector.multi_reduction <add>, %395, %cst_173 [1] : vector<40x32xf32> to vector<40xf32>
    %397 = vector.shape_cast %396 : vector<40xf32> to vector<40x1xf32>
    %cst_174 = arith.constant 3.200000e+01 : f32
    %398 = vector.broadcast %cst_174 : f32 to vector<40x1xf32>
    %399 = arith.divf %397, %398 : vector<40x1xf32>
    %cst_175 = arith.constant 9.99999997E-7 : f32
    %400 = vector.broadcast %cst_175 : f32 to vector<40x1xf32>
    %401 = arith.addf %399, %400 : vector<40x1xf32>
    %402 = math.rsqrt %401 : vector<40x1xf32>
    %403 = vector.broadcast %402 : vector<40x1xf32> to vector<40x32xf32>
    %404 = arith.mulf %394, %403 : vector<40x32xf32>
    %405 = vector.broadcast %386 : vector<1x32xf32> to vector<40x32xf32>
    %406 = arith.mulf %404, %405 : vector<40x32xf32>
    %407 = vector.broadcast %388 : vector<1x32xf32> to vector<40x32xf32>
    %408 = arith.addf %406, %407 : vector<40x32xf32>
    %c1_176 = arith.constant 1 : index
    %c0_177 = arith.constant 0 : index
    %c0_178 = arith.constant 0 : index
    %409 = vector.load %arg16[%c1_176, %c0_177, %c0_178] : memref<4x32x64xf32, #tpu.memory_space<vmem>>, vector<1x32x64xf32>
    %410 = vector.shape_cast %409 : vector<1x32x64xf32> to vector<32x64xf32>
    %cst_179 = arith.constant dense<0.000000e+00> : vector<40x64xf32>
    %411 = tpu.matmul %408, %410, %cst_179 {dimension_numbers = #tpu.dot_dimension_numbers<[1], [0], [0], [1], [0, 0, 1, 1], [], []>} : vector<40x32xf32>, vector<32x64xf32>, vector<40x64xf32> -> vector<40x64xf32>
    %c1_180 = arith.constant 1 : index
    %c0_181 = arith.constant 0 : index
    %c0_182 = arith.constant 0 : index
    %412 = vector.load %arg17[%c1_180, %c0_181, %c0_182] : memref<4x1x64xf32, #tpu.memory_space<vmem>>, vector<1x1x64xf32>
    %413 = vector.shape_cast %412 : vector<1x1x64xf32> to vector<1x64xf32>
    %414 = vector.broadcast %413 : vector<1x64xf32> to vector<40x64xf32>
    %415 = arith.addf %411, %414 : vector<40x64xf32>
    %416 = arith.mulf %415, %415 : vector<40x64xf32>
    %417 = arith.mulf %415, %416 : vector<40x64xf32>
    %cst_183 = arith.constant 4.471500e-02 : f32
    %418 = vector.broadcast %cst_183 : f32 to vector<40x64xf32>
    %419 = arith.mulf %418, %417 : vector<40x64xf32>
    %420 = arith.addf %415, %419 : vector<40x64xf32>
    %cst_184 = arith.constant 0.797884583 : f32
    %421 = vector.broadcast %cst_184 : f32 to vector<40x64xf32>
    %422 = arith.mulf %421, %420 : vector<40x64xf32>
    %423 = math.tanh %422 : vector<40x64xf32>
    %cst_185 = arith.constant 1.000000e+00 : f32
    %424 = vector.broadcast %cst_185 : f32 to vector<40x64xf32>
    %425 = arith.addf %424, %423 : vector<40x64xf32>
    %cst_186 = arith.constant 5.000000e-01 : f32
    %426 = vector.broadcast %cst_186 : f32 to vector<40x64xf32>
    %427 = arith.mulf %426, %425 : vector<40x64xf32>
    %428 = arith.mulf %415, %427 : vector<40x64xf32>
    %c1_187 = arith.constant 1 : index
    %c0_188 = arith.constant 0 : index
    %c0_189 = arith.constant 0 : index
    %429 = vector.load %arg18[%c1_187, %c0_188, %c0_189] : memref<4x64x32xf32, #tpu.memory_space<vmem>>, vector<1x64x32xf32>
    %430 = vector.shape_cast %429 : vector<1x64x32xf32> to vector<64x32xf32>
    %cst_190 = arith.constant dense<0.000000e+00> : vector<40x32xf32>
    %431 = tpu.matmul %428, %430, %cst_190 {dimension_numbers = #tpu.dot_dimension_numbers<[1], [0], [0], [1], [0, 0, 1, 1], [], []>} : vector<40x64xf32>, vector<64x32xf32>, vector<40x32xf32> -> vector<40x32xf32>
    %432 = arith.addf %384, %431 : vector<40x32xf32>
    %c1_191 = arith.constant 1 : index
    %c0_192 = arith.constant 0 : index
    %c0_193 = arith.constant 0 : index
    %433 = vector.load %arg19[%c1_191, %c0_192, %c0_193] : memref<4x1x32xf32, #tpu.memory_space<vmem>>, vector<1x1x32xf32>
    %434 = vector.shape_cast %433 : vector<1x1x32xf32> to vector<1x32xf32>
    %435 = vector.broadcast %434 : vector<1x32xf32> to vector<40x32xf32>
    %436 = arith.addf %432, %435 : vector<40x32xf32>
    %cst_194 = arith.constant dense<0.000000e+00> : vector<40xf32>
    %437 = vector.multi_reduction <add>, %436, %cst_194 [1] : vector<40x32xf32> to vector<40xf32>
    %438 = vector.shape_cast %437 : vector<40xf32> to vector<40x1xf32>
    %cst_195 = arith.constant 3.200000e+01 : f32
    %439 = vector.broadcast %cst_195 : f32 to vector<40x1xf32>
    %440 = arith.divf %438, %439 : vector<40x1xf32>
    %441 = vector.broadcast %440 : vector<40x1xf32> to vector<40x32xf32>
    %442 = arith.subf %436, %441 : vector<40x32xf32>
    %443 = arith.mulf %442, %442 : vector<40x32xf32>
    %cst_196 = arith.constant dense<0.000000e+00> : vector<40xf32>
    %444 = vector.multi_reduction <add>, %443, %cst_196 [1] : vector<40x32xf32> to vector<40xf32>
    %445 = vector.shape_cast %444 : vector<40xf32> to vector<40x1xf32>
    %cst_197 = arith.constant 3.200000e+01 : f32
    %446 = vector.broadcast %cst_197 : f32 to vector<40x1xf32>
    %447 = arith.divf %445, %446 : vector<40x1xf32>
    %cst_198 = arith.constant 9.99999997E-7 : f32
    %448 = vector.broadcast %cst_198 : f32 to vector<40x1xf32>
    %449 = arith.addf %447, %448 : vector<40x1xf32>
    %450 = math.rsqrt %449 : vector<40x1xf32>
    %451 = vector.broadcast %450 : vector<40x1xf32> to vector<40x32xf32>
    %452 = arith.mulf %442, %451 : vector<40x32xf32>
    %453 = vector.broadcast %6 : vector<1x32xf32> to vector<40x32xf32>
    %454 = arith.mulf %452, %453 : vector<40x32xf32>
    %455 = vector.broadcast %7 : vector<1x32xf32> to vector<40x32xf32>
    %456 = arith.addf %454, %455 : vector<40x32xf32>
    %c2 = arith.constant 2 : index
    %c0_199 = arith.constant 0 : index
    %c0_200 = arith.constant 0 : index
    %457 = vector.load %arg4[%c2, %c0_199, %c0_200] : memref<4x1x32xf32, #tpu.memory_space<vmem>>, vector<1x1x32xf32>
    %458 = vector.shape_cast %457 : vector<1x1x32xf32> to vector<1x32xf32>
    %c2_201 = arith.constant 2 : index
    %c0_202 = arith.constant 0 : index
    %c0_203 = arith.constant 0 : index
    %459 = vector.load %arg5[%c2_201, %c0_202, %c0_203] : memref<4x1x32xf32, #tpu.memory_space<vmem>>, vector<1x1x32xf32>
    %460 = vector.shape_cast %459 : vector<1x1x32xf32> to vector<1x32xf32>
    %cst_204 = arith.constant dense<0.000000e+00> : vector<40xf32>
    %461 = vector.multi_reduction <add>, %436, %cst_204 [1] : vector<40x32xf32> to vector<40xf32>
    %462 = vector.shape_cast %461 : vector<40xf32> to vector<40x1xf32>
    %cst_205 = arith.constant 3.200000e+01 : f32
    %463 = vector.broadcast %cst_205 : f32 to vector<40x1xf32>
    %464 = arith.divf %462, %463 : vector<40x1xf32>
    %465 = vector.broadcast %464 : vector<40x1xf32> to vector<40x32xf32>
    %466 = arith.subf %436, %465 : vector<40x32xf32>
    %467 = arith.mulf %466, %466 : vector<40x32xf32>
    %cst_206 = arith.constant dense<0.000000e+00> : vector<40xf32>
    %468 = vector.multi_reduction <add>, %467, %cst_206 [1] : vector<40x32xf32> to vector<40xf32>
    %469 = vector.shape_cast %468 : vector<40xf32> to vector<40x1xf32>
    %cst_207 = arith.constant 3.200000e+01 : f32
    %470 = vector.broadcast %cst_207 : f32 to vector<40x1xf32>
    %471 = arith.divf %469, %470 : vector<40x1xf32>
    %cst_208 = arith.constant 9.99999997E-7 : f32
    %472 = vector.broadcast %cst_208 : f32 to vector<40x1xf32>
    %473 = arith.addf %471, %472 : vector<40x1xf32>
    %474 = math.rsqrt %473 : vector<40x1xf32>
    %475 = vector.broadcast %474 : vector<40x1xf32> to vector<40x32xf32>
    %476 = arith.mulf %466, %475 : vector<40x32xf32>
    %477 = vector.broadcast %458 : vector<1x32xf32> to vector<40x32xf32>
    %478 = arith.mulf %476, %477 : vector<40x32xf32>
    %479 = vector.broadcast %460 : vector<1x32xf32> to vector<40x32xf32>
    %480 = arith.addf %478, %479 : vector<40x32xf32>
    %c2_209 = arith.constant 2 : index
    %c0_210 = arith.constant 0 : index
    %c0_211 = arith.constant 0 : index
    %481 = vector.load %arg6[%c2_209, %c0_210, %c0_211] : memref<4x32x32xf32, #tpu.memory_space<vmem>>, vector<1x32x32xf32>
    %482 = vector.shape_cast %481 : vector<1x32x32xf32> to vector<32x32xf32>
    %cst_212 = arith.constant dense<0.000000e+00> : vector<40x32xf32>
    %483 = tpu.matmul %480, %482, %cst_212 {dimension_numbers = #tpu.dot_dimension_numbers<[1], [0], [0], [1], [0, 0, 1, 1], [], []>} : vector<40x32xf32>, vector<32x32xf32>, vector<40x32xf32> -> vector<40x32xf32>
    %c2_213 = arith.constant 2 : index
    %c0_214 = arith.constant 0 : index
    %c0_215 = arith.constant 0 : index
    %484 = vector.load %arg7[%c2_213, %c0_214, %c0_215] : memref<4x1x32xf32, #tpu.memory_space<vmem>>, vector<1x1x32xf32>
    %485 = vector.shape_cast %484 : vector<1x1x32xf32> to vector<1x32xf32>
    %486 = vector.broadcast %485 : vector<1x32xf32> to vector<40x32xf32>
    %487 = arith.addf %483, %486 : vector<40x32xf32>
    %c2_216 = arith.constant 2 : index
    %c0_217 = arith.constant 0 : index
    %c0_218 = arith.constant 0 : index
    %488 = vector.load %arg8[%c2_216, %c0_217, %c0_218] : memref<4x32x32xf32, #tpu.memory_space<vmem>>, vector<1x32x32xf32>
    %489 = vector.shape_cast %488 : vector<1x32x32xf32> to vector<32x32xf32>
    %cst_219 = arith.constant dense<0.000000e+00> : vector<40x32xf32>
    %490 = tpu.matmul %480, %489, %cst_219 {dimension_numbers = #tpu.dot_dimension_numbers<[1], [0], [0], [1], [0, 0, 1, 1], [], []>} : vector<40x32xf32>, vector<32x32xf32>, vector<40x32xf32> -> vector<40x32xf32>
    %c2_220 = arith.constant 2 : index
    %c0_221 = arith.constant 0 : index
    %c0_222 = arith.constant 0 : index
    %491 = vector.load %arg9[%c2_220, %c0_221, %c0_222] : memref<4x1x32xf32, #tpu.memory_space<vmem>>, vector<1x1x32xf32>
    %492 = vector.shape_cast %491 : vector<1x1x32xf32> to vector<1x32xf32>
    %493 = vector.broadcast %492 : vector<1x32xf32> to vector<40x32xf32>
    %494 = arith.addf %490, %493 : vector<40x32xf32>
    %c2_223 = arith.constant 2 : index
    %c0_224 = arith.constant 0 : index
    %c0_225 = arith.constant 0 : index
    %495 = vector.load %arg10[%c2_223, %c0_224, %c0_225] : memref<4x32x32xf32, #tpu.memory_space<vmem>>, vector<1x32x32xf32>
    %496 = vector.shape_cast %495 : vector<1x32x32xf32> to vector<32x32xf32>
    %cst_226 = arith.constant dense<0.000000e+00> : vector<40x32xf32>
    %497 = tpu.matmul %480, %496, %cst_226 {dimension_numbers = #tpu.dot_dimension_numbers<[1], [0], [0], [1], [0, 0, 1, 1], [], []>} : vector<40x32xf32>, vector<32x32xf32>, vector<40x32xf32> -> vector<40x32xf32>
    %c2_227 = arith.constant 2 : index
    %c0_228 = arith.constant 0 : index
    %c0_229 = arith.constant 0 : index
    %498 = vector.load %arg11[%c2_227, %c0_228, %c0_229] : memref<4x1x32xf32, #tpu.memory_space<vmem>>, vector<1x1x32xf32>
    %499 = vector.shape_cast %498 : vector<1x1x32xf32> to vector<1x32xf32>
    %500 = vector.broadcast %499 : vector<1x32xf32> to vector<40x32xf32>
    %501 = arith.addf %497, %500 : vector<40x32xf32>
    %c0_i32_230 = arith.constant 0 : i32
    %502 = vector.broadcast %c0_i32_230 : i32 to vector<1x32xi32>
    %503 = arith.cmpi sge, %8, %502 : vector<1x32xi32>
    %c8_i32_231 = arith.constant 8 : i32
    %504 = vector.broadcast %c8_i32_231 : i32 to vector<1x32xi32>
    %505 = arith.cmpi slt, %8, %504 : vector<1x32xi32>
    %506 = arith.andi %503, %505 : vector<1x32xi1>
    %507 = arith.extui %506 : vector<1x32xi1> to vector<1x32xi32>
    %508 = arith.sitofp %507 : vector<1x32xi32> to vector<1x32xf32>
    %509 = vector.broadcast %508 : vector<1x32xf32> to vector<40x32xf32>
    %510 = arith.mulf %487, %509 : vector<40x32xf32>
    %cst_232 = arith.constant dense<0.000000e+00> : vector<40x40xf32>
    %511 = tpu.matmul %510, %494, %cst_232 {dimension_numbers = #tpu.dot_dimension_numbers<[1], [1], [0], [0], [0, 0, 1, 0], [], []>} : vector<40x32xf32>, vector<40x32xf32>, vector<40x40xf32> -> vector<40x40xf32>
    %512 = arith.addf %511, %5 : vector<40x40xf32>
    %cst_233 = arith.constant dense<0xFF800000> : vector<40xf32>
    %513 = vector.multi_reduction <maximumf>, %512, %cst_233 [1] : vector<40x40xf32> to vector<40xf32>
    %514 = vector.shape_cast %513 : vector<40xf32> to vector<40x1xf32>
    %515 = vector.broadcast %514 : vector<40x1xf32> to vector<40x40xf32>
    %516 = arith.subf %512, %515 : vector<40x40xf32>
    %517 = math.exp %516 : vector<40x40xf32>
    %cst_234 = arith.constant dense<0.000000e+00> : vector<40xf32>
    %518 = vector.multi_reduction <add>, %517, %cst_234 [1] : vector<40x40xf32> to vector<40xf32>
    %519 = vector.shape_cast %518 : vector<40xf32> to vector<40x1xf32>
    %520 = tpu.reciprocal %519 {approx = true} : vector<40x1xf32> -> vector<40x1xf32>
    %521 = vector.broadcast %520 : vector<40x1xf32> to vector<40x40xf32>
    %522 = arith.mulf %517, %521 : vector<40x40xf32>
    %523 = vector.broadcast %508 : vector<1x32xf32> to vector<40x32xf32>
    %524 = arith.mulf %501, %523 : vector<40x32xf32>
    %cst_235 = arith.constant dense<0.000000e+00> : vector<40x32xf32>
    %525 = tpu.matmul %522, %524, %cst_235 {dimension_numbers = #tpu.dot_dimension_numbers<[1], [0], [0], [1], [0, 0, 1, 1], [], []>} : vector<40x40xf32>, vector<40x32xf32>, vector<40x32xf32> -> vector<40x32xf32>
    %c8_i32_236 = arith.constant 8 : i32
    %526 = vector.broadcast %c8_i32_236 : i32 to vector<1x32xi32>
    %527 = arith.cmpi sge, %8, %526 : vector<1x32xi32>
    %c16_i32_237 = arith.constant 16 : i32
    %528 = vector.broadcast %c16_i32_237 : i32 to vector<1x32xi32>
    %529 = arith.cmpi slt, %8, %528 : vector<1x32xi32>
    %530 = arith.andi %527, %529 : vector<1x32xi1>
    %531 = arith.extui %530 : vector<1x32xi1> to vector<1x32xi32>
    %532 = arith.sitofp %531 : vector<1x32xi32> to vector<1x32xf32>
    %533 = vector.broadcast %532 : vector<1x32xf32> to vector<40x32xf32>
    %534 = arith.mulf %487, %533 : vector<40x32xf32>
    %cst_238 = arith.constant dense<0.000000e+00> : vector<40x40xf32>
    %535 = tpu.matmul %534, %494, %cst_238 {dimension_numbers = #tpu.dot_dimension_numbers<[1], [1], [0], [0], [0, 0, 1, 0], [], []>} : vector<40x32xf32>, vector<40x32xf32>, vector<40x40xf32> -> vector<40x40xf32>
    %536 = arith.addf %535, %5 : vector<40x40xf32>
    %cst_239 = arith.constant dense<0xFF800000> : vector<40xf32>
    %537 = vector.multi_reduction <maximumf>, %536, %cst_239 [1] : vector<40x40xf32> to vector<40xf32>
    %538 = vector.shape_cast %537 : vector<40xf32> to vector<40x1xf32>
    %539 = vector.broadcast %538 : vector<40x1xf32> to vector<40x40xf32>
    %540 = arith.subf %536, %539 : vector<40x40xf32>
    %541 = math.exp %540 : vector<40x40xf32>
    %cst_240 = arith.constant dense<0.000000e+00> : vector<40xf32>
    %542 = vector.multi_reduction <add>, %541, %cst_240 [1] : vector<40x40xf32> to vector<40xf32>
    %543 = vector.shape_cast %542 : vector<40xf32> to vector<40x1xf32>
    %544 = tpu.reciprocal %543 {approx = true} : vector<40x1xf32> -> vector<40x1xf32>
    %545 = vector.broadcast %544 : vector<40x1xf32> to vector<40x40xf32>
    %546 = arith.mulf %541, %545 : vector<40x40xf32>
    %547 = vector.broadcast %532 : vector<1x32xf32> to vector<40x32xf32>
    %548 = arith.mulf %501, %547 : vector<40x32xf32>
    %cst_241 = arith.constant dense<0.000000e+00> : vector<40x32xf32>
    %549 = tpu.matmul %546, %548, %cst_241 {dimension_numbers = #tpu.dot_dimension_numbers<[1], [0], [0], [1], [0, 0, 1, 1], [], []>} : vector<40x40xf32>, vector<40x32xf32>, vector<40x32xf32> -> vector<40x32xf32>
    %550 = arith.addf %525, %549 : vector<40x32xf32>
    %c16_i32_242 = arith.constant 16 : i32
    %551 = vector.broadcast %c16_i32_242 : i32 to vector<1x32xi32>
    %552 = arith.cmpi sge, %8, %551 : vector<1x32xi32>
    %c24_i32_243 = arith.constant 24 : i32
    %553 = vector.broadcast %c24_i32_243 : i32 to vector<1x32xi32>
    %554 = arith.cmpi slt, %8, %553 : vector<1x32xi32>
    %555 = arith.andi %552, %554 : vector<1x32xi1>
    %556 = arith.extui %555 : vector<1x32xi1> to vector<1x32xi32>
    %557 = arith.sitofp %556 : vector<1x32xi32> to vector<1x32xf32>
    %558 = vector.broadcast %557 : vector<1x32xf32> to vector<40x32xf32>
    %559 = arith.mulf %487, %558 : vector<40x32xf32>
    %cst_244 = arith.constant dense<0.000000e+00> : vector<40x40xf32>
    %560 = tpu.matmul %559, %494, %cst_244 {dimension_numbers = #tpu.dot_dimension_numbers<[1], [1], [0], [0], [0, 0, 1, 0], [], []>} : vector<40x32xf32>, vector<40x32xf32>, vector<40x40xf32> -> vector<40x40xf32>
    %561 = arith.addf %560, %5 : vector<40x40xf32>
    %cst_245 = arith.constant dense<0xFF800000> : vector<40xf32>
    %562 = vector.multi_reduction <maximumf>, %561, %cst_245 [1] : vector<40x40xf32> to vector<40xf32>
    %563 = vector.shape_cast %562 : vector<40xf32> to vector<40x1xf32>
    %564 = vector.broadcast %563 : vector<40x1xf32> to vector<40x40xf32>
    %565 = arith.subf %561, %564 : vector<40x40xf32>
    %566 = math.exp %565 : vector<40x40xf32>
    %cst_246 = arith.constant dense<0.000000e+00> : vector<40xf32>
    %567 = vector.multi_reduction <add>, %566, %cst_246 [1] : vector<40x40xf32> to vector<40xf32>
    %568 = vector.shape_cast %567 : vector<40xf32> to vector<40x1xf32>
    %569 = tpu.reciprocal %568 {approx = true} : vector<40x1xf32> -> vector<40x1xf32>
    %570 = vector.broadcast %569 : vector<40x1xf32> to vector<40x40xf32>
    %571 = arith.mulf %566, %570 : vector<40x40xf32>
    %572 = vector.broadcast %557 : vector<1x32xf32> to vector<40x32xf32>
    %573 = arith.mulf %501, %572 : vector<40x32xf32>
    %cst_247 = arith.constant dense<0.000000e+00> : vector<40x32xf32>
    %574 = tpu.matmul %571, %573, %cst_247 {dimension_numbers = #tpu.dot_dimension_numbers<[1], [0], [0], [1], [0, 0, 1, 1], [], []>} : vector<40x40xf32>, vector<40x32xf32>, vector<40x32xf32> -> vector<40x32xf32>
    %575 = arith.addf %550, %574 : vector<40x32xf32>
    %c24_i32_248 = arith.constant 24 : i32
    %576 = vector.broadcast %c24_i32_248 : i32 to vector<1x32xi32>
    %577 = arith.cmpi sge, %8, %576 : vector<1x32xi32>
    %c32_i32_249 = arith.constant 32 : i32
    %578 = vector.broadcast %c32_i32_249 : i32 to vector<1x32xi32>
    %579 = arith.cmpi slt, %8, %578 : vector<1x32xi32>
    %580 = arith.andi %577, %579 : vector<1x32xi1>
    %581 = arith.extui %580 : vector<1x32xi1> to vector<1x32xi32>
    %582 = arith.sitofp %581 : vector<1x32xi32> to vector<1x32xf32>
    %583 = vector.broadcast %582 : vector<1x32xf32> to vector<40x32xf32>
    %584 = arith.mulf %487, %583 : vector<40x32xf32>
    %cst_250 = arith.constant dense<0.000000e+00> : vector<40x40xf32>
    %585 = tpu.matmul %584, %494, %cst_250 {dimension_numbers = #tpu.dot_dimension_numbers<[1], [1], [0], [0], [0, 0, 1, 0], [], []>} : vector<40x32xf32>, vector<40x32xf32>, vector<40x40xf32> -> vector<40x40xf32>
    %586 = arith.addf %585, %5 : vector<40x40xf32>
    %cst_251 = arith.constant dense<0xFF800000> : vector<40xf32>
    %587 = vector.multi_reduction <maximumf>, %586, %cst_251 [1] : vector<40x40xf32> to vector<40xf32>
    %588 = vector.shape_cast %587 : vector<40xf32> to vector<40x1xf32>
    %589 = vector.broadcast %588 : vector<40x1xf32> to vector<40x40xf32>
    %590 = arith.subf %586, %589 : vector<40x40xf32>
    %591 = math.exp %590 : vector<40x40xf32>
    %cst_252 = arith.constant dense<0.000000e+00> : vector<40xf32>
    %592 = vector.multi_reduction <add>, %591, %cst_252 [1] : vector<40x40xf32> to vector<40xf32>
    %593 = vector.shape_cast %592 : vector<40xf32> to vector<40x1xf32>
    %594 = tpu.reciprocal %593 {approx = true} : vector<40x1xf32> -> vector<40x1xf32>
    %595 = vector.broadcast %594 : vector<40x1xf32> to vector<40x40xf32>
    %596 = arith.mulf %591, %595 : vector<40x40xf32>
    %597 = vector.broadcast %582 : vector<1x32xf32> to vector<40x32xf32>
    %598 = arith.mulf %501, %597 : vector<40x32xf32>
    %cst_253 = arith.constant dense<0.000000e+00> : vector<40x32xf32>
    %599 = tpu.matmul %596, %598, %cst_253 {dimension_numbers = #tpu.dot_dimension_numbers<[1], [0], [0], [1], [0, 0, 1, 1], [], []>} : vector<40x40xf32>, vector<40x32xf32>, vector<40x32xf32> -> vector<40x32xf32>
    %600 = arith.addf %575, %599 : vector<40x32xf32>
    %c2_254 = arith.constant 2 : index
    %c0_255 = arith.constant 0 : index
    %c0_256 = arith.constant 0 : index
    %601 = vector.load %arg12[%c2_254, %c0_255, %c0_256] : memref<4x32x32xf32, #tpu.memory_space<vmem>>, vector<1x32x32xf32>
    %602 = vector.shape_cast %601 : vector<1x32x32xf32> to vector<32x32xf32>
    %cst_257 = arith.constant dense<0.000000e+00> : vector<40x32xf32>
    %603 = tpu.matmul %600, %602, %cst_257 {dimension_numbers = #tpu.dot_dimension_numbers<[1], [0], [0], [1], [0, 0, 1, 1], [], []>} : vector<40x32xf32>, vector<32x32xf32>, vector<40x32xf32> -> vector<40x32xf32>
    %604 = arith.addf %436, %603 : vector<40x32xf32>
    %c2_258 = arith.constant 2 : index
    %c0_259 = arith.constant 0 : index
    %c0_260 = arith.constant 0 : index
    %605 = vector.load %arg13[%c2_258, %c0_259, %c0_260] : memref<4x1x32xf32, #tpu.memory_space<vmem>>, vector<1x1x32xf32>
    %606 = vector.shape_cast %605 : vector<1x1x32xf32> to vector<1x32xf32>
    %607 = vector.broadcast %606 : vector<1x32xf32> to vector<40x32xf32>
    %608 = arith.addf %604, %607 : vector<40x32xf32>
    %c2_261 = arith.constant 2 : index
    %c0_262 = arith.constant 0 : index
    %c0_263 = arith.constant 0 : index
    %609 = vector.load %arg14[%c2_261, %c0_262, %c0_263] : memref<4x1x32xf32, #tpu.memory_space<vmem>>, vector<1x1x32xf32>
    %610 = vector.shape_cast %609 : vector<1x1x32xf32> to vector<1x32xf32>
    %c2_264 = arith.constant 2 : index
    %c0_265 = arith.constant 0 : index
    %c0_266 = arith.constant 0 : index
    %611 = vector.load %arg15[%c2_264, %c0_265, %c0_266] : memref<4x1x32xf32, #tpu.memory_space<vmem>>, vector<1x1x32xf32>
    %612 = vector.shape_cast %611 : vector<1x1x32xf32> to vector<1x32xf32>
    %cst_267 = arith.constant dense<0.000000e+00> : vector<40xf32>
    %613 = vector.multi_reduction <add>, %608, %cst_267 [1] : vector<40x32xf32> to vector<40xf32>
    %614 = vector.shape_cast %613 : vector<40xf32> to vector<40x1xf32>
    %cst_268 = arith.constant 3.200000e+01 : f32
    %615 = vector.broadcast %cst_268 : f32 to vector<40x1xf32>
    %616 = arith.divf %614, %615 : vector<40x1xf32>
    %617 = vector.broadcast %616 : vector<40x1xf32> to vector<40x32xf32>
    %618 = arith.subf %608, %617 : vector<40x32xf32>
    %619 = arith.mulf %618, %618 : vector<40x32xf32>
    %cst_269 = arith.constant dense<0.000000e+00> : vector<40xf32>
    %620 = vector.multi_reduction <add>, %619, %cst_269 [1] : vector<40x32xf32> to vector<40xf32>
    %621 = vector.shape_cast %620 : vector<40xf32> to vector<40x1xf32>
    %cst_270 = arith.constant 3.200000e+01 : f32
    %622 = vector.broadcast %cst_270 : f32 to vector<40x1xf32>
    %623 = arith.divf %621, %622 : vector<40x1xf32>
    %cst_271 = arith.constant 9.99999997E-7 : f32
    %624 = vector.broadcast %cst_271 : f32 to vector<40x1xf32>
    %625 = arith.addf %623, %624 : vector<40x1xf32>
    %626 = math.rsqrt %625 : vector<40x1xf32>
    %627 = vector.broadcast %626 : vector<40x1xf32> to vector<40x32xf32>
    %628 = arith.mulf %618, %627 : vector<40x32xf32>
    %629 = vector.broadcast %610 : vector<1x32xf32> to vector<40x32xf32>
    %630 = arith.mulf %628, %629 : vector<40x32xf32>
    %631 = vector.broadcast %612 : vector<1x32xf32> to vector<40x32xf32>
    %632 = arith.addf %630, %631 : vector<40x32xf32>
    %c2_272 = arith.constant 2 : index
    %c0_273 = arith.constant 0 : index
    %c0_274 = arith.constant 0 : index
    %633 = vector.load %arg16[%c2_272, %c0_273, %c0_274] : memref<4x32x64xf32, #tpu.memory_space<vmem>>, vector<1x32x64xf32>
    %634 = vector.shape_cast %633 : vector<1x32x64xf32> to vector<32x64xf32>
    %cst_275 = arith.constant dense<0.000000e+00> : vector<40x64xf32>
    %635 = tpu.matmul %632, %634, %cst_275 {dimension_numbers = #tpu.dot_dimension_numbers<[1], [0], [0], [1], [0, 0, 1, 1], [], []>} : vector<40x32xf32>, vector<32x64xf32>, vector<40x64xf32> -> vector<40x64xf32>
    %c2_276 = arith.constant 2 : index
    %c0_277 = arith.constant 0 : index
    %c0_278 = arith.constant 0 : index
    %636 = vector.load %arg17[%c2_276, %c0_277, %c0_278] : memref<4x1x64xf32, #tpu.memory_space<vmem>>, vector<1x1x64xf32>
    %637 = vector.shape_cast %636 : vector<1x1x64xf32> to vector<1x64xf32>
    %638 = vector.broadcast %637 : vector<1x64xf32> to vector<40x64xf32>
    %639 = arith.addf %635, %638 : vector<40x64xf32>
    %640 = arith.mulf %639, %639 : vector<40x64xf32>
    %641 = arith.mulf %639, %640 : vector<40x64xf32>
    %cst_279 = arith.constant 4.471500e-02 : f32
    %642 = vector.broadcast %cst_279 : f32 to vector<40x64xf32>
    %643 = arith.mulf %642, %641 : vector<40x64xf32>
    %644 = arith.addf %639, %643 : vector<40x64xf32>
    %cst_280 = arith.constant 0.797884583 : f32
    %645 = vector.broadcast %cst_280 : f32 to vector<40x64xf32>
    %646 = arith.mulf %645, %644 : vector<40x64xf32>
    %647 = math.tanh %646 : vector<40x64xf32>
    %cst_281 = arith.constant 1.000000e+00 : f32
    %648 = vector.broadcast %cst_281 : f32 to vector<40x64xf32>
    %649 = arith.addf %648, %647 : vector<40x64xf32>
    %cst_282 = arith.constant 5.000000e-01 : f32
    %650 = vector.broadcast %cst_282 : f32 to vector<40x64xf32>
    %651 = arith.mulf %650, %649 : vector<40x64xf32>
    %652 = arith.mulf %639, %651 : vector<40x64xf32>
    %c2_283 = arith.constant 2 : index
    %c0_284 = arith.constant 0 : index
    %c0_285 = arith.constant 0 : index
    %653 = vector.load %arg18[%c2_283, %c0_284, %c0_285] : memref<4x64x32xf32, #tpu.memory_space<vmem>>, vector<1x64x32xf32>
    %654 = vector.shape_cast %653 : vector<1x64x32xf32> to vector<64x32xf32>
    %cst_286 = arith.constant dense<0.000000e+00> : vector<40x32xf32>
    %655 = tpu.matmul %652, %654, %cst_286 {dimension_numbers = #tpu.dot_dimension_numbers<[1], [0], [0], [1], [0, 0, 1, 1], [], []>} : vector<40x64xf32>, vector<64x32xf32>, vector<40x32xf32> -> vector<40x32xf32>
    %656 = arith.addf %608, %655 : vector<40x32xf32>
    %c2_287 = arith.constant 2 : index
    %c0_288 = arith.constant 0 : index
    %c0_289 = arith.constant 0 : index
    %657 = vector.load %arg19[%c2_287, %c0_288, %c0_289] : memref<4x1x32xf32, #tpu.memory_space<vmem>>, vector<1x1x32xf32>
    %658 = vector.shape_cast %657 : vector<1x1x32xf32> to vector<1x32xf32>
    %659 = vector.broadcast %658 : vector<1x32xf32> to vector<40x32xf32>
    %660 = arith.addf %656, %659 : vector<40x32xf32>
    %cst_290 = arith.constant dense<0.000000e+00> : vector<40xf32>
    %661 = vector.multi_reduction <add>, %660, %cst_290 [1] : vector<40x32xf32> to vector<40xf32>
    %662 = vector.shape_cast %661 : vector<40xf32> to vector<40x1xf32>
    %cst_291 = arith.constant 3.200000e+01 : f32
    %663 = vector.broadcast %cst_291 : f32 to vector<40x1xf32>
    %664 = arith.divf %662, %663 : vector<40x1xf32>
    %665 = vector.broadcast %664 : vector<40x1xf32> to vector<40x32xf32>
    %666 = arith.subf %660, %665 : vector<40x32xf32>
    %667 = arith.mulf %666, %666 : vector<40x32xf32>
    %cst_292 = arith.constant dense<0.000000e+00> : vector<40xf32>
    %668 = vector.multi_reduction <add>, %667, %cst_292 [1] : vector<40x32xf32> to vector<40xf32>
    %669 = vector.shape_cast %668 : vector<40xf32> to vector<40x1xf32>
    %cst_293 = arith.constant 3.200000e+01 : f32
    %670 = vector.broadcast %cst_293 : f32 to vector<40x1xf32>
    %671 = arith.divf %669, %670 : vector<40x1xf32>
    %cst_294 = arith.constant 9.99999997E-7 : f32
    %672 = vector.broadcast %cst_294 : f32 to vector<40x1xf32>
    %673 = arith.addf %671, %672 : vector<40x1xf32>
    %674 = math.rsqrt %673 : vector<40x1xf32>
    %675 = vector.broadcast %674 : vector<40x1xf32> to vector<40x32xf32>
    %676 = arith.mulf %666, %675 : vector<40x32xf32>
    %677 = vector.broadcast %6 : vector<1x32xf32> to vector<40x32xf32>
    %678 = arith.mulf %676, %677 : vector<40x32xf32>
    %679 = vector.broadcast %7 : vector<1x32xf32> to vector<40x32xf32>
    %680 = arith.addf %678, %679 : vector<40x32xf32>
    %c3 = arith.constant 3 : index
    %c0_295 = arith.constant 0 : index
    %c0_296 = arith.constant 0 : index
    %681 = vector.load %arg4[%c3, %c0_295, %c0_296] : memref<4x1x32xf32, #tpu.memory_space<vmem>>, vector<1x1x32xf32>
    %682 = vector.shape_cast %681 : vector<1x1x32xf32> to vector<1x32xf32>
    %c3_297 = arith.constant 3 : index
    %c0_298 = arith.constant 0 : index
    %c0_299 = arith.constant 0 : index
    %683 = vector.load %arg5[%c3_297, %c0_298, %c0_299] : memref<4x1x32xf32, #tpu.memory_space<vmem>>, vector<1x1x32xf32>
    %684 = vector.shape_cast %683 : vector<1x1x32xf32> to vector<1x32xf32>
    %cst_300 = arith.constant dense<0.000000e+00> : vector<40xf32>
    %685 = vector.multi_reduction <add>, %660, %cst_300 [1] : vector<40x32xf32> to vector<40xf32>
    %686 = vector.shape_cast %685 : vector<40xf32> to vector<40x1xf32>
    %cst_301 = arith.constant 3.200000e+01 : f32
    %687 = vector.broadcast %cst_301 : f32 to vector<40x1xf32>
    %688 = arith.divf %686, %687 : vector<40x1xf32>
    %689 = vector.broadcast %688 : vector<40x1xf32> to vector<40x32xf32>
    %690 = arith.subf %660, %689 : vector<40x32xf32>
    %691 = arith.mulf %690, %690 : vector<40x32xf32>
    %cst_302 = arith.constant dense<0.000000e+00> : vector<40xf32>
    %692 = vector.multi_reduction <add>, %691, %cst_302 [1] : vector<40x32xf32> to vector<40xf32>
    %693 = vector.shape_cast %692 : vector<40xf32> to vector<40x1xf32>
    %cst_303 = arith.constant 3.200000e+01 : f32
    %694 = vector.broadcast %cst_303 : f32 to vector<40x1xf32>
    %695 = arith.divf %693, %694 : vector<40x1xf32>
    %cst_304 = arith.constant 9.99999997E-7 : f32
    %696 = vector.broadcast %cst_304 : f32 to vector<40x1xf32>
    %697 = arith.addf %695, %696 : vector<40x1xf32>
    %698 = math.rsqrt %697 : vector<40x1xf32>
    %699 = vector.broadcast %698 : vector<40x1xf32> to vector<40x32xf32>
    %700 = arith.mulf %690, %699 : vector<40x32xf32>
    %701 = vector.broadcast %682 : vector<1x32xf32> to vector<40x32xf32>
    %702 = arith.mulf %700, %701 : vector<40x32xf32>
    %703 = vector.broadcast %684 : vector<1x32xf32> to vector<40x32xf32>
    %704 = arith.addf %702, %703 : vector<40x32xf32>
    %c3_305 = arith.constant 3 : index
    %c0_306 = arith.constant 0 : index
    %c0_307 = arith.constant 0 : index
    %705 = vector.load %arg6[%c3_305, %c0_306, %c0_307] : memref<4x32x32xf32, #tpu.memory_space<vmem>>, vector<1x32x32xf32>
    %706 = vector.shape_cast %705 : vector<1x32x32xf32> to vector<32x32xf32>
    %cst_308 = arith.constant dense<0.000000e+00> : vector<40x32xf32>
    %707 = tpu.matmul %704, %706, %cst_308 {dimension_numbers = #tpu.dot_dimension_numbers<[1], [0], [0], [1], [0, 0, 1, 1], [], []>} : vector<40x32xf32>, vector<32x32xf32>, vector<40x32xf32> -> vector<40x32xf32>
    %c3_309 = arith.constant 3 : index
    %c0_310 = arith.constant 0 : index
    %c0_311 = arith.constant 0 : index
    %708 = vector.load %arg7[%c3_309, %c0_310, %c0_311] : memref<4x1x32xf32, #tpu.memory_space<vmem>>, vector<1x1x32xf32>
    %709 = vector.shape_cast %708 : vector<1x1x32xf32> to vector<1x32xf32>
    %710 = vector.broadcast %709 : vector<1x32xf32> to vector<40x32xf32>
    %711 = arith.addf %707, %710 : vector<40x32xf32>
    %c3_312 = arith.constant 3 : index
    %c0_313 = arith.constant 0 : index
    %c0_314 = arith.constant 0 : index
    %712 = vector.load %arg8[%c3_312, %c0_313, %c0_314] : memref<4x32x32xf32, #tpu.memory_space<vmem>>, vector<1x32x32xf32>
    %713 = vector.shape_cast %712 : vector<1x32x32xf32> to vector<32x32xf32>
    %cst_315 = arith.constant dense<0.000000e+00> : vector<40x32xf32>
    %714 = tpu.matmul %704, %713, %cst_315 {dimension_numbers = #tpu.dot_dimension_numbers<[1], [0], [0], [1], [0, 0, 1, 1], [], []>} : vector<40x32xf32>, vector<32x32xf32>, vector<40x32xf32> -> vector<40x32xf32>
    %c3_316 = arith.constant 3 : index
    %c0_317 = arith.constant 0 : index
    %c0_318 = arith.constant 0 : index
    %715 = vector.load %arg9[%c3_316, %c0_317, %c0_318] : memref<4x1x32xf32, #tpu.memory_space<vmem>>, vector<1x1x32xf32>
    %716 = vector.shape_cast %715 : vector<1x1x32xf32> to vector<1x32xf32>
    %717 = vector.broadcast %716 : vector<1x32xf32> to vector<40x32xf32>
    %718 = arith.addf %714, %717 : vector<40x32xf32>
    %c3_319 = arith.constant 3 : index
    %c0_320 = arith.constant 0 : index
    %c0_321 = arith.constant 0 : index
    %719 = vector.load %arg10[%c3_319, %c0_320, %c0_321] : memref<4x32x32xf32, #tpu.memory_space<vmem>>, vector<1x32x32xf32>
    %720 = vector.shape_cast %719 : vector<1x32x32xf32> to vector<32x32xf32>
    %cst_322 = arith.constant dense<0.000000e+00> : vector<40x32xf32>
    %721 = tpu.matmul %704, %720, %cst_322 {dimension_numbers = #tpu.dot_dimension_numbers<[1], [0], [0], [1], [0, 0, 1, 1], [], []>} : vector<40x32xf32>, vector<32x32xf32>, vector<40x32xf32> -> vector<40x32xf32>
    %c3_323 = arith.constant 3 : index
    %c0_324 = arith.constant 0 : index
    %c0_325 = arith.constant 0 : index
    %722 = vector.load %arg11[%c3_323, %c0_324, %c0_325] : memref<4x1x32xf32, #tpu.memory_space<vmem>>, vector<1x1x32xf32>
    %723 = vector.shape_cast %722 : vector<1x1x32xf32> to vector<1x32xf32>
    %724 = vector.broadcast %723 : vector<1x32xf32> to vector<40x32xf32>
    %725 = arith.addf %721, %724 : vector<40x32xf32>
    %c0_i32_326 = arith.constant 0 : i32
    %726 = vector.broadcast %c0_i32_326 : i32 to vector<1x32xi32>
    %727 = arith.cmpi sge, %8, %726 : vector<1x32xi32>
    %c8_i32_327 = arith.constant 8 : i32
    %728 = vector.broadcast %c8_i32_327 : i32 to vector<1x32xi32>
    %729 = arith.cmpi slt, %8, %728 : vector<1x32xi32>
    %730 = arith.andi %727, %729 : vector<1x32xi1>
    %731 = arith.extui %730 : vector<1x32xi1> to vector<1x32xi32>
    %732 = arith.sitofp %731 : vector<1x32xi32> to vector<1x32xf32>
    %733 = vector.broadcast %732 : vector<1x32xf32> to vector<40x32xf32>
    %734 = arith.mulf %711, %733 : vector<40x32xf32>
    %cst_328 = arith.constant dense<0.000000e+00> : vector<40x40xf32>
    %735 = tpu.matmul %734, %718, %cst_328 {dimension_numbers = #tpu.dot_dimension_numbers<[1], [1], [0], [0], [0, 0, 1, 0], [], []>} : vector<40x32xf32>, vector<40x32xf32>, vector<40x40xf32> -> vector<40x40xf32>
    %736 = arith.addf %735, %5 : vector<40x40xf32>
    %cst_329 = arith.constant dense<0xFF800000> : vector<40xf32>
    %737 = vector.multi_reduction <maximumf>, %736, %cst_329 [1] : vector<40x40xf32> to vector<40xf32>
    %738 = vector.shape_cast %737 : vector<40xf32> to vector<40x1xf32>
    %739 = vector.broadcast %738 : vector<40x1xf32> to vector<40x40xf32>
    %740 = arith.subf %736, %739 : vector<40x40xf32>
    %741 = math.exp %740 : vector<40x40xf32>
    %cst_330 = arith.constant dense<0.000000e+00> : vector<40xf32>
    %742 = vector.multi_reduction <add>, %741, %cst_330 [1] : vector<40x40xf32> to vector<40xf32>
    %743 = vector.shape_cast %742 : vector<40xf32> to vector<40x1xf32>
    %744 = tpu.reciprocal %743 {approx = true} : vector<40x1xf32> -> vector<40x1xf32>
    %745 = vector.broadcast %744 : vector<40x1xf32> to vector<40x40xf32>
    %746 = arith.mulf %741, %745 : vector<40x40xf32>
    %747 = vector.broadcast %732 : vector<1x32xf32> to vector<40x32xf32>
    %748 = arith.mulf %725, %747 : vector<40x32xf32>
    %cst_331 = arith.constant dense<0.000000e+00> : vector<40x32xf32>
    %749 = tpu.matmul %746, %748, %cst_331 {dimension_numbers = #tpu.dot_dimension_numbers<[1], [0], [0], [1], [0, 0, 1, 1], [], []>} : vector<40x40xf32>, vector<40x32xf32>, vector<40x32xf32> -> vector<40x32xf32>
    %c8_i32_332 = arith.constant 8 : i32
    %750 = vector.broadcast %c8_i32_332 : i32 to vector<1x32xi32>
    %751 = arith.cmpi sge, %8, %750 : vector<1x32xi32>
    %c16_i32_333 = arith.constant 16 : i32
    %752 = vector.broadcast %c16_i32_333 : i32 to vector<1x32xi32>
    %753 = arith.cmpi slt, %8, %752 : vector<1x32xi32>
    %754 = arith.andi %751, %753 : vector<1x32xi1>
    %755 = arith.extui %754 : vector<1x32xi1> to vector<1x32xi32>
    %756 = arith.sitofp %755 : vector<1x32xi32> to vector<1x32xf32>
    %757 = vector.broadcast %756 : vector<1x32xf32> to vector<40x32xf32>
    %758 = arith.mulf %711, %757 : vector<40x32xf32>
    %cst_334 = arith.constant dense<0.000000e+00> : vector<40x40xf32>
    %759 = tpu.matmul %758, %718, %cst_334 {dimension_numbers = #tpu.dot_dimension_numbers<[1], [1], [0], [0], [0, 0, 1, 0], [], []>} : vector<40x32xf32>, vector<40x32xf32>, vector<40x40xf32> -> vector<40x40xf32>
    %760 = arith.addf %759, %5 : vector<40x40xf32>
    %cst_335 = arith.constant dense<0xFF800000> : vector<40xf32>
    %761 = vector.multi_reduction <maximumf>, %760, %cst_335 [1] : vector<40x40xf32> to vector<40xf32>
    %762 = vector.shape_cast %761 : vector<40xf32> to vector<40x1xf32>
    %763 = vector.broadcast %762 : vector<40x1xf32> to vector<40x40xf32>
    %764 = arith.subf %760, %763 : vector<40x40xf32>
    %765 = math.exp %764 : vector<40x40xf32>
    %cst_336 = arith.constant dense<0.000000e+00> : vector<40xf32>
    %766 = vector.multi_reduction <add>, %765, %cst_336 [1] : vector<40x40xf32> to vector<40xf32>
    %767 = vector.shape_cast %766 : vector<40xf32> to vector<40x1xf32>
    %768 = tpu.reciprocal %767 {approx = true} : vector<40x1xf32> -> vector<40x1xf32>
    %769 = vector.broadcast %768 : vector<40x1xf32> to vector<40x40xf32>
    %770 = arith.mulf %765, %769 : vector<40x40xf32>
    %771 = vector.broadcast %756 : vector<1x32xf32> to vector<40x32xf32>
    %772 = arith.mulf %725, %771 : vector<40x32xf32>
    %cst_337 = arith.constant dense<0.000000e+00> : vector<40x32xf32>
    %773 = tpu.matmul %770, %772, %cst_337 {dimension_numbers = #tpu.dot_dimension_numbers<[1], [0], [0], [1], [0, 0, 1, 1], [], []>} : vector<40x40xf32>, vector<40x32xf32>, vector<40x32xf32> -> vector<40x32xf32>
    %774 = arith.addf %749, %773 : vector<40x32xf32>
    %c16_i32_338 = arith.constant 16 : i32
    %775 = vector.broadcast %c16_i32_338 : i32 to vector<1x32xi32>
    %776 = arith.cmpi sge, %8, %775 : vector<1x32xi32>
    %c24_i32_339 = arith.constant 24 : i32
    %777 = vector.broadcast %c24_i32_339 : i32 to vector<1x32xi32>
    %778 = arith.cmpi slt, %8, %777 : vector<1x32xi32>
    %779 = arith.andi %776, %778 : vector<1x32xi1>
    %780 = arith.extui %779 : vector<1x32xi1> to vector<1x32xi32>
    %781 = arith.sitofp %780 : vector<1x32xi32> to vector<1x32xf32>
    %782 = vector.broadcast %781 : vector<1x32xf32> to vector<40x32xf32>
    %783 = arith.mulf %711, %782 : vector<40x32xf32>
    %cst_340 = arith.constant dense<0.000000e+00> : vector<40x40xf32>
    %784 = tpu.matmul %783, %718, %cst_340 {dimension_numbers = #tpu.dot_dimension_numbers<[1], [1], [0], [0], [0, 0, 1, 0], [], []>} : vector<40x32xf32>, vector<40x32xf32>, vector<40x40xf32> -> vector<40x40xf32>
    %785 = arith.addf %784, %5 : vector<40x40xf32>
    %cst_341 = arith.constant dense<0xFF800000> : vector<40xf32>
    %786 = vector.multi_reduction <maximumf>, %785, %cst_341 [1] : vector<40x40xf32> to vector<40xf32>
    %787 = vector.shape_cast %786 : vector<40xf32> to vector<40x1xf32>
    %788 = vector.broadcast %787 : vector<40x1xf32> to vector<40x40xf32>
    %789 = arith.subf %785, %788 : vector<40x40xf32>
    %790 = math.exp %789 : vector<40x40xf32>
    %cst_342 = arith.constant dense<0.000000e+00> : vector<40xf32>
    %791 = vector.multi_reduction <add>, %790, %cst_342 [1] : vector<40x40xf32> to vector<40xf32>
    %792 = vector.shape_cast %791 : vector<40xf32> to vector<40x1xf32>
    %793 = tpu.reciprocal %792 {approx = true} : vector<40x1xf32> -> vector<40x1xf32>
    %794 = vector.broadcast %793 : vector<40x1xf32> to vector<40x40xf32>
    %795 = arith.mulf %790, %794 : vector<40x40xf32>
    %796 = vector.broadcast %781 : vector<1x32xf32> to vector<40x32xf32>
    %797 = arith.mulf %725, %796 : vector<40x32xf32>
    %cst_343 = arith.constant dense<0.000000e+00> : vector<40x32xf32>
    %798 = tpu.matmul %795, %797, %cst_343 {dimension_numbers = #tpu.dot_dimension_numbers<[1], [0], [0], [1], [0, 0, 1, 1], [], []>} : vector<40x40xf32>, vector<40x32xf32>, vector<40x32xf32> -> vector<40x32xf32>
    %799 = arith.addf %774, %798 : vector<40x32xf32>
    %c24_i32_344 = arith.constant 24 : i32
    %800 = vector.broadcast %c24_i32_344 : i32 to vector<1x32xi32>
    %801 = arith.cmpi sge, %8, %800 : vector<1x32xi32>
    %c32_i32_345 = arith.constant 32 : i32
    %802 = vector.broadcast %c32_i32_345 : i32 to vector<1x32xi32>
    %803 = arith.cmpi slt, %8, %802 : vector<1x32xi32>
    %804 = arith.andi %801, %803 : vector<1x32xi1>
    %805 = arith.extui %804 : vector<1x32xi1> to vector<1x32xi32>
    %806 = arith.sitofp %805 : vector<1x32xi32> to vector<1x32xf32>
    %807 = vector.broadcast %806 : vector<1x32xf32> to vector<40x32xf32>
    %808 = arith.mulf %711, %807 : vector<40x32xf32>
    %cst_346 = arith.constant dense<0.000000e+00> : vector<40x40xf32>
    %809 = tpu.matmul %808, %718, %cst_346 {dimension_numbers = #tpu.dot_dimension_numbers<[1], [1], [0], [0], [0, 0, 1, 0], [], []>} : vector<40x32xf32>, vector<40x32xf32>, vector<40x40xf32> -> vector<40x40xf32>
    %810 = arith.addf %809, %5 : vector<40x40xf32>
    %cst_347 = arith.constant dense<0xFF800000> : vector<40xf32>
    %811 = vector.multi_reduction <maximumf>, %810, %cst_347 [1] : vector<40x40xf32> to vector<40xf32>
    %812 = vector.shape_cast %811 : vector<40xf32> to vector<40x1xf32>
    %813 = vector.broadcast %812 : vector<40x1xf32> to vector<40x40xf32>
    %814 = arith.subf %810, %813 : vector<40x40xf32>
    %815 = math.exp %814 : vector<40x40xf32>
    %cst_348 = arith.constant dense<0.000000e+00> : vector<40xf32>
    %816 = vector.multi_reduction <add>, %815, %cst_348 [1] : vector<40x40xf32> to vector<40xf32>
    %817 = vector.shape_cast %816 : vector<40xf32> to vector<40x1xf32>
    %818 = tpu.reciprocal %817 {approx = true} : vector<40x1xf32> -> vector<40x1xf32>
    %819 = vector.broadcast %818 : vector<40x1xf32> to vector<40x40xf32>
    %820 = arith.mulf %815, %819 : vector<40x40xf32>
    %821 = vector.broadcast %806 : vector<1x32xf32> to vector<40x32xf32>
    %822 = arith.mulf %725, %821 : vector<40x32xf32>
    %cst_349 = arith.constant dense<0.000000e+00> : vector<40x32xf32>
    %823 = tpu.matmul %820, %822, %cst_349 {dimension_numbers = #tpu.dot_dimension_numbers<[1], [0], [0], [1], [0, 0, 1, 1], [], []>} : vector<40x40xf32>, vector<40x32xf32>, vector<40x32xf32> -> vector<40x32xf32>
    %824 = arith.addf %799, %823 : vector<40x32xf32>
    %c3_350 = arith.constant 3 : index
    %c0_351 = arith.constant 0 : index
    %c0_352 = arith.constant 0 : index
    %825 = vector.load %arg12[%c3_350, %c0_351, %c0_352] : memref<4x32x32xf32, #tpu.memory_space<vmem>>, vector<1x32x32xf32>
    %826 = vector.shape_cast %825 : vector<1x32x32xf32> to vector<32x32xf32>
    %cst_353 = arith.constant dense<0.000000e+00> : vector<40x32xf32>
    %827 = tpu.matmul %824, %826, %cst_353 {dimension_numbers = #tpu.dot_dimension_numbers<[1], [0], [0], [1], [0, 0, 1, 1], [], []>} : vector<40x32xf32>, vector<32x32xf32>, vector<40x32xf32> -> vector<40x32xf32>
    %828 = arith.addf %660, %827 : vector<40x32xf32>
    %c3_354 = arith.constant 3 : index
    %c0_355 = arith.constant 0 : index
    %c0_356 = arith.constant 0 : index
    %829 = vector.load %arg13[%c3_354, %c0_355, %c0_356] : memref<4x1x32xf32, #tpu.memory_space<vmem>>, vector<1x1x32xf32>
    %830 = vector.shape_cast %829 : vector<1x1x32xf32> to vector<1x32xf32>
    %831 = vector.broadcast %830 : vector<1x32xf32> to vector<40x32xf32>
    %832 = arith.addf %828, %831 : vector<40x32xf32>
    %c3_357 = arith.constant 3 : index
    %c0_358 = arith.constant 0 : index
    %c0_359 = arith.constant 0 : index
    %833 = vector.load %arg14[%c3_357, %c0_358, %c0_359] : memref<4x1x32xf32, #tpu.memory_space<vmem>>, vector<1x1x32xf32>
    %834 = vector.shape_cast %833 : vector<1x1x32xf32> to vector<1x32xf32>
    %c3_360 = arith.constant 3 : index
    %c0_361 = arith.constant 0 : index
    %c0_362 = arith.constant 0 : index
    %835 = vector.load %arg15[%c3_360, %c0_361, %c0_362] : memref<4x1x32xf32, #tpu.memory_space<vmem>>, vector<1x1x32xf32>
    %836 = vector.shape_cast %835 : vector<1x1x32xf32> to vector<1x32xf32>
    %cst_363 = arith.constant dense<0.000000e+00> : vector<40xf32>
    %837 = vector.multi_reduction <add>, %832, %cst_363 [1] : vector<40x32xf32> to vector<40xf32>
    %838 = vector.shape_cast %837 : vector<40xf32> to vector<40x1xf32>
    %cst_364 = arith.constant 3.200000e+01 : f32
    %839 = vector.broadcast %cst_364 : f32 to vector<40x1xf32>
    %840 = arith.divf %838, %839 : vector<40x1xf32>
    %841 = vector.broadcast %840 : vector<40x1xf32> to vector<40x32xf32>
    %842 = arith.subf %832, %841 : vector<40x32xf32>
    %843 = arith.mulf %842, %842 : vector<40x32xf32>
    %cst_365 = arith.constant dense<0.000000e+00> : vector<40xf32>
    %844 = vector.multi_reduction <add>, %843, %cst_365 [1] : vector<40x32xf32> to vector<40xf32>
    %845 = vector.shape_cast %844 : vector<40xf32> to vector<40x1xf32>
    %cst_366 = arith.constant 3.200000e+01 : f32
    %846 = vector.broadcast %cst_366 : f32 to vector<40x1xf32>
    %847 = arith.divf %845, %846 : vector<40x1xf32>
    %cst_367 = arith.constant 9.99999997E-7 : f32
    %848 = vector.broadcast %cst_367 : f32 to vector<40x1xf32>
    %849 = arith.addf %847, %848 : vector<40x1xf32>
    %850 = math.rsqrt %849 : vector<40x1xf32>
    %851 = vector.broadcast %850 : vector<40x1xf32> to vector<40x32xf32>
    %852 = arith.mulf %842, %851 : vector<40x32xf32>
    %853 = vector.broadcast %834 : vector<1x32xf32> to vector<40x32xf32>
    %854 = arith.mulf %852, %853 : vector<40x32xf32>
    %855 = vector.broadcast %836 : vector<1x32xf32> to vector<40x32xf32>
    %856 = arith.addf %854, %855 : vector<40x32xf32>
    %c3_368 = arith.constant 3 : index
    %c0_369 = arith.constant 0 : index
    %c0_370 = arith.constant 0 : index
    %857 = vector.load %arg16[%c3_368, %c0_369, %c0_370] : memref<4x32x64xf32, #tpu.memory_space<vmem>>, vector<1x32x64xf32>
    %858 = vector.shape_cast %857 : vector<1x32x64xf32> to vector<32x64xf32>
    %cst_371 = arith.constant dense<0.000000e+00> : vector<40x64xf32>
    %859 = tpu.matmul %856, %858, %cst_371 {dimension_numbers = #tpu.dot_dimension_numbers<[1], [0], [0], [1], [0, 0, 1, 1], [], []>} : vector<40x32xf32>, vector<32x64xf32>, vector<40x64xf32> -> vector<40x64xf32>
    %c3_372 = arith.constant 3 : index
    %c0_373 = arith.constant 0 : index
    %c0_374 = arith.constant 0 : index
    %860 = vector.load %arg17[%c3_372, %c0_373, %c0_374] : memref<4x1x64xf32, #tpu.memory_space<vmem>>, vector<1x1x64xf32>
    %861 = vector.shape_cast %860 : vector<1x1x64xf32> to vector<1x64xf32>
    %862 = vector.broadcast %861 : vector<1x64xf32> to vector<40x64xf32>
    %863 = arith.addf %859, %862 : vector<40x64xf32>
    %864 = arith.mulf %863, %863 : vector<40x64xf32>
    %865 = arith.mulf %863, %864 : vector<40x64xf32>
    %cst_375 = arith.constant 4.471500e-02 : f32
    %866 = vector.broadcast %cst_375 : f32 to vector<40x64xf32>
    %867 = arith.mulf %866, %865 : vector<40x64xf32>
    %868 = arith.addf %863, %867 : vector<40x64xf32>
    %cst_376 = arith.constant 0.797884583 : f32
    %869 = vector.broadcast %cst_376 : f32 to vector<40x64xf32>
    %870 = arith.mulf %869, %868 : vector<40x64xf32>
    %871 = math.tanh %870 : vector<40x64xf32>
    %cst_377 = arith.constant 1.000000e+00 : f32
    %872 = vector.broadcast %cst_377 : f32 to vector<40x64xf32>
    %873 = arith.addf %872, %871 : vector<40x64xf32>
    %cst_378 = arith.constant 5.000000e-01 : f32
    %874 = vector.broadcast %cst_378 : f32 to vector<40x64xf32>
    %875 = arith.mulf %874, %873 : vector<40x64xf32>
    %876 = arith.mulf %863, %875 : vector<40x64xf32>
    %c3_379 = arith.constant 3 : index
    %c0_380 = arith.constant 0 : index
    %c0_381 = arith.constant 0 : index
    %877 = vector.load %arg18[%c3_379, %c0_380, %c0_381] : memref<4x64x32xf32, #tpu.memory_space<vmem>>, vector<1x64x32xf32>
    %878 = vector.shape_cast %877 : vector<1x64x32xf32> to vector<64x32xf32>
    %cst_382 = arith.constant dense<0.000000e+00> : vector<40x32xf32>
    %879 = tpu.matmul %876, %878, %cst_382 {dimension_numbers = #tpu.dot_dimension_numbers<[1], [0], [0], [1], [0, 0, 1, 1], [], []>} : vector<40x64xf32>, vector<64x32xf32>, vector<40x32xf32> -> vector<40x32xf32>
    %880 = arith.addf %832, %879 : vector<40x32xf32>
    %c3_383 = arith.constant 3 : index
    %c0_384 = arith.constant 0 : index
    %c0_385 = arith.constant 0 : index
    %881 = vector.load %arg19[%c3_383, %c0_384, %c0_385] : memref<4x1x32xf32, #tpu.memory_space<vmem>>, vector<1x1x32xf32>
    %882 = vector.shape_cast %881 : vector<1x1x32xf32> to vector<1x32xf32>
    %883 = vector.broadcast %882 : vector<1x32xf32> to vector<40x32xf32>
    %884 = arith.addf %880, %883 : vector<40x32xf32>
    %cst_386 = arith.constant dense<0.000000e+00> : vector<40xf32>
    %885 = vector.multi_reduction <add>, %884, %cst_386 [1] : vector<40x32xf32> to vector<40xf32>
    %886 = vector.shape_cast %885 : vector<40xf32> to vector<40x1xf32>
    %cst_387 = arith.constant 3.200000e+01 : f32
    %887 = vector.broadcast %cst_387 : f32 to vector<40x1xf32>
    %888 = arith.divf %886, %887 : vector<40x1xf32>
    %889 = vector.broadcast %888 : vector<40x1xf32> to vector<40x32xf32>
    %890 = arith.subf %884, %889 : vector<40x32xf32>
    %891 = arith.mulf %890, %890 : vector<40x32xf32>
    %cst_388 = arith.constant dense<0.000000e+00> : vector<40xf32>
    %892 = vector.multi_reduction <add>, %891, %cst_388 [1] : vector<40x32xf32> to vector<40xf32>
    %893 = vector.shape_cast %892 : vector<40xf32> to vector<40x1xf32>
    %cst_389 = arith.constant 3.200000e+01 : f32
    %894 = vector.broadcast %cst_389 : f32 to vector<40x1xf32>
    %895 = arith.divf %893, %894 : vector<40x1xf32>
    %cst_390 = arith.constant 9.99999997E-7 : f32
    %896 = vector.broadcast %cst_390 : f32 to vector<40x1xf32>
    %897 = arith.addf %895, %896 : vector<40x1xf32>
    %898 = math.rsqrt %897 : vector<40x1xf32>
    %899 = vector.broadcast %898 : vector<40x1xf32> to vector<40x32xf32>
    %900 = arith.mulf %890, %899 : vector<40x32xf32>
    %901 = vector.broadcast %6 : vector<1x32xf32> to vector<40x32xf32>
    %902 = arith.mulf %900, %901 : vector<40x32xf32>
    %903 = vector.broadcast %7 : vector<1x32xf32> to vector<40x32xf32>
    %904 = arith.addf %902, %903 : vector<40x32xf32>
    %c0_391 = arith.constant 0 : index
    %c0_392 = arith.constant 0 : index
    %905 = vector.load %arg22[%c0_391, %c0_392] : memref<32x512xf32, #tpu.memory_space<vmem>>, vector<32x512xf32>
    %cst_393 = arith.constant dense<0.000000e+00> : vector<40x512xf32>
    %906 = tpu.matmul %232, %905, %cst_393 {dimension_numbers = #tpu.dot_dimension_numbers<[1], [0], [0], [1], [0, 0, 1, 1], [], []>} : vector<40x32xf32>, vector<32x512xf32>, vector<40x512xf32> -> vector<40x512xf32>
    %c0_394 = arith.constant 0 : index
    %c0_395 = arith.constant 0 : index
    %907 = vector.load %arg23[%c0_394, %c0_395] : memref<1x512xf32, #tpu.memory_space<vmem>>, vector<1x512xf32>
    %908 = vector.broadcast %907 : vector<1x512xf32> to vector<40x512xf32>
    %909 = arith.addf %906, %908 : vector<40x512xf32>
    %c0_396 = arith.constant 0 : index
    %c0_397 = arith.constant 0 : index
    %910 = vector.load %arg29[%c0_396, %c0_397] : memref<40x512xf32, #tpu.memory_space<vmem>>, vector<40x512xf32>
    tpu.vector_store %arg29[%c0_396, %c0_397], %909 {strides = array<i32>} : memref<40x512xf32, #tpu.memory_space<vmem>>, vector<40x512xf32>,
    %c0_398 = arith.constant 0 : index
    %c0_399 = arith.constant 0 : index
    %911 = vector.load %arg24[%c0_398, %c0_399] : memref<32x128xf32, #tpu.memory_space<vmem>>, vector<32x128xf32>
    %cst_400 = arith.constant dense<0.000000e+00> : vector<40x128xf32>
    %912 = tpu.matmul %456, %911, %cst_400 {dimension_numbers = #tpu.dot_dimension_numbers<[1], [0], [0], [1], [0, 0, 1, 1], [], []>} : vector<40x32xf32>, vector<32x128xf32>, vector<40x128xf32> -> vector<40x128xf32>
    %c0_401 = arith.constant 0 : index
    %c0_402 = arith.constant 0 : index
    %913 = vector.load %arg25[%c0_401, %c0_402] : memref<1x128xf32, #tpu.memory_space<vmem>>, vector<1x128xf32>
    %914 = vector.broadcast %913 : vector<1x128xf32> to vector<40x128xf32>
    %915 = arith.addf %912, %914 : vector<40x128xf32>
    %c0_403 = arith.constant 0 : index
    %c0_404 = arith.constant 0 : index
    %916 = vector.load %arg30[%c0_403, %c0_404] : memref<40x128xf32, #tpu.memory_space<vmem>>, vector<40x128xf32>
    tpu.vector_store %arg30[%c0_403, %c0_404], %915 {strides = array<i32>} : memref<40x128xf32, #tpu.memory_space<vmem>>, vector<40x128xf32>,
    %c0_405 = arith.constant 0 : index
    %c0_406 = arith.constant 0 : index
    %917 = vector.load %arg31[%c0_405, %c0_406] : memref<40x32xf32, #tpu.memory_space<vmem>>, vector<40x32xf32>
    tpu.vector_store %arg31[%c0_405, %c0_406], %680 {strides = array<i32>} : memref<40x32xf32, #tpu.memory_space<vmem>>, vector<40x32xf32>,
    %c0_407 = arith.constant 0 : index
    %c0_408 = arith.constant 0 : index
    %c0_409 = arith.constant 0 : index
    %918 = vector.load %arg26[%c0_407, %c0_408, %c0_409] : memref<4x8x40xf32, #tpu.memory_space<vmem>>, vector<1x8x40xf32>
    %919 = vector.shape_cast %918 : vector<1x8x40xf32> to vector<8x40xf32>
    %cst_410 = arith.constant dense<0.000000e+00> : vector<8x32xf32>
    %920 = tpu.matmul %919, %904, %cst_410 {dimension_numbers = #tpu.dot_dimension_numbers<[1], [0], [0], [1], [0, 0, 1, 1], [], []>} : vector<8x40xf32>, vector<40x32xf32>, vector<8x32xf32> -> vector<8x32xf32>
    %c0_411 = arith.constant 0 : index
    %c0_412 = arith.constant 0 : index
    %c0_413 = arith.constant 0 : index
    %921 = vector.load %arg27[%c0_411, %c0_412, %c0_413] : memref<4x32x32xf32, #tpu.memory_space<vmem>>, vector<1x32x32xf32>
    %922 = vector.shape_cast %921 : vector<1x32x32xf32> to vector<32x32xf32>
    %cst_414 = arith.constant dense<0.000000e+00> : vector<8x32xf32>
    %923 = tpu.matmul %920, %922, %cst_414 {dimension_numbers = #tpu.dot_dimension_numbers<[1], [0], [0], [1], [0, 0, 1, 1], [], []>} : vector<8x32xf32>, vector<32x32xf32>, vector<8x32xf32> -> vector<8x32xf32>
    %c1_415 = arith.constant 1 : index
    %c0_416 = arith.constant 0 : index
    %c0_417 = arith.constant 0 : index
    %924 = vector.load %arg26[%c1_415, %c0_416, %c0_417] : memref<4x8x40xf32, #tpu.memory_space<vmem>>, vector<1x8x40xf32>
    %925 = vector.shape_cast %924 : vector<1x8x40xf32> to vector<8x40xf32>
    %cst_418 = arith.constant dense<0.000000e+00> : vector<8x32xf32>
    %926 = tpu.matmul %925, %904, %cst_418 {dimension_numbers = #tpu.dot_dimension_numbers<[1], [0], [0], [1], [0, 0, 1, 1], [], []>} : vector<8x40xf32>, vector<40x32xf32>, vector<8x32xf32> -> vector<8x32xf32>
    %c1_419 = arith.constant 1 : index
    %c0_420 = arith.constant 0 : index
    %c0_421 = arith.constant 0 : index
    %927 = vector.load %arg27[%c1_419, %c0_420, %c0_421] : memref<4x32x32xf32, #tpu.memory_space<vmem>>, vector<1x32x32xf32>
    %928 = vector.shape_cast %927 : vector<1x32x32xf32> to vector<32x32xf32>
    %cst_422 = arith.constant dense<0.000000e+00> : vector<8x32xf32>
    %929 = tpu.matmul %926, %928, %cst_422 {dimension_numbers = #tpu.dot_dimension_numbers<[1], [0], [0], [1], [0, 0, 1, 1], [], []>} : vector<8x32xf32>, vector<32x32xf32>, vector<8x32xf32> -> vector<8x32xf32>
    %930 = arith.addf %923, %929 : vector<8x32xf32>
    %c2_423 = arith.constant 2 : index
    %c0_424 = arith.constant 0 : index
    %c0_425 = arith.constant 0 : index
    %931 = vector.load %arg26[%c2_423, %c0_424, %c0_425] : memref<4x8x40xf32, #tpu.memory_space<vmem>>, vector<1x8x40xf32>
    %932 = vector.shape_cast %931 : vector<1x8x40xf32> to vector<8x40xf32>
    %cst_426 = arith.constant dense<0.000000e+00> : vector<8x32xf32>
    %933 = tpu.matmul %932, %904, %cst_426 {dimension_numbers = #tpu.dot_dimension_numbers<[1], [0], [0], [1], [0, 0, 1, 1], [], []>} : vector<8x40xf32>, vector<40x32xf32>, vector<8x32xf32> -> vector<8x32xf32>
    %c2_427 = arith.constant 2 : index
    %c0_428 = arith.constant 0 : index
    %c0_429 = arith.constant 0 : index
    %934 = vector.load %arg27[%c2_427, %c0_428, %c0_429] : memref<4x32x32xf32, #tpu.memory_space<vmem>>, vector<1x32x32xf32>
    %935 = vector.shape_cast %934 : vector<1x32x32xf32> to vector<32x32xf32>
    %cst_430 = arith.constant dense<0.000000e+00> : vector<8x32xf32>
    %936 = tpu.matmul %933, %935, %cst_430 {dimension_numbers = #tpu.dot_dimension_numbers<[1], [0], [0], [1], [0, 0, 1, 1], [], []>} : vector<8x32xf32>, vector<32x32xf32>, vector<8x32xf32> -> vector<8x32xf32>
    %937 = arith.addf %930, %936 : vector<8x32xf32>
    %c3_431 = arith.constant 3 : index
    %c0_432 = arith.constant 0 : index
    %c0_433 = arith.constant 0 : index
    %938 = vector.load %arg26[%c3_431, %c0_432, %c0_433] : memref<4x8x40xf32, #tpu.memory_space<vmem>>, vector<1x8x40xf32>
    %939 = vector.shape_cast %938 : vector<1x8x40xf32> to vector<8x40xf32>
    %cst_434 = arith.constant dense<0.000000e+00> : vector<8x32xf32>
    %940 = tpu.matmul %939, %904, %cst_434 {dimension_numbers = #tpu.dot_dimension_numbers<[1], [0], [0], [1], [0, 0, 1, 1], [], []>} : vector<8x40xf32>, vector<40x32xf32>, vector<8x32xf32> -> vector<8x32xf32>
    %c3_435 = arith.constant 3 : index
    %c0_436 = arith.constant 0 : index
    %c0_437 = arith.constant 0 : index
    %941 = vector.load %arg27[%c3_435, %c0_436, %c0_437] : memref<4x32x32xf32, #tpu.memory_space<vmem>>, vector<1x32x32xf32>
    %942 = vector.shape_cast %941 : vector<1x32x32xf32> to vector<32x32xf32>
    %cst_438 = arith.constant dense<0.000000e+00> : vector<8x32xf32>
    %943 = tpu.matmul %940, %942, %cst_438 {dimension_numbers = #tpu.dot_dimension_numbers<[1], [0], [0], [1], [0, 0, 1, 1], [], []>} : vector<8x32xf32>, vector<32x32xf32>, vector<8x32xf32> -> vector<8x32xf32>
    %944 = arith.addf %937, %943 : vector<8x32xf32>
    %c0_439 = arith.constant 0 : index
    %c0_440 = arith.constant 0 : index
    %945 = vector.load %arg28[%c0_439, %c0_440] : memref<1x32xf32, #tpu.memory_space<vmem>>, vector<1x32xf32>
    %946 = vector.broadcast %945 : vector<1x32xf32> to vector<8x32xf32>
    %947 = arith.addf %944, %946 : vector<8x32xf32>
    %c0_441 = arith.constant 0 : index
    %c0_442 = arith.constant 0 : index
    %948 = vector.load %arg32[%c0_441, %c0_442] : memref<8x32xf32, #tpu.memory_space<vmem>>, vector<8x32xf32>
    tpu.vector_store %arg32[%c0_441, %c0_442], %947 {strides = array<i32>} : memref<8x32xf32, #tpu.memory_space<vmem>>, vector<8x32xf32>,
    return
  }
}

</mosaic_0001>

<llo_original>
// kernel: selfsup_vit_forward.1
$region0: #{selfsup_vit_forward.1}
  #allocation0 [shape = 'u32[]', space=smem, size = 0x4, offset = 0x4, fixed_abs, tag = 'smem constant byte address 0x4 - core index']
  #allocation1 [shape = 'u32[144,128]{1,0:T(1,128)}', space=vmem, size = 0x12000, scoped, tag = 'internal scratch']
  %s0 = inlined_call_operand.smem [shape: u32[33], index: -1, kind: input, shape index: {}]
  %s1 = sld [smem:[%s0]]
  %s2 = scalar_lea.smem %s0, 1
  %s3 = sld [smem:[%s2]]
  %s4 = scalar_lea.smem %s0, 2
  %s5 = sld [smem:[%s4]]
  %s6 = scalar_lea.smem %s0, 3
  %s7 = sld [smem:[%s6]]
  %s8 = scalar_lea.smem %s0, 4
  %s9 = sld [smem:[%s8]]
  %s10 = scalar_lea.smem %s0, 5
  %s11 = sld [smem:[%s10]]
  %s12 = scalar_lea.smem %s0, 6
  %s13 = sld [smem:[%s12]]
  %s14 = scalar_lea.smem %s0, 7
  %s15 = sld [smem:[%s14]]
  %s16 = scalar_lea.smem %s0, 8
  %s17 = sld [smem:[%s16]]
  %s18 = scalar_lea.smem %s0, 9
  %s19 = sld [smem:[%s18]]
  %s20 = scalar_lea.smem %s0, 10
  %s21 = sld [smem:[%s20]]
  %s22 = scalar_lea.smem %s0, 11
  %s23 = sld [smem:[%s22]]
  %s24 = scalar_lea.smem %s0, 12
  %s25 = sld [smem:[%s24]]
  %s26 = scalar_lea.smem %s0, 13
  %s27 = sld [smem:[%s26]]
  %s28 = scalar_lea.smem %s0, 14
  %s29 = sld [smem:[%s28]]
  %s30 = scalar_lea.smem %s0, 15
  %s31 = sld [smem:[%s30]]
  %s32 = scalar_lea.smem %s0, 16
  %s33 = sld [smem:[%s32]]
  %s34 = scalar_lea.smem %s0, 17
  %s35 = sld [smem:[%s34]]
  %s36 = scalar_lea.smem %s0, 18
  %s37 = sld [smem:[%s36]]
  %s38 = scalar_lea.smem %s0, 19
  %s39 = sld [smem:[%s38]]
  %s40 = scalar_lea.smem %s0, 20
  %s41 = sld [smem:[%s40]]
  %s42 = scalar_lea.smem %s0, 21
  %s43 = sld [smem:[%s42]]
  %s44 = scalar_lea.smem %s0, 22
  %s45 = sld [smem:[%s44]]
  %s46 = scalar_lea.smem %s0, 23
  %s47 = sld [smem:[%s46]]
  %s48 = scalar_lea.smem %s0, 24
  %s49 = sld [smem:[%s48]]
  %s50 = scalar_lea.smem %s0, 25
  %s51 = sld [smem:[%s50]]
  %s52 = scalar_lea.smem %s0, 26
  %s53 = sld [smem:[%s52]]
  %s54 = scalar_lea.smem %s0, 27
  %s55 = sld [smem:[%s54]]
  %s56 = scalar_lea.smem %s0, 28
  %s57 = sld [smem:[%s56]]
  %s58 = scalar_lea.smem %s0, 29
  %s59 = sld [smem:[%s58]]
  %s60 = scalar_lea.smem %s0, 30
  %s61 = sld [smem:[%s60]]
  %s62 = scalar_lea.smem %s0, 31
  %s63 = sld [smem:[%s62]]
  %s64 = scalar_lea.smem %s0, 32
  %s65 = sld [smem:[%s64]]
  %66 = xla_tuple %s59, %s61, %s63, %s65
  %s67 = sld [smem:[#allocation0]]
  $region150: #{selfsup_vit_forward.1} parent=0
    _
  %s69 = ssub.s32 1, %s67
  %s70 = scalar_select 0, %s69, %s67
  $region1: #{selfsup_vit_forward.1} parent=0
    #allocation2 [shape = 'u8[4096]{0}', space=vmem, size = 0x1000, scoped, tag = 'output window, operand 3, single buffered']
    #allocation3 [shape = 's32[1]{0}', space=sflag, size = 0x4, scoped, tag = 'scoped memory for selfsup_vit_forward.1']
    %71 = vsyncpa [#allocation3], 0
    // Predicated region
    $region2: #{selfsup_vit_forward.1} parent=1 // pred_check
      _
    $region3: #{selfsup_vit_forward.1} parent=1 // pred_check_branch
      %73 = sbr.rel (0) target = $region5
    $region4: #{selfsup_vit_forward.1} parent=1 // pred_region
      _
    $region5: #{selfsup_vit_forward.1} parent=1 // pred_fallthru
      _
    // Predicated region
    $region6: #{selfsup_vit_forward.1} parent=1 // pred_check
      _
    $region7: #{selfsup_vit_forward.1} parent=1 // pred_check_branch
      %75 = sbr.rel (0) target = $region9
    $region8: #{selfsup_vit_forward.1} parent=1 // pred_region
      _
    $region9: #{selfsup_vit_forward.1} parent=1 // pred_fallthru
      _
    // Predicated region
    $region10: #{selfsup_vit_forward.1} parent=1 // pred_check
      _
    $region11: #{selfsup_vit_forward.1} parent=1 // pred_check_branch
      %77 = sbr.rel (0) target = $region13
    $region12: #{selfsup_vit_forward.1} parent=1 // pred_region
      _
    $region13: #{selfsup_vit_forward.1} parent=1 // pred_fallthru
      _
    // Predicated region
    $region14: #{selfsup_vit_forward.1} parent=1 // pred_check
      _
    $region15: #{selfsup_vit_forward.1} parent=1 // pred_check_branch
      %79 = sbr.rel (0) target = $region17
    $region16: #{selfsup_vit_forward.1} parent=1 // pred_region
      _
    $region17: #{selfsup_vit_forward.1} parent=1 // pred_fallthru
      _
    // Predicated region
    $region18: #{selfsup_vit_forward.1} parent=1 // pred_check
      _
    $region19: #{selfsup_vit_forward.1} parent=1 // pred_check_branch
      %81 = sbr.rel (0) target = $region21
    $region20: #{selfsup_vit_forward.1} parent=1 // pred_region
      _
    $region21: #{selfsup_vit_forward.1} parent=1 // pred_fallthru
      _
    // Predicated region
    $region22: #{selfsup_vit_forward.1} parent=1 // pred_check
      _
    $region23: #{selfsup_vit_forward.1} parent=1 // pred_check_branch
      %83 = sbr.rel (0) target = $region25
    $region24: #{selfsup_vit_forward.1} parent=1 // pred_region
      _
    $region25: #{selfsup_vit_forward.1} parent=1 // pred_fallthru
      _
    // Predicated region
    $region26: #{selfsup_vit_forward.1} parent=1 // pred_check
      _
    $region27: #{selfsup_vit_forward.1} parent=1 // pred_check_branch
      %85 = sbr.rel (0) target = $region29
    $region28: #{selfsup_vit_forward.1} parent=1 // pred_region
      _
    $region29: #{selfsup_vit_forward.1} parent=1 // pred_fallthru
      _
    // Predicated region
    $region30: #{selfsup_vit_forward.1} parent=1 // pred_check
      _
    $region31: #{selfsup_vit_forward.1} parent=1 // pred_check_branch
      %87 = sbr.rel (0) target = $region33
    $region32: #{selfsup_vit_forward.1} parent=1 // pred_region
      _
    $region33: #{selfsup_vit_forward.1} parent=1 // pred_fallthru
      _
    // Predicated region
    $region34: #{selfsup_vit_forward.1} parent=1 // pred_check
      _
    $region35: #{selfsup_vit_forward.1} parent=1 // pred_check_branch
      %89 = sbr.rel (0) target = $region37
    $region36: #{selfsup_vit_forward.1} parent=1 // pred_region
      _
    $region37: #{selfsup_vit_forward.1} parent=1 // pred_fallthru
      _
    // Predicated region
    $region38: #{selfsup_vit_forward.1} parent=1 // pred_check
      _
    $region39: #{selfsup_vit_forward.1} parent=1 // pred_check_branch
      %91 = sbr.rel (0) target = $region41
    $region40: #{selfsup_vit_forward.1} parent=1 // pred_region
      _
    $region41: #{selfsup_vit_forward.1} parent=1 // pred_fallthru
      _
    // Predicated region
    $region42: #{selfsup_vit_forward.1} parent=1 // pred_check
      _
    $region43: #{selfsup_vit_forward.1} parent=1 // pred_check_branch
      %93 = sbr.rel (0) target = $region45
    $region44: #{selfsup_vit_forward.1} parent=1 // pred_region
      _
    $region45: #{selfsup_vit_forward.1} parent=1 // pred_fallthru
      _
    // Predicated region
    $region46: #{selfsup_vit_forward.1} parent=1 // pred_check
      _
    $region47: #{selfsup_vit_forward.1} parent=1 // pred_check_branch
      %95 = sbr.rel (0) target = $region49
    $region48: #{selfsup_vit_forward.1} parent=1 // pred_region
      _
    $region49: #{selfsup_vit_forward.1} parent=1 // pred_fallthru
      _
    // Predicated region
    $region50: #{selfsup_vit_forward.1} parent=1 // pred_check
      _
    $region51: #{selfsup_vit_forward.1} parent=1 // pred_check_branch
      %97 = sbr.rel (0) target = $region53
    $region52: #{selfsup_vit_forward.1} parent=1 // pred_region
      _
    $region53: #{selfsup_vit_forward.1} parent=1 // pred_fallthru
      _
    // Predicated region
    $region54: #{selfsup_vit_forward.1} parent=1 // pred_check
      _
    $region55: #{selfsup_vit_forward.1} parent=1 // pred_check_branch
      %99 = sbr.rel (0) target = $region57
    $region56: #{selfsup_vit_forward.1} parent=1 // pred_region
      _
    $region57: #{selfsup_vit_forward.1} parent=1 // pred_fallthru
      _
    // Predicated region
    $region58: #{selfsup_vit_forward.1} parent=1 // pred_check
      _
    $region59: #{selfsup_vit_forward.1} parent=1 // pred_check_branch
      %101 = sbr.rel (0) target = $region61
    $region60: #{selfsup_vit_forward.1} parent=1 // pred_region
      _
    $region61: #{selfsup_vit_forward.1} parent=1 // pred_fallthru
      _
    // Predicated region
    $region62: #{selfsup_vit_forward.1} parent=1 // pred_check
      _
    $region63: #{selfsup_vit_forward.1} parent=1 // pred_check_branch
      %103 = sbr.rel (0) target = $region65
    $region64: #{selfsup_vit_forward.1} parent=1 // pred_region
      _
    $region65: #{selfsup_vit_forward.1} parent=1 // pred_fallthru
      _
    // Predicated region
    $region66: #{selfsup_vit_forward.1} parent=1 // pred_check
      _
    $region67: #{selfsup_vit_forward.1} parent=1 // pred_check_branch
      %105 = sbr.rel (0) target = $region69
    $region68: #{selfsup_vit_forward.1} parent=1 // pred_region
      _
    $region69: #{selfsup_vit_forward.1} parent=1 // pred_fallthru
      _
    // Predicated region
    $region70: #{selfsup_vit_forward.1} parent=1 // pred_check
      _
    $region71: #{selfsup_vit_forward.1} parent=1 // pred_check_branch
      %107 = sbr.rel (0) target = $region73
    $region72: #{selfsup_vit_forward.1} parent=1 // pred_region
      _
    $region73: #{selfsup_vit_forward.1} parent=1 // pred_fallthru
      _
    // Predicated region
    $region74: #{selfsup_vit_forward.1} parent=1 // pred_check
      _
    $region75: #{selfsup_vit_forward.1} parent=1 // pred_check_branch
      %109 = sbr.rel (0) target = $region77
    $region76: #{selfsup_vit_forward.1} parent=1 // pred_region
      _
    $region77: #{selfsup_vit_forward.1} parent=1 // pred_fallthru
      _
    // Predicated region
    $region78: #{selfsup_vit_forward.1} parent=1 // pred_check
      _
    $region79: #{selfsup_vit_forward.1} parent=1 // pred_check_branch
      %111 = sbr.rel (0) target = $region81
    $region80: #{selfsup_vit_forward.1} parent=1 // pred_region
      _
    $region81: #{selfsup_vit_forward.1} parent=1 // pred_fallthru
      _
    // Predicated region
    $region82: #{selfsup_vit_forward.1} parent=1 // pred_check
      _
    $region83: #{selfsup_vit_forward.1} parent=1 // pred_check_branch
      %113 = sbr.rel (0) target = $region85
    $region84: #{selfsup_vit_forward.1} parent=1 // pred_region
      _
    $region85: #{selfsup_vit_forward.1} parent=1 // pred_fallthru
      _
    // Predicated region
    $region86: #{selfsup_vit_forward.1} parent=1 // pred_check
      _
    $region87: #{selfsup_vit_forward.1} parent=1 // pred_check_branch
      %115 = sbr.rel (0) target = $region89
    $region88: #{selfsup_vit_forward.1} parent=1 // pred_region
      _
    $region89: #{selfsup_vit_forward.1} parent=1 // pred_fallthru
      _
    // Predicated region
    $region90: #{selfsup_vit_forward.1} parent=1 // pred_check
      _
    $region91: #{selfsup_vit_forward.1} parent=1 // pred_check_branch
      %117 = sbr.rel (0) target = $region93
    $region92: #{selfsup_vit_forward.1} parent=1 // pred_region
      _
    $region93: #{selfsup_vit_forward.1} parent=1 // pred_fallthru
      _
    // Predicated region
    $region94: #{selfsup_vit_forward.1} parent=1 // pred_check
      _
    $region95: #{selfsup_vit_forward.1} parent=1 // pred_check_branch
      %119 = sbr.rel (0) target = $region97
    $region96: #{selfsup_vit_forward.1} parent=1 // pred_region
      _
    $region97: #{selfsup_vit_forward.1} parent=1 // pred_fallthru
      _
    // Predicated region
    $region98: #{selfsup_vit_forward.1} parent=1 // pred_check
      _
    $region99: #{selfsup_vit_forward.1} parent=1 // pred_check_branch
      %121 = sbr.rel (0) target = $region101
    $region100: #{selfsup_vit_forward.1} parent=1 // pred_region
      _
    $region101: #{selfsup_vit_forward.1} parent=1 // pred_fallthru
      _
    // Predicated region
    $region102: #{selfsup_vit_forward.1} parent=1 // pred_check
      _
    $region103: #{selfsup_vit_forward.1} parent=1 // pred_check_branch
      %123 = sbr.rel (0) target = $region105
    $region104: #{selfsup_vit_forward.1} parent=1 // pred_region
      _
    $region105: #{selfsup_vit_forward.1} parent=1 // pred_fallthru
      _
    // Predicated region
    $region106: #{selfsup_vit_forward.1} parent=1 // pred_check
      _
    $region107: #{selfsup_vit_forward.1} parent=1 // pred_check_branch
      %125 = sbr.rel (0) target = $region109
    $region108: #{selfsup_vit_forward.1} parent=1 // pred_region
      _
    $region109: #{selfsup_vit_forward.1} parent=1 // pred_fallthru
      _
    // Predicated region
    $region110: #{selfsup_vit_forward.1} parent=1 // pred_check
      _
    $region111: #{selfsup_vit_forward.1} parent=1 // pred_check_branch
      %127 = sbr.rel (0) target = $region113
    $region112: #{selfsup_vit_forward.1} parent=1 // pred_region
      _
    $region113: #{selfsup_vit_forward.1} parent=1 // pred_fallthru
      _
    // Predicated region
    $region114: #{selfsup_vit_forward.1} parent=1 // pred_check
      _
    $region115: #{selfsup_vit_forward.1} parent=1 // pred_check_branch
      %129 = sbr.rel (0) target = $region117
    $region116: #{selfsup_vit_forward.1} parent=1 // pred_region
      _
    $region117: #{selfsup_vit_forward.1} parent=1 // pred_fallthru
      _
    %v130 = vld [vmem:[%s1] sm:$0xff]
    %v131 = vld [vmem:[%s1 + $0x8] sm:$0xff]
    %v132 = vld [vmem:[%s1 + $0x10] sm:$0xff]
    %v133 = vld [vmem:[%s1 + $0x18] sm:$0xff]
    %v134 = vld [vmem:[%s1 + $0x20] sm:$0xff]
    %v135 = vld [vmem:[%s3] sm:$0xff]
    %v136 = vld [vmem:[%s3 + $0x8] sm:$0xff]
    %v137 = vld [vmem:[%s3 + $0x10] sm:$0xff]
    %v138 = vld [vmem:[%s3 + $0x18] sm:$0xff]
    %v139 = vld [vmem:[%s3 + $0x20] sm:$0xff]
    %v140 = vld [vmem:[%s3 + $0x28] sm:$0xff]
    %v141 = vld [vmem:[%s3 + $0x30] sm:$0xff]
    %v142 = vld [vmem:[%s3 + $0x38] sm:$0xff]
    %v143 = vld [vmem:[%s3 + $0x40] sm:$0xff]
    %v144 = vld [vmem:[%s3 + $0x48] sm:$0xff]
    %v145 = vld [vmem:[%s3 + $0x50] sm:$0xff]
    %v146 = vld [vmem:[%s3 + $0x58] sm:$0xff]
    %v147 = vld [vmem:[%s3 + $0x60] sm:$0xff]
    %v148 = vld [vmem:[%s3 + $0x68] sm:$0xff]
    %v149 = vld [vmem:[%s3 + $0x70] sm:$0xff]
    %v150 = vld [vmem:[%s3 + $0x78] sm:$0xff]
    %v151 = vld [vmem:[%s5] sm:$0xff]
    %v152 = vld [vmem:[%s5 + $0x8] sm:$0xff]
    %v153 = vld [vmem:[%s5 + $0x10] sm:$0xff]
    %v154 = vld [vmem:[%s5 + $0x18] sm:$0xff]
    %v155 = vld [vmem:[%s5 + $0x20] sm:$0xff]
    %156 = vmatprep.subr.mxu0 0.0
    %157 = vmatpush1.msra.mxu0 %v150
    %158 = vmatprep.subr.mxu0 0.0
    %159 = vmatpush1.msra.mxu0 %v149
    %160 = vmatprep.subr.mxu0 0.0
    %161 = vmatpush1.msra.mxu0 %v148
    %162 = vmatprep.subr.mxu0 0.0
    %163 = vmatpush1.msra.mxu0 %v147
    %164 = vmatprep.subr.mxu0 0.0
    %165 = vmatpush1.msra.mxu0 %v146
    %166 = vmatprep.subr.mxu0 0.0
    %167 = vmatpush1.msra.mxu0 %v145
    %168 = vmatprep.subr.mxu0 0.0
    %169 = vmatpush1.msra.mxu0 %v144
    %170 = vmatprep.subr.mxu0 0.0
    %171 = vmatpush1.msra.mxu0 %v143
    %172 = vmatprep.subr.mxu0 0.0
    %173 = vmatpush1.msra.mxu0 %v142
    %174 = vmatprep.subr.mxu0 0.0
    %175 = vmatpush1.msra.mxu0 %v141
    %176 = vmatprep.subr.mxu0 0.0
    %177 = vmatpush1.msra.mxu0 %v140
    %178 = vmatprep.subr.mxu0 0.0
    %179 = vmatpush1.msra.mxu0 %v139
    %180 = vmatprep.subr.mxu0 0.0
    %181 = vmatpush1.msra.mxu0 %v138
    %182 = vmatprep.subr.mxu0 0.0
    %183 = vmatpush1.msra.mxu0 %v137
    %184 = vmatprep.subr.mxu0 0.0
    %185 = vmatpush1.msra.mxu0 %v136
    %186 = vmatprep.subr.mxu0 0.0
    %187 = vmatpush1.msra.mxu0 %v135
    %188 = vmatprep.subr.mxu0 0.0
    %189 = vmatpush2.msra.mxu0 0.0
    %190 = vmatprep.subr.mxu0 0.0
    %191 = vmatpush2.msra.mxu0 0.0
    %192 = vmatprep.subr.mxu0 0.0
    %193 = vmatpush2.msra.mxu0 0.0
    %194 = vmatprep.subr.mxu0 0.0
    %195 = vmatpush2.msra.mxu0 0.0
    %196 = vmatprep.subr.mxu0 0.0
    %197 = vmatpush2.msra.mxu0 0.0
    %198 = vmatprep.subr.mxu0 0.0
    %199 = vmatpush2.msra.mxu0 0.0
    %200 = vmatprep.subr.mxu0 0.0
    %201 = vmatpush2.msra.mxu0 0.0
    %202 = vmatprep.subr.mxu0 0.0
    %203 = vmatpush2.msra.mxu0 0.0
    %204 = vmatprep.subr.mxu0 0.0
    %205 = vmatpush2.msra.mxu0 0.0
    %206 = vmatprep.subr.mxu0 0.0
    %207 = vmatpush2.msra.mxu0 0.0
    %208 = vmatprep.subr.mxu0 0.0
    %209 = vmatpush2.msra.mxu0 0.0
    %210 = vmatprep.subr.mxu0 0.0
    %211 = vmatpush2.msra.mxu0 0.0
    %212 = vmatprep.subr.mxu0 0.0
    %213 = vmatpush2.msra.mxu0 0.0
    %214 = vmatprep.subr.mxu0 0.0
    %215 = vmatpush2.msra.mxu0 0.0
    %216 = vmatprep.subr.mxu0 0.0
    %217 = vmatpush2.msra.mxu0 0.0
    %218 = vmatprep.subr.mxu0 0.0
    %219 = vmatpush2.msra.mxu0 0.0
    %220 = vmatprep.mubr.f32.mxu0 0.0
    %221 = vmatmul.mubr.f32.gmra.mxu0 %v130
    %v222 = vpop.f32.mrf.mxu0
    %v223 = vadd.f32 %v151, %v222
    %v224 = vpop.f32.mrf.mxu0
    %225 = vmatprep.mubr.f32.mxu0 0.0
    %226 = vmatmul.mubr.f32.gmra.mxu0 %v131
    %v227 = vpop.f32.mrf.mxu0
    %v228 = vadd.f32 %v152, %v227
    %v229 = vpop.f32.mrf.mxu0
    %230 = vmatprep.mubr.f32.mxu0 0.0
    %231 = vmatmul.mubr.f32.gmra.mxu0 %v132
    %v232 = vpop.f32.mrf.mxu0
    %v233 = vadd.f32 %v153, %v232
    %v234 = vpop.f32.mrf.mxu0
    %235 = vmatprep.mubr.f32.mxu0 0.0
    %236 = vmatmul.mubr.f32.gmra.mxu0 %v133
    %v237 = vpop.f32.mrf.mxu0
    %v238 = vadd.f32 %v154, %v237
    %v239 = vpop.f32.mrf.mxu0
    %240 = vmatprep.mubr.f32.mxu0 0.0
    %241 = vmatmul.mubr.f32.gmra.mxu0 %v134
    %v242 = vpop.f32.mrf.mxu0
    %v243 = vadd.f32 %v155, %v242
    %v244 = vpop.f32.mrf.mxu0
    %245 = vdwg.mxu0
    %v246 = vld [vmem:[%s7] sm:$0xff]
    %v247 = vld [vmem:[%s7 + $0x8] sm:$0xff]
    %v248 = vld [vmem:[%s7 + $0x10] sm:$0xff]
    %v249 = vld [vmem:[%s7 + $0x18] sm:$0xff]
    %v250 = vld [vmem:[%s7 + $0x20] sm:$0xff]
    %v251 = vld [vmem:[%s41] sm:$0x1]
    %v252 = vld [vmem:[%s43] sm:$0x1]
    %v253 = vlaneseq
    %v254 = vand.u32 %v253, 127
    %v255 = vld [vmem:[%s9] sm:$0x1]
    %v256 = vld [vmem:[%s11] sm:$0x1]
    %vm257 = vcmask 261120
    %v258 = vsel %vm257, %v223, 0.0
    %259 = vadd.xlane.f32.xlu0 %v258
    %v260 = vpop.xlane.xlu0 %259
    %v261 = vsel %vm257, %v228, 0.0
    %262 = vadd.xlane.f32.xlu0 %v261
    %v263 = vpop.xlane.xlu0 %262
    %v264 = vsel %vm257, %v233, 0.0
    %265 = vadd.xlane.f32.xlu0 %v264
    %v266 = vpop.xlane.xlu0 %265
    %v267 = vsel %vm257, %v238, 0.0
    %268 = vadd.xlane.f32.xlu0 %v267
    %v269 = vpop.xlane.xlu0 %268
    %v270 = vsel %vm257, %v243, 0.0
    %271 = vadd.xlane.f32.xlu0 %v270
    %v272 = vpop.xlane.xlu0 %271
    %v273 = vrcp.pop 32.0
    %v274 = vmul.f32 %v260, %v273
    %v275 = vmul.f32 %v263, %v273
    %v276 = vmul.f32 %v266, %v273
    %v277 = vmul.f32 %v269, %v273
    %v278 = vmul.f32 %v272, %v273
    %v279 = vsub.f32 %v223, %v274
    %v280 = vsub.f32 %v228, %v275
    %v281 = vsub.f32 %v233, %v276
    %v282 = vsub.f32 %v238, %v277
    %v283 = vsub.f32 %v243, %v278
    %v284 = vmul.f32 %v279, %v279
    %v285 = vmul.f32 %v280, %v280
    %v286 = vmul.f32 %v281, %v281
    %v287 = vmul.f32 %v282, %v282
    %v288 = vmul.f32 %v283, %v283
    %v289 = vsel %vm257, %v284, 0.0
    %290 = vadd.xlane.f32.xlu0 %v289
    %v291 = vpop.xlane.xlu0 %290
    %v292 = vsel %vm257, %v285, 0.0
    %293 = vadd.xlane.f32.xlu0 %v292
    %v294 = vpop.xlane.xlu0 %293
    %v295 = vsel %vm257, %v286, 0.0
    %296 = vadd.xlane.f32.xlu0 %v295
    %v297 = vpop.xlane.xlu0 %296
    %v298 = vsel %vm257, %v287, 0.0
    %299 = vadd.xlane.f32.xlu0 %v298
    %v300 = vpop.xlane.xlu0 %299
    %v301 = vsel %vm257, %v288, 0.0
    %302 = vadd.xlane.f32.xlu0 %v301
    %v303 = vpop.xlane.xlu0 %302
    %v304 = vmul.f32 %v291, %v273
    %v305 = vmul.f32 %v294, %v273
    %v306 = vmul.f32 %v297, %v273
    %v307 = vmul.f32 %v300, %v273
    %v308 = vmul.f32 %v303, %v273
    %v309 = vadd.f32 %v304, 1e-06
    %v310 = vadd.f32 %v305, 1e-06
    %v311 = vadd.f32 %v306, 1e-06
    %v312 = vadd.f32 %v307, 1e-06
    %v313 = vadd.f32 %v308, 1e-06
    %v314 = vrsqrt.pop %v309
    %v315 = vrsqrt.pop %v310
    %v316 = vrsqrt.pop %v311
    %v317 = vrsqrt.pop %v312
    %v318 = vrsqrt.pop %v313
    %v319 = vmul.f32 %v279, %v314
    %v320 = vmul.f32 %v280, %v315
    %v321 = vmul.f32 %v281, %v316
    %v322 = vmul.f32 %v282, %v317
    %v323 = vmul.f32 %v283, %v318
    %v325 = vlaneseq
    %v326 = vshrl.u32 %v325, 7
    %v327 = vsub.s32 0, %v326
    %v328 = vrot.slane %v255, %v327
    %v330 = vmul.f32 %v319, %v328
    %v331 = vmul.f32 %v320, %v328
    %v332 = vmul.f32 %v321, %v328
    %v333 = vmul.f32 %v322, %v328
    %v334 = vmul.f32 %v323, %v328
    %v336 = vlaneseq
    %v337 = vshrl.u32 %v336, 7
    %v338 = vsub.s32 0, %v337
    %v339 = vrot.slane %v256, %v338
    %v341 = vadd.f32 %v330, %v339
    %v342 = vadd.f32 %v331, %v339
    %v343 = vadd.f32 %v332, %v339
    %v344 = vadd.f32 %v333, %v339
    %v345 = vadd.f32 %v334, %v339
    %v346 = vld [vmem:[%s13] sm:$0xff]
    %v347 = vld [vmem:[%s13 + $0x8] sm:$0xff]
    %v348 = vld [vmem:[%s13 + $0x10] sm:$0xff]
    %v349 = vld [vmem:[%s13 + $0x18] sm:$0xff]
    %v350 = vld [vmem:[%s15] sm:$0x1]
    %v352 = vlaneseq
    %v353 = vshrl.u32 %v352, 7
    %v354 = vsub.s32 0, %v353
    %v355 = vrot.slane %v350, %v354
    %v358 = vsel %vm257, %v341, 0
    %v361 = vsel %vm257, %v342, 0
    %v364 = vsel %vm257, %v343, 0
    %v367 = vsel %vm257, %v344, 0
    %v370 = vsel %vm257, %v345, 0
    %372 = vmatprep.subr.mxu0 0.0
    %373 = vmatpush1.msra.mxu0 0.0
    %374 = vmatprep.subr.mxu0 0.0
    %375 = vmatpush1.msra.mxu0 0.0
    %376 = vmatprep.subr.mxu0 0.0
    %377 = vmatpush1.msra.mxu0 0.0
    %378 = vmatprep.subr.mxu0 0.0
    %379 = vmatpush1.msra.mxu0 0.0
    %380 = vmatprep.subr.mxu0 0.0
    %381 = vmatpush1.msra.mxu0 0.0
    %382 = vmatprep.subr.mxu0 0.0
    %383 = vmatpush1.msra.mxu0 0.0
    %384 = vmatprep.subr.mxu0 0.0
    %385 = vmatpush1.msra.mxu0 0.0
    %386 = vmatprep.subr.mxu0 0.0
    %387 = vmatpush1.msra.mxu0 0.0
    %388 = vmatprep.subr.mxu0 0.0
    %389 = vmatpush1.msra.mxu0 0.0
    %390 = vmatprep.subr.mxu0 0.0
    %391 = vmatpush1.msra.mxu0 0.0
    %392 = vmatprep.subr.mxu0 0.0
    %393 = vmatpush1.msra.mxu0 0.0
    %394 = vmatprep.subr.mxu0 0.0
    %395 = vmatpush1.msra.mxu0 0.0
    %396 = vmatprep.subr.mxu0 0.0
    %397 = vmatpush1.msra.mxu0 %v349
    %398 = vmatprep.subr.mxu0 0.0
    %399 = vmatpush1.msra.mxu0 %v348
    %400 = vmatprep.subr.mxu0 0.0
    %401 = vmatpush1.msra.mxu0 %v347
    %402 = vmatprep.subr.mxu0 0.0
    %403 = vmatpush1.msra.mxu0 %v346
    %404 = vmatprep.subr.mxu0 0.0
    %405 = vmatpush2.msra.mxu0 0.0
    %406 = vmatprep.subr.mxu0 0.0
    %407 = vmatpush2.msra.mxu0 0.0
    %408 = vmatprep.subr.mxu0 0.0
    %409 = vmatpush2.msra.mxu0 0.0
    %410 = vmatprep.subr.mxu0 0.0
    %411 = vmatpush2.msra.mxu0 0.0
    %412 = vmatprep.subr.mxu0 0.0
    %413 = vmatpush2.msra.mxu0 0.0
    %414 = vmatprep.subr.mxu0 0.0
    %415 = vmatpush2.msra.mxu0 0.0
    %416 = vmatprep.subr.mxu0 0.0
    %417 = vmatpush2.msra.mxu0 0.0
    %418 = vmatprep.subr.mxu0 0.0
    %419 = vmatpush2.msra.mxu0 0.0
    %420 = vmatprep.subr.mxu0 0.0
    %421 = vmatpush2.msra.mxu0 0.0
    %422 = vmatprep.subr.mxu0 0.0
    %423 = vmatpush2.msra.mxu0 0.0
    %424 = vmatprep.subr.mxu0 0.0
    %425 = vmatpush2.msra.mxu0 0.0
    %426 = vmatprep.subr.mxu0 0.0
    %427 = vmatpush2.msra.mxu0 0.0
    %428 = vmatprep.subr.mxu0 0.0
    %429 = vmatpush2.msra.mxu0 0.0
    %430 = vmatprep.subr.mxu0 0.0
    %431 = vmatpush2.msra.mxu0 0.0
    %432 = vmatprep.subr.mxu0 0.0
    %433 = vmatpush2.msra.mxu0 0.0
    %434 = vmatprep.subr.mxu0 0.0
    %435 = vmatpush2.msra.mxu0 0.0
    %436 = vmatprep.mubr.f32.mxu0 0.0
    %437 = vmatmul.mubr.f32.gmra.mxu0 %v358
    %v438 = vpop.f32.mrf.mxu0
    %v439 = vadd.f32 %v355, %v438
    %v440 = vpop.f32.mrf.mxu0
    %441 = vmatprep.mubr.f32.mxu0 0.0
    %442 = vmatmul.mubr.f32.gmra.mxu0 %v361
    %v443 = vpop.f32.mrf.mxu0
    %v444 = vadd.f32 %v355, %v443
    %v445 = vpop.f32.mrf.mxu0
    %446 = vmatprep.mubr.f32.mxu0 0.0
    %447 = vmatmul.mubr.f32.gmra.mxu0 %v364
    %v448 = vpop.f32.mrf.mxu0
    %v449 = vadd.f32 %v355, %v448
    %v450 = vpop.f32.mrf.mxu0
    %451 = vmatprep.mubr.f32.mxu0 0.0
    %452 = vmatmul.mubr.f32.gmra.mxu0 %v367
    %v453 = vpop.f32.mrf.mxu0
    %v454 = vadd.f32 %v355, %v453
    %v455 = vpop.f32.mrf.mxu0
    %456 = vmatprep.mubr.f32.mxu0 0.0
    %457 = vmatmul.mubr.f32.gmra.mxu0 %v370
    %v458 = vpop.f32.mrf.mxu0
    %v459 = vadd.f32 %v355, %v458
    %v460 = vpop.f32.mrf.mxu0
    %461 = vdwg.mxu0
    %v462 = vld [vmem:[%s17] sm:$0xff]
    %v463 = vld [vmem:[%s17 + $0x8] sm:$0xff]
    %v464 = vld [vmem:[%s17 + $0x10] sm:$0xff]
    %v465 = vld [vmem:[%s17 + $0x18] sm:$0xff]
    %v466 = vld [vmem:[%s19] sm:$0x1]
    %v468 = vlaneseq
    %v469 = vshrl.u32 %v468, 7
    %v470 = vsub.s32 0, %v469
    %v471 = vrot.slane %v466, %v470
    %473 = vmatprep.subr.mxu0 0.0
    %474 = vmatpush1.msra.mxu0 0.0
    %475 = vmatprep.subr.mxu0 0.0
    %476 = vmatpush1.msra.mxu0 0.0
    %477 = vmatprep.subr.mxu0 0.0
    %478 = vmatpush1.msra.mxu0 0.0
    %479 = vmatprep.subr.mxu0 0.0
    %480 = vmatpush1.msra.mxu0 0.0
    %481 = vmatprep.subr.mxu0 0.0
    %482 = vmatpush1.msra.mxu0 0.0
    %483 = vmatprep.subr.mxu0 0.0
    %484 = vmatpush1.msra.mxu0 0.0
    %485 = vmatprep.subr.mxu0 0.0
    %486 = vmatpush1.msra.mxu0 0.0
    %487 = vmatprep.subr.mxu0 0.0
    %488 = vmatpush1.msra.mxu0 0.0
    %489 = vmatprep.subr.mxu0 0.0
    %490 = vmatpush1.msra.mxu0 0.0
    %491 = vmatprep.subr.mxu0 0.0
    %492 = vmatpush1.msra.mxu0 0.0
    %493 = vmatprep.subr.mxu0 0.0
    %494 = vmatpush1.msra.mxu0 0.0
    %495 = vmatprep.subr.mxu0 0.0
    %496 = vmatpush1.msra.mxu0 0.0
    %497 = vmatprep.subr.mxu0 0.0
    %498 = vmatpush1.msra.mxu0 %v465
    %499 = vmatprep.subr.mxu0 0.0
    %500 = vmatpush1.msra.mxu0 %v464
    %501 = vmatprep.subr.mxu0 0.0
    %502 = vmatpush1.msra.mxu0 %v463
    %503 = vmatprep.subr.mxu0 0.0
    %504 = vmatpush1.msra.mxu0 %v462
    %505 = vmatprep.subr.mxu0 0.0
    %506 = vmatpush2.msra.mxu0 0.0
    %507 = vmatprep.subr.mxu0 0.0
    %508 = vmatpush2.msra.mxu0 0.0
    %509 = vmatprep.subr.mxu0 0.0
    %510 = vmatpush2.msra.mxu0 0.0
    %511 = vmatprep.subr.mxu0 0.0
    %512 = vmatpush2.msra.mxu0 0.0
    %513 = vmatprep.subr.mxu0 0.0
    %514 = vmatpush2.msra.mxu0 0.0
    %515 = vmatprep.subr.mxu0 0.0
    %516 = vmatpush2.msra.mxu0 0.0
    %517 = vmatprep.subr.mxu0 0.0
    %518 = vmatpush2.msra.mxu0 0.0
    %519 = vmatprep.subr.mxu0 0.0
    %520 = vmatpush2.msra.mxu0 0.0
    %521 = vmatprep.subr.mxu0 0.0
    %522 = vmatpush2.msra.mxu0 0.0
    %523 = vmatprep.subr.mxu0 0.0
    %524 = vmatpush2.msra.mxu0 0.0
    %525 = vmatprep.subr.mxu0 0.0
    %526 = vmatpush2.msra.mxu0 0.0
    %527 = vmatprep.subr.mxu0 0.0
    %528 = vmatpush2.msra.mxu0 0.0
    %529 = vmatprep.subr.mxu0 0.0
    %530 = vmatpush2.msra.mxu0 0.0
    %531 = vmatprep.subr.mxu0 0.0
    %532 = vmatpush2.msra.mxu0 0.0
    %533 = vmatprep.subr.mxu0 0.0
    %534 = vmatpush2.msra.mxu0 0.0
    %535 = vmatprep.subr.mxu0 0.0
    %536 = vmatpush2.msra.mxu0 0.0
    %537 = vmatprep.mubr.f32.mxu0 0.0
    %538 = vmatmul.mubr.f32.gmra.mxu0 %v358
    %v539 = vpop.f32.mrf.mxu0
    %v540 = vadd.f32 %v471, %v539
    %v541 = vpop.f32.mrf.mxu0
    %542 = vmatprep.mubr.f32.mxu0 0.0
    %543 = vmatmul.mubr.f32.gmra.mxu0 %v361
    %v544 = vpop.f32.mrf.mxu0
    %v545 = vadd.f32 %v471, %v544
    %v546 = vpop.f32.mrf.mxu0
    %547 = vmatprep.mubr.f32.mxu0 0.0
    %548 = vmatmul.mubr.f32.gmra.mxu0 %v364
    %v549 = vpop.f32.mrf.mxu0
    %v550 = vadd.f32 %v471, %v549
    %v551 = vpop.f32.mrf.mxu0
    %552 = vmatprep.mubr.f32.mxu0 0.0
    %553 = vmatmul.mubr.f32.gmra.mxu0 %v367
    %v554 = vpop.f32.mrf.mxu0
    %v555 = vadd.f32 %v471, %v554
    %v556 = vpop.f32.mrf.mxu0
    %557 = vmatprep.mubr.f32.mxu0 0.0
    %558 = vmatmul.mubr.f32.gmra.mxu0 %v370
    %v559 = vpop.f32.mrf.mxu0
    %v560 = vadd.f32 %v471, %v559
    %v561 = vpop.f32.mrf.mxu0
    %562 = vdwg.mxu0
    %v563 = vld [vmem:[%s21] sm:$0xff]
    %v564 = vld [vmem:[%s21 + $0x8] sm:$0xff]
    %v565 = vld [vmem:[%s21 + $0x10] sm:$0xff]
    %v566 = vld [vmem:[%s21 + $0x18] sm:$0xff]
    %v567 = vld [vmem:[%s23] sm:$0x1]
    %v569 = vlaneseq
    %v570 = vshrl.u32 %v569, 7
    %v571 = vsub.s32 0, %v570
    %v572 = vrot.slane %v567, %v571
    %574 = vmatprep.subr.mxu0 0.0
    %575 = vmatpush1.msra.mxu0 0.0
    %576 = vmatprep.subr.mxu0 0.0
    %577 = vmatpush1.msra.mxu0 0.0
    %578 = vmatprep.subr.mxu0 0.0
    %579 = vmatpush1.msra.mxu0 0.0
    %580 = vmatprep.subr.mxu0 0.0
    %581 = vmatpush1.msra.mxu0 0.0
    %582 = vmatprep.subr.mxu0 0.0
    %583 = vmatpush1.msra.mxu0 0.0
    %584 = vmatprep.subr.mxu0 0.0
    %585 = vmatpush1.msra.mxu0 0.0
    %586 = vmatprep.subr.mxu0 0.0
    %587 = vmatpush1.msra.mxu0 0.0
    %588 = vmatprep.subr.mxu0 0.0
    %589 = vmatpush1.msra.mxu0 0.0
    %590 = vmatprep.subr.mxu0 0.0
    %591 = vmatpush1.msra.mxu0 0.0
    %592 = vmatprep.subr.mxu0 0.0
    %593 = vmatpush1.msra.mxu0 0.0
    %594 = vmatprep.subr.mxu0 0.0
    %595 = vmatpush1.msra.mxu0 0.0
    %596 = vmatprep.subr.mxu0 0.0
    %597 = vmatpush1.msra.mxu0 0.0
    %598 = vmatprep.subr.mxu0 0.0
    %599 = vmatpush1.msra.mxu0 %v566
    %600 = vmatprep.subr.mxu0 0.0
    %601 = vmatpush1.msra.mxu0 %v565
    %602 = vmatprep.subr.mxu0 0.0
    %603 = vmatpush1.msra.mxu0 %v564
    %604 = vmatprep.subr.mxu0 0.0
    %605 = vmatpush1.msra.mxu0 %v563
    %606 = vmatprep.subr.mxu0 0.0
    %607 = vmatpush2.msra.mxu0 0.0
    %608 = vmatprep.subr.mxu0 0.0
    %609 = vmatpush2.msra.mxu0 0.0
    %610 = vmatprep.subr.mxu0 0.0
    %611 = vmatpush2.msra.mxu0 0.0
    %612 = vmatprep.subr.mxu0 0.0
    %613 = vmatpush2.msra.mxu0 0.0
    %614 = vmatprep.subr.mxu0 0.0
    %615 = vmatpush2.msra.mxu0 0.0
    %616 = vmatprep.subr.mxu0 0.0
    %617 = vmatpush2.msra.mxu0 0.0
    %618 = vmatprep.subr.mxu0 0.0
    %619 = vmatpush2.msra.mxu0 0.0
    %620 = vmatprep.subr.mxu0 0.0
    %621 = vmatpush2.msra.mxu0 0.0
    %622 = vmatprep.subr.mxu0 0.0
    %623 = vmatpush2.msra.mxu0 0.0
    %624 = vmatprep.subr.mxu0 0.0
    %625 = vmatpush2.msra.mxu0 0.0
    %626 = vmatprep.subr.mxu0 0.0
    %627 = vmatpush2.msra.mxu0 0.0
    %628 = vmatprep.subr.mxu0 0.0
    %629 = vmatpush2.msra.mxu0 0.0
    %630 = vmatprep.subr.mxu0 0.0
    %631 = vmatpush2.msra.mxu0 0.0
    %632 = vmatprep.subr.mxu0 0.0
    %633 = vmatpush2.msra.mxu0 0.0
    %634 = vmatprep.subr.mxu0 0.0
    %635 = vmatpush2.msra.mxu0 0.0
    %636 = vmatprep.subr.mxu0 0.0
    %637 = vmatpush2.msra.mxu0 0.0
    %638 = vmatprep.mubr.f32.mxu0 0.0
    %639 = vmatmul.mubr.f32.gmra.mxu0 %v358
    %v640 = vpop.f32.mrf.mxu0
    %v641 = vadd.f32 %v572, %v640
    %v642 = vpop.f32.mrf.mxu0
    %643 = vmatprep.mubr.f32.mxu0 0.0
    %644 = vmatmul.mubr.f32.gmra.mxu0 %v361
    %v645 = vpop.f32.mrf.mxu0
    %v646 = vadd.f32 %v572, %v645
    %v647 = vpop.f32.mrf.mxu0
    %648 = vmatprep.mubr.f32.mxu0 0.0
    %649 = vmatmul.mubr.f32.gmra.mxu0 %v364
    %v650 = vpop.f32.mrf.mxu0
    %v651 = vadd.f32 %v572, %v650
    %v652 = vpop.f32.mrf.mxu0
    %653 = vmatprep.mubr.f32.mxu0 0.0
    %654 = vmatmul.mubr.f32.gmra.mxu0 %v367
    %v655 = vpop.f32.mrf.mxu0
    %v656 = vadd.f32 %v572, %v655
    %v657 = vpop.f32.mrf.mxu0
    %658 = vmatprep.mubr.f32.mxu0 0.0
    %659 = vmatmul.mubr.f32.gmra.mxu0 %v370
    %v660 = vpop.f32.mrf.mxu0
    %v661 = vadd.f32 %v572, %v660
    %v662 = vpop.f32.mrf.mxu0
    %663 = vdwg.mxu0
    %vm664 = vcmp.ge.s32.totalorder %v254, 0
    %vm665 = vcmp.lt.s32.totalorder %v254, 8
    %vm666 = vmand %vm664, %vm665
    %v667 = vsel %vm666, 1, 0
    %v668 = vcvt.s32.f32 %v667
    %v669 = vmul.f32 %v439, %v668
    %v670 = vmul.f32 %v444, %v668
    %v671 = vmul.f32 %v449, %v668
    %v672 = vmul.f32 %v454, %v668
    %v673 = vmul.f32 %v459, %v668
    %v675 = vsel %vm257, %v669, 0
    %v678 = vsel %vm257, %v670, 0
    %v681 = vsel %vm257, %v671, 0
    %v684 = vsel %vm257, %v672, 0
    %v687 = vsel %vm257, %v673, 0
    %v690 = vsel %vm257, %v540, 0
    %v693 = vsel %vm257, %v545, 0
    %v696 = vsel %vm257, %v550, 0
    %v699 = vsel %vm257, %v555, 0
    %v702 = vsel %vm257, %v560, 0
    %704 = vmatprep.subr.mxu0 0.0
    %705 = vmatpush1.xpose.msra.mxu0 0.0
    %706 = vmatprep.subr.mxu0 0.0
    %707 = vmatpush1.xpose.msra.mxu0 0.0
    %708 = vmatprep.subr.mxu0 0.0
    %709 = vmatpush1.xpose.msra.mxu0 0.0
    %710 = vmatprep.subr.mxu0 0.0
    %711 = vmatpush1.xpose.msra.mxu0 0.0
    %712 = vmatprep.subr.mxu0 0.0
    %713 = vmatpush1.xpose.msra.mxu0 0.0
    %714 = vmatprep.subr.mxu0 0.0
    %715 = vmatpush1.xpose.msra.mxu0 0.0
    %716 = vmatprep.subr.mxu0 0.0
    %717 = vmatpush1.xpose.msra.mxu0 0.0
    %718 = vmatprep.subr.mxu0 0.0
    %719 = vmatpush1.xpose.msra.mxu0 0.0
    %720 = vmatprep.subr.mxu0 0.0
    %721 = vmatpush1.xpose.msra.mxu0 0.0
    %722 = vmatprep.subr.mxu0 0.0
    %723 = vmatpush1.xpose.msra.mxu0 0.0
    %724 = vmatprep.subr.mxu0 0.0
    %725 = vmatpush1.xpose.msra.mxu0 0.0
    %726 = vmatprep.subr.mxu0 0.0
    %727 = vmatpush1.xpose.msra.mxu0 %v702
    %728 = vmatprep.subr.mxu0 0.0
    %729 = vmatpush1.xpose.msra.mxu0 %v699
    %730 = vmatprep.subr.mxu0 0.0
    %731 = vmatpush1.xpose.msra.mxu0 %v696
    %732 = vmatprep.subr.mxu0 0.0
    %733 = vmatpush1.xpose.msra.mxu0 %v693
    %734 = vmatprep.subr.mxu0 0.0
    %735 = vmatpush1.xpose.msra.mxu0 %v690
    %736 = vmatprep.subr.mxu0 0.0
    %737 = vmatpush2.xpose.msra.mxu0 0.0
    %738 = vmatprep.subr.mxu0 0.0
    %739 = vmatpush2.xpose.msra.mxu0 0.0
    %740 = vmatprep.subr.mxu0 0.0
    %741 = vmatpush2.xpose.msra.mxu0 0.0
    %742 = vmatprep.subr.mxu0 0.0
    %743 = vmatpush2.xpose.msra.mxu0 0.0
    %744 = vmatprep.subr.mxu0 0.0
    %745 = vmatpush2.xpose.msra.mxu0 0.0
    %746 = vmatprep.subr.mxu0 0.0
    %747 = vmatpush2.xpose.msra.mxu0 0.0
    %748 = vmatprep.subr.mxu0 0.0
    %749 = vmatpush2.xpose.msra.mxu0 0.0
    %750 = vmatprep.subr.mxu0 0.0
    %751 = vmatpush2.xpose.msra.mxu0 0.0
    %752 = vmatprep.subr.mxu0 0.0
    %753 = vmatpush2.xpose.msra.mxu0 0.0
    %754 = vmatprep.subr.mxu0 0.0
    %755 = vmatpush2.xpose.msra.mxu0 0.0
    %756 = vmatprep.subr.mxu0 0.0
    %757 = vmatpush2.xpose.msra.mxu0 0.0
    %758 = vmatprep.subr.mxu0 0.0
    %759 = vmatpush2.xpose.msra.mxu0 0.0
    %760 = vmatprep.subr.mxu0 0.0
    %761 = vmatpush2.xpose.msra.mxu0 0.0
    %762 = vmatprep.subr.mxu0 0.0
    %763 = vmatpush2.xpose.msra.mxu0 0.0
    %764 = vmatprep.subr.mxu0 0.0
    %765 = vmatpush2.xpose.msra.mxu0 0.0
    %766 = vmatprep.subr.mxu0 0.0
    %767 = vmatpush2.xpose.msra.mxu0 0.0
    %768 = vmatprep.mubr.f32.mxu0 0.0
    %769 = vmatmul.mubr.f32.gmra.mxu0 %v675
    %v770 = vpop.f32.mrf.mxu0
    %v771 = vadd.f32 %v246, %v770
    %v772 = vpop.f32.mrf.mxu0
    %773 = vmatprep.mubr.f32.mxu0 0.0
    %774 = vmatmul.mubr.f32.gmra.mxu0 %v678
    %v775 = vpop.f32.mrf.mxu0
    %v776 = vadd.f32 %v247, %v775
    %v777 = vpop.f32.mrf.mxu0
    %778 = vmatprep.mubr.f32.mxu0 0.0
    %779 = vmatmul.mubr.f32.gmra.mxu0 %v681
    %v780 = vpop.f32.mrf.mxu0
    %v781 = vadd.f32 %v248, %v780
    %v782 = vpop.f32.mrf.mxu0
    %783 = vmatprep.mubr.f32.mxu0 0.0
    %784 = vmatmul.mubr.f32.gmra.mxu0 %v684
    %v785 = vpop.f32.mrf.mxu0
    %v786 = vadd.f32 %v249, %v785
    %v787 = vpop.f32.mrf.mxu0
    %788 = vmatprep.mubr.f32.mxu0 0.0
    %789 = vmatmul.mubr.f32.gmra.mxu0 %v687
    %v790 = vpop.f32.mrf.mxu0
    %v791 = vadd.f32 %v250, %v790
    %v792 = vpop.f32.mrf.mxu0
    %793 = vdwg.mxu0
    %vm794 = vcmask 326656
    %v795 = vsel %vm794, %v771, -inf
    %796 = vmax.xlane.f32.xlu0 %v795
    %v797 = vpop.xlane.xlu0 %796
    %v798 = vsel %vm794, %v776, -inf
    %799 = vmax.xlane.f32.xlu0 %v798
    %v800 = vpop.xlane.xlu0 %799
    %v801 = vsel %vm794, %v781, -inf
    %802 = vmax.xlane.f32.xlu0 %v801
    %v803 = vpop.xlane.xlu0 %802
    %v804 = vsel %vm794, %v786, -inf
    %805 = vmax.xlane.f32.xlu0 %v804
    %v806 = vpop.xlane.xlu0 %805
    %v807 = vsel %vm794, %v791, -inf
    %808 = vmax.xlane.f32.xlu0 %v807
    %v809 = vpop.xlane.xlu0 %808
    %v810 = vsub.f32 %v771, %v797
    %v811 = vsub.f32 %v776, %v800
    %v812 = vsub.f32 %v781, %v803
    %v813 = vsub.f32 %v786, %v806
    %v814 = vsub.f32 %v791, %v809
    %v815 = vmul.f32 %v810, 1.442695
    %v816 = vpow.pop %v815
    %v817 = vmul.f32 %v811, 1.442695
    %v818 = vpow.pop %v817
    %v819 = vmul.f32 %v812, 1.442695
    %v820 = vpow.pop %v819
    %v821 = vmul.f32 %v813, 1.442695
    %v822 = vpow.pop %v821
    %v823 = vmul.f32 %v814, 1.442695
    %v824 = vpow.pop %v823
    %v825 = vsel %vm794, %v816, 0.0
    %826 = vadd.xlane.f32.xlu0 %v825
    %v827 = vpop.xlane.xlu0 %826
    %v828 = vsel %vm794, %v818, 0.0
    %829 = vadd.xlane.f32.xlu0 %v828
    %v830 = vpop.xlane.xlu0 %829
    %v831 = vsel %vm794, %v820, 0.0
    %832 = vadd.xlane.f32.xlu0 %v831
    %v833 = vpop.xlane.xlu0 %832
    %v834 = vsel %vm794, %v822, 0.0
    %835 = vadd.xlane.f32.xlu0 %v834
    %v836 = vpop.xlane.xlu0 %835
    %v837 = vsel %vm794, %v824, 0.0
    %838 = vadd.xlane.f32.xlu0 %v837
    %v839 = vpop.xlane.xlu0 %838
    %v840 = vrcp.pop %v827
    %v841 = vrcp.pop %v830
    %v842 = vrcp.pop %v833
    %v843 = vrcp.pop %v836
    %v844 = vrcp.pop %v839
    %v845 = vmul.f32 %v816, %v840
    %v846 = vmul.f32 %v818, %v841
    %v847 = vmul.f32 %v820, %v842
    %v848 = vmul.f32 %v822, %v843
    %v849 = vmul.f32 %v824, %v844
    %v850 = vmul.f32 %v641, %v668
    %v851 = vmul.f32 %v646, %v668
    %v852 = vmul.f32 %v651, %v668
    %v853 = vmul.f32 %v656, %v668
    %v854 = vmul.f32 %v661, %v668
    %vm855 = vcmp.ge.s32.totalorder %v254, 8
    %vm856 = vcmp.lt.s32.totalorder %v254, 16
    %vm857 = vmand %vm855, %vm856
    %v858 = vsel %vm857, 1, 0
    %v859 = vcvt.s32.f32 %v858
    %v860 = vmul.f32 %v439, %v859
    %v861 = vmul.f32 %v444, %v859
    %v862 = vmul.f32 %v449, %v859
    %v863 = vmul.f32 %v454, %v859
    %v864 = vmul.f32 %v459, %v859
    %v866 = vsel %vm257, %v860, 0
    %v869 = vsel %vm257, %v861, 0
    %v872 = vsel %vm257, %v862, 0
    %v875 = vsel %vm257, %v863, 0
    %v878 = vsel %vm257, %v864, 0
    %880 = vmatprep.subr.mxu0 0.0
    %881 = vmatpush1.xpose.msra.mxu0 0.0
    %882 = vmatprep.subr.mxu0 0.0
    %883 = vmatpush1.xpose.msra.mxu0 0.0
    %884 = vmatprep.subr.mxu0 0.0
    %885 = vmatpush1.xpose.msra.mxu0 0.0
    %886 = vmatprep.subr.mxu0 0.0
    %887 = vmatpush1.xpose.msra.mxu0 0.0
    %888 = vmatprep.subr.mxu0 0.0
    %889 = vmatpush1.xpose.msra.mxu0 0.0
    %890 = vmatprep.subr.mxu0 0.0
    %891 = vmatpush1.xpose.msra.mxu0 0.0
    %892 = vmatprep.subr.mxu0 0.0
    %893 = vmatpush1.xpose.msra.mxu0 0.0
    %894 = vmatprep.subr.mxu0 0.0
    %895 = vmatpush1.xpose.msra.mxu0 0.0
    %896 = vmatprep.subr.mxu0 0.0
    %897 = vmatpush1.xpose.msra.mxu0 0.0
    %898 = vmatprep.subr.mxu0 0.0
    %899 = vmatpush1.xpose.msra.mxu0 0.0
    %900 = vmatprep.subr.mxu0 0.0
    %901 = vmatpush1.xpose.msra.mxu0 0.0
    %902 = vmatprep.subr.mxu0 0.0
    %903 = vmatpush1.xpose.msra.mxu0 %v702
    %904 = vmatprep.subr.mxu0 0.0
    %905 = vmatpush1.xpose.msra.mxu0 %v699
    %906 = vmatprep.subr.mxu0 0.0
    %907 = vmatpush1.xpose.msra.mxu0 %v696
    %908 = vmatprep.subr.mxu0 0.0
    %909 = vmatpush1.xpose.msra.mxu0 %v693
    %910 = vmatprep.subr.mxu0 0.0
    %911 = vmatpush1.xpose.msra.mxu0 %v690
    %912 = vmatprep.subr.mxu0 0.0
    %913 = vmatpush2.xpose.msra.mxu0 0.0
    %914 = vmatprep.subr.mxu0 0.0
    %915 = vmatpush2.xpose.msra.mxu0 0.0
    %916 = vmatprep.subr.mxu0 0.0
    %917 = vmatpush2.xpose.msra.mxu0 0.0
    %918 = vmatprep.subr.mxu0 0.0
    %919 = vmatpush2.xpose.msra.mxu0 0.0
    %920 = vmatprep.subr.mxu0 0.0
    %921 = vmatpush2.xpose.msra.mxu0 0.0
    %922 = vmatprep.subr.mxu0 0.0
    %923 = vmatpush2.xpose.msra.mxu0 0.0
    %924 = vmatprep.subr.mxu0 0.0
    %925 = vmatpush2.xpose.msra.mxu0 0.0
    %926 = vmatprep.subr.mxu0 0.0
    %927 = vmatpush2.xpose.msra.mxu0 0.0
    %928 = vmatprep.subr.mxu0 0.0
    %929 = vmatpush2.xpose.msra.mxu0 0.0
    %930 = vmatprep.subr.mxu0 0.0
    %931 = vmatpush2.xpose.msra.mxu0 0.0
    %932 = vmatprep.subr.mxu0 0.0
    %933 = vmatpush2.xpose.msra.mxu0 0.0
    %934 = vmatprep.subr.mxu0 0.0
    %935 = vmatpush2.xpose.msra.mxu0 0.0
    %936 = vmatprep.subr.mxu0 0.0
    %937 = vmatpush2.xpose.msra.mxu0 0.0
    %938 = vmatprep.subr.mxu0 0.0
    %939 = vmatpush2.xpose.msra.mxu0 0.0
    %940 = vmatprep.subr.mxu0 0.0
    %941 = vmatpush2.xpose.msra.mxu0 0.0
    %942 = vmatprep.subr.mxu0 0.0
    %943 = vmatpush2.xpose.msra.mxu0 0.0
    %944 = vmatprep.mubr.f32.mxu0 0.0
    %945 = vmatmul.mubr.f32.gmra.mxu0 %v866
    %v946 = vpop.f32.mrf.mxu0
    %v947 = vadd.f32 %v246, %v946
    %v948 = vpop.f32.mrf.mxu0
    %949 = vmatprep.mubr.f32.mxu0 0.0
    %950 = vmatmul.mubr.f32.gmra.mxu0 %v869
    %v951 = vpop.f32.mrf.mxu0
    %v952 = vadd.f32 %v247, %v951
    %v953 = vpop.f32.mrf.mxu0
    %954 = vmatprep.mubr.f32.mxu0 0.0
    %955 = vmatmul.mubr.f32.gmra.mxu0 %v872
    %v956 = vpop.f32.mrf.mxu0
    %v957 = vadd.f32 %v248, %v956
    %v958 = vpop.f32.mrf.mxu0
    %959 = vmatprep.mubr.f32.mxu0 0.0
    %960 = vmatmul.mubr.f32.gmra.mxu0 %v875
    %v961 = vpop.f32.mrf.mxu0
    %v962 = vadd.f32 %v249, %v961
    %v963 = vpop.f32.mrf.mxu0
    %964 = vmatprep.mubr.f32.mxu0 0.0
    %965 = vmatmul.mubr.f32.gmra.mxu0 %v878
    %v966 = vpop.f32.mrf.mxu0
    %v967 = vadd.f32 %v250, %v966
    %v968 = vpop.f32.mrf.mxu0
    %969 = vdwg.mxu0
    %v970 = vsel %vm794, %v947, -inf
    %971 = vmax.xlane.f32.xlu0 %v970
    %v972 = vpop.xlane.xlu0 %971
    %v973 = vsel %vm794, %v952, -inf
    %974 = vmax.xlane.f32.xlu0 %v973
    %v975 = vpop.xlane.xlu0 %974
    %v976 = vsel %vm794, %v957, -inf
    %977 = vmax.xlane.f32.xlu0 %v976
    %v978 = vpop.xlane.xlu0 %977
    %v979 = vsel %vm794, %v962, -inf
    %980 = vmax.xlane.f32.xlu0 %v979
    %v981 = vpop.xlane.xlu0 %980
    %v982 = vsel %vm794, %v967, -inf
    %983 = vmax.xlane.f32.xlu0 %v982
    %v984 = vpop.xlane.xlu0 %983
    %v985 = vsub.f32 %v947, %v972
    %v986 = vsub.f32 %v952, %v975
    %v987 = vsub.f32 %v957, %v978
    %v988 = vsub.f32 %v962, %v981
    %v989 = vsub.f32 %v967, %v984
    %v990 = vmul.f32 %v985, 1.442695
    %v991 = vpow.pop %v990
    %v992 = vmul.f32 %v986, 1.442695
    %v993 = vpow.pop %v992
    %v994 = vmul.f32 %v987, 1.442695
    %v995 = vpow.pop %v994
    %v996 = vmul.f32 %v988, 1.442695
    %v997 = vpow.pop %v996
    %v998 = vmul.f32 %v989, 1.442695
    %v999 = vpow.pop %v998
    %v1000 = vsel %vm794, %v991, 0.0
    %1001 = vadd.xlane.f32.xlu0 %v1000
    %v1002 = vpop.xlane.xlu0 %1001
    %v1003 = vsel %vm794, %v993, 0.0
    %1004 = vadd.xlane.f32.xlu0 %v1003
    %v1005 = vpop.xlane.xlu0 %1004
    %v1006 = vsel %vm794, %v995, 0.0
    %1007 = vadd.xlane.f32.xlu0 %v1006
    %v1008 = vpop.xlane.xlu0 %1007
    %v1009 = vsel %vm794, %v997, 0.0
    %1010 = vadd.xlane.f32.xlu0 %v1009
    %v1011 = vpop.xlane.xlu0 %1010
    %v1012 = vsel %vm794, %v999, 0.0
    %1013 = vadd.xlane.f32.xlu0 %v1012
    %v1014 = vpop.xlane.xlu0 %1013
    %v1015 = vrcp.pop %v1002
    %v1016 = vrcp.pop %v1005
    %v1017 = vrcp.pop %v1008
    %v1018 = vrcp.pop %v1011
    %v1019 = vrcp.pop %v1014
    %v1020 = vmul.f32 %v991, %v1015
    %v1021 = vmul.f32 %v993, %v1016
    %v1022 = vmul.f32 %v995, %v1017
    %v1023 = vmul.f32 %v997, %v1018
    %v1024 = vmul.f32 %v999, %v1019
    %v1025 = vmul.f32 %v641, %v859
    %v1026 = vmul.f32 %v646, %v859
    %v1027 = vmul.f32 %v651, %v859
    %v1028 = vmul.f32 %v656, %v859
    %v1029 = vmul.f32 %v661, %v859
    %v1031 = vsel %vm794, %v1020, 0
    %v1034 = vsel %vm794, %v1021, 0
    %v1037 = vsel %vm794, %v1022, 0
    %v1040 = vsel %vm794, %v1023, 0
    %v1043 = vsel %vm794, %v1024, 0
    %1045 = vmatprep.subr.mxu0 0.0
    %1046 = vmatpush1.msra.mxu0 0.0
    %1047 = vmatprep.subr.mxu0 0.0
    %1048 = vmatpush1.msra.mxu0 0.0
    %1049 = vmatprep.subr.mxu0 0.0
    %1050 = vmatpush1.msra.mxu0 0.0
    %1051 = vmatprep.subr.mxu0 0.0
    %1052 = vmatpush1.msra.mxu0 0.0
    %1053 = vmatprep.subr.mxu0 0.0
    %1054 = vmatpush1.msra.mxu0 0.0
    %1055 = vmatprep.subr.mxu0 0.0
    %1056 = vmatpush1.msra.mxu0 0.0
    %1057 = vmatprep.subr.mxu0 0.0
    %1058 = vmatpush1.msra.mxu0 0.0
    %1059 = vmatprep.subr.mxu0 0.0
    %1060 = vmatpush1.msra.mxu0 0.0
    %1061 = vmatprep.subr.mxu0 0.0
    %1062 = vmatpush1.msra.mxu0 0.0
    %1063 = vmatprep.subr.mxu0 0.0
    %1064 = vmatpush1.msra.mxu0 0.0
    %1065 = vmatprep.subr.mxu0 0.0
    %1066 = vmatpush1.msra.mxu0 0.0
    %1067 = vmatprep.subr.mxu0 0.0
    %1068 = vmatpush1.msra.mxu0 %v1029
    %1069 = vmatprep.subr.mxu0 0.0
    %1070 = vmatpush1.msra.mxu0 %v1028
    %1071 = vmatprep.subr.mxu0 0.0
    %1072 = vmatpush1.msra.mxu0 %v1027
    %1073 = vmatprep.subr.mxu0 0.0
    %1074 = vmatpush1.msra.mxu0 %v1026
    %1075 = vmatprep.subr.mxu0 0.0
    %1076 = vmatpush1.msra.mxu0 %v1025
    %1077 = vmatprep.subr.mxu0 0.0
    %1078 = vmatpush2.msra.mxu0 0.0
    %1079 = vmatprep.subr.mxu0 0.0
    %1080 = vmatpush2.msra.mxu0 0.0
    %1081 = vmatprep.subr.mxu0 0.0
    %1082 = vmatpush2.msra.mxu0 0.0
    %1083 = vmatprep.subr.mxu0 0.0
    %1084 = vmatpush2.msra.mxu0 0.0
    %1085 = vmatprep.subr.mxu0 0.0
    %1086 = vmatpush2.msra.mxu0 0.0
    %1087 = vmatprep.subr.mxu0 0.0
    %1088 = vmatpush2.msra.mxu0 0.0
    %1089 = vmatprep.subr.mxu0 0.0
    %1090 = vmatpush2.msra.mxu0 0.0
    %1091 = vmatprep.subr.mxu0 0.0
    %1092 = vmatpush2.msra.mxu0 0.0
    %1093 = vmatprep.subr.mxu0 0.0
    %1094 = vmatpush2.msra.mxu0 0.0
    %1095 = vmatprep.subr.mxu0 0.0
    %1096 = vmatpush2.msra.mxu0 0.0
    %1097 = vmatprep.subr.mxu0 0.0
    %1098 = vmatpush2.msra.mxu0 0.0
    %1099 = vmatprep.subr.mxu0 0.0
    %1100 = vmatpush2.msra.mxu0 0.0
    %1101 = vmatprep.subr.mxu0 0.0
    %1102 = vmatpush2.msra.mxu0 0.0
    %1103 = vmatprep.subr.mxu0 0.0
    %1104 = vmatpush2.msra.mxu0 0.0
    %1105 = vmatprep.subr.mxu0 0.0
    %1106 = vmatpush2.msra.mxu0 0.0
    %1107 = vmatprep.subr.mxu0 0.0
    %1108 = vmatpush2.msra.mxu0 0.0
    %1109 = vmatprep.mubr.f32.mxu0 0.0
    %1110 = vmatmul.mubr.f32.gmra.mxu0 %v1031
    %v1111 = vpop.f32.mrf.mxu0
    %v1112 = vadd.f32 0.0, %v1111
    %v1113 = vpop.f32.mrf.mxu0
    %1114 = vmatprep.mubr.f32.mxu0 0.0
    %1115 = vmatmul.mubr.f32.gmra.mxu0 %v1034
    %v1116 = vpop.f32.mrf.mxu0
    %v1117 = vadd.f32 0.0, %v1116
    %v1118 = vpop.f32.mrf.mxu0
    %1119 = vmatprep.mubr.f32.mxu0 0.0
    %1120 = vmatmul.mubr.f32.gmra.mxu0 %v1037
    %v1121 = vpop.f32.mrf.mxu0
    %v1122 = vadd.f32 0.0, %v1121
    %v1123 = vpop.f32.mrf.mxu0
    %1124 = vmatprep.mubr.f32.mxu0 0.0
    %1125 = vmatmul.mubr.f32.gmra.mxu0 %v1040
    %v1126 = vpop.f32.mrf.mxu0
    %v1127 = vadd.f32 0.0, %v1126
    %v1128 = vpop.f32.mrf.mxu0
    %1129 = vmatprep.mubr.f32.mxu0 0.0
    %1130 = vmatmul.mubr.f32.gmra.mxu0 %v1043
    %v1131 = vpop.f32.mrf.mxu0
    %v1132 = vadd.f32 0.0, %v1131
    %v1133 = vpop.f32.mrf.mxu0
    %1134 = vdwg.mxu0
    %v1136 = vsel %vm794, %v845, 0
    %v1139 = vsel %vm794, %v846, 0
    %v1142 = vsel %vm794, %v847, 0
    %v1145 = vsel %vm794, %v848, 0
    %v1148 = vsel %vm794, %v849, 0
    %1150 = vmatprep.subr.mxu0 0.0
    %1151 = vmatpush1.msra.mxu0 0.0
    %1152 = vmatprep.subr.mxu0 0.0
    %1153 = vmatpush1.msra.mxu0 0.0
    %1154 = vmatprep.subr.mxu0 0.0
    %1155 = vmatpush1.msra.mxu0 0.0
    %1156 = vmatprep.subr.mxu0 0.0
    %1157 = vmatpush1.msra.mxu0 0.0
    %1158 = vmatprep.subr.mxu0 0.0
    %1159 = vmatpush1.msra.mxu0 0.0
    %1160 = vmatprep.subr.mxu0 0.0
    %1161 = vmatpush1.msra.mxu0 0.0
    %1162 = vmatprep.subr.mxu0 0.0
    %1163 = vmatpush1.msra.mxu0 0.0
    %1164 = vmatprep.subr.mxu0 0.0
    %1165 = vmatpush1.msra.mxu0 0.0
    %1166 = vmatprep.subr.mxu0 0.0
    %1167 = vmatpush1.msra.mxu0 0.0
    %1168 = vmatprep.subr.mxu0 0.0
    %1169 = vmatpush1.msra.mxu0 0.0
    %1170 = vmatprep.subr.mxu0 0.0
    %1171 = vmatpush1.msra.mxu0 0.0
    %1172 = vmatprep.subr.mxu0 0.0
    %1173 = vmatpush1.msra.mxu0 %v854
    %1174 = vmatprep.subr.mxu0 0.0
    %1175 = vmatpush1.msra.mxu0 %v853
    %1176 = vmatprep.subr.mxu0 0.0
    %1177 = vmatpush1.msra.mxu0 %v852
    %1178 = vmatprep.subr.mxu0 0.0
    %1179 = vmatpush1.msra.mxu0 %v851
    %1180 = vmatprep.subr.mxu0 0.0
    %1181 = vmatpush1.msra.mxu0 %v850
    %1182 = vmatprep.subr.mxu0 0.0
    %1183 = vmatpush2.msra.mxu0 0.0
    %1184 = vmatprep.subr.mxu0 0.0
    %1185 = vmatpush2.msra.mxu0 0.0
    %1186 = vmatprep.subr.mxu0 0.0
    %1187 = vmatpush2.msra.mxu0 0.0
    %1188 = vmatprep.subr.mxu0 0.0
    %1189 = vmatpush2.msra.mxu0 0.0
    %1190 = vmatprep.subr.mxu0 0.0
    %1191 = vmatpush2.msra.mxu0 0.0
    %1192 = vmatprep.subr.mxu0 0.0
    %1193 = vmatpush2.msra.mxu0 0.0
    %1194 = vmatprep.subr.mxu0 0.0
    %1195 = vmatpush2.msra.mxu0 0.0
    %1196 = vmatprep.subr.mxu0 0.0
    %1197 = vmatpush2.msra.mxu0 0.0
    %1198 = vmatprep.subr.mxu0 0.0
    %1199 = vmatpush2.msra.mxu0 0.0
    %1200 = vmatprep.subr.mxu0 0.0
    %1201 = vmatpush2.msra.mxu0 0.0
    %1202 = vmatprep.subr.mxu0 0.0
    %1203 = vmatpush2.msra.mxu0 0.0
    %1204 = vmatprep.subr.mxu0 0.0
    %1205 = vmatpush2.msra.mxu0 0.0
    %1206 = vmatprep.subr.mxu0 0.0
    %1207 = vmatpush2.msra.mxu0 0.0
    %1208 = vmatprep.subr.mxu0 0.0
    %1209 = vmatpush2.msra.mxu0 0.0
    %1210 = vmatprep.subr.mxu0 0.0
    %1211 = vmatpush2.msra.mxu0 0.0
    %1212 = vmatprep.subr.mxu0 0.0
    %1213 = vmatpush2.msra.mxu0 0.0
    %1214 = vmatprep.mubr.f32.mxu0 0.0
    %1215 = vmatmul.mubr.f32.gmra.mxu0 %v1136
    %v1216 = vpop.f32.mrf.mxu0
    %v1217 = vadd.f32 %v1112, %v1216
    %v1218 = vpop.f32.mrf.mxu0
    %1219 = vmatprep.mubr.f32.mxu0 0.0
    %1220 = vmatmul.mubr.f32.gmra.mxu0 %v1139
    %v1221 = vpop.f32.mrf.mxu0
    %v1222 = vadd.f32 %v1117, %v1221
    %v1223 = vpop.f32.mrf.mxu0
    %1224 = vmatprep.mubr.f32.mxu0 0.0
    %1225 = vmatmul.mubr.f32.gmra.mxu0 %v1142
    %v1226 = vpop.f32.mrf.mxu0
    %v1227 = vadd.f32 %v1122, %v1226
    %v1228 = vpop.f32.mrf.mxu0
    %1229 = vmatprep.mubr.f32.mxu0 0.0
    %1230 = vmatmul.mubr.f32.gmra.mxu0 %v1145
    %v1231 = vpop.f32.mrf.mxu0
    %v1232 = vadd.f32 %v1127, %v1231
    %v1233 = vpop.f32.mrf.mxu0
    %1234 = vmatprep.mubr.f32.mxu0 0.0
    %1235 = vmatmul.mubr.f32.gmra.mxu0 %v1148
    %v1236 = vpop.f32.mrf.mxu0
    %v1237 = vadd.f32 %v1132, %v1236
    %v1238 = vpop.f32.mrf.mxu0
    %1239 = vdwg.mxu0
    %vm1240 = vcmp.ge.s32.totalorder %v254, 16
    %vm1241 = vcmp.lt.s32.totalorder %v254, 24
    %vm1242 = vmand %vm1240, %vm1241
    %v1243 = vsel %vm1242, 1, 0
    %v1244 = vcvt.s32.f32 %v1243
    %v1245 = vmul.f32 %v439, %v1244
    %v1246 = vmul.f32 %v444, %v1244
    %v1247 = vmul.f32 %v449, %v1244
    %v1248 = vmul.f32 %v454, %v1244
    %v1249 = vmul.f32 %v459, %v1244
    %v1251 = vsel %vm257, %v1245, 0
    %v1254 = vsel %vm257, %v1246, 0
    %v1257 = vsel %vm257, %v1247, 0
    %v1260 = vsel %vm257, %v1248, 0
    %v1263 = vsel %vm257, %v1249, 0
    %1265 = vmatprep.subr.mxu0 0.0
    %1266 = vmatpush1.xpose.msra.mxu0 0.0
    %1267 = vmatprep.subr.mxu0 0.0
    %1268 = vmatpush1.xpose.msra.mxu0 0.0
    %1269 = vmatprep.subr.mxu0 0.0
    %1270 = vmatpush1.xpose.msra.mxu0 0.0
    %1271 = vmatprep.subr.mxu0 0.0
    %1272 = vmatpush1.xpose.msra.mxu0 0.0
    %1273 = vmatprep.subr.mxu0 0.0
    %1274 = vmatpush1.xpose.msra.mxu0 0.0
    %1275 = vmatprep.subr.mxu0 0.0
    %1276 = vmatpush1.xpose.msra.mxu0 0.0
    %1277 = vmatprep.subr.mxu0 0.0
    %1278 = vmatpush1.xpose.msra.mxu0 0.0
    %1279 = vmatprep.subr.mxu0 0.0
    %1280 = vmatpush1.xpose.msra.mxu0 0.0
    %1281 = vmatprep.subr.mxu0 0.0
    %1282 = vmatpush1.xpose.msra.mxu0 0.0
    %1283 = vmatprep.subr.mxu0 0.0
    %1284 = vmatpush1.xpose.msra.mxu0 0.0
    %1285 = vmatprep.subr.mxu0 0.0
    %1286 = vmatpush1.xpose.msra.mxu0 0.0
    %1287 = vmatprep.subr.mxu0 0.0
    %1288 = vmatpush1.xpose.msra.mxu0 %v702
    %1289 = vmatprep.subr.mxu0 0.0
    %1290 = vmatpush1.xpose.msra.mxu0 %v699
    %1291 = vmatprep.subr.mxu0 0.0
    %1292 = vmatpush1.xpose.msra.mxu0 %v696
    %1293 = vmatprep.subr.mxu0 0.0
    %1294 = vmatpush1.xpose.msra.mxu0 %v693
    %1295 = vmatprep.subr.mxu0 0.0
    %1296 = vmatpush1.xpose.msra.mxu0 %v690
    %1297 = vmatprep.subr.mxu0 0.0
    %1298 = vmatpush2.xpose.msra.mxu0 0.0
    %1299 = vmatprep.subr.mxu0 0.0
    %1300 = vmatpush2.xpose.msra.mxu0 0.0
    %1301 = vmatprep.subr.mxu0 0.0
    %1302 = vmatpush2.xpose.msra.mxu0 0.0
    %1303 = vmatprep.subr.mxu0 0.0
    %1304 = vmatpush2.xpose.msra.mxu0 0.0
    %1305 = vmatprep.subr.mxu0 0.0
    %1306 = vmatpush2.xpose.msra.mxu0 0.0
    %1307 = vmatprep.subr.mxu0 0.0
    %1308 = vmatpush2.xpose.msra.mxu0 0.0
    %1309 = vmatprep.subr.mxu0 0.0
    %1310 = vmatpush2.xpose.msra.mxu0 0.0
    %1311 = vmatprep.subr.mxu0 0.0
    %1312 = vmatpush2.xpose.msra.mxu0 0.0
    %1313 = vmatprep.subr.mxu0 0.0
    %1314 = vmatpush2.xpose.msra.mxu0 0.0
    %1315 = vmatprep.subr.mxu0 0.0
    %1316 = vmatpush2.xpose.msra.mxu0 0.0
    %1317 = vmatprep.subr.mxu0 0.0
    %1318 = vmatpush2.xpose.msra.mxu0 0.0
    %1319 = vmatprep.subr.mxu0 0.0
    %1320 = vmatpush2.xpose.msra.mxu0 0.0
    %1321 = vmatprep.subr.mxu0 0.0
    %1322 = vmatpush2.xpose.msra.mxu0 0.0
    %1323 = vmatprep.subr.mxu0 0.0
    %1324 = vmatpush2.xpose.msra.mxu0 0.0
    %1325 = vmatprep.subr.mxu0 0.0
    %1326 = vmatpush2.xpose.msra.mxu0 0.0
    %1327 = vmatprep.subr.mxu0 0.0
    %1328 = vmatpush2.xpose.msra.mxu0 0.0
    %1329 = vmatprep.mubr.f32.mxu0 0.0
    %1330 = vmatmul.mubr.f32.gmra.mxu0 %v1251
    %v1331 = vpop.f32.mrf.mxu0
    %v1332 = vadd.f32 %v246, %v1331
    %v1333 = vpop.f32.mrf.mxu0
    %1334 = vmatprep.mubr.f32.mxu0 0.0
    %1335 = vmatmul.mubr.f32.gmra.mxu0 %v1254
    %v1336 = vpop.f32.mrf.mxu0
    %v1337 = vadd.f32 %v247, %v1336
    %v1338 = vpop.f32.mrf.mxu0
    %1339 = vmatprep.mubr.f32.mxu0 0.0
    %1340 = vmatmul.mubr.f32.gmra.mxu0 %v1257
    %v1341 = vpop.f32.mrf.mxu0
    %v1342 = vadd.f32 %v248, %v1341
    %v1343 = vpop.f32.mrf.mxu0
    %1344 = vmatprep.mubr.f32.mxu0 0.0
    %1345 = vmatmul.mubr.f32.gmra.mxu0 %v1260
    %v1346 = vpop.f32.mrf.mxu0
    %v1347 = vadd.f32 %v249, %v1346
    %v1348 = vpop.f32.mrf.mxu0
    %1349 = vmatprep.mubr.f32.mxu0 0.0
    %1350 = vmatmul.mubr.f32.gmra.mxu0 %v1263
    %v1351 = vpop.f32.mrf.mxu0
    %v1352 = vadd.f32 %v250, %v1351
    %v1353 = vpop.f32.mrf.mxu0
    %1354 = vdwg.mxu0
    %v1355 = vsel %vm794, %v1332, -inf
    %1356 = vmax.xlane.f32.xlu0 %v1355
    %v1357 = vpop.xlane.xlu0 %1356
    %v1358 = vsel %vm794, %v1337, -inf
    %1359 = vmax.xlane.f32.xlu0 %v1358
    %v1360 = vpop.xlane.xlu0 %1359
    %v1361 = vsel %vm794, %v1342, -inf
    %1362 = vmax.xlane.f32.xlu0 %v1361
    %v1363 = vpop.xlane.xlu0 %1362
    %v1364 = vsel %vm794, %v1347, -inf
    %1365 = vmax.xlane.f32.xlu0 %v1364
    %v1366 = vpop.xlane.xlu0 %1365
    %v1367 = vsel %vm794, %v1352, -inf
    %1368 = vmax.xlane.f32.xlu0 %v1367
    %v1369 = vpop.xlane.xlu0 %1368
    %v1370 = vsub.f32 %v1332, %v1357
    %v1371 = vsub.f32 %v1337, %v1360
    %v1372 = vsub.f32 %v1342, %v1363
    %v1373 = vsub.f32 %v1347, %v1366
    %v1374 = vsub.f32 %v1352, %v1369
    %v1375 = vmul.f32 %v1370, 1.442695
    %v1376 = vpow.pop %v1375
    %v1377 = vmul.f32 %v1371, 1.442695
    %v1378 = vpow.pop %v1377
    %v1379 = vmul.f32 %v1372, 1.442695
    %v1380 = vpow.pop %v1379
    %v1381 = vmul.f32 %v1373, 1.442695
    %v1382 = vpow.pop %v1381
    %v1383 = vmul.f32 %v1374, 1.442695
    %v1384 = vpow.pop %v1383
    %v1385 = vsel %vm794, %v1376, 0.0
    %1386 = vadd.xlane.f32.xlu0 %v1385
    %v1387 = vpop.xlane.xlu0 %1386
    %v1388 = vsel %vm794, %v1378, 0.0
    %1389 = vadd.xlane.f32.xlu0 %v1388
    %v1390 = vpop.xlane.xlu0 %1389
    %v1391 = vsel %vm794, %v1380, 0.0
    %1392 = vadd.xlane.f32.xlu0 %v1391
    %v1393 = vpop.xlane.xlu0 %1392
    %v1394 = vsel %vm794, %v1382, 0.0
    %1395 = vadd.xlane.f32.xlu0 %v1394
    %v1396 = vpop.xlane.xlu0 %1395
    %v1397 = vsel %vm794, %v1384, 0.0
    %1398 = vadd.xlane.f32.xlu0 %v1397
    %v1399 = vpop.xlane.xlu0 %1398
    %v1400 = vrcp.pop %v1387
    %v1401 = vrcp.pop %v1390
    %v1402 = vrcp.pop %v1393
    %v1403 = vrcp.pop %v1396
    %v1404 = vrcp.pop %v1399
    %v1405 = vmul.f32 %v1376, %v1400
    %v1406 = vmul.f32 %v1378, %v1401
    %v1407 = vmul.f32 %v1380, %v1402
    %v1408 = vmul.f32 %v1382, %v1403
    %v1409 = vmul.f32 %v1384, %v1404
    %v1410 = vmul.f32 %v641, %v1244
    %v1411 = vmul.f32 %v646, %v1244
    %v1412 = vmul.f32 %v651, %v1244
    %v1413 = vmul.f32 %v656, %v1244
    %v1414 = vmul.f32 %v661, %v1244
    %v1416 = vsel %vm794, %v1405, 0
    %v1419 = vsel %vm794, %v1406, 0
    %v1422 = vsel %vm794, %v1407, 0
    %v1425 = vsel %vm794, %v1408, 0
    %v1428 = vsel %vm794, %v1409, 0
    %1430 = vmatprep.subr.mxu0 0.0
    %1431 = vmatpush1.msra.mxu0 0.0
    %1432 = vmatprep.subr.mxu0 0.0
    %1433 = vmatpush1.msra.mxu0 0.0
    %1434 = vmatprep.subr.mxu0 0.0
    %1435 = vmatpush1.msra.mxu0 0.0
    %1436 = vmatprep.subr.mxu0 0.0
    %1437 = vmatpush1.msra.mxu0 0.0
    %1438 = vmatprep.subr.mxu0 0.0
    %1439 = vmatpush1.msra.mxu0 0.0
    %1440 = vmatprep.subr.mxu0 0.0
    %1441 = vmatpush1.msra.mxu0 0.0
    %1442 = vmatprep.subr.mxu0 0.0
    %1443 = vmatpush1.msra.mxu0 0.0
    %1444 = vmatprep.subr.mxu0 0.0
    %1445 = vmatpush1.msra.mxu0 0.0
    %1446 = vmatprep.subr.mxu0 0.0
    %1447 = vmatpush1.msra.mxu0 0.0
    %1448 = vmatprep.subr.mxu0 0.0
    %1449 = vmatpush1.msra.mxu0 0.0
    %1450 = vmatprep.subr.mxu0 0.0
    %1451 = vmatpush1.msra.mxu0 0.0
    %1452 = vmatprep.subr.mxu0 0.0
    %1453 = vmatpush1.msra.mxu0 %v1414
    %1454 = vmatprep.subr.mxu0 0.0
    %1455 = vmatpush1.msra.mxu0 %v1413
    %1456 = vmatprep.subr.mxu0 0.0
    %1457 = vmatpush1.msra.mxu0 %v1412
    %1458 = vmatprep.subr.mxu0 0.0
    %1459 = vmatpush1.msra.mxu0 %v1411
    %1460 = vmatprep.subr.mxu0 0.0
    %1461 = vmatpush1.msra.mxu0 %v1410
    %1462 = vmatprep.subr.mxu0 0.0
    %1463 = vmatpush2.msra.mxu0 0.0
    %1464 = vmatprep.subr.mxu0 0.0
    %1465 = vmatpush2.msra.mxu0 0.0
    %1466 = vmatprep.subr.mxu0 0.0
    %1467 = vmatpush2.msra.mxu0 0.0
    %1468 = vmatprep.subr.mxu0 0.0
    %1469 = vmatpush2.msra.mxu0 0.0
    %1470 = vmatprep.subr.mxu0 0.0
    %1471 = vmatpush2.msra.mxu0 0.0
    %1472 = vmatprep.subr.mxu0 0.0
    %1473 = vmatpush2.msra.mxu0 0.0
    %1474 = vmatprep.subr.mxu0 0.0
    %1475 = vmatpush2.msra.mxu0 0.0
    %1476 = vmatprep.subr.mxu0 0.0
    %1477 = vmatpush2.msra.mxu0 0.0
    %1478 = vmatprep.subr.mxu0 0.0
    %1479 = vmatpush2.msra.mxu0 0.0
    %1480 = vmatprep.subr.mxu0 0.0
    %1481 = vmatpush2.msra.mxu0 0.0
    %1482 = vmatprep.subr.mxu0 0.0
    %1483 = vmatpush2.msra.mxu0 0.0
    %1484 = vmatprep.subr.mxu0 0.0
    %1485 = vmatpush2.msra.mxu0 0.0
    %1486 = vmatprep.subr.mxu0 0.0
    %1487 = vmatpush2.msra.mxu0 0.0
    %1488 = vmatprep.subr.mxu0 0.0
    %1489 = vmatpush2.msra.mxu0 0.0
    %1490 = vmatprep.subr.mxu0 0.0
    %1491 = vmatpush2.msra.mxu0 0.0
    %1492 = vmatprep.subr.mxu0 0.0
    %1493 = vmatpush2.msra.mxu0 0.0
    %1494 = vmatprep.mubr.f32.mxu0 0.0
    %1495 = vmatmul.mubr.f32.gmra.mxu0 %v1416
    %v1496 = vpop.f32.mrf.mxu0
    %v1497 = vadd.f32 0.0, %v1496
    %v1498 = vpop.f32.mrf.mxu0
    %1499 = vmatprep.mubr.f32.mxu0 0.0
    %1500 = vmatmul.mubr.f32.gmra.mxu0 %v1419
    %v1501 = vpop.f32.mrf.mxu0
    %v1502 = vadd.f32 0.0, %v1501
    %v1503 = vpop.f32.mrf.mxu0
    %1504 = vmatprep.mubr.f32.mxu0 0.0
    %1505 = vmatmul.mubr.f32.gmra.mxu0 %v1422
    %v1506 = vpop.f32.mrf.mxu0
    %v1507 = vadd.f32 0.0, %v1506
    %v1508 = vpop.f32.mrf.mxu0
    %1509 = vmatprep.mubr.f32.mxu0 0.0
    %1510 = vmatmul.mubr.f32.gmra.mxu0 %v1425
    %v1511 = vpop.f32.mrf.mxu0
    %v1512 = vadd.f32 0.0, %v1511
    %v1513 = vpop.f32.mrf.mxu0
    %1514 = vmatprep.mubr.f32.mxu0 0.0
    %1515 = vmatmul.mubr.f32.gmra.mxu0 %v1428
    %v1516 = vpop.f32.mrf.mxu0
    %v1517 = vadd.f32 0.0, %v1516
    %v1518 = vpop.f32.mrf.mxu0
    %1519 = vdwg.mxu0
    %v1520 = vadd.f32 %v1217, %v1497
    %v1521 = vadd.f32 %v1222, %v1502
    %v1522 = vadd.f32 %v1227, %v1507
    %v1523 = vadd.f32 %v1232, %v1512
    %v1524 = vadd.f32 %v1237, %v1517
    %vm1525 = vcmp.ge.s32.totalorder %v254, 24
    %vm1526 = vcmp.lt.s32.totalorder %v254, 32
    %vm1527 = vmand %vm1525, %vm1526
    %v1528 = vsel %vm1527, 1, 0
    %v1529 = vcvt.s32.f32 %v1528
    %v1530 = vmul.f32 %v439, %v1529
    %v1531 = vmul.f32 %v444, %v1529
    %v1532 = vmul.f32 %v449, %v1529
    %v1533 = vmul.f32 %v454, %v1529
    %v1534 = vmul.f32 %v459, %v1529
    %v1536 = vsel %vm257, %v1530, 0
    %v1539 = vsel %vm257, %v1531, 0
    %v1542 = vsel %vm257, %v1532, 0
    %v1545 = vsel %vm257, %v1533, 0
    %v1548 = vsel %vm257, %v1534, 0
    %1550 = vmatprep.subr.mxu0 0.0
    %1551 = vmatpush1.xpose.msra.mxu0 0.0
    %1552 = vmatprep.subr.mxu0 0.0
    %1553 = vmatpush1.xpose.msra.mxu0 0.0
    %1554 = vmatprep.subr.mxu0 0.0
    %1555 = vmatpush1.xpose.msra.mxu0 0.0
    %1556 = vmatprep.subr.mxu0 0.0
    %1557 = vmatpush1.xpose.msra.mxu0 0.0
    %1558 = vmatprep.subr.mxu0 0.0
    %1559 = vmatpush1.xpose.msra.mxu0 0.0
    %1560 = vmatprep.subr.mxu0 0.0
    %1561 = vmatpush1.xpose.msra.mxu0 0.0
    %1562 = vmatprep.subr.mxu0 0.0
    %1563 = vmatpush1.xpose.msra.mxu0 0.0
    %1564 = vmatprep.subr.mxu0 0.0
    %1565 = vmatpush1.xpose.msra.mxu0 0.0
    %1566 = vmatprep.subr.mxu0 0.0
    %1567 = vmatpush1.xpose.msra.mxu0 0.0
    %1568 = vmatprep.subr.mxu0 0.0
    %1569 = vmatpush1.xpose.msra.mxu0 0.0
    %1570 = vmatprep.subr.mxu0 0.0
    %1571 = vmatpush1.xpose.msra.mxu0 0.0
    %1572 = vmatprep.subr.mxu0 0.0
    %1573 = vmatpush1.xpose.msra.mxu0 %v702
    %1574 = vmatprep.subr.mxu0 0.0
    %1575 = vmatpush1.xpose.msra.mxu0 %v699
    %1576 = vmatprep.subr.mxu0 0.0
    %1577 = vmatpush1.xpose.msra.mxu0 %v696
    %1578 = vmatprep.subr.mxu0 0.0
    %1579 = vmatpush1.xpose.msra.mxu0 %v693
    %1580 = vmatprep.subr.mxu0 0.0
    %1581 = vmatpush1.xpose.msra.mxu0 %v690
    %1582 = vmatprep.subr.mxu0 0.0
    %1583 = vmatpush2.xpose.msra.mxu0 0.0
    %1584 = vmatprep.subr.mxu0 0.0
    %1585 = vmatpush2.xpose.msra.mxu0 0.0
    %1586 = vmatprep.subr.mxu0 0.0
    %1587 = vmatpush2.xpose.msra.mxu0 0.0
    %1588 = vmatprep.subr.mxu0 0.0
    %1589 = vmatpush2.xpose.msra.mxu0 0.0
    %1590 = vmatprep.subr.mxu0 0.0
    %1591 = vmatpush2.xpose.msra.mxu0 0.0
    %1592 = vmatprep.subr.mxu0 0.0
    %1593 = vmatpush2.xpose.msra.mxu0 0.0
    %1594 = vmatprep.subr.mxu0 0.0
    %1595 = vmatpush2.xpose.msra.mxu0 0.0
    %1596 = vmatprep.subr.mxu0 0.0
    %1597 = vmatpush2.xpose.msra.mxu0 0.0
    %1598 = vmatprep.subr.mxu0 0.0
    %1599 = vmatpush2.xpose.msra.mxu0 0.0
    %1600 = vmatprep.subr.mxu0 0.0
    %1601 = vmatpush2.xpose.msra.mxu0 0.0
    %1602 = vmatprep.subr.mxu0 0.0
    %1603 = vmatpush2.xpose.msra.mxu0 0.0
    %1604 = vmatprep.subr.mxu0 0.0
    %1605 = vmatpush2.xpose.msra.mxu0 0.0
    %1606 = vmatprep.subr.mxu0 0.0
    %1607 = vmatpush2.xpose.msra.mxu0 0.0
    %1608 = vmatprep.subr.mxu0 0.0
    %1609 = vmatpush2.xpose.msra.mxu0 0.0
    %1610 = vmatprep.subr.mxu0 0.0
    %1611 = vmatpush2.xpose.msra.mxu0 0.0
    %1612 = vmatprep.subr.mxu0 0.0
    %1613 = vmatpush2.xpose.msra.mxu0 0.0
    %1614 = vmatprep.mubr.f32.mxu0 0.0
    %1615 = vmatmul.mubr.f32.gmra.mxu0 %v1536
    %v1616 = vpop.f32.mrf.mxu0
    %v1617 = vadd.f32 %v246, %v1616
    %v1618 = vpop.f32.mrf.mxu0
    %1619 = vmatprep.mubr.f32.mxu0 0.0
    %1620 = vmatmul.mubr.f32.gmra.mxu0 %v1539
    %v1621 = vpop.f32.mrf.mxu0
    %v1622 = vadd.f32 %v247, %v1621
    %v1623 = vpop.f32.mrf.mxu0
    %1624 = vmatprep.mubr.f32.mxu0 0.0
    %1625 = vmatmul.mubr.f32.gmra.mxu0 %v1542
    %v1626 = vpop.f32.mrf.mxu0
    %v1627 = vadd.f32 %v248, %v1626
    %v1628 = vpop.f32.mrf.mxu0
    %1629 = vmatprep.mubr.f32.mxu0 0.0
    %1630 = vmatmul.mubr.f32.gmra.mxu0 %v1545
    %v1631 = vpop.f32.mrf.mxu0
    %v1632 = vadd.f32 %v249, %v1631
    %v1633 = vpop.f32.mrf.mxu0
    %1634 = vmatprep.mubr.f32.mxu0 0.0
    %1635 = vmatmul.mubr.f32.gmra.mxu0 %v1548
    %v1636 = vpop.f32.mrf.mxu0
    %v1637 = vadd.f32 %v250, %v1636
    %v1638 = vpop.f32.mrf.mxu0
    %1639 = vdwg.mxu0
    %v1640 = vsel %vm794, %v1617, -inf
    %1641 = vmax.xlane.f32.xlu0 %v1640
    %v1642 = vpop.xlane.xlu0 %1641
    %v1643 = vsel %vm794, %v1622, -inf
    %1644 = vmax.xlane.f32.xlu0 %v1643
    %v1645 = vpop.xlane.xlu0 %1644
    %v1646 = vsel %vm794, %v1627, -inf
    %1647 = vmax.xlane.f32.xlu0 %v1646
    %v1648 = vpop.xlane.xlu0 %1647
    %v1649 = vsel %vm794, %v1632, -inf
    %1650 = vmax.xlane.f32.xlu0 %v1649
    %v1651 = vpop.xlane.xlu0 %1650
    %v1652 = vsel %vm794, %v1637, -inf
    %1653 = vmax.xlane.f32.xlu0 %v1652
    %v1654 = vpop.xlane.xlu0 %1653
    %v1655 = vsub.f32 %v1617, %v1642
    %v1656 = vsub.f32 %v1622, %v1645
    %v1657 = vsub.f32 %v1627, %v1648
    %v1658 = vsub.f32 %v1632, %v1651
    %v1659 = vsub.f32 %v1637, %v1654
    %v1660 = vmul.f32 %v1655, 1.442695
    %v1661 = vpow.pop %v1660
    %v1662 = vmul.f32 %v1656, 1.442695
    %v1663 = vpow.pop %v1662
    %v1664 = vmul.f32 %v1657, 1.442695
    %v1665 = vpow.pop %v1664
    %v1666 = vmul.f32 %v1658, 1.442695
    %v1667 = vpow.pop %v1666
    %v1668 = vmul.f32 %v1659, 1.442695
    %v1669 = vpow.pop %v1668
    %v1670 = vsel %vm794, %v1661, 0.0
    %1671 = vadd.xlane.f32.xlu0 %v1670
    %v1672 = vpop.xlane.xlu0 %1671
    %v1673 = vsel %vm794, %v1663, 0.0
    %1674 = vadd.xlane.f32.xlu0 %v1673
    %v1675 = vpop.xlane.xlu0 %1674
    %v1676 = vsel %vm794, %v1665, 0.0
    %1677 = vadd.xlane.f32.xlu0 %v1676
    %v1678 = vpop.xlane.xlu0 %1677
    %v1679 = vsel %vm794, %v1667, 0.0
    %1680 = vadd.xlane.f32.xlu0 %v1679
    %v1681 = vpop.xlane.xlu0 %1680
    %v1682 = vsel %vm794, %v1669, 0.0
    %1683 = vadd.xlane.f32.xlu0 %v1682
    %v1684 = vpop.xlane.xlu0 %1683
    %v1685 = vrcp.pop %v1672
    %v1686 = vrcp.pop %v1675
    %v1687 = vrcp.pop %v1678
    %v1688 = vrcp.pop %v1681
    %v1689 = vrcp.pop %v1684
    %v1690 = vmul.f32 %v1661, %v1685
    %v1691 = vmul.f32 %v1663, %v1686
    %v1692 = vmul.f32 %v1665, %v1687
    %v1693 = vmul.f32 %v1667, %v1688
    %v1694 = vmul.f32 %v1669, %v1689
    %v1695 = vmul.f32 %v641, %v1529
    %v1696 = vmul.f32 %v646, %v1529
    %v1697 = vmul.f32 %v651, %v1529
    %v1698 = vmul.f32 %v656, %v1529
    %v1699 = vmul.f32 %v661, %v1529
    %v1701 = vsel %vm794, %v1690, 0
    %v1704 = vsel %vm794, %v1691, 0
    %v1707 = vsel %vm794, %v1692, 0
    %v1710 = vsel %vm794, %v1693, 0
    %v1713 = vsel %vm794, %v1694, 0
    %1715 = vmatprep.subr.mxu0 0.0
    %1716 = vmatpush1.msra.mxu0 0.0
    %1717 = vmatprep.subr.mxu0 0.0
    %1718 = vmatpush1.msra.mxu0 0.0
    %1719 = vmatprep.subr.mxu0 0.0
    %1720 = vmatpush1.msra.mxu0 0.0
    %1721 = vmatprep.subr.mxu0 0.0
    %1722 = vmatpush1.msra.mxu0 0.0
    %1723 = vmatprep.subr.mxu0 0.0
    %1724 = vmatpush1.msra.mxu0 0.0
    %1725 = vmatprep.subr.mxu0 0.0
    %1726 = vmatpush1.msra.mxu0 0.0
    %1727 = vmatprep.subr.mxu0 0.0
    %1728 = vmatpush1.msra.mxu0 0.0
    %1729 = vmatprep.subr.mxu0 0.0
    %1730 = vmatpush1.msra.mxu0 0.0
    %1731 = vmatprep.subr.mxu0 0.0
    %1732 = vmatpush1.msra.mxu0 0.0
    %1733 = vmatprep.subr.mxu0 0.0
    %1734 = vmatpush1.msra.mxu0 0.0
    %1735 = vmatprep.subr.mxu0 0.0
    %1736 = vmatpush1.msra.mxu0 0.0
    %1737 = vmatprep.subr.mxu0 0.0
    %1738 = vmatpush1.msra.mxu0 %v1699
    %1739 = vmatprep.subr.mxu0 0.0
    %1740 = vmatpush1.msra.mxu0 %v1698
    %1741 = vmatprep.subr.mxu0 0.0
    %1742 = vmatpush1.msra.mxu0 %v1697
    %1743 = vmatprep.subr.mxu0 0.0
    %1744 = vmatpush1.msra.mxu0 %v1696
    %1745 = vmatprep.subr.mxu0 0.0
    %1746 = vmatpush1.msra.mxu0 %v1695
    %1747 = vmatprep.subr.mxu0 0.0
    %1748 = vmatpush2.msra.mxu0 0.0
    %1749 = vmatprep.subr.mxu0 0.0
    %1750 = vmatpush2.msra.mxu0 0.0
    %1751 = vmatprep.subr.mxu0 0.0
    %1752 = vmatpush2.msra.mxu0 0.0
    %1753 = vmatprep.subr.mxu0 0.0
    %1754 = vmatpush2.msra.mxu0 0.0
    %1755 = vmatprep.subr.mxu0 0.0
    %1756 = vmatpush2.msra.mxu0 0.0
    %1757 = vmatprep.subr.mxu0 0.0
    %1758 = vmatpush2.msra.mxu0 0.0
    %1759 = vmatprep.subr.mxu0 0.0
    %1760 = vmatpush2.msra.mxu0 0.0
    %1761 = vmatprep.subr.mxu0 0.0
    %1762 = vmatpush2.msra.mxu0 0.0
    %1763 = vmatprep.subr.mxu0 0.0
    %1764 = vmatpush2.msra.mxu0 0.0
    %1765 = vmatprep.subr.mxu0 0.0
    %1766 = vmatpush2.msra.mxu0 0.0
    %1767 = vmatprep.subr.mxu0 0.0
    %1768 = vmatpush2.msra.mxu0 0.0
    %1769 = vmatprep.subr.mxu0 0.0
    %1770 = vmatpush2.msra.mxu0 0.0
    %1771 = vmatprep.subr.mxu0 0.0
    %1772 = vmatpush2.msra.mxu0 0.0
    %1773 = vmatprep.subr.mxu0 0.0
    %1774 = vmatpush2.msra.mxu0 0.0
    %1775 = vmatprep.subr.mxu0 0.0
    %1776 = vmatpush2.msra.mxu0 0.0
    %1777 = vmatprep.subr.mxu0 0.0
    %1778 = vmatpush2.msra.mxu0 0.0
    %1779 = vmatprep.mubr.f32.mxu0 0.0
    %1780 = vmatmul.mubr.f32.gmra.mxu0 %v1701
    %v1781 = vpop.f32.mrf.mxu0
    %v1782 = vadd.f32 0.0, %v1781
    %v1783 = vpop.f32.mrf.mxu0
    %1784 = vmatprep.mubr.f32.mxu0 0.0
    %1785 = vmatmul.mubr.f32.gmra.mxu0 %v1704
    %v1786 = vpop.f32.mrf.mxu0
    %v1787 = vadd.f32 0.0, %v1786
    %v1788 = vpop.f32.mrf.mxu0
    %1789 = vmatprep.mubr.f32.mxu0 0.0
    %1790 = vmatmul.mubr.f32.gmra.mxu0 %v1707
    %v1791 = vpop.f32.mrf.mxu0
    %v1792 = vadd.f32 0.0, %v1791
    %v1793 = vpop.f32.mrf.mxu0
    %1794 = vmatprep.mubr.f32.mxu0 0.0
    %1795 = vmatmul.mubr.f32.gmra.mxu0 %v1710
    %v1796 = vpop.f32.mrf.mxu0
    %v1797 = vadd.f32 0.0, %v1796
    %v1798 = vpop.f32.mrf.mxu0
    %1799 = vmatprep.mubr.f32.mxu0 0.0
    %1800 = vmatmul.mubr.f32.gmra.mxu0 %v1713
    %v1801 = vpop.f32.mrf.mxu0
    %v1802 = vadd.f32 0.0, %v1801
    %v1803 = vpop.f32.mrf.mxu0
    %1804 = vdwg.mxu0
    %v1805 = vadd.f32 %v1520, %v1782
    %v1806 = vadd.f32 %v1521, %v1787
    %v1807 = vadd.f32 %v1522, %v1792
    %v1808 = vadd.f32 %v1523, %v1797
    %v1809 = vadd.f32 %v1524, %v1802
    %v1810 = vld [vmem:[%s25] sm:$0xff]
    %v1811 = vld [vmem:[%s25 + $0x8] sm:$0xff]
    %v1812 = vld [vmem:[%s25 + $0x10] sm:$0xff]
    %v1813 = vld [vmem:[%s25 + $0x18] sm:$0xff]
    %v1815 = vsel %vm257, %v1805, 0
    %v1818 = vsel %vm257, %v1806, 0
    %v1821 = vsel %vm257, %v1807, 0
    %v1824 = vsel %vm257, %v1808, 0
    %v1827 = vsel %vm257, %v1809, 0
    %1829 = vmatprep.subr.mxu0 0.0
    %1830 = vmatpush1.msra.mxu0 0.0
    %1831 = vmatprep.subr.mxu0 0.0
    %1832 = vmatpush1.msra.mxu0 0.0
    %1833 = vmatprep.subr.mxu0 0.0
    %1834 = vmatpush1.msra.mxu0 0.0
    %1835 = vmatprep.subr.mxu0 0.0
    %1836 = vmatpush1.msra.mxu0 0.0
    %1837 = vmatprep.subr.mxu0 0.0
    %1838 = vmatpush1.msra.mxu0 0.0
    %1839 = vmatprep.subr.mxu0 0.0
    %1840 = vmatpush1.msra.mxu0 0.0
    %1841 = vmatprep.subr.mxu0 0.0
    %1842 = vmatpush1.msra.mxu0 0.0
    %1843 = vmatprep.subr.mxu0 0.0
    %1844 = vmatpush1.msra.mxu0 0.0
    %1845 = vmatprep.subr.mxu0 0.0
    %1846 = vmatpush1.msra.mxu0 0.0
    %1847 = vmatprep.subr.mxu0 0.0
    %1848 = vmatpush1.msra.mxu0 0.0
    %1849 = vmatprep.subr.mxu0 0.0
    %1850 = vmatpush1.msra.mxu0 0.0
    %1851 = vmatprep.subr.mxu0 0.0
    %1852 = vmatpush1.msra.mxu0 0.0
    %1853 = vmatprep.subr.mxu0 0.0
    %1854 = vmatpush1.msra.mxu0 %v1813
    %1855 = vmatprep.subr.mxu0 0.0
    %1856 = vmatpush1.msra.mxu0 %v1812
    %1857 = vmatprep.subr.mxu0 0.0
    %1858 = vmatpush1.msra.mxu0 %v1811
    %1859 = vmatprep.subr.mxu0 0.0
    %1860 = vmatpush1.msra.mxu0 %v1810
    %1861 = vmatprep.subr.mxu0 0.0
    %1862 = vmatpush2.msra.mxu0 0.0
    %1863 = vmatprep.subr.mxu0 0.0
    %1864 = vmatpush2.msra.mxu0 0.0
    %1865 = vmatprep.subr.mxu0 0.0
    %1866 = vmatpush2.msra.mxu0 0.0
    %1867 = vmatprep.subr.mxu0 0.0
    %1868 = vmatpush2.msra.mxu0 0.0
    %1869 = vmatprep.subr.mxu0 0.0
    %1870 = vmatpush2.msra.mxu0 0.0
    %1871 = vmatprep.subr.mxu0 0.0
    %1872 = vmatpush2.msra.mxu0 0.0
    %1873 = vmatprep.subr.mxu0 0.0
    %1874 = vmatpush2.msra.mxu0 0.0
    %1875 = vmatprep.subr.mxu0 0.0
    %1876 = vmatpush2.msra.mxu0 0.0
    %1877 = vmatprep.subr.mxu0 0.0
    %1878 = vmatpush2.msra.mxu0 0.0
    %1879 = vmatprep.subr.mxu0 0.0
    %1880 = vmatpush2.msra.mxu0 0.0
    %1881 = vmatprep.subr.mxu0 0.0
    %1882 = vmatpush2.msra.mxu0 0.0
    %1883 = vmatprep.subr.mxu0 0.0
    %1884 = vmatpush2.msra.mxu0 0.0
    %1885 = vmatprep.subr.mxu0 0.0
    %1886 = vmatpush2.msra.mxu0 0.0
    %1887 = vmatprep.subr.mxu0 0.0
    %1888 = vmatpush2.msra.mxu0 0.0
    %1889 = vmatprep.subr.mxu0 0.0
    %1890 = vmatpush2.msra.mxu0 0.0
    %1891 = vmatprep.subr.mxu0 0.0
    %1892 = vmatpush2.msra.mxu0 0.0
    %1893 = vmatprep.mubr.f32.mxu0 0.0
    %1894 = vmatmul.mubr.f32.gmra.mxu0 %v1815
    %v1895 = vpop.f32.mrf.mxu0
    %v1896 = vadd.f32 0.0, %v1895
    %v1897 = vpop.f32.mrf.mxu0
    %1898 = vmatprep.mubr.f32.mxu0 0.0
    %1899 = vmatmul.mubr.f32.gmra.mxu0 %v1818
    %v1900 = vpop.f32.mrf.mxu0
    %v1901 = vadd.f32 0.0, %v1900
    %v1902 = vpop.f32.mrf.mxu0
    %1903 = vmatprep.mubr.f32.mxu0 0.0
    %1904 = vmatmul.mubr.f32.gmra.mxu0 %v1821
    %v1905 = vpop.f32.mrf.mxu0
    %v1906 = vadd.f32 0.0, %v1905
    %v1907 = vpop.f32.mrf.mxu0
    %1908 = vmatprep.mubr.f32.mxu0 0.0
    %1909 = vmatmul.mubr.f32.gmra.mxu0 %v1824
    %v1910 = vpop.f32.mrf.mxu0
    %v1911 = vadd.f32 0.0, %v1910
    %v1912 = vpop.f32.mrf.mxu0
    %1913 = vmatprep.mubr.f32.mxu0 0.0
    %1914 = vmatmul.mubr.f32.gmra.mxu0 %v1827
    %v1915 = vpop.f32.mrf.mxu0
    %v1916 = vadd.f32 0.0, %v1915
    %v1917 = vpop.f32.mrf.mxu0
    %1918 = vdwg.mxu0
    %v1919 = vadd.f32 %v223, %v1896
    %v1920 = vadd.f32 %v228, %v1901
    %v1921 = vadd.f32 %v233, %v1906
    %v1922 = vadd.f32 %v238, %v1911
    %v1923 = vadd.f32 %v243, %v1916
    %v1924 = vld [vmem:[%s27] sm:$0x1]
    %v1926 = vlaneseq
    %v1927 = vshrl.u32 %v1926, 7
    %v1928 = vsub.s32 0, %v1927
    %v1929 = vrot.slane %v1924, %v1928
    %v1931 = vadd.f32 %v1919, %v1929
    %v1932 = vadd.f32 %v1920, %v1929
    %v1933 = vadd.f32 %v1921, %v1929
    %v1934 = vadd.f32 %v1922, %v1929
    %v1935 = vadd.f32 %v1923, %v1929
    %v1936 = vld [vmem:[%s29] sm:$0x1]
    %v1937 = vld [vmem:[%s31] sm:$0x1]
    %v1938 = vsel %vm257, %v1931, 0.0
    %1939 = vadd.xlane.f32.xlu0 %v1938
    %v1940 = vpop.xlane.xlu0 %1939
    %v1941 = vsel %vm257, %v1932, 0.0
    %1942 = vadd.xlane.f32.xlu0 %v1941
    %v1943 = vpop.xlane.xlu0 %1942
    %v1944 = vsel %vm257, %v1933, 0.0
    %1945 = vadd.xlane.f32.xlu0 %v1944
    %v1946 = vpop.xlane.xlu0 %1945
    %v1947 = vsel %vm257, %v1934, 0.0
    %1948 = vadd.xlane.f32.xlu0 %v1947
    %v1949 = vpop.xlane.xlu0 %1948
    %v1950 = vsel %vm257, %v1935, 0.0
    %1951 = vadd.xlane.f32.xlu0 %v1950
    %v1952 = vpop.xlane.xlu0 %1951
    %v1953 = vmul.f32 %v1940, %v273
    %v1954 = vmul.f32 %v1943, %v273
    %v1955 = vmul.f32 %v1946, %v273
    %v1956 = vmul.f32 %v1949, %v273
    %v1957 = vmul.f32 %v1952, %v273
    %v1958 = vsub.f32 %v1931, %v1953
    %v1959 = vsub.f32 %v1932, %v1954
    %v1960 = vsub.f32 %v1933, %v1955
    %v1961 = vsub.f32 %v1934, %v1956
    %v1962 = vsub.f32 %v1935, %v1957
    %v1963 = vmul.f32 %v1958, %v1958
    %v1964 = vmul.f32 %v1959, %v1959
    %v1965 = vmul.f32 %v1960, %v1960
    %v1966 = vmul.f32 %v1961, %v1961
    %v1967 = vmul.f32 %v1962, %v1962
    %v1968 = vsel %vm257, %v1963, 0.0
    %1969 = vadd.xlane.f32.xlu0 %v1968
    %v1970 = vpop.xlane.xlu0 %1969
    %v1971 = vsel %vm257, %v1964, 0.0
    %1972 = vadd.xlane.f32.xlu0 %v1971
    %v1973 = vpop.xlane.xlu0 %1972
    %v1974 = vsel %vm257, %v1965, 0.0
    %1975 = vadd.xlane.f32.xlu0 %v1974
    %v1976 = vpop.xlane.xlu0 %1975
    %v1977 = vsel %vm257, %v1966, 0.0
    %1978 = vadd.xlane.f32.xlu0 %v1977
    %v1979 = vpop.xlane.xlu0 %1978
    %v1980 = vsel %vm257, %v1967, 0.0
    %1981 = vadd.xlane.f32.xlu0 %v1980
    %v1982 = vpop.xlane.xlu0 %1981
    %v1983 = vmul.f32 %v1970, %v273
    %v1984 = vmul.f32 %v1973, %v273
    %v1985 = vmul.f32 %v1976, %v273
    %v1986 = vmul.f32 %v1979, %v273
    %v1987 = vmul.f32 %v1982, %v273
    %v1988 = vadd.f32 %v1983, 1e-06
    %v1989 = vadd.f32 %v1984, 1e-06
    %v1990 = vadd.f32 %v1985, 1e-06
    %v1991 = vadd.f32 %v1986, 1e-06
    %v1992 = vadd.f32 %v1987, 1e-06
    %v1993 = vrsqrt.pop %v1988
    %v1994 = vrsqrt.pop %v1989
    %v1995 = vrsqrt.pop %v1990
    %v1996 = vrsqrt.pop %v1991
    %v1997 = vrsqrt.pop %v1992
    %v1998 = vmul.f32 %v1958, %v1993
    %v1999 = vmul.f32 %v1959, %v1994
    %v2000 = vmul.f32 %v1960, %v1995
    %v2001 = vmul.f32 %v1961, %v1996
    %v2002 = vmul.f32 %v1962, %v1997
    %v2004 = vlaneseq
    %v2005 = vshrl.u32 %v2004, 7
    %v2006 = vsub.s32 0, %v2005
    %v2007 = vrot.slane %v1936, %v2006
    %v2009 = vmul.f32 %v1998, %v2007
    %v2010 = vmul.f32 %v1999, %v2007
    %v2011 = vmul.f32 %v2000, %v2007
    %v2012 = vmul.f32 %v2001, %v2007
    %v2013 = vmul.f32 %v2002, %v2007
    %v2015 = vlaneseq
    %v2016 = vshrl.u32 %v2015, 7
    %v2017 = vsub.s32 0, %v2016
    %v2018 = vrot.slane %v1937, %v2017
    %v2020 = vadd.f32 %v2009, %v2018
    %v2021 = vadd.f32 %v2010, %v2018
    %v2022 = vadd.f32 %v2011, %v2018
    %v2023 = vadd.f32 %v2012, %v2018
    %v2024 = vadd.f32 %v2013, %v2018
    %v2025 = vld [vmem:[%s33] sm:$0xff]
    %v2026 = vld [vmem:[%s33 + $0x8] sm:$0xff]
    %v2027 = vld [vmem:[%s33 + $0x10] sm:$0xff]
    %v2028 = vld [vmem:[%s33 + $0x18] sm:$0xff]
    %v2029 = vld [vmem:[%s35] sm:$0x1]
    %v2031 = vlaneseq
    %v2032 = vshrl.u32 %v2031, 7
    %v2033 = vsub.s32 0, %v2032
    %v2034 = vrot.slane %v2029, %v2033
    %v2037 = vsel %vm257, %v2020, 0
    %v2040 = vsel %vm257, %v2021, 0
    %v2043 = vsel %vm257, %v2022, 0
    %v2046 = vsel %vm257, %v2023, 0
    %v2049 = vsel %vm257, %v2024, 0
    %2051 = vmatprep.subr.mxu0 0.0
    %2052 = vmatpush1.msra.mxu0 0.0
    %2053 = vmatprep.subr.mxu0 0.0
    %2054 = vmatpush1.msra.mxu0 0.0
    %2055 = vmatprep.subr.mxu0 0.0
    %2056 = vmatpush1.msra.mxu0 0.0
    %2057 = vmatprep.subr.mxu0 0.0
    %2058 = vmatpush1.msra.mxu0 0.0
    %2059 = vmatprep.subr.mxu0 0.0
    %2060 = vmatpush1.msra.mxu0 0.0
    %2061 = vmatprep.subr.mxu0 0.0
    %2062 = vmatpush1.msra.mxu0 0.0
    %2063 = vmatprep.subr.mxu0 0.0
    %2064 = vmatpush1.msra.mxu0 0.0
    %2065 = vmatprep.subr.mxu0 0.0
    %2066 = vmatpush1.msra.mxu0 0.0
    %2067 = vmatprep.subr.mxu0 0.0
    %2068 = vmatpush1.msra.mxu0 0.0
    %2069 = vmatprep.subr.mxu0 0.0
    %2070 = vmatpush1.msra.mxu0 0.0
    %2071 = vmatprep.subr.mxu0 0.0
    %2072 = vmatpush1.msra.mxu0 0.0
    %2073 = vmatprep.subr.mxu0 0.0
    %2074 = vmatpush1.msra.mxu0 0.0
    %2075 = vmatprep.subr.mxu0 0.0
    %2076 = vmatpush1.msra.mxu0 %v2028
    %2077 = vmatprep.subr.mxu0 0.0
    %2078 = vmatpush1.msra.mxu0 %v2027
    %2079 = vmatprep.subr.mxu0 0.0
    %2080 = vmatpush1.msra.mxu0 %v2026
    %2081 = vmatprep.subr.mxu0 0.0
    %2082 = vmatpush1.msra.mxu0 %v2025
    %2083 = vmatprep.subr.mxu0 0.0
    %2084 = vmatpush2.msra.mxu0 0.0
    %2085 = vmatprep.subr.mxu0 0.0
    %2086 = vmatpush2.msra.mxu0 0.0
    %2087 = vmatprep.subr.mxu0 0.0
    %2088 = vmatpush2.msra.mxu0 0.0
    %2089 = vmatprep.subr.mxu0 0.0
    %2090 = vmatpush2.msra.mxu0 0.0
    %2091 = vmatprep.subr.mxu0 0.0
    %2092 = vmatpush2.msra.mxu0 0.0
    %2093 = vmatprep.subr.mxu0 0.0
    %2094 = vmatpush2.msra.mxu0 0.0
    %2095 = vmatprep.subr.mxu0 0.0
    %2096 = vmatpush2.msra.mxu0 0.0
    %2097 = vmatprep.subr.mxu0 0.0
    %2098 = vmatpush2.msra.mxu0 0.0
    %2099 = vmatprep.subr.mxu0 0.0
    %2100 = vmatpush2.msra.mxu0 0.0
    %2101 = vmatprep.subr.mxu0 0.0
    %2102 = vmatpush2.msra.mxu0 0.0
    %2103 = vmatprep.subr.mxu0 0.0
    %2104 = vmatpush2.msra.mxu0 0.0
    %2105 = vmatprep.subr.mxu0 0.0
    %2106 = vmatpush2.msra.mxu0 0.0
    %2107 = vmatprep.subr.mxu0 0.0
    %2108 = vmatpush2.msra.mxu0 0.0
    %2109 = vmatprep.subr.mxu0 0.0
    %2110 = vmatpush2.msra.mxu0 0.0
    %2111 = vmatprep.subr.mxu0 0.0
    %2112 = vmatpush2.msra.mxu0 0.0
    %2113 = vmatprep.subr.mxu0 0.0
    %2114 = vmatpush2.msra.mxu0 0.0
    %2115 = vmatprep.mubr.f32.mxu0 0.0
    %2116 = vmatmul.mubr.f32.gmra.mxu0 %v2037
    %v2117 = vpop.f32.mrf.mxu0
    %v2118 = vadd.f32 %v2034, %v2117
    %v2119 = vpop.f32.mrf.mxu0
    %2120 = vmatprep.mubr.f32.mxu0 0.0
    %2121 = vmatmul.mubr.f32.gmra.mxu0 %v2040
    %v2122 = vpop.f32.mrf.mxu0
    %v2123 = vadd.f32 %v2034, %v2122
    %v2124 = vpop.f32.mrf.mxu0
    %2125 = vmatprep.mubr.f32.mxu0 0.0
    %2126 = vmatmul.mubr.f32.gmra.mxu0 %v2043
    %v2127 = vpop.f32.mrf.mxu0
    %v2128 = vadd.f32 %v2034, %v2127
    %v2129 = vpop.f32.mrf.mxu0
    %2130 = vmatprep.mubr.f32.mxu0 0.0
    %2131 = vmatmul.mubr.f32.gmra.mxu0 %v2046
    %v2132 = vpop.f32.mrf.mxu0
    %v2133 = vadd.f32 %v2034, %v2132
    %v2134 = vpop.f32.mrf.mxu0
    %2135 = vmatprep.mubr.f32.mxu0 0.0
    %2136 = vmatmul.mubr.f32.gmra.mxu0 %v2049
    %v2137 = vpop.f32.mrf.mxu0
    %v2138 = vadd.f32 %v2034, %v2137
    %v2139 = vpop.f32.mrf.mxu0
    %2140 = vdwg.mxu0
    %v2141 = vmul.f32 %v2118, %v2118
    %v2142 = vmul.f32 %v2123, %v2123
    %v2143 = vmul.f32 %v2128, %v2128
    %v2144 = vmul.f32 %v2133, %v2133
    %v2145 = vmul.f32 %v2138, %v2138
    %v2146 = vmul.f32 %v2118, %v2141
    %v2147 = vmul.f32 %v2123, %v2142
    %v2148 = vmul.f32 %v2128, %v2143
    %v2149 = vmul.f32 %v2133, %v2144
    %v2150 = vmul.f32 %v2138, %v2145
    %v2151 = vmul.f32 %v2146, 0.044715
    %v2152 = vmul.f32 %v2147, 0.044715
    %v2153 = vmul.f32 %v2148, 0.044715
    %v2154 = vmul.f32 %v2149, 0.044715
    %v2155 = vmul.f32 %v2150, 0.044715
    %v2156 = vadd.f32 %v2118, %v2151
    %v2157 = vadd.f32 %v2123, %v2152
    %v2158 = vadd.f32 %v2128, %v2153
    %v2159 = vadd.f32 %v2133, %v2154
    %v2160 = vadd.f32 %v2138, %v2155
    %v2161 = vmul.f32 %v2156, 0.7978846
    %v2162 = vmul.f32 %v2157, 0.7978846
    %v2163 = vmul.f32 %v2158, 0.7978846
    %v2164 = vmul.f32 %v2159, 0.7978846
    %v2165 = vmul.f32 %v2160, 0.7978846
    %v2166 = vtanh.pop %v2161
    %v2167 = vtanh.pop %v2162
    %v2168 = vtanh.pop %v2163
    %v2169 = vtanh.pop %v2164
    %v2170 = vtanh.pop %v2165
    %v2171 = vadd.f32 %v2166, 1.0
    %v2172 = vadd.f32 %v2167, 1.0
    %v2173 = vadd.f32 %v2168, 1.0
    %v2174 = vadd.f32 %v2169, 1.0
    %v2175 = vadd.f32 %v2170, 1.0
    %v2176 = vmul.f32 %v2171, 0.5
    %v2177 = vmul.f32 %v2172, 0.5
    %v2178 = vmul.f32 %v2173, 0.5
    %v2179 = vmul.f32 %v2174, 0.5
    %v2180 = vmul.f32 %v2175, 0.5
    %v2181 = vmul.f32 %v2118, %v2176
    %v2182 = vmul.f32 %v2123, %v2177
    %v2183 = vmul.f32 %v2128, %v2178
    %v2184 = vmul.f32 %v2133, %v2179
    %v2185 = vmul.f32 %v2138, %v2180
    %v2186 = vld [vmem:[%s37] sm:$0xff]
    %v2187 = vld [vmem:[%s37 + $0x8] sm:$0xff]
    %v2188 = vld [vmem:[%s37 + $0x10] sm:$0xff]
    %v2189 = vld [vmem:[%s37 + $0x18] sm:$0xff]
    %v2190 = vld [vmem:[%s37 + $0x20] sm:$0xff]
    %v2191 = vld [vmem:[%s37 + $0x28] sm:$0xff]
    %v2192 = vld [vmem:[%s37 + $0x30] sm:$0xff]
    %v2193 = vld [vmem:[%s37 + $0x38] sm:$0xff]
    %vm2194 = vcmask 523264
    %v2196 = vsel %vm2194, %v2181, 0
    %v2199 = vsel %vm2194, %v2182, 0
    %v2202 = vsel %vm2194, %v2183, 0
    %v2205 = vsel %vm2194, %v2184, 0
    %v2208 = vsel %vm2194, %v2185, 0
    %2210 = vmatprep.subr.mxu0 0.0
    %2211 = vmatpush1.msra.mxu0 0.0
    %2212 = vmatprep.subr.mxu0 0.0
    %2213 = vmatpush1.msra.mxu0 0.0
    %2214 = vmatprep.subr.mxu0 0.0
    %2215 = vmatpush1.msra.mxu0 0.0
    %2216 = vmatprep.subr.mxu0 0.0
    %2217 = vmatpush1.msra.mxu0 0.0
    %2218 = vmatprep.subr.mxu0 0.0
    %2219 = vmatpush1.msra.mxu0 0.0
    %2220 = vmatprep.subr.mxu0 0.0
    %2221 = vmatpush1.msra.mxu0 0.0
    %2222 = vmatprep.subr.mxu0 0.0
    %2223 = vmatpush1.msra.mxu0 0.0
    %2224 = vmatprep.subr.mxu0 0.0
    %2225 = vmatpush1.msra.mxu0 0.0
    %2226 = vmatprep.subr.mxu0 0.0
    %2227 = vmatpush1.msra.mxu0 %v2193
    %2228 = vmatprep.subr.mxu0 0.0
    %2229 = vmatpush1.msra.mxu0 %v2192
    %2230 = vmatprep.subr.mxu0 0.0
    %2231 = vmatpush1.msra.mxu0 %v2191
    %2232 = vmatprep.subr.mxu0 0.0
    %2233 = vmatpush1.msra.mxu0 %v2190
    %2234 = vmatprep.subr.mxu0 0.0
    %2235 = vmatpush1.msra.mxu0 %v2189
    %2236 = vmatprep.subr.mxu0 0.0
    %2237 = vmatpush1.msra.mxu0 %v2188
    %2238 = vmatprep.subr.mxu0 0.0
    %2239 = vmatpush1.msra.mxu0 %v2187
    %2240 = vmatprep.subr.mxu0 0.0
    %2241 = vmatpush1.msra.mxu0 %v2186
    %2242 = vmatprep.subr.mxu0 0.0
    %2243 = vmatpush2.msra.mxu0 0.0
    %2244 = vmatprep.subr.mxu0 0.0
    %2245 = vmatpush2.msra.mxu0 0.0
    %2246 = vmatprep.subr.mxu0 0.0
    %2247 = vmatpush2.msra.mxu0 0.0
    %2248 = vmatprep.subr.mxu0 0.0
    %2249 = vmatpush2.msra.mxu0 0.0
    %2250 = vmatprep.subr.mxu0 0.0
    %2251 = vmatpush2.msra.mxu0 0.0
    %2252 = vmatprep.subr.mxu0 0.0
    %2253 = vmatpush2.msra.mxu0 0.0
    %2254 = vmatprep.subr.mxu0 0.0
    %2255 = vmatpush2.msra.mxu0 0.0
    %2256 = vmatprep.subr.mxu0 0.0
    %2257 = vmatpush2.msra.mxu0 0.0
    %2258 = vmatprep.subr.mxu0 0.0
    %2259 = vmatpush2.msra.mxu0 0.0
    %2260 = vmatprep.subr.mxu0 0.0
    %2261 = vmatpush2.msra.mxu0 0.0
    %2262 = vmatprep.subr.mxu0 0.0
    %2263 = vmatpush2.msra.mxu0 0.0
    %2264 = vmatprep.subr.mxu0 0.0
    %2265 = vmatpush2.msra.mxu0 0.0
    %2266 = vmatprep.subr.mxu0 0.0
    %2267 = vmatpush2.msra.mxu0 0.0
    %2268 = vmatprep.subr.mxu0 0.0
    %2269 = vmatpush2.msra.mxu0 0.0
    %2270 = vmatprep.subr.mxu0 0.0
    %2271 = vmatpush2.msra.mxu0 0.0
    %2272 = vmatprep.subr.mxu0 0.0
    %2273 = vmatpush2.msra.mxu0 0.0
    %2274 = vmatprep.mubr.f32.mxu0 0.0
    %2275 = vmatmul.mubr.f32.gmra.mxu0 %v2196
    %v2276 = vpop.f32.mrf.mxu0
    %v2277 = vadd.f32 0.0, %v2276
    %v2278 = vpop.f32.mrf.mxu0
    %2279 = vmatprep.mubr.f32.mxu0 0.0
    %2280 = vmatmul.mubr.f32.gmra.mxu0 %v2199
    %v2281 = vpop.f32.mrf.mxu0
    %v2282 = vadd.f32 0.0, %v2281
    %v2283 = vpop.f32.mrf.mxu0
    %2284 = vmatprep.mubr.f32.mxu0 0.0
    %2285 = vmatmul.mubr.f32.gmra.mxu0 %v2202
    %v2286 = vpop.f32.mrf.mxu0
    %v2287 = vadd.f32 0.0, %v2286
    %v2288 = vpop.f32.mrf.mxu0
    %2289 = vmatprep.mubr.f32.mxu0 0.0
    %2290 = vmatmul.mubr.f32.gmra.mxu0 %v2205
    %v2291 = vpop.f32.mrf.mxu0
    %v2292 = vadd.f32 0.0, %v2291
    %v2293 = vpop.f32.mrf.mxu0
    %2294 = vmatprep.mubr.f32.mxu0 0.0
    %2295 = vmatmul.mubr.f32.gmra.mxu0 %v2208
    %v2296 = vpop.f32.mrf.mxu0
    %v2297 = vadd.f32 0.0, %v2296
    %v2298 = vpop.f32.mrf.mxu0
    %2299 = vdwg.mxu0
    %v2300 = vadd.f32 %v1931, %v2277
    %v2301 = vadd.f32 %v1932, %v2282
    %v2302 = vadd.f32 %v1933, %v2287
    %v2303 = vadd.f32 %v1934, %v2292
    %v2304 = vadd.f32 %v1935, %v2297
    %v2305 = vld [vmem:[%s39] sm:$0x1]
    %v2307 = vlaneseq
    %v2308 = vshrl.u32 %v2307, 7
    %v2309 = vsub.s32 0, %v2308
    %v2310 = vrot.slane %v2305, %v2309
    %v2312 = vadd.f32 %v2300, %v2310
    %v2313 = vadd.f32 %v2301, %v2310
    %v2314 = vadd.f32 %v2302, %v2310
    %v2315 = vadd.f32 %v2303, %v2310
    %v2316 = vadd.f32 %v2304, %v2310
    %v2317 = vsel %vm257, %v2312, 0.0
    %2318 = vadd.xlane.f32.xlu0 %v2317
    %v2319 = vpop.xlane.xlu0 %2318
    %v2320 = vsel %vm257, %v2313, 0.0
    %2321 = vadd.xlane.f32.xlu0 %v2320
    %v2322 = vpop.xlane.xlu0 %2321
    %v2323 = vsel %vm257, %v2314, 0.0
    %2324 = vadd.xlane.f32.xlu0 %v2323
    %v2325 = vpop.xlane.xlu0 %2324
    %v2326 = vsel %vm257, %v2315, 0.0
    %2327 = vadd.xlane.f32.xlu0 %v2326
    %v2328 = vpop.xlane.xlu0 %2327
    %v2329 = vsel %vm257, %v2316, 0.0
    %2330 = vadd.xlane.f32.xlu0 %v2329
    %v2331 = vpop.xlane.xlu0 %2330
    %v2332 = vmul.f32 %v2319, %v273
    %v2333 = vmul.f32 %v2322, %v273
    %v2334 = vmul.f32 %v2325, %v273
    %v2335 = vmul.f32 %v2328, %v273
    %v2336 = vmul.f32 %v2331, %v273
    %v2337 = vsub.f32 %v2312, %v2332
    %v2338 = vsub.f32 %v2313, %v2333
    %v2339 = vsub.f32 %v2314, %v2334
    %v2340 = vsub.f32 %v2315, %v2335
    %v2341 = vsub.f32 %v2316, %v2336
    %v2342 = vmul.f32 %v2337, %v2337
    %v2343 = vmul.f32 %v2338, %v2338
    %v2344 = vmul.f32 %v2339, %v2339
    %v2345 = vmul.f32 %v2340, %v2340
    %v2346 = vmul.f32 %v2341, %v2341
    %v2347 = vsel %vm257, %v2342, 0.0
    %2348 = vadd.xlane.f32.xlu0 %v2347
    %v2349 = vpop.xlane.xlu0 %2348
    %v2350 = vsel %vm257, %v2343, 0.0
    %2351 = vadd.xlane.f32.xlu0 %v2350
    %v2352 = vpop.xlane.xlu0 %2351
    %v2353 = vsel %vm257, %v2344, 0.0
    %2354 = vadd.xlane.f32.xlu0 %v2353
    %v2355 = vpop.xlane.xlu0 %2354
    %v2356 = vsel %vm257, %v2345, 0.0
    %2357 = vadd.xlane.f32.xlu0 %v2356
    %v2358 = vpop.xlane.xlu0 %2357
    %v2359 = vsel %vm257, %v2346, 0.0
    %2360 = vadd.xlane.f32.xlu0 %v2359
    %v2361 = vpop.xlane.xlu0 %2360
    %v2362 = vmul.f32 %v2349, %v273
    %v2363 = vmul.f32 %v2352, %v273
    %v2364 = vmul.f32 %v2355, %v273
    %v2365 = vmul.f32 %v2358, %v273
    %v2366 = vmul.f32 %v2361, %v273
    %v2367 = vadd.f32 %v2362, 1e-06
    %v2368 = vadd.f32 %v2363, 1e-06
    %v2369 = vadd.f32 %v2364, 1e-06
    %v2370 = vadd.f32 %v2365, 1e-06
    %v2371 = vadd.f32 %v2366, 1e-06
    %v2372 = vrsqrt.pop %v2367
    %v2373 = vrsqrt.pop %v2368
    %v2374 = vrsqrt.pop %v2369
    %v2375 = vrsqrt.pop %v2370
    %v2376 = vrsqrt.pop %v2371
    %v2377 = vmul.f32 %v2337, %v2372
    %v2378 = vmul.f32 %v2338, %v2373
    %v2379 = vmul.f32 %v2339, %v2374
    %v2380 = vmul.f32 %v2340, %v2375
    %v2381 = vmul.f32 %v2341, %v2376
    %v2383 = vlaneseq
    %v2384 = vshrl.u32 %v2383, 7
    %v2385 = vsub.s32 0, %v2384
    %v2386 = vrot.slane %v251, %v2385
    %v2388 = vmul.f32 %v2377, %v2386
    %v2389 = vmul.f32 %v2378, %v2386
    %v2390 = vmul.f32 %v2379, %v2386
    %v2391 = vmul.f32 %v2380, %v2386
    %v2392 = vmul.f32 %v2381, %v2386
    %v2394 = vlaneseq
    %v2395 = vshrl.u32 %v2394, 7
    %v2396 = vsub.s32 0, %v2395
    %v2397 = vrot.slane %v252, %v2396
    %v2399 = vadd.f32 %v2388, %v2397
    %v2400 = vadd.f32 %v2389, %v2397
    %v2401 = vadd.f32 %v2390, %v2397
    %v2402 = vadd.f32 %v2391, %v2397
    %v2403 = vadd.f32 %v2392, %v2397
    %s2404 = scalar_lea.vmem %s9, 1
    %v2405 = vld [vmem:[%s2404] sm:$0x1]
    %s2406 = scalar_lea.vmem %s11, 1
    %v2407 = vld [vmem:[%s2406] sm:$0x1]
    %v2409 = vlaneseq
    %v2410 = vshrl.u32 %v2409, 7
    %v2411 = vsub.s32 0, %v2410
    %v2412 = vrot.slane %v2405, %v2411
    %v2414 = vmul.f32 %v2377, %v2412
    %v2415 = vmul.f32 %v2378, %v2412
    %v2416 = vmul.f32 %v2379, %v2412
    %v2417 = vmul.f32 %v2380, %v2412
    %v2418 = vmul.f32 %v2381, %v2412
    %v2420 = vlaneseq
    %v2421 = vshrl.u32 %v2420, 7
    %v2422 = vsub.s32 0, %v2421
    %v2423 = vrot.slane %v2407, %v2422
    %v2425 = vadd.f32 %v2414, %v2423
    %v2426 = vadd.f32 %v2415, %v2423
    %v2427 = vadd.f32 %v2416, %v2423
    %v2428 = vadd.f32 %v2417, %v2423
    %v2429 = vadd.f32 %v2418, %v2423
    %s2430 = scalar_lea.vmem %s13, 32
    %v2431 = vld [vmem:[%s2430] sm:$0xff]
    %v2432 = vld [vmem:[%s2430 + $0x8] sm:$0xff]
    %v2433 = vld [vmem:[%s2430 + $0x10] sm:$0xff]
    %v2434 = vld [vmem:[%s2430 + $0x18] sm:$0xff]
    %s2435 = scalar_lea.vmem %s15, 1
    %v2436 = vld [vmem:[%s2435] sm:$0x1]
    %v2438 = vlaneseq
    %v2439 = vshrl.u32 %v2438, 7
    %v2440 = vsub.s32 0, %v2439
    %v2441 = vrot.slane %v2436, %v2440
    %v2444 = vsel %vm257, %v2425, 0
    %v2447 = vsel %vm257, %v2426, 0
    %v2450 = vsel %vm257, %v2427, 0
    %v2453 = vsel %vm257, %v2428, 0
    %v2456 = vsel %vm257, %v2429, 0
    %2458 = vmatprep.subr.mxu0 0.0
    %2459 = vmatpush1.msra.mxu0 0.0
    %2460 = vmatprep.subr.mxu0 0.0
    %2461 = vmatpush1.msra.mxu0 0.0
    %2462 = vmatprep.subr.mxu0 0.0
    %2463 = vmatpush1.msra.mxu0 0.0
    %2464 = vmatprep.subr.mxu0 0.0
    %2465 = vmatpush1.msra.mxu0 0.0
    %2466 = vmatprep.subr.mxu0 0.0
    %2467 = vmatpush1.msra.mxu0 0.0
    %2468 = vmatprep.subr.mxu0 0.0
    %2469 = vmatpush1.msra.mxu0 0.0
    %2470 = vmatprep.subr.mxu0 0.0
    %2471 = vmatpush1.msra.mxu0 0.0
    %2472 = vmatprep.subr.mxu0 0.0
    %2473 = vmatpush1.msra.mxu0 0.0
    %2474 = vmatprep.subr.mxu0 0.0
    %2475 = vmatpush1.msra.mxu0 0.0
    %2476 = vmatprep.subr.mxu0 0.0
    %2477 = vmatpush1.msra.mxu0 0.0
    %2478 = vmatprep.subr.mxu0 0.0
    %2479 = vmatpush1.msra.mxu0 0.0
    %2480 = vmatprep.subr.mxu0 0.0
    %2481 = vmatpush1.msra.mxu0 0.0
    %2482 = vmatprep.subr.mxu0 0.0
    %2483 = vmatpush1.msra.mxu0 %v2434
    %2484 = vmatprep.subr.mxu0 0.0
    %2485 = vmatpush1.msra.mxu0 %v2433
    %2486 = vmatprep.subr.mxu0 0.0
    %2487 = vmatpush1.msra.mxu0 %v2432
    %2488 = vmatprep.subr.mxu0 0.0
    %2489 = vmatpush1.msra.mxu0 %v2431
    %2490 = vmatprep.subr.mxu0 0.0
    %2491 = vmatpush2.msra.mxu0 0.0
    %2492 = vmatprep.subr.mxu0 0.0
    %2493 = vmatpush2.msra.mxu0 0.0
    %2494 = vmatprep.subr.mxu0 0.0
    %2495 = vmatpush2.msra.mxu0 0.0
    %2496 = vmatprep.subr.mxu0 0.0
    %2497 = vmatpush2.msra.mxu0 0.0
    %2498 = vmatprep.subr.mxu0 0.0
    %2499 = vmatpush2.msra.mxu0 0.0
    %2500 = vmatprep.subr.mxu0 0.0
    %2501 = vmatpush2.msra.mxu0 0.0
    %2502 = vmatprep.subr.mxu0 0.0
    %2503 = vmatpush2.msra.mxu0 0.0
    %2504 = vmatprep.subr.mxu0 0.0
    %2505 = vmatpush2.msra.mxu0 0.0
    %2506 = vmatprep.subr.mxu0 0.0
    %2507 = vmatpush2.msra.mxu0 0.0
    %2508 = vmatprep.subr.mxu0 0.0
    %2509 = vmatpush2.msra.mxu0 0.0
    %2510 = vmatprep.subr.mxu0 0.0
    %2511 = vmatpush2.msra.mxu0 0.0
    %2512 = vmatprep.subr.mxu0 0.0
    %2513 = vmatpush2.msra.mxu0 0.0
    %2514 = vmatprep.subr.mxu0 0.0
    %2515 = vmatpush2.msra.mxu0 0.0
    %2516 = vmatprep.subr.mxu0 0.0
    %2517 = vmatpush2.msra.mxu0 0.0
    %2518 = vmatprep.subr.mxu0 0.0
    %2519 = vmatpush2.msra.mxu0 0.0
    %2520 = vmatprep.subr.mxu0 0.0
    %2521 = vmatpush2.msra.mxu0 0.0
    %2522 = vmatprep.mubr.f32.mxu0 0.0
    %2523 = vmatmul.mubr.f32.gmra.mxu0 %v2444
    %v2524 = vpop.f32.mrf.mxu0
    %v2525 = vadd.f32 %v2441, %v2524
    %v2526 = vpop.f32.mrf.mxu0
    %2527 = vmatprep.mubr.f32.mxu0 0.0
    %2528 = vmatmul.mubr.f32.gmra.mxu0 %v2447
    %v2529 = vpop.f32.mrf.mxu0
    %v2530 = vadd.f32 %v2441, %v2529
    %v2531 = vpop.f32.mrf.mxu0
    %2532 = vmatprep.mubr.f32.mxu0 0.0
    %2533 = vmatmul.mubr.f32.gmra.mxu0 %v2450
    %v2534 = vpop.f32.mrf.mxu0
    %v2535 = vadd.f32 %v2441, %v2534
    %v2536 = vpop.f32.mrf.mxu0
    %2537 = vmatprep.mubr.f32.mxu0 0.0
    %2538 = vmatmul.mubr.f32.gmra.mxu0 %v2453
    %v2539 = vpop.f32.mrf.mxu0
    %v2540 = vadd.f32 %v2441, %v2539
    %v2541 = vpop.f32.mrf.mxu0
    %2542 = vmatprep.mubr.f32.mxu0 0.0
    %2543 = vmatmul.mubr.f32.gmra.mxu0 %v2456
    %v2544 = vpop.f32.mrf.mxu0
    %v2545 = vadd.f32 %v2441, %v2544
    %v2546 = vpop.f32.mrf.mxu0
    %2547 = vdwg.mxu0
    %s2548 = scalar_lea.vmem %s17, 32
    %v2549 = vld [vmem:[%s2548] sm:$0xff]
    %v2550 = vld [vmem:[%s2548 + $0x8] sm:$0xff]
    %v2551 = vld [vmem:[%s2548 + $0x10] sm:$0xff]
    %v2552 = vld [vmem:[%s2548 + $0x18] sm:$0xff]
    %s2553 = scalar_lea.vmem %s19, 1
    %v2554 = vld [vmem:[%s2553] sm:$0x1]
    %v2556 = vlaneseq
    %v2557 = vshrl.u32 %v2556, 7
    %v2558 = vsub.s32 0, %v2557
    %v2559 = vrot.slane %v2554, %v2558
    %2561 = vmatprep.subr.mxu0 0.0
    %2562 = vmatpush1.msra.mxu0 0.0
    %2563 = vmatprep.subr.mxu0 0.0
    %2564 = vmatpush1.msra.mxu0 0.0
    %2565 = vmatprep.subr.mxu0 0.0
    %2566 = vmatpush1.msra.mxu0 0.0
    %2567 = vmatprep.subr.mxu0 0.0
    %2568 = vmatpush1.msra.mxu0 0.0
    %2569 = vmatprep.subr.mxu0 0.0
    %2570 = vmatpush1.msra.mxu0 0.0
    %2571 = vmatprep.subr.mxu0 0.0
    %2572 = vmatpush1.msra.mxu0 0.0
    %2573 = vmatprep.subr.mxu0 0.0
    %2574 = vmatpush1.msra.mxu0 0.0
    %2575 = vmatprep.subr.mxu0 0.0
    %2576 = vmatpush1.msra.mxu0 0.0
    %2577 = vmatprep.subr.mxu0 0.0
    %2578 = vmatpush1.msra.mxu0 0.0
    %2579 = vmatprep.subr.mxu0 0.0
    %2580 = vmatpush1.msra.mxu0 0.0
    %2581 = vmatprep.subr.mxu0 0.0
    %2582 = vmatpush1.msra.mxu0 0.0
    %2583 = vmatprep.subr.mxu0 0.0
    %2584 = vmatpush1.msra.mxu0 0.0
    %2585 = vmatprep.subr.mxu0 0.0
    %2586 = vmatpush1.msra.mxu0 %v2552
    %2587 = vmatprep.subr.mxu0 0.0
    %2588 = vmatpush1.msra.mxu0 %v2551
    %2589 = vmatprep.subr.mxu0 0.0
    %2590 = vmatpush1.msra.mxu0 %v2550
    %2591 = vmatprep.subr.mxu0 0.0
    %2592 = vmatpush1.msra.mxu0 %v2549
    %2593 = vmatprep.subr.mxu0 0.0
    %2594 = vmatpush2.msra.mxu0 0.0
    %2595 = vmatprep.subr.mxu0 0.0
    %2596 = vmatpush2.msra.mxu0 0.0
    %2597 = vmatprep.subr.mxu0 0.0
    %2598 = vmatpush2.msra.mxu0 0.0
    %2599 = vmatprep.subr.mxu0 0.0
    %2600 = vmatpush2.msra.mxu0 0.0
    %2601 = vmatprep.subr.mxu0 0.0
    %2602 = vmatpush2.msra.mxu0 0.0
    %2603 = vmatprep.subr.mxu0 0.0
    %2604 = vmatpush2.msra.mxu0 0.0
    %2605 = vmatprep.subr.mxu0 0.0
    %2606 = vmatpush2.msra.mxu0 0.0
    %2607 = vmatprep.subr.mxu0 0.0
    %2608 = vmatpush2.msra.mxu0 0.0
    %2609 = vmatprep.subr.mxu0 0.0
    %2610 = vmatpush2.msra.mxu0 0.0
    %2611 = vmatprep.subr.mxu0 0.0
    %2612 = vmatpush2.msra.mxu0 0.0
    %2613 = vmatprep.subr.mxu0 0.0
    %2614 = vmatpush2.msra.mxu0 0.0
    %2615 = vmatprep.subr.mxu0 0.0
    %2616 = vmatpush2.msra.mxu0 0.0
    %2617 = vmatprep.subr.mxu0 0.0
    %2618 = vmatpush2.msra.mxu0 0.0
    %2619 = vmatprep.subr.mxu0 0.0
    %2620 = vmatpush2.msra.mxu0 0.0
    %2621 = vmatprep.subr.mxu0 0.0
    %2622 = vmatpush2.msra.mxu0 0.0
    %2623 = vmatprep.subr.mxu0 0.0
    %2624 = vmatpush2.msra.mxu0 0.0
    %2625 = vmatprep.mubr.f32.mxu0 0.0
    %2626 = vmatmul.mubr.f32.gmra.mxu0 %v2444
    %v2627 = vpop.f32.mrf.mxu0
    %v2628 = vadd.f32 %v2559, %v2627
    %v2629 = vpop.f32.mrf.mxu0
    %2630 = vmatprep.mubr.f32.mxu0 0.0
    %2631 = vmatmul.mubr.f32.gmra.mxu0 %v2447
    %v2632 = vpop.f32.mrf.mxu0
    %v2633 = vadd.f32 %v2559, %v2632
    %v2634 = vpop.f32.mrf.mxu0
    %2635 = vmatprep.mubr.f32.mxu0 0.0
    %2636 = vmatmul.mubr.f32.gmra.mxu0 %v2450
    %v2637 = vpop.f32.mrf.mxu0
    %v2638 = vadd.f32 %v2559, %v2637
    %v2639 = vpop.f32.mrf.mxu0
    %2640 = vmatprep.mubr.f32.mxu0 0.0
    %2641 = vmatmul.mubr.f32.gmra.mxu0 %v2453
    %v2642 = vpop.f32.mrf.mxu0
    %v2643 = vadd.f32 %v2559, %v2642
    %v2644 = vpop.f32.mrf.mxu0
    %2645 = vmatprep.mubr.f32.mxu0 0.0
    %2646 = vmatmul.mubr.f32.gmra.mxu0 %v2456
    %v2647 = vpop.f32.mrf.mxu0
    %v2648 = vadd.f32 %v2559, %v2647
    %v2649 = vpop.f32.mrf.mxu0
    %2650 = vdwg.mxu0
    %s2651 = scalar_lea.vmem %s21, 32
    %v2652 = vld [vmem:[%s2651] sm:$0xff]
    %v2653 = vld [vmem:[%s2651 + $0x8] sm:$0xff]
    %v2654 = vld [vmem:[%s2651 + $0x10] sm:$0xff]
    %v2655 = vld [vmem:[%s2651 + $0x18] sm:$0xff]
    %s2656 = scalar_lea.vmem %s23, 1
    %v2657 = vld [vmem:[%s2656] sm:$0x1]
    %v2659 = vlaneseq
    %v2660 = vshrl.u32 %v2659, 7
    %v2661 = vsub.s32 0, %v2660
    %v2662 = vrot.slane %v2657, %v2661
    %2664 = vmatprep.subr.mxu0 0.0
    %2665 = vmatpush1.msra.mxu0 0.0
    %2666 = vmatprep.subr.mxu0 0.0
    %2667 = vmatpush1.msra.mxu0 0.0
    %2668 = vmatprep.subr.mxu0 0.0
    %2669 = vmatpush1.msra.mxu0 0.0
    %2670 = vmatprep.subr.mxu0 0.0
    %2671 = vmatpush1.msra.mxu0 0.0
    %2672 = vmatprep.subr.mxu0 0.0
    %2673 = vmatpush1.msra.mxu0 0.0
    %2674 = vmatprep.subr.mxu0 0.0
    %2675 = vmatpush1.msra.mxu0 0.0
    %2676 = vmatprep.subr.mxu0 0.0
    %2677 = vmatpush1.msra.mxu0 0.0
    %2678 = vmatprep.subr.mxu0 0.0
    %2679 = vmatpush1.msra.mxu0 0.0
    %2680 = vmatprep.subr.mxu0 0.0
    %2681 = vmatpush1.msra.mxu0 0.0
    %2682 = vmatprep.subr.mxu0 0.0
    %2683 = vmatpush1.msra.mxu0 0.0
    %2684 = vmatprep.subr.mxu0 0.0
    %2685 = vmatpush1.msra.mxu0 0.0
    %2686 = vmatprep.subr.mxu0 0.0
    %2687 = vmatpush1.msra.mxu0 0.0
    %2688 = vmatprep.subr.mxu0 0.0
    %2689 = vmatpush1.msra.mxu0 %v2655
    %2690 = vmatprep.subr.mxu0 0.0
    %2691 = vmatpush1.msra.mxu0 %v2654
    %2692 = vmatprep.subr.mxu0 0.0
    %2693 = vmatpush1.msra.mxu0 %v2653
    %2694 = vmatprep.subr.mxu0 0.0
    %2695 = vmatpush1.msra.mxu0 %v2652
    %2696 = vmatprep.subr.mxu0 0.0
    %2697 = vmatpush2.msra.mxu0 0.0
    %2698 = vmatprep.subr.mxu0 0.0
    %2699 = vmatpush2.msra.mxu0 0.0
    %2700 = vmatprep.subr.mxu0 0.0
    %2701 = vmatpush2.msra.mxu0 0.0
    %2702 = vmatprep.subr.mxu0 0.0
    %2703 = vmatpush2.msra.mxu0 0.0
    %2704 = vmatprep.subr.mxu0 0.0
    %2705 = vmatpush2.msra.mxu0 0.0
    %2706 = vmatprep.subr.mxu0 0.0
    %2707 = vmatpush2.msra.mxu0 0.0
    %2708 = vmatprep.subr.mxu0 0.0
    %2709 = vmatpush2.msra.mxu0 0.0
    %2710 = vmatprep.subr.mxu0 0.0
    %2711 = vmatpush2.msra.mxu0 0.0
    %2712 = vmatprep.subr.mxu0 0.0
    %2713 = vmatpush2.msra.mxu0 0.0
    %2714 = vmatprep.subr.mxu0 0.0
    %2715 = vmatpush2.msra.mxu0 0.0
    %2716 = vmatprep.subr.mxu0 0.0
    %2717 = vmatpush2.msra.mxu0 0.0
    %2718 = vmatprep.subr.mxu0 0.0
    %2719 = vmatpush2.msra.mxu0 0.0
    %2720 = vmatprep.subr.mxu0 0.0
    %2721 = vmatpush2.msra.mxu0 0.0
    %2722 = vmatprep.subr.mxu0 0.0
    %2723 = vmatpush2.msra.mxu0 0.0
    %2724 = vmatprep.subr.mxu0 0.0
    %2725 = vmatpush2.msra.mxu0 0.0
    %2726 = vmatprep.subr.mxu0 0.0
    %2727 = vmatpush2.msra.mxu0 0.0
    %2728 = vmatprep.mubr.f32.mxu0 0.0
    %2729 = vmatmul.mubr.f32.gmra.mxu0 %v2444
    %v2730 = vpop.f32.mrf.mxu0
    %v2731 = vadd.f32 %v2662, %v2730
    %v2732 = vpop.f32.mrf.mxu0
    %2733 = vmatprep.mubr.f32.mxu0 0.0
    %2734 = vmatmul.mubr.f32.gmra.mxu0 %v2447
    %v2735 = vpop.f32.mrf.mxu0
    %v2736 = vadd.f32 %v2662, %v2735
    %v2737 = vpop.f32.mrf.mxu0
    %2738 = vmatprep.mubr.f32.mxu0 0.0
    %2739 = vmatmul.mubr.f32.gmra.mxu0 %v2450
    %v2740 = vpop.f32.mrf.mxu0
    %v2741 = vadd.f32 %v2662, %v2740
    %v2742 = vpop.f32.mrf.mxu0
    %2743 = vmatprep.mubr.f32.mxu0 0.0
    %2744 = vmatmul.mubr.f32.gmra.mxu0 %v2453
    %v2745 = vpop.f32.mrf.mxu0
    %v2746 = vadd.f32 %v2662, %v2745
    %v2747 = vpop.f32.mrf.mxu0
    %2748 = vmatprep.mubr.f32.mxu0 0.0
    %2749 = vmatmul.mubr.f32.gmra.mxu0 %v2456
    %v2750 = vpop.f32.mrf.mxu0
    %v2751 = vadd.f32 %v2662, %v2750
    %v2752 = vpop.f32.mrf.mxu0
    %2753 = vdwg.mxu0
    %v2754 = vmul.f32 %v2525, %v668
    %v2755 = vmul.f32 %v2530, %v668
    %v2756 = vmul.f32 %v2535, %v668
    %v2757 = vmul.f32 %v2540, %v668
    %v2758 = vmul.f32 %v2545, %v668
    %v2760 = vsel %vm257, %v2754, 0
    %v2763 = vsel %vm257, %v2755, 0
    %v2766 = vsel %vm257, %v2756, 0
    %v2769 = vsel %vm257, %v2757, 0
    %v2772 = vsel %vm257, %v2758, 0
    %v2775 = vsel %vm257, %v2628, 0
    %v2778 = vsel %vm257, %v2633, 0
    %v2781 = vsel %vm257, %v2638, 0
    %v2784 = vsel %vm257, %v2643, 0
    %v2787 = vsel %vm257, %v2648, 0
    %2789 = vmatprep.subr.mxu0 0.0
    %2790 = vmatpush1.xpose.msra.mxu0 0.0
    %2791 = vmatprep.subr.mxu0 0.0
    %2792 = vmatpush1.xpose.msra.mxu0 0.0
    %2793 = vmatprep.subr.mxu0 0.0
    %2794 = vmatpush1.xpose.msra.mxu0 0.0
    %2795 = vmatprep.subr.mxu0 0.0
    %2796 = vmatpush1.xpose.msra.mxu0 0.0
    %2797 = vmatprep.subr.mxu0 0.0
    %2798 = vmatpush1.xpose.msra.mxu0 0.0
    %2799 = vmatprep.subr.mxu0 0.0
    %2800 = vmatpush1.xpose.msra.mxu0 0.0
    %2801 = vmatprep.subr.mxu0 0.0
    %2802 = vmatpush1.xpose.msra.mxu0 0.0
    %2803 = vmatprep.subr.mxu0 0.0
    %2804 = vmatpush1.xpose.msra.mxu0 0.0
    %2805 = vmatprep.subr.mxu0 0.0
    %2806 = vmatpush1.xpose.msra.mxu0 0.0
    %2807 = vmatprep.subr.mxu0 0.0
    %2808 = vmatpush1.xpose.msra.mxu0 0.0
    %2809 = vmatprep.subr.mxu0 0.0
    %2810 = vmatpush1.xpose.msra.mxu0 0.0
    %2811 = vmatprep.subr.mxu0 0.0
    %2812 = vmatpush1.xpose.msra.mxu0 %v2787
    %2813 = vmatprep.subr.mxu0 0.0
    %2814 = vmatpush1.xpose.msra.mxu0 %v2784
    %2815 = vmatprep.subr.mxu0 0.0
    %2816 = vmatpush1.xpose.msra.mxu0 %v2781
    %2817 = vmatprep.subr.mxu0 0.0
    %2818 = vmatpush1.xpose.msra.mxu0 %v2778
    %2819 = vmatprep.subr.mxu0 0.0
    %2820 = vmatpush1.xpose.msra.mxu0 %v2775
    %2821 = vmatprep.subr.mxu0 0.0
    %2822 = vmatpush2.xpose.msra.mxu0 0.0
    %2823 = vmatprep.subr.mxu0 0.0
    %2824 = vmatpush2.xpose.msra.mxu0 0.0
    %2825 = vmatprep.subr.mxu0 0.0
    %2826 = vmatpush2.xpose.msra.mxu0 0.0
    %2827 = vmatprep.subr.mxu0 0.0
    %2828 = vmatpush2.xpose.msra.mxu0 0.0
    %2829 = vmatprep.subr.mxu0 0.0
    %2830 = vmatpush2.xpose.msra.mxu0 0.0
    %2831 = vmatprep.subr.mxu0 0.0
    %2832 = vmatpush2.xpose.msra.mxu0 0.0
    %2833 = vmatprep.subr.mxu0 0.0
    %2834 = vmatpush2.xpose.msra.mxu0 0.0
    %2835 = vmatprep.subr.mxu0 0.0
    %2836 = vmatpush2.xpose.msra.mxu0 0.0
    %2837 = vmatprep.subr.mxu0 0.0
    %2838 = vmatpush2.xpose.msra.mxu0 0.0
    %2839 = vmatprep.subr.mxu0 0.0
    %2840 = vmatpush2.xpose.msra.mxu0 0.0
    %2841 = vmatprep.subr.mxu0 0.0
    %2842 = vmatpush2.xpose.msra.mxu0 0.0
    %2843 = vmatprep.subr.mxu0 0.0
    %2844 = vmatpush2.xpose.msra.mxu0 0.0
    %2845 = vmatprep.subr.mxu0 0.0
    %2846 = vmatpush2.xpose.msra.mxu0 0.0
    %2847 = vmatprep.subr.mxu0 0.0
    %2848 = vmatpush2.xpose.msra.mxu0 0.0
    %2849 = vmatprep.subr.mxu0 0.0
    %2850 = vmatpush2.xpose.msra.mxu0 0.0
    %2851 = vmatprep.subr.mxu0 0.0
    %2852 = vmatpush2.xpose.msra.mxu0 0.0
    %2853 = vmatprep.mubr.f32.mxu0 0.0
    %2854 = vmatmul.mubr.f32.gmra.mxu0 %v2760
    %v2855 = vpop.f32.mrf.mxu0
    %v2856 = vadd.f32 %v246, %v2855
    %v2857 = vpop.f32.mrf.mxu0
    %2858 = vmatprep.mubr.f32.mxu0 0.0
    %2859 = vmatmul.mubr.f32.gmra.mxu0 %v2763
    %v2860 = vpop.f32.mrf.mxu0
    %v2861 = vadd.f32 %v247, %v2860
    %v2862 = vpop.f32.mrf.mxu0
    %2863 = vmatprep.mubr.f32.mxu0 0.0
    %2864 = vmatmul.mubr.f32.gmra.mxu0 %v2766
    %v2865 = vpop.f32.mrf.mxu0
    %v2866 = vadd.f32 %v248, %v2865
    %v2867 = vpop.f32.mrf.mxu0
    %2868 = vmatprep.mubr.f32.mxu0 0.0
    %2869 = vmatmul.mubr.f32.gmra.mxu0 %v2769
    %v2870 = vpop.f32.mrf.mxu0
    %v2871 = vadd.f32 %v249, %v2870
    %v2872 = vpop.f32.mrf.mxu0
    %2873 = vmatprep.mubr.f32.mxu0 0.0
    %2874 = vmatmul.mubr.f32.gmra.mxu0 %v2772
    %v2875 = vpop.f32.mrf.mxu0
    %v2876 = vadd.f32 %v250, %v2875
    %v2877 = vpop.f32.mrf.mxu0
    %2878 = vdwg.mxu0
    %v2879 = vsel %vm794, %v2856, -inf
    %2880 = vmax.xlane.f32.xlu0 %v2879
    %v2881 = vpop.xlane.xlu0 %2880
    %v2882 = vsel %vm794, %v2861, -inf
    %2883 = vmax.xlane.f32.xlu0 %v2882
    %v2884 = vpop.xlane.xlu0 %2883
    %v2885 = vsel %vm794, %v2866, -inf
    %2886 = vmax.xlane.f32.xlu0 %v2885
    %v2887 = vpop.xlane.xlu0 %2886
    %v2888 = vsel %vm794, %v2871, -inf
    %2889 = vmax.xlane.f32.xlu0 %v2888
    %v2890 = vpop.xlane.xlu0 %2889
    %v2891 = vsel %vm794, %v2876, -inf
    %2892 = vmax.xlane.f32.xlu0 %v2891
    %v2893 = vpop.xlane.xlu0 %2892
    %v2894 = vsub.f32 %v2856, %v2881
    %v2895 = vsub.f32 %v2861, %v2884
    %v2896 = vsub.f32 %v2866, %v2887
    %v2897 = vsub.f32 %v2871, %v2890
    %v2898 = vsub.f32 %v2876, %v2893
    %v2899 = vmul.f32 %v2894, 1.442695
    %v2900 = vpow.pop %v2899
    %v2901 = vmul.f32 %v2895, 1.442695
    %v2902 = vpow.pop %v2901
    %v2903 = vmul.f32 %v2896, 1.442695
    %v2904 = vpow.pop %v2903
    %v2905 = vmul.f32 %v2897, 1.442695
    %v2906 = vpow.pop %v2905
    %v2907 = vmul.f32 %v2898, 1.442695
    %v2908 = vpow.pop %v2907
    %v2909 = vsel %vm794, %v2900, 0.0
    %2910 = vadd.xlane.f32.xlu0 %v2909
    %v2911 = vpop.xlane.xlu0 %2910
    %v2912 = vsel %vm794, %v2902, 0.0
    %2913 = vadd.xlane.f32.xlu0 %v2912
    %v2914 = vpop.xlane.xlu0 %2913
    %v2915 = vsel %vm794, %v2904, 0.0
    %2916 = vadd.xlane.f32.xlu0 %v2915
    %v2917 = vpop.xlane.xlu0 %2916
    %v2918 = vsel %vm794, %v2906, 0.0
    %2919 = vadd.xlane.f32.xlu0 %v2918
    %v2920 = vpop.xlane.xlu0 %2919
    %v2921 = vsel %vm794, %v2908, 0.0
    %2922 = vadd.xlane.f32.xlu0 %v2921
    %v2923 = vpop.xlane.xlu0 %2922
    %v2924 = vrcp.pop %v2911
    %v2925 = vrcp.pop %v2914
    %v2926 = vrcp.pop %v2917
    %v2927 = vrcp.pop %v2920
    %v2928 = vrcp.pop %v2923
    %v2929 = vmul.f32 %v2900, %v2924
    %v2930 = vmul.f32 %v2902, %v2925
    %v2931 = vmul.f32 %v2904, %v2926
    %v2932 = vmul.f32 %v2906, %v2927
    %v2933 = vmul.f32 %v2908, %v2928
    %v2934 = vmul.f32 %v2731, %v668
    %v2935 = vmul.f32 %v2736, %v668
    %v2936 = vmul.f32 %v2741, %v668
    %v2937 = vmul.f32 %v2746, %v668
    %v2938 = vmul.f32 %v2751, %v668
    %v2939 = vmul.f32 %v2525, %v859
    %v2940 = vmul.f32 %v2530, %v859
    %v2941 = vmul.f32 %v2535, %v859
    %v2942 = vmul.f32 %v2540, %v859
    %v2943 = vmul.f32 %v2545, %v859
    %v2945 = vsel %vm257, %v2939, 0
    %v2948 = vsel %vm257, %v2940, 0
    %v2951 = vsel %vm257, %v2941, 0
    %v2954 = vsel %vm257, %v2942, 0
    %v2957 = vsel %vm257, %v2943, 0
    %2959 = vmatprep.subr.mxu0 0.0
    %2960 = vmatpush1.xpose.msra.mxu0 0.0
    %2961 = vmatprep.subr.mxu0 0.0
    %2962 = vmatpush1.xpose.msra.mxu0 0.0
    %2963 = vmatprep.subr.mxu0 0.0
    %2964 = vmatpush1.xpose.msra.mxu0 0.0
    %2965 = vmatprep.subr.mxu0 0.0
    %2966 = vmatpush1.xpose.msra.mxu0 0.0
    %2967 = vmatprep.subr.mxu0 0.0
    %2968 = vmatpush1.xpose.msra.mxu0 0.0
    %2969 = vmatprep.subr.mxu0 0.0
    %2970 = vmatpush1.xpose.msra.mxu0 0.0
    %2971 = vmatprep.subr.mxu0 0.0
    %2972 = vmatpush1.xpose.msra.mxu0 0.0
    %2973 = vmatprep.subr.mxu0 0.0
    %2974 = vmatpush1.xpose.msra.mxu0 0.0
    %2975 = vmatprep.subr.mxu0 0.0
    %2976 = vmatpush1.xpose.msra.mxu0 0.0
    %2977 = vmatprep.subr.mxu0 0.0
    %2978 = vmatpush1.xpose.msra.mxu0 0.0
    %2979 = vmatprep.subr.mxu0 0.0
    %2980 = vmatpush1.xpose.msra.mxu0 0.0
    %2981 = vmatprep.subr.mxu0 0.0
    %2982 = vmatpush1.xpose.msra.mxu0 %v2787
    %2983 = vmatprep.subr.mxu0 0.0
    %2984 = vmatpush1.xpose.msra.mxu0 %v2784
    %2985 = vmatprep.subr.mxu0 0.0
    %2986 = vmatpush1.xpose.msra.mxu0 %v2781
    %2987 = vmatprep.subr.mxu0 0.0
    %2988 = vmatpush1.xpose.msra.mxu0 %v2778
    %2989 = vmatprep.subr.mxu0 0.0
    %2990 = vmatpush1.xpose.msra.mxu0 %v2775
    %2991 = vmatprep.subr.mxu0 0.0
    %2992 = vmatpush2.xpose.msra.mxu0 0.0
    %2993 = vmatprep.subr.mxu0 0.0
    %2994 = vmatpush2.xpose.msra.mxu0 0.0
    %2995 = vmatprep.subr.mxu0 0.0
    %2996 = vmatpush2.xpose.msra.mxu0 0.0
    %2997 = vmatprep.subr.mxu0 0.0
    %2998 = vmatpush2.xpose.msra.mxu0 0.0
    %2999 = vmatprep.subr.mxu0 0.0
    %3000 = vmatpush2.xpose.msra.mxu0 0.0
    %3001 = vmatprep.subr.mxu0 0.0
    %3002 = vmatpush2.xpose.msra.mxu0 0.0
    %3003 = vmatprep.subr.mxu0 0.0
    %3004 = vmatpush2.xpose.msra.mxu0 0.0
    %3005 = vmatprep.subr.mxu0 0.0
    %3006 = vmatpush2.xpose.msra.mxu0 0.0
    %3007 = vmatprep.subr.mxu0 0.0
    %3008 = vmatpush2.xpose.msra.mxu0 0.0
    %3009 = vmatprep.subr.mxu0 0.0
    %3010 = vmatpush2.xpose.msra.mxu0 0.0
    %3011 = vmatprep.subr.mxu0 0.0
    %3012 = vmatpush2.xpose.msra.mxu0 0.0
    %3013 = vmatprep.subr.mxu0 0.0
    %3014 = vmatpush2.xpose.msra.mxu0 0.0
    %3015 = vmatprep.subr.mxu0 0.0
    %3016 = vmatpush2.xpose.msra.mxu0 0.0
    %3017 = vmatprep.subr.mxu0 0.0
    %3018 = vmatpush2.xpose.msra.mxu0 0.0
    %3019 = vmatprep.subr.mxu0 0.0
    %3020 = vmatpush2.xpose.msra.mxu0 0.0
    %3021 = vmatprep.subr.mxu0 0.0
    %3022 = vmatpush2.xpose.msra.mxu0 0.0
    %3023 = vmatprep.mubr.f32.mxu0 0.0
    %3024 = vmatmul.mubr.f32.gmra.mxu0 %v2945
    %v3025 = vpop.f32.mrf.mxu0
    %v3026 = vadd.f32 %v246, %v3025
    %v3027 = vpop.f32.mrf.mxu0
    %3028 = vmatprep.mubr.f32.mxu0 0.0
    %3029 = vmatmul.mubr.f32.gmra.mxu0 %v2948
    %v3030 = vpop.f32.mrf.mxu0
    %v3031 = vadd.f32 %v247, %v3030
    %v3032 = vpop.f32.mrf.mxu0
    %3033 = vmatprep.mubr.f32.mxu0 0.0
    %3034 = vmatmul.mubr.f32.gmra.mxu0 %v2951
    %v3035 = vpop.f32.mrf.mxu0
    %v3036 = vadd.f32 %v248, %v3035
    %v3037 = vpop.f32.mrf.mxu0
    %3038 = vmatprep.mubr.f32.mxu0 0.0
    %3039 = vmatmul.mubr.f32.gmra.mxu0 %v2954
    %v3040 = vpop.f32.mrf.mxu0
    %v3041 = vadd.f32 %v249, %v3040
    %v3042 = vpop.f32.mrf.mxu0
    %3043 = vmatprep.mubr.f32.mxu0 0.0
    %3044 = vmatmul.mubr.f32.gmra.mxu0 %v2957
    %v3045 = vpop.f32.mrf.mxu0
    %v3046 = vadd.f32 %v250, %v3045
    %v3047 = vpop.f32.mrf.mxu0
    %3048 = vdwg.mxu0
    %v3049 = vsel %vm794, %v3026, -inf
    %3050 = vmax.xlane.f32.xlu0 %v3049
    %v3051 = vpop.xlane.xlu0 %3050
    %v3052 = vsel %vm794, %v3031, -inf
    %3053 = vmax.xlane.f32.xlu0 %v3052
    %v3054 = vpop.xlane.xlu0 %3053
    %v3055 = vsel %vm794, %v3036, -inf
    %3056 = vmax.xlane.f32.xlu0 %v3055
    %v3057 = vpop.xlane.xlu0 %3056
    %v3058 = vsel %vm794, %v3041, -inf
    %3059 = vmax.xlane.f32.xlu0 %v3058
    %v3060 = vpop.xlane.xlu0 %3059
    %v3061 = vsel %vm794, %v3046, -inf
    %3062 = vmax.xlane.f32.xlu0 %v3061
    %v3063 = vpop.xlane.xlu0 %3062
    %v3064 = vsub.f32 %v3026, %v3051
    %v3065 = vsub.f32 %v3031, %v3054
    %v3066 = vsub.f32 %v3036, %v3057
    %v3067 = vsub.f32 %v3041, %v3060
    %v3068 = vsub.f32 %v3046, %v3063
    %v3069 = vmul.f32 %v3064, 1.442695
    %v3070 = vpow.pop %v3069
    %v3071 = vmul.f32 %v3065, 1.442695
    %v3072 = vpow.pop %v3071
    %v3073 = vmul.f32 %v3066, 1.442695
    %v3074 = vpow.pop %v3073
    %v3075 = vmul.f32 %v3067, 1.442695
    %v3076 = vpow.pop %v3075
    %v3077 = vmul.f32 %v3068, 1.442695
    %v3078 = vpow.pop %v3077
    %v3079 = vsel %vm794, %v3070, 0.0
    %3080 = vadd.xlane.f32.xlu0 %v3079
    %v3081 = vpop.xlane.xlu0 %3080
    %v3082 = vsel %vm794, %v3072, 0.0
    %3083 = vadd.xlane.f32.xlu0 %v3082
    %v3084 = vpop.xlane.xlu0 %3083
    %v3085 = vsel %vm794, %v3074, 0.0
    %3086 = vadd.xlane.f32.xlu0 %v3085
    %v3087 = vpop.xlane.xlu0 %3086
    %v3088 = vsel %vm794, %v3076, 0.0
    %3089 = vadd.xlane.f32.xlu0 %v3088
    %v3090 = vpop.xlane.xlu0 %3089
    %v3091 = vsel %vm794, %v3078, 0.0
    %3092 = vadd.xlane.f32.xlu0 %v3091
    %v3093 = vpop.xlane.xlu0 %3092
    %v3094 = vrcp.pop %v3081
    %v3095 = vrcp.pop %v3084
    %v3096 = vrcp.pop %v3087
    %v3097 = vrcp.pop %v3090
    %v3098 = vrcp.pop %v3093
    %v3099 = vmul.f32 %v3070, %v3094
    %v3100 = vmul.f32 %v3072, %v3095
    %v3101 = vmul.f32 %v3074, %v3096
    %v3102 = vmul.f32 %v3076, %v3097
    %v3103 = vmul.f32 %v3078, %v3098
    %v3104 = vmul.f32 %v2731, %v859
    %v3105 = vmul.f32 %v2736, %v859
    %v3106 = vmul.f32 %v2741, %v859
    %v3107 = vmul.f32 %v2746, %v859
    %v3108 = vmul.f32 %v2751, %v859
    %v3110 = vsel %vm794, %v3099, 0
    %v3113 = vsel %vm794, %v3100, 0
    %v3116 = vsel %vm794, %v3101, 0
    %v3119 = vsel %vm794, %v3102, 0
    %v3122 = vsel %vm794, %v3103, 0
    %3124 = vmatprep.subr.mxu0 0.0
    %3125 = vmatpush1.msra.mxu0 0.0
    %3126 = vmatprep.subr.mxu0 0.0
    %3127 = vmatpush1.msra.mxu0 0.0
    %3128 = vmatprep.subr.mxu0 0.0
    %3129 = vmatpush1.msra.mxu0 0.0
    %3130 = vmatprep.subr.mxu0 0.0
    %3131 = vmatpush1.msra.mxu0 0.0
    %3132 = vmatprep.subr.mxu0 0.0
    %3133 = vmatpush1.msra.mxu0 0.0
    %3134 = vmatprep.subr.mxu0 0.0
    %3135 = vmatpush1.msra.mxu0 0.0
    %3136 = vmatprep.subr.mxu0 0.0
    %3137 = vmatpush1.msra.mxu0 0.0
    %3138 = vmatprep.subr.mxu0 0.0
    %3139 = vmatpush1.msra.mxu0 0.0
    %3140 = vmatprep.subr.mxu0 0.0
    %3141 = vmatpush1.msra.mxu0 0.0
    %3142 = vmatprep.subr.mxu0 0.0
    %3143 = vmatpush1.msra.mxu0 0.0
    %3144 = vmatprep.subr.mxu0 0.0
    %3145 = vmatpush1.msra.mxu0 0.0
    %3146 = vmatprep.subr.mxu0 0.0
    %3147 = vmatpush1.msra.mxu0 %v3108
    %3148 = vmatprep.subr.mxu0 0.0
    %3149 = vmatpush1.msra.mxu0 %v3107
    %3150 = vmatprep.subr.mxu0 0.0
    %3151 = vmatpush1.msra.mxu0 %v3106
    %3152 = vmatprep.subr.mxu0 0.0
    %3153 = vmatpush1.msra.mxu0 %v3105
    %3154 = vmatprep.subr.mxu0 0.0
    %3155 = vmatpush1.msra.mxu0 %v3104
    %3156 = vmatprep.subr.mxu0 0.0
    %3157 = vmatpush2.msra.mxu0 0.0
    %3158 = vmatprep.subr.mxu0 0.0
    %3159 = vmatpush2.msra.mxu0 0.0
    %3160 = vmatprep.subr.mxu0 0.0
    %3161 = vmatpush2.msra.mxu0 0.0
    %3162 = vmatprep.subr.mxu0 0.0
    %3163 = vmatpush2.msra.mxu0 0.0
    %3164 = vmatprep.subr.mxu0 0.0
    %3165 = vmatpush2.msra.mxu0 0.0
    %3166 = vmatprep.subr.mxu0 0.0
    %3167 = vmatpush2.msra.mxu0 0.0
    %3168 = vmatprep.subr.mxu0 0.0
    %3169 = vmatpush2.msra.mxu0 0.0
    %3170 = vmatprep.subr.mxu0 0.0
    %3171 = vmatpush2.msra.mxu0 0.0
    %3172 = vmatprep.subr.mxu0 0.0
    %3173 = vmatpush2.msra.mxu0 0.0
    %3174 = vmatprep.subr.mxu0 0.0
    %3175 = vmatpush2.msra.mxu0 0.0
    %3176 = vmatprep.subr.mxu0 0.0
    %3177 = vmatpush2.msra.mxu0 0.0
    %3178 = vmatprep.subr.mxu0 0.0
    %3179 = vmatpush2.msra.mxu0 0.0
    %3180 = vmatprep.subr.mxu0 0.0
    %3181 = vmatpush2.msra.mxu0 0.0
    %3182 = vmatprep.subr.mxu0 0.0
    %3183 = vmatpush2.msra.mxu0 0.0
    %3184 = vmatprep.subr.mxu0 0.0
    %3185 = vmatpush2.msra.mxu0 0.0
    %3186 = vmatprep.subr.mxu0 0.0
    %3187 = vmatpush2.msra.mxu0 0.0
    %3188 = vmatprep.mubr.f32.mxu0 0.0
    %3189 = vmatmul.mubr.f32.gmra.mxu0 %v3110
    %v3190 = vpop.f32.mrf.mxu0
    %v3191 = vadd.f32 0.0, %v3190
    %v3192 = vpop.f32.mrf.mxu0
    %3193 = vmatprep.mubr.f32.mxu0 0.0
    %3194 = vmatmul.mubr.f32.gmra.mxu0 %v3113
    %v3195 = vpop.f32.mrf.mxu0
    %v3196 = vadd.f32 0.0, %v3195
    %v3197 = vpop.f32.mrf.mxu0
    %3198 = vmatprep.mubr.f32.mxu0 0.0
    %3199 = vmatmul.mubr.f32.gmra.mxu0 %v3116
    %v3200 = vpop.f32.mrf.mxu0
    %v3201 = vadd.f32 0.0, %v3200
    %v3202 = vpop.f32.mrf.mxu0
    %3203 = vmatprep.mubr.f32.mxu0 0.0
    %3204 = vmatmul.mubr.f32.gmra.mxu0 %v3119
    %v3205 = vpop.f32.mrf.mxu0
    %v3206 = vadd.f32 0.0, %v3205
    %v3207 = vpop.f32.mrf.mxu0
    %3208 = vmatprep.mubr.f32.mxu0 0.0
    %3209 = vmatmul.mubr.f32.gmra.mxu0 %v3122
    %v3210 = vpop.f32.mrf.mxu0
    %v3211 = vadd.f32 0.0, %v3210
    %v3212 = vpop.f32.mrf.mxu0
    %3213 = vdwg.mxu0
    %v3215 = vsel %vm794, %v2929, 0
    %v3218 = vsel %vm794, %v2930, 0
    %v3221 = vsel %vm794, %v2931, 0
    %v3224 = vsel %vm794, %v2932, 0
    %v3227 = vsel %vm794, %v2933, 0
    %3229 = vmatprep.subr.mxu0 0.0
    %3230 = vmatpush1.msra.mxu0 0.0
    %3231 = vmatprep.subr.mxu0 0.0
    %3232 = vmatpush1.msra.mxu0 0.0
    %3233 = vmatprep.subr.mxu0 0.0
    %3234 = vmatpush1.msra.mxu0 0.0
    %3235 = vmatprep.subr.mxu0 0.0
    %3236 = vmatpush1.msra.mxu0 0.0
    %3237 = vmatprep.subr.mxu0 0.0
    %3238 = vmatpush1.msra.mxu0 0.0
    %3239 = vmatprep.subr.mxu0 0.0
    %3240 = vmatpush1.msra.mxu0 0.0
    %3241 = vmatprep.subr.mxu0 0.0
    %3242 = vmatpush1.msra.mxu0 0.0
    %3243 = vmatprep.subr.mxu0 0.0
    %3244 = vmatpush1.msra.mxu0 0.0
    %3245 = vmatprep.subr.mxu0 0.0
    %3246 = vmatpush1.msra.mxu0 0.0
    %3247 = vmatprep.subr.mxu0 0.0
    %3248 = vmatpush1.msra.mxu0 0.0
    %3249 = vmatprep.subr.mxu0 0.0
    %3250 = vmatpush1.msra.mxu0 0.0
    %3251 = vmatprep.subr.mxu0 0.0
    %3252 = vmatpush1.msra.mxu0 %v2938
    %3253 = vmatprep.subr.mxu0 0.0
    %3254 = vmatpush1.msra.mxu0 %v2937
    %3255 = vmatprep.subr.mxu0 0.0
    %3256 = vmatpush1.msra.mxu0 %v2936
    %3257 = vmatprep.subr.mxu0 0.0
    %3258 = vmatpush1.msra.mxu0 %v2935
    %3259 = vmatprep.subr.mxu0 0.0
    %3260 = vmatpush1.msra.mxu0 %v2934
    %3261 = vmatprep.subr.mxu0 0.0
    %3262 = vmatpush2.msra.mxu0 0.0
    %3263 = vmatprep.subr.mxu0 0.0
    %3264 = vmatpush2.msra.mxu0 0.0
    %3265 = vmatprep.subr.mxu0 0.0
    %3266 = vmatpush2.msra.mxu0 0.0
    %3267 = vmatprep.subr.mxu0 0.0
    %3268 = vmatpush2.msra.mxu0 0.0
    %3269 = vmatprep.subr.mxu0 0.0
    %3270 = vmatpush2.msra.mxu0 0.0
    %3271 = vmatprep.subr.mxu0 0.0
    %3272 = vmatpush2.msra.mxu0 0.0
    %3273 = vmatprep.subr.mxu0 0.0
    %3274 = vmatpush2.msra.mxu0 0.0
    %3275 = vmatprep.subr.mxu0 0.0
    %3276 = vmatpush2.msra.mxu0 0.0
    %3277 = vmatprep.subr.mxu0 0.0
    %3278 = vmatpush2.msra.mxu0 0.0
    %3279 = vmatprep.subr.mxu0 0.0
    %3280 = vmatpush2.msra.mxu0 0.0
    %3281 = vmatprep.subr.mxu0 0.0
    %3282 = vmatpush2.msra.mxu0 0.0
    %3283 = vmatprep.subr.mxu0 0.0
    %3284 = vmatpush2.msra.mxu0 0.0
    %3285 = vmatprep.subr.mxu0 0.0
    %3286 = vmatpush2.msra.mxu0 0.0
    %3287 = vmatprep.subr.mxu0 0.0
    %3288 = vmatpush2.msra.mxu0 0.0
    %3289 = vmatprep.subr.mxu0 0.0
    %3290 = vmatpush2.msra.mxu0 0.0
    %3291 = vmatprep.subr.mxu0 0.0
    %3292 = vmatpush2.msra.mxu0 0.0
    %3293 = vmatprep.mubr.f32.mxu0 0.0
    %3294 = vmatmul.mubr.f32.gmra.mxu0 %v3215
    %v3295 = vpop.f32.mrf.mxu0
    %v3296 = vadd.f32 %v3191, %v3295
    %v3297 = vpop.f32.mrf.mxu0
    %3298 = vmatprep.mubr.f32.mxu0 0.0
    %3299 = vmatmul.mubr.f32.gmra.mxu0 %v3218
    %v3300 = vpop.f32.mrf.mxu0
    %v3301 = vadd.f32 %v3196, %v3300
    %v3302 = vpop.f32.mrf.mxu0
    %3303 = vmatprep.mubr.f32.mxu0 0.0
    %3304 = vmatmul.mubr.f32.gmra.mxu0 %v3221
    %v3305 = vpop.f32.mrf.mxu0
    %v3306 = vadd.f32 %v3201, %v3305
    %v3307 = vpop.f32.mrf.mxu0
    %3308 = vmatprep.mubr.f32.mxu0 0.0
    %3309 = vmatmul.mubr.f32.gmra.mxu0 %v3224
    %v3310 = vpop.f32.mrf.mxu0
    %v3311 = vadd.f32 %v3206, %v3310
    %v3312 = vpop.f32.mrf.mxu0
    %3313 = vmatprep.mubr.f32.mxu0 0.0
    %3314 = vmatmul.mubr.f32.gmra.mxu0 %v3227
    %v3315 = vpop.f32.mrf.mxu0
    %v3316 = vadd.f32 %v3211, %v3315
    %v3317 = vpop.f32.mrf.mxu0
    %3318 = vdwg.mxu0
    %v3319 = vmul.f32 %v2525, %v1244
    %v3320 = vmul.f32 %v2530, %v1244
    %v3321 = vmul.f32 %v2535, %v1244
    %v3322 = vmul.f32 %v2540, %v1244
    %v3323 = vmul.f32 %v2545, %v1244
    %v3325 = vsel %vm257, %v3319, 0
    %v3328 = vsel %vm257, %v3320, 0
    %v3331 = vsel %vm257, %v3321, 0
    %v3334 = vsel %vm257, %v3322, 0
    %v3337 = vsel %vm257, %v3323, 0
    %3339 = vmatprep.subr.mxu0 0.0
    %3340 = vmatpush1.xpose.msra.mxu0 0.0
    %3341 = vmatprep.subr.mxu0 0.0
    %3342 = vmatpush1.xpose.msra.mxu0 0.0
    %3343 = vmatprep.subr.mxu0 0.0
    %3344 = vmatpush1.xpose.msra.mxu0 0.0
    %3345 = vmatprep.subr.mxu0 0.0
    %3346 = vmatpush1.xpose.msra.mxu0 0.0
    %3347 = vmatprep.subr.mxu0 0.0
    %3348 = vmatpush1.xpose.msra.mxu0 0.0
    %3349 = vmatprep.subr.mxu0 0.0
    %3350 = vmatpush1.xpose.msra.mxu0 0.0
    %3351 = vmatprep.subr.mxu0 0.0
    %3352 = vmatpush1.xpose.msra.mxu0 0.0
    %3353 = vmatprep.subr.mxu0 0.0
    %3354 = vmatpush1.xpose.msra.mxu0 0.0
    %3355 = vmatprep.subr.mxu0 0.0
    %3356 = vmatpush1.xpose.msra.mxu0 0.0
    %3357 = vmatprep.subr.mxu0 0.0
    %3358 = vmatpush1.xpose.msra.mxu0 0.0
    %3359 = vmatprep.subr.mxu0 0.0
    %3360 = vmatpush1.xpose.msra.mxu0 0.0
    %3361 = vmatprep.subr.mxu0 0.0
    %3362 = vmatpush1.xpose.msra.mxu0 %v2787
    %3363 = vmatprep.subr.mxu0 0.0
    %3364 = vmatpush1.xpose.msra.mxu0 %v2784
    %3365 = vmatprep.subr.mxu0 0.0
    %3366 = vmatpush1.xpose.msra.mxu0 %v2781
    %3367 = vmatprep.subr.mxu0 0.0
    %3368 = vmatpush1.xpose.msra.mxu0 %v2778
    %3369 = vmatprep.subr.mxu0 0.0
    %3370 = vmatpush1.xpose.msra.mxu0 %v2775
    %3371 = vmatprep.subr.mxu0 0.0
    %3372 = vmatpush2.xpose.msra.mxu0 0.0
    %3373 = vmatprep.subr.mxu0 0.0
    %3374 = vmatpush2.xpose.msra.mxu0 0.0
    %3375 = vmatprep.subr.mxu0 0.0
    %3376 = vmatpush2.xpose.msra.mxu0 0.0
    %3377 = vmatprep.subr.mxu0 0.0
    %3378 = vmatpush2.xpose.msra.mxu0 0.0
    %3379 = vmatprep.subr.mxu0 0.0
    %3380 = vmatpush2.xpose.msra.mxu0 0.0
    %3381 = vmatprep.subr.mxu0 0.0
    %3382 = vmatpush2.xpose.msra.mxu0 0.0
    %3383 = vmatprep.subr.mxu0 0.0
    %3384 = vmatpush2.xpose.msra.mxu0 0.0
    %3385 = vmatprep.subr.mxu0 0.0
    %3386 = vmatpush2.xpose.msra.mxu0 0.0
    %3387 = vmatprep.subr.mxu0 0.0
    %3388 = vmatpush2.xpose.msra.mxu0 0.0
    %3389 = vmatprep.subr.mxu0 0.0
    %3390 = vmatpush2.xpose.msra.mxu0 0.0
    %3391 = vmatprep.subr.mxu0 0.0
    %3392 = vmatpush2.xpose.msra.mxu0 0.0
    %3393 = vmatprep.subr.mxu0 0.0
    %3394 = vmatpush2.xpose.msra.mxu0 0.0
    %3395 = vmatprep.subr.mxu0 0.0
    %3396 = vmatpush2.xpose.msra.mxu0 0.0
    %3397 = vmatprep.subr.mxu0 0.0
    %3398 = vmatpush2.xpose.msra.mxu0 0.0
    %3399 = vmatprep.subr.mxu0 0.0
    %3400 = vmatpush2.xpose.msra.mxu0 0.0
    %3401 = vmatprep.subr.mxu0 0.0
    %3402 = vmatpush2.xpose.msra.mxu0 0.0
    %3403 = vmatprep.mubr.f32.mxu0 0.0
    %3404 = vmatmul.mubr.f32.gmra.mxu0 %v3325
    %v3405 = vpop.f32.mrf.mxu0
    %v3406 = vadd.f32 %v246, %v3405
    %v3407 = vpop.f32.mrf.mxu0
    %3408 = vmatprep.mubr.f32.mxu0 0.0
    %3409 = vmatmul.mubr.f32.gmra.mxu0 %v3328
    %v3410 = vpop.f32.mrf.mxu0
    %v3411 = vadd.f32 %v247, %v3410
    %v3412 = vpop.f32.mrf.mxu0
    %3413 = vmatprep.mubr.f32.mxu0 0.0
    %3414 = vmatmul.mubr.f32.gmra.mxu0 %v3331
    %v3415 = vpop.f32.mrf.mxu0
    %v3416 = vadd.f32 %v248, %v3415
    %v3417 = vpop.f32.mrf.mxu0
    %3418 = vmatprep.mubr.f32.mxu0 0.0
    %3419 = vmatmul.mubr.f32.gmra.mxu0 %v3334
    %v3420 = vpop.f32.mrf.mxu0
    %v3421 = vadd.f32 %v249, %v3420
    %v3422 = vpop.f32.mrf.mxu0
    %3423 = vmatprep.mubr.f32.mxu0 0.0
    %3424 = vmatmul.mubr.f32.gmra.mxu0 %v3337
    %v3425 = vpop.f32.mrf.mxu0
    %v3426 = vadd.f32 %v250, %v3425
    %v3427 = vpop.f32.mrf.mxu0
    %3428 = vdwg.mxu0
    %v3429 = vsel %vm794, %v3406, -inf
    %3430 = vmax.xlane.f32.xlu0 %v3429
    %v3431 = vpop.xlane.xlu0 %3430
    %v3432 = vsel %vm794, %v3411, -inf
    %3433 = vmax.xlane.f32.xlu0 %v3432
    %v3434 = vpop.xlane.xlu0 %3433
    %v3435 = vsel %vm794, %v3416, -inf
    %3436 = vmax.xlane.f32.xlu0 %v3435
    %v3437 = vpop.xlane.xlu0 %3436
    %v3438 = vsel %vm794, %v3421, -inf
    %3439 = vmax.xlane.f32.xlu0 %v3438
    %v3440 = vpop.xlane.xlu0 %3439
    %v3441 = vsel %vm794, %v3426, -inf
    %3442 = vmax.xlane.f32.xlu0 %v3441
    %v3443 = vpop.xlane.xlu0 %3442
    %v3444 = vsub.f32 %v3406, %v3431
    %v3445 = vsub.f32 %v3411, %v3434
    %v3446 = vsub.f32 %v3416, %v3437
    %v3447 = vsub.f32 %v3421, %v3440
    %v3448 = vsub.f32 %v3426, %v3443
    %v3449 = vmul.f32 %v3444, 1.442695
    %v3450 = vpow.pop %v3449
    %v3451 = vmul.f32 %v3445, 1.442695
    %v3452 = vpow.pop %v3451
    %v3453 = vmul.f32 %v3446, 1.442695
    %v3454 = vpow.pop %v3453
    %v3455 = vmul.f32 %v3447, 1.442695
    %v3456 = vpow.pop %v3455
    %v3457 = vmul.f32 %v3448, 1.442695
    %v3458 = vpow.pop %v3457
    %v3459 = vsel %vm794, %v3450, 0.0
    %3460 = vadd.xlane.f32.xlu0 %v3459
    %v3461 = vpop.xlane.xlu0 %3460
    %v3462 = vsel %vm794, %v3452, 0.0
    %3463 = vadd.xlane.f32.xlu0 %v3462
    %v3464 = vpop.xlane.xlu0 %3463
    %v3465 = vsel %vm794, %v3454, 0.0
    %3466 = vadd.xlane.f32.xlu0 %v3465
    %v3467 = vpop.xlane.xlu0 %3466
    %v3468 = vsel %vm794, %v3456, 0.0
    %3469 = vadd.xlane.f32.xlu0 %v3468
    %v3470 = vpop.xlane.xlu0 %3469
    %v3471 = vsel %vm794, %v3458, 0.0
    %3472 = vadd.xlane.f32.xlu0 %v3471
    %v3473 = vpop.xlane.xlu0 %3472
    %v3474 = vrcp.pop %v3461
    %v3475 = vrcp.pop %v3464
    %v3476 = vrcp.pop %v3467
    %v3477 = vrcp.pop %v3470
    %v3478 = vrcp.pop %v3473
    %v3479 = vmul.f32 %v3450, %v3474
    %v3480 = vmul.f32 %v3452, %v3475
    %v3481 = vmul.f32 %v3454, %v3476
    %v3482 = vmul.f32 %v3456, %v3477
    %v3483 = vmul.f32 %v3458, %v3478
    %v3484 = vmul.f32 %v2731, %v1244
    %v3485 = vmul.f32 %v2736, %v1244
    %v3486 = vmul.f32 %v2741, %v1244
    %v3487 = vmul.f32 %v2746, %v1244
    %v3488 = vmul.f32 %v2751, %v1244
    %v3490 = vsel %vm794, %v3479, 0
    %v3493 = vsel %vm794, %v3480, 0
    %v3496 = vsel %vm794, %v3481, 0
    %v3499 = vsel %vm794, %v3482, 0
    %v3502 = vsel %vm794, %v3483, 0
    %3504 = vmatprep.subr.mxu0 0.0
    %3505 = vmatpush1.msra.mxu0 0.0
    %3506 = vmatprep.subr.mxu0 0.0
    %3507 = vmatpush1.msra.mxu0 0.0
    %3508 = vmatprep.subr.mxu0 0.0
    %3509 = vmatpush1.msra.mxu0 0.0
    %3510 = vmatprep.subr.mxu0 0.0
    %3511 = vmatpush1.msra.mxu0 0.0
    %3512 = vmatprep.subr.mxu0 0.0
    %3513 = vmatpush1.msra.mxu0 0.0
    %3514 = vmatprep.subr.mxu0 0.0
    %3515 = vmatpush1.msra.mxu0 0.0
    %3516 = vmatprep.subr.mxu0 0.0
    %3517 = vmatpush1.msra.mxu0 0.0
    %3518 = vmatprep.subr.mxu0 0.0
    %3519 = vmatpush1.msra.mxu0 0.0
    %3520 = vmatprep.subr.mxu0 0.0
    %3521 = vmatpush1.msra.mxu0 0.0
    %3522 = vmatprep.subr.mxu0 0.0
    %3523 = vmatpush1.msra.mxu0 0.0
    %3524 = vmatprep.subr.mxu0 0.0
    %3525 = vmatpush1.msra.mxu0 0.0
    %3526 = vmatprep.subr.mxu0 0.0
    %3527 = vmatpush1.msra.mxu0 %v3488
    %3528 = vmatprep.subr.mxu0 0.0
    %3529 = vmatpush1.msra.mxu0 %v3487
    %3530 = vmatprep.subr.mxu0 0.0
    %3531 = vmatpush1.msra.mxu0 %v3486
    %3532 = vmatprep.subr.mxu0 0.0
    %3533 = vmatpush1.msra.mxu0 %v3485
    %3534 = vmatprep.subr.mxu0 0.0
    %3535 = vmatpush1.msra.mxu0 %v3484
    %3536 = vmatprep.subr.mxu0 0.0
    %3537 = vmatpush2.msra.mxu0 0.0
    %3538 = vmatprep.subr.mxu0 0.0
    %3539 = vmatpush2.msra.mxu0 0.0
    %3540 = vmatprep.subr.mxu0 0.0
    %3541 = vmatpush2.msra.mxu0 0.0
    %3542 = vmatprep.subr.mxu0 0.0
    %3543 = vmatpush2.msra.mxu0 0.0
    %3544 = vmatprep.subr.mxu0 0.0
    %3545 = vmatpush2.msra.mxu0 0.0
    %3546 = vmatprep.subr.mxu0 0.0
    %3547 = vmatpush2.msra.mxu0 0.0
    %3548 = vmatprep.subr.mxu0 0.0
    %3549 = vmatpush2.msra.mxu0 0.0
    %3550 = vmatprep.subr.mxu0 0.0
    %3551 = vmatpush2.msra.mxu0 0.0
    %3552 = vmatprep.subr.mxu0 0.0
    %3553 = vmatpush2.msra.mxu0 0.0
    %3554 = vmatprep.subr.mxu0 0.0
    %3555 = vmatpush2.msra.mxu0 0.0
    %3556 = vmatprep.subr.mxu0 0.0
    %3557 = vmatpush2.msra.mxu0 0.0
    %3558 = vmatprep.subr.mxu0 0.0
    %3559 = vmatpush2.msra.mxu0 0.0
    %3560 = vmatprep.subr.mxu0 0.0
    %3561 = vmatpush2.msra.mxu0 0.0
    %3562 = vmatprep.subr.mxu0 0.0
    %3563 = vmatpush2.msra.mxu0 0.0
    %3564 = vmatprep.subr.mxu0 0.0
    %3565 = vmatpush2.msra.mxu0 0.0
    %3566 = vmatprep.subr.mxu0 0.0
    %3567 = vmatpush2.msra.mxu0 0.0
    %3568 = vmatprep.mubr.f32.mxu0 0.0
    %3569 = vmatmul.mubr.f32.gmra.mxu0 %v3490
    %v3570 = vpop.f32.mrf.mxu0
    %v3571 = vadd.f32 0.0, %v3570
    %v3572 = vpop.f32.mrf.mxu0
    %3573 = vmatprep.mubr.f32.mxu0 0.0
    %3574 = vmatmul.mubr.f32.gmra.mxu0 %v3493
    %v3575 = vpop.f32.mrf.mxu0
    %v3576 = vadd.f32 0.0, %v3575
    %v3577 = vpop.f32.mrf.mxu0
    %3578 = vmatprep.mubr.f32.mxu0 0.0
    %3579 = vmatmul.mubr.f32.gmra.mxu0 %v3496
    %v3580 = vpop.f32.mrf.mxu0
    %v3581 = vadd.f32 0.0, %v3580
    %v3582 = vpop.f32.mrf.mxu0
    %3583 = vmatprep.mubr.f32.mxu0 0.0
    %3584 = vmatmul.mubr.f32.gmra.mxu0 %v3499
    %v3585 = vpop.f32.mrf.mxu0
    %v3586 = vadd.f32 0.0, %v3585
    %v3587 = vpop.f32.mrf.mxu0
    %3588 = vmatprep.mubr.f32.mxu0 0.0
    %3589 = vmatmul.mubr.f32.gmra.mxu0 %v3502
    %v3590 = vpop.f32.mrf.mxu0
    %v3591 = vadd.f32 0.0, %v3590
    %v3592 = vpop.f32.mrf.mxu0
    %3593 = vdwg.mxu0
    %v3594 = vadd.f32 %v3296, %v3571
    %v3595 = vadd.f32 %v3301, %v3576
    %v3596 = vadd.f32 %v3306, %v3581
    %v3597 = vadd.f32 %v3311, %v3586
    %v3598 = vadd.f32 %v3316, %v3591
    %v3599 = vmul.f32 %v2525, %v1529
    %v3600 = vmul.f32 %v2530, %v1529
    %v3601 = vmul.f32 %v2535, %v1529
    %v3602 = vmul.f32 %v2540, %v1529
    %v3603 = vmul.f32 %v2545, %v1529
    %v3605 = vsel %vm257, %v3599, 0
    %v3608 = vsel %vm257, %v3600, 0
    %v3611 = vsel %vm257, %v3601, 0
    %v3614 = vsel %vm257, %v3602, 0
    %v3617 = vsel %vm257, %v3603, 0
    %3619 = vmatprep.subr.mxu0 0.0
    %3620 = vmatpush1.xpose.msra.mxu0 0.0
    %3621 = vmatprep.subr.mxu0 0.0
    %3622 = vmatpush1.xpose.msra.mxu0 0.0
    %3623 = vmatprep.subr.mxu0 0.0
    %3624 = vmatpush1.xpose.msra.mxu0 0.0
    %3625 = vmatprep.subr.mxu0 0.0
    %3626 = vmatpush1.xpose.msra.mxu0 0.0
    %3627 = vmatprep.subr.mxu0 0.0
    %3628 = vmatpush1.xpose.msra.mxu0 0.0
    %3629 = vmatprep.subr.mxu0 0.0
    %3630 = vmatpush1.xpose.msra.mxu0 0.0
    %3631 = vmatprep.subr.mxu0 0.0
    %3632 = vmatpush1.xpose.msra.mxu0 0.0
    %3633 = vmatprep.subr.mxu0 0.0
    %3634 = vmatpush1.xpose.msra.mxu0 0.0
    %3635 = vmatprep.subr.mxu0 0.0
    %3636 = vmatpush1.xpose.msra.mxu0 0.0
    %3637 = vmatprep.subr.mxu0 0.0
    %3638 = vmatpush1.xpose.msra.mxu0 0.0
    %3639 = vmatprep.subr.mxu0 0.0
    %3640 = vmatpush1.xpose.msra.mxu0 0.0
    %3641 = vmatprep.subr.mxu0 0.0
    %3642 = vmatpush1.xpose.msra.mxu0 %v2787
    %3643 = vmatprep.subr.mxu0 0.0
    %3644 = vmatpush1.xpose.msra.mxu0 %v2784
    %3645 = vmatprep.subr.mxu0 0.0
    %3646 = vmatpush1.xpose.msra.mxu0 %v2781
    %3647 = vmatprep.subr.mxu0 0.0
    %3648 = vmatpush1.xpose.msra.mxu0 %v2778
    %3649 = vmatprep.subr.mxu0 0.0
    %3650 = vmatpush1.xpose.msra.mxu0 %v2775
    %3651 = vmatprep.subr.mxu0 0.0
    %3652 = vmatpush2.xpose.msra.mxu0 0.0
    %3653 = vmatprep.subr.mxu0 0.0
    %3654 = vmatpush2.xpose.msra.mxu0 0.0
    %3655 = vmatprep.subr.mxu0 0.0
    %3656 = vmatpush2.xpose.msra.mxu0 0.0
    %3657 = vmatprep.subr.mxu0 0.0
    %3658 = vmatpush2.xpose.msra.mxu0 0.0
    %3659 = vmatprep.subr.mxu0 0.0
    %3660 = vmatpush2.xpose.msra.mxu0 0.0
    %3661 = vmatprep.subr.mxu0 0.0
    %3662 = vmatpush2.xpose.msra.mxu0 0.0
    %3663 = vmatprep.subr.mxu0 0.0
    %3664 = vmatpush2.xpose.msra.mxu0 0.0
    %3665 = vmatprep.subr.mxu0 0.0
    %3666 = vmatpush2.xpose.msra.mxu0 0.0
    %3667 = vmatprep.subr.mxu0 0.0
    %3668 = vmatpush2.xpose.msra.mxu0 0.0
    %3669 = vmatprep.subr.mxu0 0.0
    %3670 = vmatpush2.xpose.msra.mxu0 0.0
    %3671 = vmatprep.subr.mxu0 0.0
    %3672 = vmatpush2.xpose.msra.mxu0 0.0
    %3673 = vmatprep.subr.mxu0 0.0
    %3674 = vmatpush2.xpose.msra.mxu0 0.0
    %3675 = vmatprep.subr.mxu0 0.0
    %3676 = vmatpush2.xpose.msra.mxu0 0.0
    %3677 = vmatprep.subr.mxu0 0.0
    %3678 = vmatpush2.xpose.msra.mxu0 0.0
    %3679 = vmatprep.subr.mxu0 0.0
    %3680 = vmatpush2.xpose.msra.mxu0 0.0
    %3681 = vmatprep.subr.mxu0 0.0
    %3682 = vmatpush2.xpose.msra.mxu0 0.0
    %3683 = vmatprep.mubr.f32.mxu0 0.0
    %3684 = vmatmul.mubr.f32.gmra.mxu0 %v3605
    %v3685 = vpop.f32.mrf.mxu0
    %v3686 = vadd.f32 %v246, %v3685
    %v3687 = vpop.f32.mrf.mxu0
    %3688 = vmatprep.mubr.f32.mxu0 0.0
    %3689 = vmatmul.mubr.f32.gmra.mxu0 %v3608
    %v3690 = vpop.f32.mrf.mxu0
    %v3691 = vadd.f32 %v247, %v3690
    %v3692 = vpop.f32.mrf.mxu0
    %3693 = vmatprep.mubr.f32.mxu0 0.0
    %3694 = vmatmul.mubr.f32.gmra.mxu0 %v3611
    %v3695 = vpop.f32.mrf.mxu0
    %v3696 = vadd.f32 %v248, %v3695
    %v3697 = vpop.f32.mrf.mxu0
    %3698 = vmatprep.mubr.f32.mxu0 0.0
    %3699 = vmatmul.mubr.f32.gmra.mxu0 %v3614
    %v3700 = vpop.f32.mrf.mxu0
    %v3701 = vadd.f32 %v249, %v3700
    %v3702 = vpop.f32.mrf.mxu0
    %3703 = vmatprep.mubr.f32.mxu0 0.0
    %3704 = vmatmul.mubr.f32.gmra.mxu0 %v3617
    %v3705 = vpop.f32.mrf.mxu0
    %v3706 = vadd.f32 %v250, %v3705
    %v3707 = vpop.f32.mrf.mxu0
    %3708 = vdwg.mxu0
    %v3709 = vsel %vm794, %v3686, -inf
    %3710 = vmax.xlane.f32.xlu0 %v3709
    %v3711 = vpop.xlane.xlu0 %3710
    %v3712 = vsel %vm794, %v3691, -inf
    %3713 = vmax.xlane.f32.xlu0 %v3712
    %v3714 = vpop.xlane.xlu0 %3713
    %v3715 = vsel %vm794, %v3696, -inf
    %3716 = vmax.xlane.f32.xlu0 %v3715
    %v3717 = vpop.xlane.xlu0 %3716
    %v3718 = vsel %vm794, %v3701, -inf
    %3719 = vmax.xlane.f32.xlu0 %v3718
    %v3720 = vpop.xlane.xlu0 %3719
    %v3721 = vsel %vm794, %v3706, -inf
    %3722 = vmax.xlane.f32.xlu0 %v3721
    %v3723 = vpop.xlane.xlu0 %3722
    %v3724 = vsub.f32 %v3686, %v3711
    %v3725 = vsub.f32 %v3691, %v3714
    %v3726 = vsub.f32 %v3696, %v3717
    %v3727 = vsub.f32 %v3701, %v3720
    %v3728 = vsub.f32 %v3706, %v3723
    %v3729 = vmul.f32 %v3724, 1.442695
    %v3730 = vpow.pop %v3729
    %v3731 = vmul.f32 %v3725, 1.442695
    %v3732 = vpow.pop %v3731
    %v3733 = vmul.f32 %v3726, 1.442695
    %v3734 = vpow.pop %v3733
    %v3735 = vmul.f32 %v3727, 1.442695
    %v3736 = vpow.pop %v3735
    %v3737 = vmul.f32 %v3728, 1.442695
    %v3738 = vpow.pop %v3737
    %v3739 = vsel %vm794, %v3730, 0.0
    %3740 = vadd.xlane.f32.xlu0 %v3739
    %v3741 = vpop.xlane.xlu0 %3740
    %v3742 = vsel %vm794, %v3732, 0.0
    %3743 = vadd.xlane.f32.xlu0 %v3742
    %v3744 = vpop.xlane.xlu0 %3743
    %v3745 = vsel %vm794, %v3734, 0.0
    %3746 = vadd.xlane.f32.xlu0 %v3745
    %v3747 = vpop.xlane.xlu0 %3746
    %v3748 = vsel %vm794, %v3736, 0.0
    %3749 = vadd.xlane.f32.xlu0 %v3748
    %v3750 = vpop.xlane.xlu0 %3749
    %v3751 = vsel %vm794, %v3738, 0.0
    %3752 = vadd.xlane.f32.xlu0 %v3751
    %v3753 = vpop.xlane.xlu0 %3752
    %v3754 = vrcp.pop %v3741
    %v3755 = vrcp.pop %v3744
    %v3756 = vrcp.pop %v3747
    %v3757 = vrcp.pop %v3750
    %v3758 = vrcp.pop %v3753
    %v3759 = vmul.f32 %v3730, %v3754
    %v3760 = vmul.f32 %v3732, %v3755
    %v3761 = vmul.f32 %v3734, %v3756
    %v3762 = vmul.f32 %v3736, %v3757
    %v3763 = vmul.f32 %v3738, %v3758
    %v3764 = vmul.f32 %v2731, %v1529
    %v3765 = vmul.f32 %v2736, %v1529
    %v3766 = vmul.f32 %v2741, %v1529
    %v3767 = vmul.f32 %v2746, %v1529
    %v3768 = vmul.f32 %v2751, %v1529
    %v3770 = vsel %vm794, %v3759, 0
    %v3773 = vsel %vm794, %v3760, 0
    %v3776 = vsel %vm794, %v3761, 0
    %v3779 = vsel %vm794, %v3762, 0
    %v3782 = vsel %vm794, %v3763, 0
    %3784 = vmatprep.subr.mxu0 0.0
    %3785 = vmatpush1.msra.mxu0 0.0
    %3786 = vmatprep.subr.mxu0 0.0
    %3787 = vmatpush1.msra.mxu0 0.0
    %3788 = vmatprep.subr.mxu0 0.0
    %3789 = vmatpush1.msra.mxu0 0.0
    %3790 = vmatprep.subr.mxu0 0.0
    %3791 = vmatpush1.msra.mxu0 0.0
    %3792 = vmatprep.subr.mxu0 0.0
    %3793 = vmatpush1.msra.mxu0 0.0
    %3794 = vmatprep.subr.mxu0 0.0
    %3795 = vmatpush1.msra.mxu0 0.0
    %3796 = vmatprep.subr.mxu0 0.0
    %3797 = vmatpush1.msra.mxu0 0.0
    %3798 = vmatprep.subr.mxu0 0.0
    %3799 = vmatpush1.msra.mxu0 0.0
    %3800 = vmatprep.subr.mxu0 0.0
    %3801 = vmatpush1.msra.mxu0 0.0
    %3802 = vmatprep.subr.mxu0 0.0
    %3803 = vmatpush1.msra.mxu0 0.0
    %3804 = vmatprep.subr.mxu0 0.0
    %3805 = vmatpush1.msra.mxu0 0.0
    %3806 = vmatprep.subr.mxu0 0.0
    %3807 = vmatpush1.msra.mxu0 %v3768
    %3808 = vmatprep.subr.mxu0 0.0
    %3809 = vmatpush1.msra.mxu0 %v3767
    %3810 = vmatprep.subr.mxu0 0.0
    %3811 = vmatpush1.msra.mxu0 %v3766
    %3812 = vmatprep.subr.mxu0 0.0
    %3813 = vmatpush1.msra.mxu0 %v3765
    %3814 = vmatprep.subr.mxu0 0.0
    %3815 = vmatpush1.msra.mxu0 %v3764
    %3816 = vmatprep.subr.mxu0 0.0
    %3817 = vmatpush2.msra.mxu0 0.0
    %3818 = vmatprep.subr.mxu0 0.0
    %3819 = vmatpush2.msra.mxu0 0.0
    %3820 = vmatprep.subr.mxu0 0.0
    %3821 = vmatpush2.msra.mxu0 0.0
    %3822 = vmatprep.subr.mxu0 0.0
    %3823 = vmatpush2.msra.mxu0 0.0
    %3824 = vmatprep.subr.mxu0 0.0
    %3825 = vmatpush2.msra.mxu0 0.0
    %3826 = vmatprep.subr.mxu0 0.0
    %3827 = vmatpush2.msra.mxu0 0.0
    %3828 = vmatprep.subr.mxu0 0.0
    %3829 = vmatpush2.msra.mxu0 0.0
    %3830 = vmatprep.subr.mxu0 0.0
    %3831 = vmatpush2.msra.mxu0 0.0
    %3832 = vmatprep.subr.mxu0 0.0
    %3833 = vmatpush2.msra.mxu0 0.0
    %3834 = vmatprep.subr.mxu0 0.0
    %3835 = vmatpush2.msra.mxu0 0.0
    %3836 = vmatprep.subr.mxu0 0.0
    %3837 = vmatpush2.msra.mxu0 0.0
    %3838 = vmatprep.subr.mxu0 0.0
    %3839 = vmatpush2.msra.mxu0 0.0
    %3840 = vmatprep.subr.mxu0 0.0
    %3841 = vmatpush2.msra.mxu0 0.0
    %3842 = vmatprep.subr.mxu0 0.0
    %3843 = vmatpush2.msra.mxu0 0.0
    %3844 = vmatprep.subr.mxu0 0.0
    %3845 = vmatpush2.msra.mxu0 0.0
    %3846 = vmatprep.subr.mxu0 0.0
    %3847 = vmatpush2.msra.mxu0 0.0
    %3848 = vmatprep.mubr.f32.mxu0 0.0
    %3849 = vmatmul.mubr.f32.gmra.mxu0 %v3770
    %v3850 = vpop.f32.mrf.mxu0
    %v3851 = vadd.f32 0.0, %v3850
    %v3852 = vpop.f32.mrf.mxu0
    %3853 = vmatprep.mubr.f32.mxu0 0.0
    %3854 = vmatmul.mubr.f32.gmra.mxu0 %v3773
    %v3855 = vpop.f32.mrf.mxu0
    %v3856 = vadd.f32 0.0, %v3855
    %v3857 = vpop.f32.mrf.mxu0
    %3858 = vmatprep.mubr.f32.mxu0 0.0
    %3859 = vmatmul.mubr.f32.gmra.mxu0 %v3776
    %v3860 = vpop.f32.mrf.mxu0
    %v3861 = vadd.f32 0.0, %v3860
    %v3862 = vpop.f32.mrf.mxu0
    %3863 = vmatprep.mubr.f32.mxu0 0.0
    %3864 = vmatmul.mubr.f32.gmra.mxu0 %v3779
    %v3865 = vpop.f32.mrf.mxu0
    %v3866 = vadd.f32 0.0, %v3865
    %v3867 = vpop.f32.mrf.mxu0
    %3868 = vmatprep.mubr.f32.mxu0 0.0
    %3869 = vmatmul.mubr.f32.gmra.mxu0 %v3782
    %v3870 = vpop.f32.mrf.mxu0
    %v3871 = vadd.f32 0.0, %v3870
    %v3872 = vpop.f32.mrf.mxu0
    %3873 = vdwg.mxu0
    %v3874 = vadd.f32 %v3594, %v3851
    %v3875 = vadd.f32 %v3595, %v3856
    %v3876 = vadd.f32 %v3596, %v3861
    %v3877 = vadd.f32 %v3597, %v3866
    %v3878 = vadd.f32 %v3598, %v3871
    %s3879 = scalar_lea.vmem %s25, 32
    %v3880 = vld [vmem:[%s3879] sm:$0xff]
    %v3881 = vld [vmem:[%s3879 + $0x8] sm:$0xff]
    %v3882 = vld [vmem:[%s3879 + $0x10] sm:$0xff]
    %v3883 = vld [vmem:[%s3879 + $0x18] sm:$0xff]
    %v3885 = vsel %vm257, %v3874, 0
    %v3888 = vsel %vm257, %v3875, 0
    %v3891 = vsel %vm257, %v3876, 0
    %v3894 = vsel %vm257, %v3877, 0
    %v3897 = vsel %vm257, %v3878, 0
    %3899 = vmatprep.subr.mxu0 0.0
    %3900 = vmatpush1.msra.mxu0 0.0
    %3901 = vmatprep.subr.mxu0 0.0
    %3902 = vmatpush1.msra.mxu0 0.0
    %3903 = vmatprep.subr.mxu0 0.0
    %3904 = vmatpush1.msra.mxu0 0.0
    %3905 = vmatprep.subr.mxu0 0.0
    %3906 = vmatpush1.msra.mxu0 0.0
    %3907 = vmatprep.subr.mxu0 0.0
    %3908 = vmatpush1.msra.mxu0 0.0
    %3909 = vmatprep.subr.mxu0 0.0
    %3910 = vmatpush1.msra.mxu0 0.0
    %3911 = vmatprep.subr.mxu0 0.0
    %3912 = vmatpush1.msra.mxu0 0.0
    %3913 = vmatprep.subr.mxu0 0.0
    %3914 = vmatpush1.msra.mxu0 0.0
    %3915 = vmatprep.subr.mxu0 0.0
    %3916 = vmatpush1.msra.mxu0 0.0
    %3917 = vmatprep.subr.mxu0 0.0
    %3918 = vmatpush1.msra.mxu0 0.0
    %3919 = vmatprep.subr.mxu0 0.0
    %3920 = vmatpush1.msra.mxu0 0.0
    %3921 = vmatprep.subr.mxu0 0.0
    %3922 = vmatpush1.msra.mxu0 0.0
    %3923 = vmatprep.subr.mxu0 0.0
    %3924 = vmatpush1.msra.mxu0 %v3883
    %3925 = vmatprep.subr.mxu0 0.0
    %3926 = vmatpush1.msra.mxu0 %v3882
    %3927 = vmatprep.subr.mxu0 0.0
    %3928 = vmatpush1.msra.mxu0 %v3881
    %3929 = vmatprep.subr.mxu0 0.0
    %3930 = vmatpush1.msra.mxu0 %v3880
    %3931 = vmatprep.subr.mxu0 0.0
    %3932 = vmatpush2.msra.mxu0 0.0
    %3933 = vmatprep.subr.mxu0 0.0
    %3934 = vmatpush2.msra.mxu0 0.0
    %3935 = vmatprep.subr.mxu0 0.0
    %3936 = vmatpush2.msra.mxu0 0.0
    %3937 = vmatprep.subr.mxu0 0.0
    %3938 = vmatpush2.msra.mxu0 0.0
    %3939 = vmatprep.subr.mxu0 0.0
    %3940 = vmatpush2.msra.mxu0 0.0
    %3941 = vmatprep.subr.mxu0 0.0
    %3942 = vmatpush2.msra.mxu0 0.0
    %3943 = vmatprep.subr.mxu0 0.0
    %3944 = vmatpush2.msra.mxu0 0.0
    %3945 = vmatprep.subr.mxu0 0.0
    %3946 = vmatpush2.msra.mxu0 0.0
    %3947 = vmatprep.subr.mxu0 0.0
    %3948 = vmatpush2.msra.mxu0 0.0
    %3949 = vmatprep.subr.mxu0 0.0
    %3950 = vmatpush2.msra.mxu0 0.0
    %3951 = vmatprep.subr.mxu0 0.0
    %3952 = vmatpush2.msra.mxu0 0.0
    %3953 = vmatprep.subr.mxu0 0.0
    %3954 = vmatpush2.msra.mxu0 0.0
    %3955 = vmatprep.subr.mxu0 0.0
    %3956 = vmatpush2.msra.mxu0 0.0
    %3957 = vmatprep.subr.mxu0 0.0
    %3958 = vmatpush2.msra.mxu0 0.0
    %3959 = vmatprep.subr.mxu0 0.0
    %3960 = vmatpush2.msra.mxu0 0.0
    %3961 = vmatprep.subr.mxu0 0.0
    %3962 = vmatpush2.msra.mxu0 0.0
    %3963 = vmatprep.mubr.f32.mxu0 0.0
    %3964 = vmatmul.mubr.f32.gmra.mxu0 %v3885
    %v3965 = vpop.f32.mrf.mxu0
    %v3966 = vadd.f32 0.0, %v3965
    %v3967 = vpop.f32.mrf.mxu0
    %3968 = vmatprep.mubr.f32.mxu0 0.0
    %3969 = vmatmul.mubr.f32.gmra.mxu0 %v3888
    %v3970 = vpop.f32.mrf.mxu0
    %v3971 = vadd.f32 0.0, %v3970
    %v3972 = vpop.f32.mrf.mxu0
    %3973 = vmatprep.mubr.f32.mxu0 0.0
    %3974 = vmatmul.mubr.f32.gmra.mxu0 %v3891
    %v3975 = vpop.f32.mrf.mxu0
    %v3976 = vadd.f32 0.0, %v3975
    %v3977 = vpop.f32.mrf.mxu0
    %3978 = vmatprep.mubr.f32.mxu0 0.0
    %3979 = vmatmul.mubr.f32.gmra.mxu0 %v3894
    %v3980 = vpop.f32.mrf.mxu0
    %v3981 = vadd.f32 0.0, %v3980
    %v3982 = vpop.f32.mrf.mxu0
    %3983 = vmatprep.mubr.f32.mxu0 0.0
    %3984 = vmatmul.mubr.f32.gmra.mxu0 %v3897
    %v3985 = vpop.f32.mrf.mxu0
    %v3986 = vadd.f32 0.0, %v3985
    %v3987 = vpop.f32.mrf.mxu0
    %3988 = vdwg.mxu0
    %v3989 = vadd.f32 %v2312, %v3966
    %v3990 = vadd.f32 %v2313, %v3971
    %v3991 = vadd.f32 %v2314, %v3976
    %v3992 = vadd.f32 %v2315, %v3981
    %v3993 = vadd.f32 %v2316, %v3986
    %s3994 = scalar_lea.vmem %s27, 1
    %v3995 = vld [vmem:[%s3994] sm:$0x1]
    %v3997 = vlaneseq
    %v3998 = vshrl.u32 %v3997, 7
    %v3999 = vsub.s32 0, %v3998
    %v4000 = vrot.slane %v3995, %v3999
    %v4002 = vadd.f32 %v3989, %v4000
    %v4003 = vadd.f32 %v3990, %v4000
    %v4004 = vadd.f32 %v3991, %v4000
    %v4005 = vadd.f32 %v3992, %v4000
    %v4006 = vadd.f32 %v3993, %v4000
    %s4007 = scalar_lea.vmem %s29, 1
    %v4008 = vld [vmem:[%s4007] sm:$0x1]
    %s4009 = scalar_lea.vmem %s31, 1
    %v4010 = vld [vmem:[%s4009] sm:$0x1]
    %v4011 = vsel %vm257, %v4002, 0.0
    %4012 = vadd.xlane.f32.xlu0 %v4011
    %v4013 = vpop.xlane.xlu0 %4012
    %v4014 = vsel %vm257, %v4003, 0.0
    %4015 = vadd.xlane.f32.xlu0 %v4014
    %v4016 = vpop.xlane.xlu0 %4015
    %v4017 = vsel %vm257, %v4004, 0.0
    %4018 = vadd.xlane.f32.xlu0 %v4017
    %v4019 = vpop.xlane.xlu0 %4018
    %v4020 = vsel %vm257, %v4005, 0.0
    %4021 = vadd.xlane.f32.xlu0 %v4020
    %v4022 = vpop.xlane.xlu0 %4021
    %v4023 = vsel %vm257, %v4006, 0.0
    %4024 = vadd.xlane.f32.xlu0 %v4023
    %v4025 = vpop.xlane.xlu0 %4024
    %v4026 = vmul.f32 %v4013, %v273
    %v4027 = vmul.f32 %v4016, %v273
    %v4028 = vmul.f32 %v4019, %v273
    %v4029 = vmul.f32 %v4022, %v273
    %v4030 = vmul.f32 %v4025, %v273
    %v4031 = vsub.f32 %v4002, %v4026
    %v4032 = vsub.f32 %v4003, %v4027
    %v4033 = vsub.f32 %v4004, %v4028
    %v4034 = vsub.f32 %v4005, %v4029
    %v4035 = vsub.f32 %v4006, %v4030
    %v4036 = vmul.f32 %v4031, %v4031
    %v4037 = vmul.f32 %v4032, %v4032
    %v4038 = vmul.f32 %v4033, %v4033
    %v4039 = vmul.f32 %v4034, %v4034
    %v4040 = vmul.f32 %v4035, %v4035
    %v4041 = vsel %vm257, %v4036, 0.0
    %4042 = vadd.xlane.f32.xlu0 %v4041
    %v4043 = vpop.xlane.xlu0 %4042
    %v4044 = vsel %vm257, %v4037, 0.0
    %4045 = vadd.xlane.f32.xlu0 %v4044
    %v4046 = vpop.xlane.xlu0 %4045
    %v4047 = vsel %vm257, %v4038, 0.0
    %4048 = vadd.xlane.f32.xlu0 %v4047
    %v4049 = vpop.xlane.xlu0 %4048
    %v4050 = vsel %vm257, %v4039, 0.0
    %4051 = vadd.xlane.f32.xlu0 %v4050
    %v4052 = vpop.xlane.xlu0 %4051
    %v4053 = vsel %vm257, %v4040, 0.0
    %4054 = vadd.xlane.f32.xlu0 %v4053
    %v4055 = vpop.xlane.xlu0 %4054
    %v4056 = vmul.f32 %v4043, %v273
    %v4057 = vmul.f32 %v4046, %v273
    %v4058 = vmul.f32 %v4049, %v273
    %v4059 = vmul.f32 %v4052, %v273
    %v4060 = vmul.f32 %v4055, %v273
    %v4061 = vadd.f32 %v4056, 1e-06
    %v4062 = vadd.f32 %v4057, 1e-06
    %v4063 = vadd.f32 %v4058, 1e-06
    %v4064 = vadd.f32 %v4059, 1e-06
    %v4065 = vadd.f32 %v4060, 1e-06
    %v4066 = vrsqrt.pop %v4061
    %v4067 = vrsqrt.pop %v4062
    %v4068 = vrsqrt.pop %v4063
    %v4069 = vrsqrt.pop %v4064
    %v4070 = vrsqrt.pop %v4065
    %v4071 = vmul.f32 %v4031, %v4066
    %v4072 = vmul.f32 %v4032, %v4067
    %v4073 = vmul.f32 %v4033, %v4068
    %v4074 = vmul.f32 %v4034, %v4069
    %v4075 = vmul.f32 %v4035, %v4070
    %v4077 = vlaneseq
    %v4078 = vshrl.u32 %v4077, 7
    %v4079 = vsub.s32 0, %v4078
    %v4080 = vrot.slane %v4008, %v4079
    %v4082 = vmul.f32 %v4071, %v4080
    %v4083 = vmul.f32 %v4072, %v4080
    %v4084 = vmul.f32 %v4073, %v4080
    %v4085 = vmul.f32 %v4074, %v4080
    %v4086 = vmul.f32 %v4075, %v4080
    %v4088 = vlaneseq
    %v4089 = vshrl.u32 %v4088, 7
    %v4090 = vsub.s32 0, %v4089
    %v4091 = vrot.slane %v4010, %v4090
    %v4093 = vadd.f32 %v4082, %v4091
    %v4094 = vadd.f32 %v4083, %v4091
    %v4095 = vadd.f32 %v4084, %v4091
    %v4096 = vadd.f32 %v4085, %v4091
    %v4097 = vadd.f32 %v4086, %v4091
    %s4098 = scalar_lea.vmem %s33, 32
    %v4099 = vld [vmem:[%s4098] sm:$0xff]
    %v4100 = vld [vmem:[%s4098 + $0x8] sm:$0xff]
    %v4101 = vld [vmem:[%s4098 + $0x10] sm:$0xff]
    %v4102 = vld [vmem:[%s4098 + $0x18] sm:$0xff]
    %s4103 = scalar_lea.vmem %s35, 1
    %v4104 = vld [vmem:[%s4103] sm:$0x1]
    %v4106 = vlaneseq
    %v4107 = vshrl.u32 %v4106, 7
    %v4108 = vsub.s32 0, %v4107
    %v4109 = vrot.slane %v4104, %v4108
    %v4112 = vsel %vm257, %v4093, 0
    %v4115 = vsel %vm257, %v4094, 0
    %v4118 = vsel %vm257, %v4095, 0
    %v4121 = vsel %vm257, %v4096, 0
    %v4124 = vsel %vm257, %v4097, 0
    %4126 = vmatprep.subr.mxu0 0.0
    %4127 = vmatpush1.msra.mxu0 0.0
    %4128 = vmatprep.subr.mxu0 0.0
    %4129 = vmatpush1.msra.mxu0 0.0
    %4130 = vmatprep.subr.mxu0 0.0
    %4131 = vmatpush1.msra.mxu0 0.0
    %4132 = vmatprep.subr.mxu0 0.0
    %4133 = vmatpush1.msra.mxu0 0.0
    %4134 = vmatprep.subr.mxu0 0.0
    %4135 = vmatpush1.msra.mxu0 0.0
    %4136 = vmatprep.subr.mxu0 0.0
    %4137 = vmatpush1.msra.mxu0 0.0
    %4138 = vmatprep.subr.mxu0 0.0
    %4139 = vmatpush1.msra.mxu0 0.0
    %4140 = vmatprep.subr.mxu0 0.0
    %4141 = vmatpush1.msra.mxu0 0.0
    %4142 = vmatprep.subr.mxu0 0.0
    %4143 = vmatpush1.msra.mxu0 0.0
    %4144 = vmatprep.subr.mxu0 0.0
    %4145 = vmatpush1.msra.mxu0 0.0
    %4146 = vmatprep.subr.mxu0 0.0
    %4147 = vmatpush1.msra.mxu0 0.0
    %4148 = vmatprep.subr.mxu0 0.0
    %4149 = vmatpush1.msra.mxu0 0.0
    %4150 = vmatprep.subr.mxu0 0.0
    %4151 = vmatpush1.msra.mxu0 %v4102
    %4152 = vmatprep.subr.mxu0 0.0
    %4153 = vmatpush1.msra.mxu0 %v4101
    %4154 = vmatprep.subr.mxu0 0.0
    %4155 = vmatpush1.msra.mxu0 %v4100
    %4156 = vmatprep.subr.mxu0 0.0
    %4157 = vmatpush1.msra.mxu0 %v4099
    %4158 = vmatprep.subr.mxu0 0.0
    %4159 = vmatpush2.msra.mxu0 0.0
    %4160 = vmatprep.subr.mxu0 0.0
    %4161 = vmatpush2.msra.mxu0 0.0
    %4162 = vmatprep.subr.mxu0 0.0
    %4163 = vmatpush2.msra.mxu0 0.0
    %4164 = vmatprep.subr.mxu0 0.0
    %4165 = vmatpush2.msra.mxu0 0.0
    %4166 = vmatprep.subr.mxu0 0.0
    %4167 = vmatpush2.msra.mxu0 0.0
    %4168 = vmatprep.subr.mxu0 0.0
    %4169 = vmatpush2.msra.mxu0 0.0
    %4170 = vmatprep.subr.mxu0 0.0
    %4171 = vmatpush2.msra.mxu0 0.0
    %4172 = vmatprep.subr.mxu0 0.0
    %4173 = vmatpush2.msra.mxu0 0.0
    %4174 = vmatprep.subr.mxu0 0.0
    %4175 = vmatpush2.msra.mxu0 0.0
    %4176 = vmatprep.subr.mxu0 0.0
    %4177 = vmatpush2.msra.mxu0 0.0
    %4178 = vmatprep.subr.mxu0 0.0
    %4179 = vmatpush2.msra.mxu0 0.0
    %4180 = vmatprep.subr.mxu0 0.0
    %4181 = vmatpush2.msra.mxu0 0.0
    %4182 = vmatprep.subr.mxu0 0.0
    %4183 = vmatpush2.msra.mxu0 0.0
    %4184 = vmatprep.subr.mxu0 0.0
    %4185 = vmatpush2.msra.mxu0 0.0
    %4186 = vmatprep.subr.mxu0 0.0
    %4187 = vmatpush2.msra.mxu0 0.0
    %4188 = vmatprep.subr.mxu0 0.0
    %4189 = vmatpush2.msra.mxu0 0.0
    %4190 = vmatprep.mubr.f32.mxu0 0.0
    %4191 = vmatmul.mubr.f32.gmra.mxu0 %v4112
    %v4192 = vpop.f32.mrf.mxu0
    %v4193 = vadd.f32 %v4109, %v4192
    %v4194 = vpop.f32.mrf.mxu0
    %4195 = vmatprep.mubr.f32.mxu0 0.0
    %4196 = vmatmul.mubr.f32.gmra.mxu0 %v4115
    %v4197 = vpop.f32.mrf.mxu0
    %v4198 = vadd.f32 %v4109, %v4197
    %v4199 = vpop.f32.mrf.mxu0
    %4200 = vmatprep.mubr.f32.mxu0 0.0
    %4201 = vmatmul.mubr.f32.gmra.mxu0 %v4118
    %v4202 = vpop.f32.mrf.mxu0
    %v4203 = vadd.f32 %v4109, %v4202
    %v4204 = vpop.f32.mrf.mxu0
    %4205 = vmatprep.mubr.f32.mxu0 0.0
    %4206 = vmatmul.mubr.f32.gmra.mxu0 %v4121
    %v4207 = vpop.f32.mrf.mxu0
    %v4208 = vadd.f32 %v4109, %v4207
    %v4209 = vpop.f32.mrf.mxu0
    %4210 = vmatprep.mubr.f32.mxu0 0.0
    %4211 = vmatmul.mubr.f32.gmra.mxu0 %v4124
    %v4212 = vpop.f32.mrf.mxu0
    %v4213 = vadd.f32 %v4109, %v4212
    %v4214 = vpop.f32.mrf.mxu0
    %4215 = vdwg.mxu0
    %v4216 = vmul.f32 %v4193, %v4193
    %v4217 = vmul.f32 %v4198, %v4198
    %v4218 = vmul.f32 %v4203, %v4203
    %v4219 = vmul.f32 %v4208, %v4208
    %v4220 = vmul.f32 %v4213, %v4213
    %v4221 = vmul.f32 %v4193, %v4216
    %v4222 = vmul.f32 %v4198, %v4217
    %v4223 = vmul.f32 %v4203, %v4218
    %v4224 = vmul.f32 %v4208, %v4219
    %v4225 = vmul.f32 %v4213, %v4220
    %v4226 = vmul.f32 %v4221, 0.044715
    %v4227 = vmul.f32 %v4222, 0.044715
    %v4228 = vmul.f32 %v4223, 0.044715
    %v4229 = vmul.f32 %v4224, 0.044715
    %v4230 = vmul.f32 %v4225, 0.044715
    %v4231 = vadd.f32 %v4193, %v4226
    %v4232 = vadd.f32 %v4198, %v4227
    %v4233 = vadd.f32 %v4203, %v4228
    %v4234 = vadd.f32 %v4208, %v4229
    %v4235 = vadd.f32 %v4213, %v4230
    %v4236 = vmul.f32 %v4231, 0.7978846
    %v4237 = vmul.f32 %v4232, 0.7978846
    %v4238 = vmul.f32 %v4233, 0.7978846
    %v4239 = vmul.f32 %v4234, 0.7978846
    %v4240 = vmul.f32 %v4235, 0.7978846
    %v4241 = vtanh.pop %v4236
    %v4242 = vtanh.pop %v4237
    %v4243 = vtanh.pop %v4238
    %v4244 = vtanh.pop %v4239
    %v4245 = vtanh.pop %v4240
    %v4246 = vadd.f32 %v4241, 1.0
    %v4247 = vadd.f32 %v4242, 1.0
    %v4248 = vadd.f32 %v4243, 1.0
    %v4249 = vadd.f32 %v4244, 1.0
    %v4250 = vadd.f32 %v4245, 1.0
    %v4251 = vmul.f32 %v4246, 0.5
    %v4252 = vmul.f32 %v4247, 0.5
    %v4253 = vmul.f32 %v4248, 0.5
    %v4254 = vmul.f32 %v4249, 0.5
    %v4255 = vmul.f32 %v4250, 0.5
    %v4256 = vmul.f32 %v4193, %v4251
    %v4257 = vmul.f32 %v4198, %v4252
    %v4258 = vmul.f32 %v4203, %v4253
    %v4259 = vmul.f32 %v4208, %v4254
    %v4260 = vmul.f32 %v4213, %v4255
    %s4261 = scalar_lea.vmem %s37, 64
    %v4262 = vld [vmem:[%s4261] sm:$0xff]
    %v4263 = vld [vmem:[%s4261 + $0x8] sm:$0xff]
    %v4264 = vld [vmem:[%s4261 + $0x10] sm:$0xff]
    %v4265 = vld [vmem:[%s4261 + $0x18] sm:$0xff]
    %v4266 = vld [vmem:[%s4261 + $0x20] sm:$0xff]
    %v4267 = vld [vmem:[%s4261 + $0x28] sm:$0xff]
    %v4268 = vld [vmem:[%s4261 + $0x30] sm:$0xff]
    %v4269 = vld [vmem:[%s4261 + $0x38] sm:$0xff]
    %v4271 = vsel %vm2194, %v4256, 0
    %v4274 = vsel %vm2194, %v4257, 0
    %v4277 = vsel %vm2194, %v4258, 0
    %v4280 = vsel %vm2194, %v4259, 0
    %v4283 = vsel %vm2194, %v4260, 0
    %4285 = vmatprep.subr.mxu0 0.0
    %4286 = vmatpush1.msra.mxu0 0.0
    %4287 = vmatprep.subr.mxu0 0.0
    %4288 = vmatpush1.msra.mxu0 0.0
    %4289 = vmatprep.subr.mxu0 0.0
    %4290 = vmatpush1.msra.mxu0 0.0
    %4291 = vmatprep.subr.mxu0 0.0
    %4292 = vmatpush1.msra.mxu0 0.0
    %4293 = vmatprep.subr.mxu0 0.0
    %4294 = vmatpush1.msra.mxu0 0.0
    %4295 = vmatprep.subr.mxu0 0.0
    %4296 = vmatpush1.msra.mxu0 0.0
    %4297 = vmatprep.subr.mxu0 0.0
    %4298 = vmatpush1.msra.mxu0 0.0
    %4299 = vmatprep.subr.mxu0 0.0
    %4300 = vmatpush1.msra.mxu0 0.0
    %4301 = vmatprep.subr.mxu0 0.0
    %4302 = vmatpush1.msra.mxu0 %v4269
    %4303 = vmatprep.subr.mxu0 0.0
    %4304 = vmatpush1.msra.mxu0 %v4268
    %4305 = vmatprep.subr.mxu0 0.0
    %4306 = vmatpush1.msra.mxu0 %v4267
    %4307 = vmatprep.subr.mxu0 0.0
    %4308 = vmatpush1.msra.mxu0 %v4266
    %4309 = vmatprep.subr.mxu0 0.0
    %4310 = vmatpush1.msra.mxu0 %v4265
    %4311 = vmatprep.subr.mxu0 0.0
    %4312 = vmatpush1.msra.mxu0 %v4264
    %4313 = vmatprep.subr.mxu0 0.0
    %4314 = vmatpush1.msra.mxu0 %v4263
    %4315 = vmatprep.subr.mxu0 0.0
    %4316 = vmatpush1.msra.mxu0 %v4262
    %4317 = vmatprep.subr.mxu0 0.0
    %4318 = vmatpush2.msra.mxu0 0.0
    %4319 = vmatprep.subr.mxu0 0.0
    %4320 = vmatpush2.msra.mxu0 0.0
    %4321 = vmatprep.subr.mxu0 0.0
    %4322 = vmatpush2.msra.mxu0 0.0
    %4323 = vmatprep.subr.mxu0 0.0
    %4324 = vmatpush2.msra.mxu0 0.0
    %4325 = vmatprep.subr.mxu0 0.0
    %4326 = vmatpush2.msra.mxu0 0.0
    %4327 = vmatprep.subr.mxu0 0.0
    %4328 = vmatpush2.msra.mxu0 0.0
    %4329 = vmatprep.subr.mxu0 0.0
    %4330 = vmatpush2.msra.mxu0 0.0
    %4331 = vmatprep.subr.mxu0 0.0
    %4332 = vmatpush2.msra.mxu0 0.0
    %4333 = vmatprep.subr.mxu0 0.0
    %4334 = vmatpush2.msra.mxu0 0.0
    %4335 = vmatprep.subr.mxu0 0.0
    %4336 = vmatpush2.msra.mxu0 0.0
    %4337 = vmatprep.subr.mxu0 0.0
    %4338 = vmatpush2.msra.mxu0 0.0
    %4339 = vmatprep.subr.mxu0 0.0
    %4340 = vmatpush2.msra.mxu0 0.0
    %4341 = vmatprep.subr.mxu0 0.0
    %4342 = vmatpush2.msra.mxu0 0.0
    %4343 = vmatprep.subr.mxu0 0.0
    %4344 = vmatpush2.msra.mxu0 0.0
    %4345 = vmatprep.subr.mxu0 0.0
    %4346 = vmatpush2.msra.mxu0 0.0
    %4347 = vmatprep.subr.mxu0 0.0
    %4348 = vmatpush2.msra.mxu0 0.0
    %4349 = vmatprep.mubr.f32.mxu0 0.0
    %4350 = vmatmul.mubr.f32.gmra.mxu0 %v4271
    %v4351 = vpop.f32.mrf.mxu0
    %v4352 = vadd.f32 0.0, %v4351
    %v4353 = vpop.f32.mrf.mxu0
    %4354 = vmatprep.mubr.f32.mxu0 0.0
    %4355 = vmatmul.mubr.f32.gmra.mxu0 %v4274
    %v4356 = vpop.f32.mrf.mxu0
    %v4357 = vadd.f32 0.0, %v4356
    %v4358 = vpop.f32.mrf.mxu0
    %4359 = vmatprep.mubr.f32.mxu0 0.0
    %4360 = vmatmul.mubr.f32.gmra.mxu0 %v4277
    %v4361 = vpop.f32.mrf.mxu0
    %v4362 = vadd.f32 0.0, %v4361
    %v4363 = vpop.f32.mrf.mxu0
    %4364 = vmatprep.mubr.f32.mxu0 0.0
    %4365 = vmatmul.mubr.f32.gmra.mxu0 %v4280
    %v4366 = vpop.f32.mrf.mxu0
    %v4367 = vadd.f32 0.0, %v4366
    %v4368 = vpop.f32.mrf.mxu0
    %4369 = vmatprep.mubr.f32.mxu0 0.0
    %4370 = vmatmul.mubr.f32.gmra.mxu0 %v4283
    %v4371 = vpop.f32.mrf.mxu0
    %v4372 = vadd.f32 0.0, %v4371
    %v4373 = vpop.f32.mrf.mxu0
    %4374 = vdwg.mxu0
    %v4375 = vadd.f32 %v4002, %v4352
    %v4376 = vadd.f32 %v4003, %v4357
    %v4377 = vadd.f32 %v4004, %v4362
    %v4378 = vadd.f32 %v4005, %v4367
    %v4379 = vadd.f32 %v4006, %v4372
    %s4380 = scalar_lea.vmem %s39, 1
    %v4381 = vld [vmem:[%s4380] sm:$0x1]
    %v4383 = vlaneseq
    %v4384 = vshrl.u32 %v4383, 7
    %v4385 = vsub.s32 0, %v4384
    %v4386 = vrot.slane %v4381, %v4385
    %v4388 = vadd.f32 %v4375, %v4386
    %v4389 = vadd.f32 %v4376, %v4386
    %v4390 = vadd.f32 %v4377, %v4386
    %v4391 = vadd.f32 %v4378, %v4386
    %v4392 = vadd.f32 %v4379, %v4386
    %v4393 = vsel %vm257, %v4388, 0.0
    %4394 = vadd.xlane.f32.xlu0 %v4393
    %v4395 = vpop.xlane.xlu0 %4394
    %v4396 = vsel %vm257, %v4389, 0.0
    %4397 = vadd.xlane.f32.xlu0 %v4396
    %v4398 = vpop.xlane.xlu0 %4397
    %v4399 = vsel %vm257, %v4390, 0.0
    %4400 = vadd.xlane.f32.xlu0 %v4399
    %v4401 = vpop.xlane.xlu0 %4400
    %v4402 = vsel %vm257, %v4391, 0.0
    %4403 = vadd.xlane.f32.xlu0 %v4402
    %v4404 = vpop.xlane.xlu0 %4403
    %v4405 = vsel %vm257, %v4392, 0.0
    %4406 = vadd.xlane.f32.xlu0 %v4405
    %v4407 = vpop.xlane.xlu0 %4406
    %v4408 = vmul.f32 %v4395, %v273
    %v4409 = vmul.f32 %v4398, %v273
    %v4410 = vmul.f32 %v4401, %v273
    %v4411 = vmul.f32 %v4404, %v273
    %v4412 = vmul.f32 %v4407, %v273
    %v4413 = vsub.f32 %v4388, %v4408
    %v4414 = vsub.f32 %v4389, %v4409
    %v4415 = vsub.f32 %v4390, %v4410
    %v4416 = vsub.f32 %v4391, %v4411
    %v4417 = vsub.f32 %v4392, %v4412
    %v4418 = vmul.f32 %v4413, %v4413
    %v4419 = vmul.f32 %v4414, %v4414
    %v4420 = vmul.f32 %v4415, %v4415
    %v4421 = vmul.f32 %v4416, %v4416
    %v4422 = vmul.f32 %v4417, %v4417
    %v4423 = vsel %vm257, %v4418, 0.0
    %4424 = vadd.xlane.f32.xlu0 %v4423
    %v4425 = vpop.xlane.xlu0 %4424
    %v4426 = vsel %vm257, %v4419, 0.0
    %4427 = vadd.xlane.f32.xlu0 %v4426
    %v4428 = vpop.xlane.xlu0 %4427
    %v4429 = vsel %vm257, %v4420, 0.0
    %4430 = vadd.xlane.f32.xlu0 %v4429
    %v4431 = vpop.xlane.xlu0 %4430
    %v4432 = vsel %vm257, %v4421, 0.0
    %4433 = vadd.xlane.f32.xlu0 %v4432
    %v4434 = vpop.xlane.xlu0 %4433
    %v4435 = vsel %vm257, %v4422, 0.0
    %4436 = vadd.xlane.f32.xlu0 %v4435
    %v4437 = vpop.xlane.xlu0 %4436
    %v4438 = vmul.f32 %v4425, %v273
    %v4439 = vmul.f32 %v4428, %v273
    %v4440 = vmul.f32 %v4431, %v273
    %v4441 = vmul.f32 %v4434, %v273
    %v4442 = vmul.f32 %v4437, %v273
    %v4443 = vadd.f32 %v4438, 1e-06
    %v4444 = vadd.f32 %v4439, 1e-06
    %v4445 = vadd.f32 %v4440, 1e-06
    %v4446 = vadd.f32 %v4441, 1e-06
    %v4447 = vadd.f32 %v4442, 1e-06
    %v4448 = vrsqrt.pop %v4443
    %v4449 = vrsqrt.pop %v4444
    %v4450 = vrsqrt.pop %v4445
    %v4451 = vrsqrt.pop %v4446
    %v4452 = vrsqrt.pop %v4447
    %v4453 = vmul.f32 %v4413, %v4448
    %v4454 = vmul.f32 %v4414, %v4449
    %v4455 = vmul.f32 %v4415, %v4450
    %v4456 = vmul.f32 %v4416, %v4451
    %v4457 = vmul.f32 %v4417, %v4452
    %v4458 = vmul.f32 %v4453, %v2386
    %v4459 = vmul.f32 %v4454, %v2386
    %v4460 = vmul.f32 %v4455, %v2386
    %v4461 = vmul.f32 %v4456, %v2386
    %v4462 = vmul.f32 %v4457, %v2386
    %v4463 = vadd.f32 %v4458, %v2397
    %v4464 = vadd.f32 %v4459, %v2397
    %v4465 = vadd.f32 %v4460, %v2397
    %v4466 = vadd.f32 %v4461, %v2397
    %v4467 = vadd.f32 %v4462, %v2397
    %s4468 = scalar_lea.vmem %s9, 2
    %v4469 = vld [vmem:[%s4468] sm:$0x1]
    %s4470 = scalar_lea.vmem %s11, 2
    %v4471 = vld [vmem:[%s4470] sm:$0x1]
    %v4473 = vlaneseq
    %v4474 = vshrl.u32 %v4473, 7
    %v4475 = vsub.s32 0, %v4474
    %v4476 = vrot.slane %v4469, %v4475
    %v4478 = vmul.f32 %v4453, %v4476
    %v4479 = vmul.f32 %v4454, %v4476
    %v4480 = vmul.f32 %v4455, %v4476
    %v4481 = vmul.f32 %v4456, %v4476
    %v4482 = vmul.f32 %v4457, %v4476
    %v4484 = vlaneseq
    %v4485 = vshrl.u32 %v4484, 7
    %v4486 = vsub.s32 0, %v4485
    %v4487 = vrot.slane %v4471, %v4486
    %v4489 = vadd.f32 %v4478, %v4487
    %v4490 = vadd.f32 %v4479, %v4487
    %v4491 = vadd.f32 %v4480, %v4487
    %v4492 = vadd.f32 %v4481, %v4487
    %v4493 = vadd.f32 %v4482, %v4487
    %s4494 = scalar_lea.vmem %s13, 64
    %v4495 = vld [vmem:[%s4494] sm:$0xff]
    %v4496 = vld [vmem:[%s4494 + $0x8] sm:$0xff]
    %v4497 = vld [vmem:[%s4494 + $0x10] sm:$0xff]
    %v4498 = vld [vmem:[%s4494 + $0x18] sm:$0xff]
    %s4499 = scalar_lea.vmem %s15, 2
    %v4500 = vld [vmem:[%s4499] sm:$0x1]
    %v4502 = vlaneseq
    %v4503 = vshrl.u32 %v4502, 7
    %v4504 = vsub.s32 0, %v4503
    %v4505 = vrot.slane %v4500, %v4504
    %v4508 = vsel %vm257, %v4489, 0
    %v4511 = vsel %vm257, %v4490, 0
    %v4514 = vsel %vm257, %v4491, 0
    %v4517 = vsel %vm257, %v4492, 0
    %v4520 = vsel %vm257, %v4493, 0
    %4522 = vmatprep.subr.mxu0 0.0
    %4523 = vmatpush1.msra.mxu0 0.0
    %4524 = vmatprep.subr.mxu0 0.0
    %4525 = vmatpush1.msra.mxu0 0.0
    %4526 = vmatprep.subr.mxu0 0.0
    %4527 = vmatpush1.msra.mxu0 0.0
    %4528 = vmatprep.subr.mxu0 0.0
    %4529 = vmatpush1.msra.mxu0 0.0
    %4530 = vmatprep.subr.mxu0 0.0
    %4531 = vmatpush1.msra.mxu0 0.0
    %4532 = vmatprep.subr.mxu0 0.0
    %4533 = vmatpush1.msra.mxu0 0.0
    %4534 = vmatprep.subr.mxu0 0.0
    %4535 = vmatpush1.msra.mxu0 0.0
    %4536 = vmatprep.subr.mxu0 0.0
    %4537 = vmatpush1.msra.mxu0 0.0
    %4538 = vmatprep.subr.mxu0 0.0
    %4539 = vmatpush1.msra.mxu0 0.0
    %4540 = vmatprep.subr.mxu0 0.0
    %4541 = vmatpush1.msra.mxu0 0.0
    %4542 = vmatprep.subr.mxu0 0.0
    %4543 = vmatpush1.msra.mxu0 0.0
    %4544 = vmatprep.subr.mxu0 0.0
    %4545 = vmatpush1.msra.mxu0 0.0
    %4546 = vmatprep.subr.mxu0 0.0
    %4547 = vmatpush1.msra.mxu0 %v4498
    %4548 = vmatprep.subr.mxu0 0.0
    %4549 = vmatpush1.msra.mxu0 %v4497
    %4550 = vmatprep.subr.mxu0 0.0
    %4551 = vmatpush1.msra.mxu0 %v4496
    %4552 = vmatprep.subr.mxu0 0.0
    %4553 = vmatpush1.msra.mxu0 %v4495
    %4554 = vmatprep.subr.mxu0 0.0
    %4555 = vmatpush2.msra.mxu0 0.0
    %4556 = vmatprep.subr.mxu0 0.0
    %4557 = vmatpush2.msra.mxu0 0.0
    %4558 = vmatprep.subr.mxu0 0.0
    %4559 = vmatpush2.msra.mxu0 0.0
    %4560 = vmatprep.subr.mxu0 0.0
    %4561 = vmatpush2.msra.mxu0 0.0
    %4562 = vmatprep.subr.mxu0 0.0
    %4563 = vmatpush2.msra.mxu0 0.0
    %4564 = vmatprep.subr.mxu0 0.0
    %4565 = vmatpush2.msra.mxu0 0.0
    %4566 = vmatprep.subr.mxu0 0.0
    %4567 = vmatpush2.msra.mxu0 0.0
    %4568 = vmatprep.subr.mxu0 0.0
    %4569 = vmatpush2.msra.mxu0 0.0
    %4570 = vmatprep.subr.mxu0 0.0
    %4571 = vmatpush2.msra.mxu0 0.0
    %4572 = vmatprep.subr.mxu0 0.0
    %4573 = vmatpush2.msra.mxu0 0.0
    %4574 = vmatprep.subr.mxu0 0.0
    %4575 = vmatpush2.msra.mxu0 0.0
    %4576 = vmatprep.subr.mxu0 0.0
    %4577 = vmatpush2.msra.mxu0 0.0
    %4578 = vmatprep.subr.mxu0 0.0
    %4579 = vmatpush2.msra.mxu0 0.0
    %4580 = vmatprep.subr.mxu0 0.0
    %4581 = vmatpush2.msra.mxu0 0.0
    %4582 = vmatprep.subr.mxu0 0.0
    %4583 = vmatpush2.msra.mxu0 0.0
    %4584 = vmatprep.subr.mxu0 0.0
    %4585 = vmatpush2.msra.mxu0 0.0
    %4586 = vmatprep.mubr.f32.mxu0 0.0
    %4587 = vmatmul.mubr.f32.gmra.mxu0 %v4508
    %v4588 = vpop.f32.mrf.mxu0
    %v4589 = vadd.f32 %v4505, %v4588
    %v4590 = vpop.f32.mrf.mxu0
    %4591 = vmatprep.mubr.f32.mxu0 0.0
    %4592 = vmatmul.mubr.f32.gmra.mxu0 %v4511
    %v4593 = vpop.f32.mrf.mxu0
    %v4594 = vadd.f32 %v4505, %v4593
    %v4595 = vpop.f32.mrf.mxu0
    %4596 = vmatprep.mubr.f32.mxu0 0.0
    %4597 = vmatmul.mubr.f32.gmra.mxu0 %v4514
    %v4598 = vpop.f32.mrf.mxu0
    %v4599 = vadd.f32 %v4505, %v4598
    %v4600 = vpop.f32.mrf.mxu0
    %4601 = vmatprep.mubr.f32.mxu0 0.0
    %4602 = vmatmul.mubr.f32.gmra.mxu0 %v4517
    %v4603 = vpop.f32.mrf.mxu0
    %v4604 = vadd.f32 %v4505, %v4603
    %v4605 = vpop.f32.mrf.mxu0
    %4606 = vmatprep.mubr.f32.mxu0 0.0
    %4607 = vmatmul.mubr.f32.gmra.mxu0 %v4520
    %v4608 = vpop.f32.mrf.mxu0
    %v4609 = vadd.f32 %v4505, %v4608
    %v4610 = vpop.f32.mrf.mxu0
    %4611 = vdwg.mxu0
    %s4612 = scalar_lea.vmem %s17, 64
    %v4613 = vld [vmem:[%s4612] sm:$0xff]
    %v4614 = vld [vmem:[%s4612 + $0x8] sm:$0xff]
    %v4615 = vld [vmem:[%s4612 + $0x10] sm:$0xff]
    %v4616 = vld [vmem:[%s4612 + $0x18] sm:$0xff]
    %s4617 = scalar_lea.vmem %s19, 2
    %v4618 = vld [vmem:[%s4617] sm:$0x1]
    %v4620 = vlaneseq
    %v4621 = vshrl.u32 %v4620, 7
    %v4622 = vsub.s32 0, %v4621
    %v4623 = vrot.slane %v4618, %v4622
    %4625 = vmatprep.subr.mxu0 0.0
    %4626 = vmatpush1.msra.mxu0 0.0
    %4627 = vmatprep.subr.mxu0 0.0
    %4628 = vmatpush1.msra.mxu0 0.0
    %4629 = vmatprep.subr.mxu0 0.0
    %4630 = vmatpush1.msra.mxu0 0.0
    %4631 = vmatprep.subr.mxu0 0.0
    %4632 = vmatpush1.msra.mxu0 0.0
    %4633 = vmatprep.subr.mxu0 0.0
    %4634 = vmatpush1.msra.mxu0 0.0
    %4635 = vmatprep.subr.mxu0 0.0
    %4636 = vmatpush1.msra.mxu0 0.0
    %4637 = vmatprep.subr.mxu0 0.0
    %4638 = vmatpush1.msra.mxu0 0.0
    %4639 = vmatprep.subr.mxu0 0.0
    %4640 = vmatpush1.msra.mxu0 0.0
    %4641 = vmatprep.subr.mxu0 0.0
    %4642 = vmatpush1.msra.mxu0 0.0
    %4643 = vmatprep.subr.mxu0 0.0
    %4644 = vmatpush1.msra.mxu0 0.0
    %4645 = vmatprep.subr.mxu0 0.0
    %4646 = vmatpush1.msra.mxu0 0.0
    %4647 = vmatprep.subr.mxu0 0.0
    %4648 = vmatpush1.msra.mxu0 0.0
    %4649 = vmatprep.subr.mxu0 0.0
    %4650 = vmatpush1.msra.mxu0 %v4616
    %4651 = vmatprep.subr.mxu0 0.0
    %4652 = vmatpush1.msra.mxu0 %v4615
    %4653 = vmatprep.subr.mxu0 0.0
    %4654 = vmatpush1.msra.mxu0 %v4614
    %4655 = vmatprep.subr.mxu0 0.0
    %4656 = vmatpush1.msra.mxu0 %v4613
    %4657 = vmatprep.subr.mxu0 0.0
    %4658 = vmatpush2.msra.mxu0 0.0
    %4659 = vmatprep.subr.mxu0 0.0
    %4660 = vmatpush2.msra.mxu0 0.0
    %4661 = vmatprep.subr.mxu0 0.0
    %4662 = vmatpush2.msra.mxu0 0.0
    %4663 = vmatprep.subr.mxu0 0.0
    %4664 = vmatpush2.msra.mxu0 0.0
    %4665 = vmatprep.subr.mxu0 0.0
    %4666 = vmatpush2.msra.mxu0 0.0
    %4667 = vmatprep.subr.mxu0 0.0
    %4668 = vmatpush2.msra.mxu0 0.0
    %4669 = vmatprep.subr.mxu0 0.0
    %4670 = vmatpush2.msra.mxu0 0.0
    %4671 = vmatprep.subr.mxu0 0.0
    %4672 = vmatpush2.msra.mxu0 0.0
    %4673 = vmatprep.subr.mxu0 0.0
    %4674 = vmatpush2.msra.mxu0 0.0
    %4675 = vmatprep.subr.mxu0 0.0
    %4676 = vmatpush2.msra.mxu0 0.0
    %4677 = vmatprep.subr.mxu0 0.0
    %4678 = vmatpush2.msra.mxu0 0.0
    %4679 = vmatprep.subr.mxu0 0.0
    %4680 = vmatpush2.msra.mxu0 0.0
    %4681 = vmatprep.subr.mxu0 0.0
    %4682 = vmatpush2.msra.mxu0 0.0
    %4683 = vmatprep.subr.mxu0 0.0
    %4684 = vmatpush2.msra.mxu0 0.0
    %4685 = vmatprep.subr.mxu0 0.0
    %4686 = vmatpush2.msra.mxu0 0.0
    %4687 = vmatprep.subr.mxu0 0.0
    %4688 = vmatpush2.msra.mxu0 0.0
    %4689 = vmatprep.mubr.f32.mxu0 0.0
    %4690 = vmatmul.mubr.f32.gmra.mxu0 %v4508
    %v4691 = vpop.f32.mrf.mxu0
    %v4692 = vadd.f32 %v4623, %v4691
    %v4693 = vpop.f32.mrf.mxu0
    %4694 = vmatprep.mubr.f32.mxu0 0.0
    %4695 = vmatmul.mubr.f32.gmra.mxu0 %v4511
    %v4696 = vpop.f32.mrf.mxu0
    %v4697 = vadd.f32 %v4623, %v4696
    %v4698 = vpop.f32.mrf.mxu0
    %4699 = vmatprep.mubr.f32.mxu0 0.0
    %4700 = vmatmul.mubr.f32.gmra.mxu0 %v4514
    %v4701 = vpop.f32.mrf.mxu0
    %v4702 = vadd.f32 %v4623, %v4701
    %v4703 = vpop.f32.mrf.mxu0
    %4704 = vmatprep.mubr.f32.mxu0 0.0
    %4705 = vmatmul.mubr.f32.gmra.mxu0 %v4517
    %v4706 = vpop.f32.mrf.mxu0
    %v4707 = vadd.f32 %v4623, %v4706
    %v4708 = vpop.f32.mrf.mxu0
    %4709 = vmatprep.mubr.f32.mxu0 0.0
    %4710 = vmatmul.mubr.f32.gmra.mxu0 %v4520
    %v4711 = vpop.f32.mrf.mxu0
    %v4712 = vadd.f32 %v4623, %v4711
    %v4713 = vpop.f32.mrf.mxu0
    %4714 = vdwg.mxu0
    %s4715 = scalar_lea.vmem %s21, 64
    %v4716 = vld [vmem:[%s4715] sm:$0xff]
    %v4717 = vld [vmem:[%s4715 + $0x8] sm:$0xff]
    %v4718 = vld [vmem:[%s4715 + $0x10] sm:$0xff]
    %v4719 = vld [vmem:[%s4715 + $0x18] sm:$0xff]
    %s4720 = scalar_lea.vmem %s23, 2
    %v4721 = vld [vmem:[%s4720] sm:$0x1]
    %v4723 = vlaneseq
    %v4724 = vshrl.u32 %v4723, 7
    %v4725 = vsub.s32 0, %v4724
    %v4726 = vrot.slane %v4721, %v4725
    %4728 = vmatprep.subr.mxu0 0.0
    %4729 = vmatpush1.msra.mxu0 0.0
    %4730 = vmatprep.subr.mxu0 0.0
    %4731 = vmatpush1.msra.mxu0 0.0
    %4732 = vmatprep.subr.mxu0 0.0
    %4733 = vmatpush1.msra.mxu0 0.0
    %4734 = vmatprep.subr.mxu0 0.0
    %4735 = vmatpush1.msra.mxu0 0.0
    %4736 = vmatprep.subr.mxu0 0.0
    %4737 = vmatpush1.msra.mxu0 0.0
    %4738 = vmatprep.subr.mxu0 0.0
    %4739 = vmatpush1.msra.mxu0 0.0
    %4740 = vmatprep.subr.mxu0 0.0
    %4741 = vmatpush1.msra.mxu0 0.0
    %4742 = vmatprep.subr.mxu0 0.0
    %4743 = vmatpush1.msra.mxu0 0.0
    %4744 = vmatprep.subr.mxu0 0.0
    %4745 = vmatpush1.msra.mxu0 0.0
    %4746 = vmatprep.subr.mxu0 0.0
    %4747 = vmatpush1.msra.mxu0 0.0
    %4748 = vmatprep.subr.mxu0 0.0
    %4749 = vmatpush1.msra.mxu0 0.0
    %4750 = vmatprep.subr.mxu0 0.0
    %4751 = vmatpush1.msra.mxu0 0.0
    %4752 = vmatprep.subr.mxu0 0.0
    %4753 = vmatpush1.msra.mxu0 %v4719
    %4754 = vmatprep.subr.mxu0 0.0
    %4755 = vmatpush1.msra.mxu0 %v4718
    %4756 = vmatprep.subr.mxu0 0.0
    %4757 = vmatpush1.msra.mxu0 %v4717
    %4758 = vmatprep.subr.mxu0 0.0
    %4759 = vmatpush1.msra.mxu0 %v4716
    %4760 = vmatprep.subr.mxu0 0.0
    %4761 = vmatpush2.msra.mxu0 0.0
    %4762 = vmatprep.subr.mxu0 0.0
    %4763 = vmatpush2.msra.mxu0 0.0
    %4764 = vmatprep.subr.mxu0 0.0
    %4765 = vmatpush2.msra.mxu0 0.0
    %4766 = vmatprep.subr.mxu0 0.0
    %4767 = vmatpush2.msra.mxu0 0.0
    %4768 = vmatprep.subr.mxu0 0.0
    %4769 = vmatpush2.msra.mxu0 0.0
    %4770 = vmatprep.subr.mxu0 0.0
    %4771 = vmatpush2.msra.mxu0 0.0
    %4772 = vmatprep.subr.mxu0 0.0
    %4773 = vmatpush2.msra.mxu0 0.0
    %4774 = vmatprep.subr.mxu0 0.0
    %4775 = vmatpush2.msra.mxu0 0.0
    %4776 = vmatprep.subr.mxu0 0.0
    %4777 = vmatpush2.msra.mxu0 0.0
    %4778 = vmatprep.subr.mxu0 0.0
    %4779 = vmatpush2.msra.mxu0 0.0
    %4780 = vmatprep.subr.mxu0 0.0
    %4781 = vmatpush2.msra.mxu0 0.0
    %4782 = vmatprep.subr.mxu0 0.0
    %4783 = vmatpush2.msra.mxu0 0.0
    %4784 = vmatprep.subr.mxu0 0.0
    %4785 = vmatpush2.msra.mxu0 0.0
    %4786 = vmatprep.subr.mxu0 0.0
    %4787 = vmatpush2.msra.mxu0 0.0
    %4788 = vmatprep.subr.mxu0 0.0
    %4789 = vmatpush2.msra.mxu0 0.0
    %4790 = vmatprep.subr.mxu0 0.0
    %4791 = vmatpush2.msra.mxu0 0.0
    %4792 = vmatprep.mubr.f32.mxu0 0.0
    %4793 = vmatmul.mubr.f32.gmra.mxu0 %v4508
    %v4794 = vpop.f32.mrf.mxu0
    %v4795 = vadd.f32 %v4726, %v4794
    %v4796 = vpop.f32.mrf.mxu0
    %4797 = vmatprep.mubr.f32.mxu0 0.0
    %4798 = vmatmul.mubr.f32.gmra.mxu0 %v4511
    %v4799 = vpop.f32.mrf.mxu0
    %v4800 = vadd.f32 %v4726, %v4799
    %v4801 = vpop.f32.mrf.mxu0
    %4802 = vmatprep.mubr.f32.mxu0 0.0
    %4803 = vmatmul.mubr.f32.gmra.mxu0 %v4514
    %v4804 = vpop.f32.mrf.mxu0
    %v4805 = vadd.f32 %v4726, %v4804
    %v4806 = vpop.f32.mrf.mxu0
    %4807 = vmatprep.mubr.f32.mxu0 0.0
    %4808 = vmatmul.mubr.f32.gmra.mxu0 %v4517
    %v4809 = vpop.f32.mrf.mxu0
    %v4810 = vadd.f32 %v4726, %v4809
    %v4811 = vpop.f32.mrf.mxu0
    %4812 = vmatprep.mubr.f32.mxu0 0.0
    %4813 = vmatmul.mubr.f32.gmra.mxu0 %v4520
    %v4814 = vpop.f32.mrf.mxu0
    %v4815 = vadd.f32 %v4726, %v4814
    %v4816 = vpop.f32.mrf.mxu0
    %4817 = vdwg.mxu0
    %v4818 = vmul.f32 %v4589, %v668
    %v4819 = vmul.f32 %v4594, %v668
    %v4820 = vmul.f32 %v4599, %v668
    %v4821 = vmul.f32 %v4604, %v668
    %v4822 = vmul.f32 %v4609, %v668
    %v4824 = vsel %vm257, %v4818, 0
    %v4827 = vsel %vm257, %v4819, 0
    %v4830 = vsel %vm257, %v4820, 0
    %v4833 = vsel %vm257, %v4821, 0
    %v4836 = vsel %vm257, %v4822, 0
    %v4839 = vsel %vm257, %v4692, 0
    %v4842 = vsel %vm257, %v4697, 0
    %v4845 = vsel %vm257, %v4702, 0
    %v4848 = vsel %vm257, %v4707, 0
    %v4851 = vsel %vm257, %v4712, 0
    %4853 = vmatprep.subr.mxu0 0.0
    %4854 = vmatpush1.xpose.msra.mxu0 0.0
    %4855 = vmatprep.subr.mxu0 0.0
    %4856 = vmatpush1.xpose.msra.mxu0 0.0
    %4857 = vmatprep.subr.mxu0 0.0
    %4858 = vmatpush1.xpose.msra.mxu0 0.0
    %4859 = vmatprep.subr.mxu0 0.0
    %4860 = vmatpush1.xpose.msra.mxu0 0.0
    %4861 = vmatprep.subr.mxu0 0.0
    %4862 = vmatpush1.xpose.msra.mxu0 0.0
    %4863 = vmatprep.subr.mxu0 0.0
    %4864 = vmatpush1.xpose.msra.mxu0 0.0
    %4865 = vmatprep.subr.mxu0 0.0
    %4866 = vmatpush1.xpose.msra.mxu0 0.0
    %4867 = vmatprep.subr.mxu0 0.0
    %4868 = vmatpush1.xpose.msra.mxu0 0.0
    %4869 = vmatprep.subr.mxu0 0.0
    %4870 = vmatpush1.xpose.msra.mxu0 0.0
    %4871 = vmatprep.subr.mxu0 0.0
    %4872 = vmatpush1.xpose.msra.mxu0 0.0
    %4873 = vmatprep.subr.mxu0 0.0
    %4874 = vmatpush1.xpose.msra.mxu0 0.0
    %4875 = vmatprep.subr.mxu0 0.0
    %4876 = vmatpush1.xpose.msra.mxu0 %v4851
    %4877 = vmatprep.subr.mxu0 0.0
    %4878 = vmatpush1.xpose.msra.mxu0 %v4848
    %4879 = vmatprep.subr.mxu0 0.0
    %4880 = vmatpush1.xpose.msra.mxu0 %v4845
    %4881 = vmatprep.subr.mxu0 0.0
    %4882 = vmatpush1.xpose.msra.mxu0 %v4842
    %4883 = vmatprep.subr.mxu0 0.0
    %4884 = vmatpush1.xpose.msra.mxu0 %v4839
    %4885 = vmatprep.subr.mxu0 0.0
    %4886 = vmatpush2.xpose.msra.mxu0 0.0
    %4887 = vmatprep.subr.mxu0 0.0
    %4888 = vmatpush2.xpose.msra.mxu0 0.0
    %4889 = vmatprep.subr.mxu0 0.0
    %4890 = vmatpush2.xpose.msra.mxu0 0.0
    %4891 = vmatprep.subr.mxu0 0.0
    %4892 = vmatpush2.xpose.msra.mxu0 0.0
    %4893 = vmatprep.subr.mxu0 0.0
    %4894 = vmatpush2.xpose.msra.mxu0 0.0
    %4895 = vmatprep.subr.mxu0 0.0
    %4896 = vmatpush2.xpose.msra.mxu0 0.0
    %4897 = vmatprep.subr.mxu0 0.0
    %4898 = vmatpush2.xpose.msra.mxu0 0.0
    %4899 = vmatprep.subr.mxu0 0.0
    %4900 = vmatpush2.xpose.msra.mxu0 0.0
    %4901 = vmatprep.subr.mxu0 0.0
    %4902 = vmatpush2.xpose.msra.mxu0 0.0
    %4903 = vmatprep.subr.mxu0 0.0
    %4904 = vmatpush2.xpose.msra.mxu0 0.0
    %4905 = vmatprep.subr.mxu0 0.0
    %4906 = vmatpush2.xpose.msra.mxu0 0.0
    %4907 = vmatprep.subr.mxu0 0.0
    %4908 = vmatpush2.xpose.msra.mxu0 0.0
    %4909 = vmatprep.subr.mxu0 0.0
    %4910 = vmatpush2.xpose.msra.mxu0 0.0
    %4911 = vmatprep.subr.mxu0 0.0
    %4912 = vmatpush2.xpose.msra.mxu0 0.0
    %4913 = vmatprep.subr.mxu0 0.0
    %4914 = vmatpush2.xpose.msra.mxu0 0.0
    %4915 = vmatprep.subr.mxu0 0.0
    %4916 = vmatpush2.xpose.msra.mxu0 0.0
    %4917 = vmatprep.mubr.f32.mxu0 0.0
    %4918 = vmatmul.mubr.f32.gmra.mxu0 %v4824
    %v4919 = vpop.f32.mrf.mxu0
    %v4920 = vadd.f32 %v246, %v4919
    %v4921 = vpop.f32.mrf.mxu0
    %4922 = vmatprep.mubr.f32.mxu0 0.0
    %4923 = vmatmul.mubr.f32.gmra.mxu0 %v4827
    %v4924 = vpop.f32.mrf.mxu0
    %v4925 = vadd.f32 %v247, %v4924
    %v4926 = vpop.f32.mrf.mxu0
    %4927 = vmatprep.mubr.f32.mxu0 0.0
    %4928 = vmatmul.mubr.f32.gmra.mxu0 %v4830
    %v4929 = vpop.f32.mrf.mxu0
    %v4930 = vadd.f32 %v248, %v4929
    %v4931 = vpop.f32.mrf.mxu0
    %4932 = vmatprep.mubr.f32.mxu0 0.0
    %4933 = vmatmul.mubr.f32.gmra.mxu0 %v4833
    %v4934 = vpop.f32.mrf.mxu0
    %v4935 = vadd.f32 %v249, %v4934
    %v4936 = vpop.f32.mrf.mxu0
    %4937 = vmatprep.mubr.f32.mxu0 0.0
    %4938 = vmatmul.mubr.f32.gmra.mxu0 %v4836
    %v4939 = vpop.f32.mrf.mxu0
    %v4940 = vadd.f32 %v250, %v4939
    %v4941 = vpop.f32.mrf.mxu0
    %4942 = vdwg.mxu0
    %v4943 = vsel %vm794, %v4920, -inf
    %4944 = vmax.xlane.f32.xlu0 %v4943
    %v4945 = vpop.xlane.xlu0 %4944
    %v4946 = vsel %vm794, %v4925, -inf
    %4947 = vmax.xlane.f32.xlu0 %v4946
    %v4948 = vpop.xlane.xlu0 %4947
    %v4949 = vsel %vm794, %v4930, -inf
    %4950 = vmax.xlane.f32.xlu0 %v4949
    %v4951 = vpop.xlane.xlu0 %4950
    %v4952 = vsel %vm794, %v4935, -inf
    %4953 = vmax.xlane.f32.xlu0 %v4952
    %v4954 = vpop.xlane.xlu0 %4953
    %v4955 = vsel %vm794, %v4940, -inf
    %4956 = vmax.xlane.f32.xlu0 %v4955
    %v4957 = vpop.xlane.xlu0 %4956
    %v4958 = vsub.f32 %v4920, %v4945
    %v4959 = vsub.f32 %v4925, %v4948
    %v4960 = vsub.f32 %v4930, %v4951
    %v4961 = vsub.f32 %v4935, %v4954
    %v4962 = vsub.f32 %v4940, %v4957
    %v4963 = vmul.f32 %v4958, 1.442695
    %v4964 = vpow.pop %v4963
    %v4965 = vmul.f32 %v4959, 1.442695
    %v4966 = vpow.pop %v4965
    %v4967 = vmul.f32 %v4960, 1.442695
    %v4968 = vpow.pop %v4967
    %v4969 = vmul.f32 %v4961, 1.442695
    %v4970 = vpow.pop %v4969
    %v4971 = vmul.f32 %v4962, 1.442695
    %v4972 = vpow.pop %v4971
    %v4973 = vsel %vm794, %v4964, 0.0
    %4974 = vadd.xlane.f32.xlu0 %v4973
    %v4975 = vpop.xlane.xlu0 %4974
    %v4976 = vsel %vm794, %v4966, 0.0
    %4977 = vadd.xlane.f32.xlu0 %v4976
    %v4978 = vpop.xlane.xlu0 %4977
    %v4979 = vsel %vm794, %v4968, 0.0
    %4980 = vadd.xlane.f32.xlu0 %v4979
    %v4981 = vpop.xlane.xlu0 %4980
    %v4982 = vsel %vm794, %v4970, 0.0
    %4983 = vadd.xlane.f32.xlu0 %v4982
    %v4984 = vpop.xlane.xlu0 %4983
    %v4985 = vsel %vm794, %v4972, 0.0
    %4986 = vadd.xlane.f32.xlu0 %v4985
    %v4987 = vpop.xlane.xlu0 %4986
    %v4988 = vrcp.pop %v4975
    %v4989 = vrcp.pop %v4978
    %v4990 = vrcp.pop %v4981
    %v4991 = vrcp.pop %v4984
    %v4992 = vrcp.pop %v4987
    %v4993 = vmul.f32 %v4964, %v4988
    %v4994 = vmul.f32 %v4966, %v4989
    %v4995 = vmul.f32 %v4968, %v4990
    %v4996 = vmul.f32 %v4970, %v4991
    %v4997 = vmul.f32 %v4972, %v4992
    %v4998 = vmul.f32 %v4795, %v668
    %v4999 = vmul.f32 %v4800, %v668
    %v5000 = vmul.f32 %v4805, %v668
    %v5001 = vmul.f32 %v4810, %v668
    %v5002 = vmul.f32 %v4815, %v668
    %v5003 = vmul.f32 %v4589, %v859
    %v5004 = vmul.f32 %v4594, %v859
    %v5005 = vmul.f32 %v4599, %v859
    %v5006 = vmul.f32 %v4604, %v859
    %v5007 = vmul.f32 %v4609, %v859
    %v5009 = vsel %vm257, %v5003, 0
    %v5012 = vsel %vm257, %v5004, 0
    %v5015 = vsel %vm257, %v5005, 0
    %v5018 = vsel %vm257, %v5006, 0
    %v5021 = vsel %vm257, %v5007, 0
    %5023 = vmatprep.subr.mxu0 0.0
    %5024 = vmatpush1.xpose.msra.mxu0 0.0
    %5025 = vmatprep.subr.mxu0 0.0
    %5026 = vmatpush1.xpose.msra.mxu0 0.0
    %5027 = vmatprep.subr.mxu0 0.0
    %5028 = vmatpush1.xpose.msra.mxu0 0.0
    %5029 = vmatprep.subr.mxu0 0.0
    %5030 = vmatpush1.xpose.msra.mxu0 0.0
    %5031 = vmatprep.subr.mxu0 0.0
    %5032 = vmatpush1.xpose.msra.mxu0 0.0
    %5033 = vmatprep.subr.mxu0 0.0
    %5034 = vmatpush1.xpose.msra.mxu0 0.0
    %5035 = vmatprep.subr.mxu0 0.0
    %5036 = vmatpush1.xpose.msra.mxu0 0.0
    %5037 = vmatprep.subr.mxu0 0.0
    %5038 = vmatpush1.xpose.msra.mxu0 0.0
    %5039 = vmatprep.subr.mxu0 0.0
    %5040 = vmatpush1.xpose.msra.mxu0 0.0
    %5041 = vmatprep.subr.mxu0 0.0
    %5042 = vmatpush1.xpose.msra.mxu0 0.0
    %5043 = vmatprep.subr.mxu0 0.0
    %5044 = vmatpush1.xpose.msra.mxu0 0.0
    %5045 = vmatprep.subr.mxu0 0.0
    %5046 = vmatpush1.xpose.msra.mxu0 %v4851
    %5047 = vmatprep.subr.mxu0 0.0
    %5048 = vmatpush1.xpose.msra.mxu0 %v4848
    %5049 = vmatprep.subr.mxu0 0.0
    %5050 = vmatpush1.xpose.msra.mxu0 %v4845
    %5051 = vmatprep.subr.mxu0 0.0
    %5052 = vmatpush1.xpose.msra.mxu0 %v4842
    %5053 = vmatprep.subr.mxu0 0.0
    %5054 = vmatpush1.xpose.msra.mxu0 %v4839
    %5055 = vmatprep.subr.mxu0 0.0
    %5056 = vmatpush2.xpose.msra.mxu0 0.0
    %5057 = vmatprep.subr.mxu0 0.0
    %5058 = vmatpush2.xpose.msra.mxu0 0.0
    %5059 = vmatprep.subr.mxu0 0.0
    %5060 = vmatpush2.xpose.msra.mxu0 0.0
    %5061 = vmatprep.subr.mxu0 0.0
    %5062 = vmatpush2.xpose.msra.mxu0 0.0
    %5063 = vmatprep.subr.mxu0 0.0
    %5064 = vmatpush2.xpose.msra.mxu0 0.0
    %5065 = vmatprep.subr.mxu0 0.0
    %5066 = vmatpush2.xpose.msra.mxu0 0.0
    %5067 = vmatprep.subr.mxu0 0.0
    %5068 = vmatpush2.xpose.msra.mxu0 0.0
    %5069 = vmatprep.subr.mxu0 0.0
    %5070 = vmatpush2.xpose.msra.mxu0 0.0
    %5071 = vmatprep.subr.mxu0 0.0
    %5072 = vmatpush2.xpose.msra.mxu0 0.0
    %5073 = vmatprep.subr.mxu0 0.0
    %5074 = vmatpush2.xpose.msra.mxu0 0.0
    %5075 = vmatprep.subr.mxu0 0.0
    %5076 = vmatpush2.xpose.msra.mxu0 0.0
    %5077 = vmatprep.subr.mxu0 0.0
    %5078 = vmatpush2.xpose.msra.mxu0 0.0
    %5079 = vmatprep.subr.mxu0 0.0
    %5080 = vmatpush2.xpose.msra.mxu0 0.0
    %5081 = vmatprep.subr.mxu0 0.0
    %5082 = vmatpush2.xpose.msra.mxu0 0.0
    %5083 = vmatprep.subr.mxu0 0.0
    %5084 = vmatpush2.xpose.msra.mxu0 0.0
    %5085 = vmatprep.subr.mxu0 0.0
    %5086 = vmatpush2.xpose.msra.mxu0 0.0
    %5087 = vmatprep.mubr.f32.mxu0 0.0
    %5088 = vmatmul.mubr.f32.gmra.mxu0 %v5009
    %v5089 = vpop.f32.mrf.mxu0
    %v5090 = vadd.f32 %v246, %v5089
    %v5091 = vpop.f32.mrf.mxu0
    %5092 = vmatprep.mubr.f32.mxu0 0.0
    %5093 = vmatmul.mubr.f32.gmra.mxu0 %v5012
    %v5094 = vpop.f32.mrf.mxu0
    %v5095 = vadd.f32 %v247, %v5094
    %v5096 = vpop.f32.mrf.mxu0
    %5097 = vmatprep.mubr.f32.mxu0 0.0
    %5098 = vmatmul.mubr.f32.gmra.mxu0 %v5015
    %v5099 = vpop.f32.mrf.mxu0
    %v5100 = vadd.f32 %v248, %v5099
    %v5101 = vpop.f32.mrf.mxu0
    %5102 = vmatprep.mubr.f32.mxu0 0.0
    %5103 = vmatmul.mubr.f32.gmra.mxu0 %v5018
    %v5104 = vpop.f32.mrf.mxu0
    %v5105 = vadd.f32 %v249, %v5104
    %v5106 = vpop.f32.mrf.mxu0
    %5107 = vmatprep.mubr.f32.mxu0 0.0
    %5108 = vmatmul.mubr.f32.gmra.mxu0 %v5021
    %v5109 = vpop.f32.mrf.mxu0
    %v5110 = vadd.f32 %v250, %v5109
    %v5111 = vpop.f32.mrf.mxu0
    %5112 = vdwg.mxu0
    %v5113 = vsel %vm794, %v5090, -inf
    %5114 = vmax.xlane.f32.xlu0 %v5113
    %v5115 = vpop.xlane.xlu0 %5114
    %v5116 = vsel %vm794, %v5095, -inf
    %5117 = vmax.xlane.f32.xlu0 %v5116
    %v5118 = vpop.xlane.xlu0 %5117
    %v5119 = vsel %vm794, %v5100, -inf
    %5120 = vmax.xlane.f32.xlu0 %v5119
    %v5121 = vpop.xlane.xlu0 %5120
    %v5122 = vsel %vm794, %v5105, -inf
    %5123 = vmax.xlane.f32.xlu0 %v5122
    %v5124 = vpop.xlane.xlu0 %5123
    %v5125 = vsel %vm794, %v5110, -inf
    %5126 = vmax.xlane.f32.xlu0 %v5125
    %v5127 = vpop.xlane.xlu0 %5126
    %v5128 = vsub.f32 %v5090, %v5115
    %v5129 = vsub.f32 %v5095, %v5118
    %v5130 = vsub.f32 %v5100, %v5121
    %v5131 = vsub.f32 %v5105, %v5124
    %v5132 = vsub.f32 %v5110, %v5127
    %v5133 = vmul.f32 %v5128, 1.442695
    %v5134 = vpow.pop %v5133
    %v5135 = vmul.f32 %v5129, 1.442695
    %v5136 = vpow.pop %v5135
    %v5137 = vmul.f32 %v5130, 1.442695
    %v5138 = vpow.pop %v5137
    %v5139 = vmul.f32 %v5131, 1.442695
    %v5140 = vpow.pop %v5139
    %v5141 = vmul.f32 %v5132, 1.442695
    %v5142 = vpow.pop %v5141
    %v5143 = vsel %vm794, %v5134, 0.0
    %5144 = vadd.xlane.f32.xlu0 %v5143
    %v5145 = vpop.xlane.xlu0 %5144
    %v5146 = vsel %vm794, %v5136, 0.0
    %5147 = vadd.xlane.f32.xlu0 %v5146
    %v5148 = vpop.xlane.xlu0 %5147
    %v5149 = vsel %vm794, %v5138, 0.0
    %5150 = vadd.xlane.f32.xlu0 %v5149
    %v5151 = vpop.xlane.xlu0 %5150
    %v5152 = vsel %vm794, %v5140, 0.0
    %5153 = vadd.xlane.f32.xlu0 %v5152
    %v5154 = vpop.xlane.xlu0 %5153
    %v5155 = vsel %vm794, %v5142, 0.0
    %5156 = vadd.xlane.f32.xlu0 %v5155
    %v5157 = vpop.xlane.xlu0 %5156
    %v5158 = vrcp.pop %v5145
    %v5159 = vrcp.pop %v5148
    %v5160 = vrcp.pop %v5151
    %v5161 = vrcp.pop %v5154
    %v5162 = vrcp.pop %v5157
    %v5163 = vmul.f32 %v5134, %v5158
    %v5164 = vmul.f32 %v5136, %v5159
    %v5165 = vmul.f32 %v5138, %v5160
    %v5166 = vmul.f32 %v5140, %v5161
    %v5167 = vmul.f32 %v5142, %v5162
    %v5168 = vmul.f32 %v4795, %v859
    %v5169 = vmul.f32 %v4800, %v859
    %v5170 = vmul.f32 %v4805, %v859
    %v5171 = vmul.f32 %v4810, %v859
    %v5172 = vmul.f32 %v4815, %v859
    %v5174 = vsel %vm794, %v5163, 0
    %v5177 = vsel %vm794, %v5164, 0
    %v5180 = vsel %vm794, %v5165, 0
    %v5183 = vsel %vm794, %v5166, 0
    %v5186 = vsel %vm794, %v5167, 0
    %5188 = vmatprep.subr.mxu0 0.0
    %5189 = vmatpush1.msra.mxu0 0.0
    %5190 = vmatprep.subr.mxu0 0.0
    %5191 = vmatpush1.msra.mxu0 0.0
    %5192 = vmatprep.subr.mxu0 0.0
    %5193 = vmatpush1.msra.mxu0 0.0
    %5194 = vmatprep.subr.mxu0 0.0
    %5195 = vmatpush1.msra.mxu0 0.0
    %5196 = vmatprep.subr.mxu0 0.0
    %5197 = vmatpush1.msra.mxu0 0.0
    %5198 = vmatprep.subr.mxu0 0.0
    %5199 = vmatpush1.msra.mxu0 0.0
    %5200 = vmatprep.subr.mxu0 0.0
    %5201 = vmatpush1.msra.mxu0 0.0
    %5202 = vmatprep.subr.mxu0 0.0
    %5203 = vmatpush1.msra.mxu0 0.0
    %5204 = vmatprep.subr.mxu0 0.0
    %5205 = vmatpush1.msra.mxu0 0.0
    %5206 = vmatprep.subr.mxu0 0.0
    %5207 = vmatpush1.msra.mxu0 0.0
    %5208 = vmatprep.subr.mxu0 0.0
    %5209 = vmatpush1.msra.mxu0 0.0
    %5210 = vmatprep.subr.mxu0 0.0
    %5211 = vmatpush1.msra.mxu0 %v5172
    %5212 = vmatprep.subr.mxu0 0.0
    %5213 = vmatpush1.msra.mxu0 %v5171
    %5214 = vmatprep.subr.mxu0 0.0
    %5215 = vmatpush1.msra.mxu0 %v5170
    %5216 = vmatprep.subr.mxu0 0.0
    %5217 = vmatpush1.msra.mxu0 %v5169
    %5218 = vmatprep.subr.mxu0 0.0
    %5219 = vmatpush1.msra.mxu0 %v5168
    %5220 = vmatprep.subr.mxu0 0.0
    %5221 = vmatpush2.msra.mxu0 0.0
    %5222 = vmatprep.subr.mxu0 0.0
    %5223 = vmatpush2.msra.mxu0 0.0
    %5224 = vmatprep.subr.mxu0 0.0
    %5225 = vmatpush2.msra.mxu0 0.0
    %5226 = vmatprep.subr.mxu0 0.0
    %5227 = vmatpush2.msra.mxu0 0.0
    %5228 = vmatprep.subr.mxu0 0.0
    %5229 = vmatpush2.msra.mxu0 0.0
    %5230 = vmatprep.subr.mxu0 0.0
    %5231 = vmatpush2.msra.mxu0 0.0
    %5232 = vmatprep.subr.mxu0 0.0
    %5233 = vmatpush2.msra.mxu0 0.0
    %5234 = vmatprep.subr.mxu0 0.0
    %5235 = vmatpush2.msra.mxu0 0.0
    %5236 = vmatprep.subr.mxu0 0.0
    %5237 = vmatpush2.msra.mxu0 0.0
    %5238 = vmatprep.subr.mxu0 0.0
    %5239 = vmatpush2.msra.mxu0 0.0
    %5240 = vmatprep.subr.mxu0 0.0
    %5241 = vmatpush2.msra.mxu0 0.0
    %5242 = vmatprep.subr.mxu0 0.0
    %5243 = vmatpush2.msra.mxu0 0.0
    %5244 = vmatprep.subr.mxu0 0.0
    %5245 = vmatpush2.msra.mxu0 0.0
    %5246 = vmatprep.subr.mxu0 0.0
    %5247 = vmatpush2.msra.mxu0 0.0
    %5248 = vmatprep.subr.mxu0 0.0
    %5249 = vmatpush2.msra.mxu0 0.0
    %5250 = vmatprep.subr.mxu0 0.0
    %5251 = vmatpush2.msra.mxu0 0.0
    %5252 = vmatprep.mubr.f32.mxu0 0.0
    %5253 = vmatmul.mubr.f32.gmra.mxu0 %v5174
    %v5254 = vpop.f32.mrf.mxu0
    %v5255 = vadd.f32 0.0, %v5254
    %v5256 = vpop.f32.mrf.mxu0
    %5257 = vmatprep.mubr.f32.mxu0 0.0
    %5258 = vmatmul.mubr.f32.gmra.mxu0 %v5177
    %v5259 = vpop.f32.mrf.mxu0
    %v5260 = vadd.f32 0.0, %v5259
    %v5261 = vpop.f32.mrf.mxu0
    %5262 = vmatprep.mubr.f32.mxu0 0.0
    %5263 = vmatmul.mubr.f32.gmra.mxu0 %v5180
    %v5264 = vpop.f32.mrf.mxu0
    %v5265 = vadd.f32 0.0, %v5264
    %v5266 = vpop.f32.mrf.mxu0
    %5267 = vmatprep.mubr.f32.mxu0 0.0
    %5268 = vmatmul.mubr.f32.gmra.mxu0 %v5183
    %v5269 = vpop.f32.mrf.mxu0
    %v5270 = vadd.f32 0.0, %v5269
    %v5271 = vpop.f32.mrf.mxu0
    %5272 = vmatprep.mubr.f32.mxu0 0.0
    %5273 = vmatmul.mubr.f32.gmra.mxu0 %v5186
    %v5274 = vpop.f32.mrf.mxu0
    %v5275 = vadd.f32 0.0, %v5274
    %v5276 = vpop.f32.mrf.mxu0
    %5277 = vdwg.mxu0
    %v5279 = vsel %vm794, %v4993, 0
    %v5282 = vsel %vm794, %v4994, 0
    %v5285 = vsel %vm794, %v4995, 0
    %v5288 = vsel %vm794, %v4996, 0
    %v5291 = vsel %vm794, %v4997, 0
    %5293 = vmatprep.subr.mxu0 0.0
    %5294 = vmatpush1.msra.mxu0 0.0
    %5295 = vmatprep.subr.mxu0 0.0
    %5296 = vmatpush1.msra.mxu0 0.0
    %5297 = vmatprep.subr.mxu0 0.0
    %5298 = vmatpush1.msra.mxu0 0.0
    %5299 = vmatprep.subr.mxu0 0.0
    %5300 = vmatpush1.msra.mxu0 0.0
    %5301 = vmatprep.subr.mxu0 0.0
    %5302 = vmatpush1.msra.mxu0 0.0
    %5303 = vmatprep.subr.mxu0 0.0
    %5304 = vmatpush1.msra.mxu0 0.0
    %5305 = vmatprep.subr.mxu0 0.0
    %5306 = vmatpush1.msra.mxu0 0.0
    %5307 = vmatprep.subr.mxu0 0.0
    %5308 = vmatpush1.msra.mxu0 0.0
    %5309 = vmatprep.subr.mxu0 0.0
    %5310 = vmatpush1.msra.mxu0 0.0
    %5311 = vmatprep.subr.mxu0 0.0
    %5312 = vmatpush1.msra.mxu0 0.0
    %5313 = vmatprep.subr.mxu0 0.0
    %5314 = vmatpush1.msra.mxu0 0.0
    %5315 = vmatprep.subr.mxu0 0.0
    %5316 = vmatpush1.msra.mxu0 %v5002
    %5317 = vmatprep.subr.mxu0 0.0
    %5318 = vmatpush1.msra.mxu0 %v5001
    %5319 = vmatprep.subr.mxu0 0.0
    %5320 = vmatpush1.msra.mxu0 %v5000
    %5321 = vmatprep.subr.mxu0 0.0
    %5322 = vmatpush1.msra.mxu0 %v4999
    %5323 = vmatprep.subr.mxu0 0.0
    %5324 = vmatpush1.msra.mxu0 %v4998
    %5325 = vmatprep.subr.mxu0 0.0
    %5326 = vmatpush2.msra.mxu0 0.0
    %5327 = vmatprep.subr.mxu0 0.0
    %5328 = vmatpush2.msra.mxu0 0.0
    %5329 = vmatprep.subr.mxu0 0.0
    %5330 = vmatpush2.msra.mxu0 0.0
    %5331 = vmatprep.subr.mxu0 0.0
    %5332 = vmatpush2.msra.mxu0 0.0
    %5333 = vmatprep.subr.mxu0 0.0
    %5334 = vmatpush2.msra.mxu0 0.0
    %5335 = vmatprep.subr.mxu0 0.0
    %5336 = vmatpush2.msra.mxu0 0.0
    %5337 = vmatprep.subr.mxu0 0.0
    %5338 = vmatpush2.msra.mxu0 0.0
    %5339 = vmatprep.subr.mxu0 0.0
    %5340 = vmatpush2.msra.mxu0 0.0
    %5341 = vmatprep.subr.mxu0 0.0
    %5342 = vmatpush2.msra.mxu0 0.0
    %5343 = vmatprep.subr.mxu0 0.0
    %5344 = vmatpush2.msra.mxu0 0.0
    %5345 = vmatprep.subr.mxu0 0.0
    %5346 = vmatpush2.msra.mxu0 0.0
    %5347 = vmatprep.subr.mxu0 0.0
    %5348 = vmatpush2.msra.mxu0 0.0
    %5349 = vmatprep.subr.mxu0 0.0
    %5350 = vmatpush2.msra.mxu0 0.0
    %5351 = vmatprep.subr.mxu0 0.0
    %5352 = vmatpush2.msra.mxu0 0.0
    %5353 = vmatprep.subr.mxu0 0.0
    %5354 = vmatpush2.msra.mxu0 0.0
    %5355 = vmatprep.subr.mxu0 0.0
    %5356 = vmatpush2.msra.mxu0 0.0
    %5357 = vmatprep.mubr.f32.mxu0 0.0
    %5358 = vmatmul.mubr.f32.gmra.mxu0 %v5279
    %v5359 = vpop.f32.mrf.mxu0
    %v5360 = vadd.f32 %v5255, %v5359
    %v5361 = vpop.f32.mrf.mxu0
    %5362 = vmatprep.mubr.f32.mxu0 0.0
    %5363 = vmatmul.mubr.f32.gmra.mxu0 %v5282
    %v5364 = vpop.f32.mrf.mxu0
    %v5365 = vadd.f32 %v5260, %v5364
    %v5366 = vpop.f32.mrf.mxu0
    %5367 = vmatprep.mubr.f32.mxu0 0.0
    %5368 = vmatmul.mubr.f32.gmra.mxu0 %v5285
    %v5369 = vpop.f32.mrf.mxu0
    %v5370 = vadd.f32 %v5265, %v5369
    %v5371 = vpop.f32.mrf.mxu0
    %5372 = vmatprep.mubr.f32.mxu0 0.0
    %5373 = vmatmul.mubr.f32.gmra.mxu0 %v5288
    %v5374 = vpop.f32.mrf.mxu0
    %v5375 = vadd.f32 %v5270, %v5374
    %v5376 = vpop.f32.mrf.mxu0
    %5377 = vmatprep.mubr.f32.mxu0 0.0
    %5378 = vmatmul.mubr.f32.gmra.mxu0 %v5291
    %v5379 = vpop.f32.mrf.mxu0
    %v5380 = vadd.f32 %v5275, %v5379
    %v5381 = vpop.f32.mrf.mxu0
    %5382 = vdwg.mxu0
    %v5383 = vmul.f32 %v4589, %v1244
    %v5384 = vmul.f32 %v4594, %v1244
    %v5385 = vmul.f32 %v4599, %v1244
    %v5386 = vmul.f32 %v4604, %v1244
    %v5387 = vmul.f32 %v4609, %v1244
    %v5389 = vsel %vm257, %v5383, 0
    %v5392 = vsel %vm257, %v5384, 0
    %v5395 = vsel %vm257, %v5385, 0
    %v5398 = vsel %vm257, %v5386, 0
    %v5401 = vsel %vm257, %v5387, 0
    %5403 = vmatprep.subr.mxu0 0.0
    %5404 = vmatpush1.xpose.msra.mxu0 0.0
    %5405 = vmatprep.subr.mxu0 0.0
    %5406 = vmatpush1.xpose.msra.mxu0 0.0
    %5407 = vmatprep.subr.mxu0 0.0
    %5408 = vmatpush1.xpose.msra.mxu0 0.0
    %5409 = vmatprep.subr.mxu0 0.0
    %5410 = vmatpush1.xpose.msra.mxu0 0.0
    %5411 = vmatprep.subr.mxu0 0.0
    %5412 = vmatpush1.xpose.msra.mxu0 0.0
    %5413 = vmatprep.subr.mxu0 0.0
    %5414 = vmatpush1.xpose.msra.mxu0 0.0
    %5415 = vmatprep.subr.mxu0 0.0
    %5416 = vmatpush1.xpose.msra.mxu0 0.0
    %5417 = vmatprep.subr.mxu0 0.0
    %5418 = vmatpush1.xpose.msra.mxu0 0.0
    %5419 = vmatprep.subr.mxu0 0.0
    %5420 = vmatpush1.xpose.msra.mxu0 0.0
    %5421 = vmatprep.subr.mxu0 0.0
    %5422 = vmatpush1.xpose.msra.mxu0 0.0
    %5423 = vmatprep.subr.mxu0 0.0
    %5424 = vmatpush1.xpose.msra.mxu0 0.0
    %5425 = vmatprep.subr.mxu0 0.0
    %5426 = vmatpush1.xpose.msra.mxu0 %v4851
    %5427 = vmatprep.subr.mxu0 0.0
    %5428 = vmatpush1.xpose.msra.mxu0 %v4848
    %5429 = vmatprep.subr.mxu0 0.0
    %5430 = vmatpush1.xpose.msra.mxu0 %v4845
    %5431 = vmatprep.subr.mxu0 0.0
    %5432 = vmatpush1.xpose.msra.mxu0 %v4842
    %5433 = vmatprep.subr.mxu0 0.0
    %5434 = vmatpush1.xpose.msra.mxu0 %v4839
    %5435 = vmatprep.subr.mxu0 0.0
    %5436 = vmatpush2.xpose.msra.mxu0 0.0
    %5437 = vmatprep.subr.mxu0 0.0
    %5438 = vmatpush2.xpose.msra.mxu0 0.0
    %5439 = vmatprep.subr.mxu0 0.0
    %5440 = vmatpush2.xpose.msra.mxu0 0.0
    %5441 = vmatprep.subr.mxu0 0.0
    %5442 = vmatpush2.xpose.msra.mxu0 0.0
    %5443 = vmatprep.subr.mxu0 0.0
    %5444 = vmatpush2.xpose.msra.mxu0 0.0
    %5445 = vmatprep.subr.mxu0 0.0
    %5446 = vmatpush2.xpose.msra.mxu0 0.0
    %5447 = vmatprep.subr.mxu0 0.0
    %5448 = vmatpush2.xpose.msra.mxu0 0.0
    %5449 = vmatprep.subr.mxu0 0.0
    %5450 = vmatpush2.xpose.msra.mxu0 0.0
    %5451 = vmatprep.subr.mxu0 0.0
    %5452 = vmatpush2.xpose.msra.mxu0 0.0
    %5453 = vmatprep.subr.mxu0 0.0
    %5454 = vmatpush2.xpose.msra.mxu0 0.0
    %5455 = vmatprep.subr.mxu0 0.0
    %5456 = vmatpush2.xpose.msra.mxu0 0.0
    %5457 = vmatprep.subr.mxu0 0.0
    %5458 = vmatpush2.xpose.msra.mxu0 0.0
    %5459 = vmatprep.subr.mxu0 0.0
    %5460 = vmatpush2.xpose.msra.mxu0 0.0
    %5461 = vmatprep.subr.mxu0 0.0
    %5462 = vmatpush2.xpose.msra.mxu0 0.0
    %5463 = vmatprep.subr.mxu0 0.0
    %5464 = vmatpush2.xpose.msra.mxu0 0.0
    %5465 = vmatprep.subr.mxu0 0.0
    %5466 = vmatpush2.xpose.msra.mxu0 0.0
    %5467 = vmatprep.mubr.f32.mxu0 0.0
    %5468 = vmatmul.mubr.f32.gmra.mxu0 %v5389
    %v5469 = vpop.f32.mrf.mxu0
    %v5470 = vadd.f32 %v246, %v5469
    %v5471 = vpop.f32.mrf.mxu0
    %5472 = vmatprep.mubr.f32.mxu0 0.0
    %5473 = vmatmul.mubr.f32.gmra.mxu0 %v5392
    %v5474 = vpop.f32.mrf.mxu0
    %v5475 = vadd.f32 %v247, %v5474
    %v5476 = vpop.f32.mrf.mxu0
    %5477 = vmatprep.mubr.f32.mxu0 0.0
    %5478 = vmatmul.mubr.f32.gmra.mxu0 %v5395
    %v5479 = vpop.f32.mrf.mxu0
    %v5480 = vadd.f32 %v248, %v5479
    %v5481 = vpop.f32.mrf.mxu0
    %5482 = vmatprep.mubr.f32.mxu0 0.0
    %5483 = vmatmul.mubr.f32.gmra.mxu0 %v5398
    %v5484 = vpop.f32.mrf.mxu0
    %v5485 = vadd.f32 %v249, %v5484
    %v5486 = vpop.f32.mrf.mxu0
    %5487 = vmatprep.mubr.f32.mxu0 0.0
    %5488 = vmatmul.mubr.f32.gmra.mxu0 %v5401
    %v5489 = vpop.f32.mrf.mxu0
    %v5490 = vadd.f32 %v250, %v5489
    %v5491 = vpop.f32.mrf.mxu0
    %5492 = vdwg.mxu0
    %v5493 = vsel %vm794, %v5470, -inf
    %5494 = vmax.xlane.f32.xlu0 %v5493
    %v5495 = vpop.xlane.xlu0 %5494
    %v5496 = vsel %vm794, %v5475, -inf
    %5497 = vmax.xlane.f32.xlu0 %v5496
    %v5498 = vpop.xlane.xlu0 %5497
    %v5499 = vsel %vm794, %v5480, -inf
    %5500 = vmax.xlane.f32.xlu0 %v5499
    %v5501 = vpop.xlane.xlu0 %5500
    %v5502 = vsel %vm794, %v5485, -inf
    %5503 = vmax.xlane.f32.xlu0 %v5502
    %v5504 = vpop.xlane.xlu0 %5503
    %v5505 = vsel %vm794, %v5490, -inf
    %5506 = vmax.xlane.f32.xlu0 %v5505
    %v5507 = vpop.xlane.xlu0 %5506
    %v5508 = vsub.f32 %v5470, %v5495
    %v5509 = vsub.f32 %v5475, %v5498
    %v5510 = vsub.f32 %v5480, %v5501
    %v5511 = vsub.f32 %v5485, %v5504
    %v5512 = vsub.f32 %v5490, %v5507
    %v5513 = vmul.f32 %v5508, 1.442695
    %v5514 = vpow.pop %v5513
    %v5515 = vmul.f32 %v5509, 1.442695
    %v5516 = vpow.pop %v5515
    %v5517 = vmul.f32 %v5510, 1.442695
    %v5518 = vpow.pop %v5517
    %v5519 = vmul.f32 %v5511, 1.442695
    %v5520 = vpow.pop %v5519
    %v5521 = vmul.f32 %v5512, 1.442695
    %v5522 = vpow.pop %v5521
    %v5523 = vsel %vm794, %v5514, 0.0
    %5524 = vadd.xlane.f32.xlu0 %v5523
    %v5525 = vpop.xlane.xlu0 %5524
    %v5526 = vsel %vm794, %v5516, 0.0
    %5527 = vadd.xlane.f32.xlu0 %v5526
    %v5528 = vpop.xlane.xlu0 %5527
    %v5529 = vsel %vm794, %v5518, 0.0
    %5530 = vadd.xlane.f32.xlu0 %v5529
    %v5531 = vpop.xlane.xlu0 %5530
    %v5532 = vsel %vm794, %v5520, 0.0
    %5533 = vadd.xlane.f32.xlu0 %v5532
    %v5534 = vpop.xlane.xlu0 %5533
    %v5535 = vsel %vm794, %v5522, 0.0
    %5536 = vadd.xlane.f32.xlu0 %v5535
    %v5537 = vpop.xlane.xlu0 %5536
    %v5538 = vrcp.pop %v5525
    %v5539 = vrcp.pop %v5528
    %v5540 = vrcp.pop %v5531
    %v5541 = vrcp.pop %v5534
    %v5542 = vrcp.pop %v5537
    %v5543 = vmul.f32 %v5514, %v5538
    %v5544 = vmul.f32 %v5516, %v5539
    %v5545 = vmul.f32 %v5518, %v5540
    %v5546 = vmul.f32 %v5520, %v5541
    %v5547 = vmul.f32 %v5522, %v5542
    %v5548 = vmul.f32 %v4795, %v1244
    %v5549 = vmul.f32 %v4800, %v1244
    %v5550 = vmul.f32 %v4805, %v1244
    %v5551 = vmul.f32 %v4810, %v1244
    %v5552 = vmul.f32 %v4815, %v1244
    %v5554 = vsel %vm794, %v5543, 0
    %v5557 = vsel %vm794, %v5544, 0
    %v5560 = vsel %vm794, %v5545, 0
    %v5563 = vsel %vm794, %v5546, 0
    %v5566 = vsel %vm794, %v5547, 0
    %5568 = vmatprep.subr.mxu0 0.0
    %5569 = vmatpush1.msra.mxu0 0.0
    %5570 = vmatprep.subr.mxu0 0.0
    %5571 = vmatpush1.msra.mxu0 0.0
    %5572 = vmatprep.subr.mxu0 0.0
    %5573 = vmatpush1.msra.mxu0 0.0
    %5574 = vmatprep.subr.mxu0 0.0
    %5575 = vmatpush1.msra.mxu0 0.0
    %5576 = vmatprep.subr.mxu0 0.0
    %5577 = vmatpush1.msra.mxu0 0.0
    %5578 = vmatprep.subr.mxu0 0.0
    %5579 = vmatpush1.msra.mxu0 0.0
    %5580 = vmatprep.subr.mxu0 0.0
    %5581 = vmatpush1.msra.mxu0 0.0
    %5582 = vmatprep.subr.mxu0 0.0
    %5583 = vmatpush1.msra.mxu0 0.0
    %5584 = vmatprep.subr.mxu0 0.0
    %5585 = vmatpush1.msra.mxu0 0.0
    %5586 = vmatprep.subr.mxu0 0.0
    %5587 = vmatpush1.msra.mxu0 0.0
    %5588 = vmatprep.subr.mxu0 0.0
    %5589 = vmatpush1.msra.mxu0 0.0
    %5590 = vmatprep.subr.mxu0 0.0
    %5591 = vmatpush1.msra.mxu0 %v5552
    %5592 = vmatprep.subr.mxu0 0.0
    %5593 = vmatpush1.msra.mxu0 %v5551
    %5594 = vmatprep.subr.mxu0 0.0
    %5595 = vmatpush1.msra.mxu0 %v5550
    %5596 = vmatprep.subr.mxu0 0.0
    %5597 = vmatpush1.msra.mxu0 %v5549
    %5598 = vmatprep.subr.mxu0 0.0
    %5599 = vmatpush1.msra.mxu0 %v5548
    %5600 = vmatprep.subr.mxu0 0.0
    %5601 = vmatpush2.msra.mxu0 0.0
    %5602 = vmatprep.subr.mxu0 0.0
    %5603 = vmatpush2.msra.mxu0 0.0
    %5604 = vmatprep.subr.mxu0 0.0
    %5605 = vmatpush2.msra.mxu0 0.0
    %5606 = vmatprep.subr.mxu0 0.0
    %5607 = vmatpush2.msra.mxu0 0.0
    %5608 = vmatprep.subr.mxu0 0.0
    %5609 = vmatpush2.msra.mxu0 0.0
    %5610 = vmatprep.subr.mxu0 0.0
    %5611 = vmatpush2.msra.mxu0 0.0
    %5612 = vmatprep.subr.mxu0 0.0
    %5613 = vmatpush2.msra.mxu0 0.0
    %5614 = vmatprep.subr.mxu0 0.0
    %5615 = vmatpush2.msra.mxu0 0.0
    %5616 = vmatprep.subr.mxu0 0.0
    %5617 = vmatpush2.msra.mxu0 0.0
    %5618 = vmatprep.subr.mxu0 0.0
    %5619 = vmatpush2.msra.mxu0 0.0
    %5620 = vmatprep.subr.mxu0 0.0
    %5621 = vmatpush2.msra.mxu0 0.0
    %5622 = vmatprep.subr.mxu0 0.0
    %5623 = vmatpush2.msra.mxu0 0.0
    %5624 = vmatprep.subr.mxu0 0.0
    %5625 = vmatpush2.msra.mxu0 0.0
    %5626 = vmatprep.subr.mxu0 0.0
    %5627 = vmatpush2.msra.mxu0 0.0
    %5628 = vmatprep.subr.mxu0 0.0
    %5629 = vmatpush2.msra.mxu0 0.0
    %5630 = vmatprep.subr.mxu0 0.0
    %5631 = vmatpush2.msra.mxu0 0.0
    %5632 = vmatprep.mubr.f32.mxu0 0.0
    %5633 = vmatmul.mubr.f32.gmra.mxu0 %v5554
    %v5634 = vpop.f32.mrf.mxu0
    %v5635 = vadd.f32 0.0, %v5634
    %v5636 = vpop.f32.mrf.mxu0
    %5637 = vmatprep.mubr.f32.mxu0 0.0
    %5638 = vmatmul.mubr.f32.gmra.mxu0 %v5557
    %v5639 = vpop.f32.mrf.mxu0
    %v5640 = vadd.f32 0.0, %v5639
    %v5641 = vpop.f32.mrf.mxu0
    %5642 = vmatprep.mubr.f32.mxu0 0.0
    %5643 = vmatmul.mubr.f32.gmra.mxu0 %v5560
    %v5644 = vpop.f32.mrf.mxu0
    %v5645 = vadd.f32 0.0, %v5644
    %v5646 = vpop.f32.mrf.mxu0
    %5647 = vmatprep.mubr.f32.mxu0 0.0
    %5648 = vmatmul.mubr.f32.gmra.mxu0 %v5563
    %v5649 = vpop.f32.mrf.mxu0
    %v5650 = vadd.f32 0.0, %v5649
    %v5651 = vpop.f32.mrf.mxu0
    %5652 = vmatprep.mubr.f32.mxu0 0.0
    %5653 = vmatmul.mubr.f32.gmra.mxu0 %v5566
    %v5654 = vpop.f32.mrf.mxu0
    %v5655 = vadd.f32 0.0, %v5654
    %v5656 = vpop.f32.mrf.mxu0
    %5657 = vdwg.mxu0
    %v5658 = vadd.f32 %v5360, %v5635
    %v5659 = vadd.f32 %v5365, %v5640
    %v5660 = vadd.f32 %v5370, %v5645
    %v5661 = vadd.f32 %v5375, %v5650
    %v5662 = vadd.f32 %v5380, %v5655
    %v5663 = vmul.f32 %v4589, %v1529
    %v5664 = vmul.f32 %v4594, %v1529
    %v5665 = vmul.f32 %v4599, %v1529
    %v5666 = vmul.f32 %v4604, %v1529
    %v5667 = vmul.f32 %v4609, %v1529
    %v5669 = vsel %vm257, %v5663, 0
    %v5672 = vsel %vm257, %v5664, 0
    %v5675 = vsel %vm257, %v5665, 0
    %v5678 = vsel %vm257, %v5666, 0
    %v5681 = vsel %vm257, %v5667, 0
    %5683 = vmatprep.subr.mxu0 0.0
    %5684 = vmatpush1.xpose.msra.mxu0 0.0
    %5685 = vmatprep.subr.mxu0 0.0
    %5686 = vmatpush1.xpose.msra.mxu0 0.0
    %5687 = vmatprep.subr.mxu0 0.0
    %5688 = vmatpush1.xpose.msra.mxu0 0.0
    %5689 = vmatprep.subr.mxu0 0.0
    %5690 = vmatpush1.xpose.msra.mxu0 0.0
    %5691 = vmatprep.subr.mxu0 0.0
    %5692 = vmatpush1.xpose.msra.mxu0 0.0
    %5693 = vmatprep.subr.mxu0 0.0
    %5694 = vmatpush1.xpose.msra.mxu0 0.0
    %5695 = vmatprep.subr.mxu0 0.0
    %5696 = vmatpush1.xpose.msra.mxu0 0.0
    %5697 = vmatprep.subr.mxu0 0.0
    %5698 = vmatpush1.xpose.msra.mxu0 0.0
    %5699 = vmatprep.subr.mxu0 0.0
    %5700 = vmatpush1.xpose.msra.mxu0 0.0
    %5701 = vmatprep.subr.mxu0 0.0
    %5702 = vmatpush1.xpose.msra.mxu0 0.0
    %5703 = vmatprep.subr.mxu0 0.0
    %5704 = vmatpush1.xpose.msra.mxu0 0.0
    %5705 = vmatprep.subr.mxu0 0.0
    %5706 = vmatpush1.xpose.msra.mxu0 %v4851
    %5707 = vmatprep.subr.mxu0 0.0
    %5708 = vmatpush1.xpose.msra.mxu0 %v4848
    %5709 = vmatprep.subr.mxu0 0.0
    %5710 = vmatpush1.xpose.msra.mxu0 %v4845
    %5711 = vmatprep.subr.mxu0 0.0
    %5712 = vmatpush1.xpose.msra.mxu0 %v4842
    %5713 = vmatprep.subr.mxu0 0.0
    %5714 = vmatpush1.xpose.msra.mxu0 %v4839
    %5715 = vmatprep.subr.mxu0 0.0
    %5716 = vmatpush2.xpose.msra.mxu0 0.0
    %5717 = vmatprep.subr.mxu0 0.0
    %5718 = vmatpush2.xpose.msra.mxu0 0.0
    %5719 = vmatprep.subr.mxu0 0.0
    %5720 = vmatpush2.xpose.msra.mxu0 0.0
    %5721 = vmatprep.subr.mxu0 0.0
    %5722 = vmatpush2.xpose.msra.mxu0 0.0
    %5723 = vmatprep.subr.mxu0 0.0
    %5724 = vmatpush2.xpose.msra.mxu0 0.0
    %5725 = vmatprep.subr.mxu0 0.0
    %5726 = vmatpush2.xpose.msra.mxu0 0.0
    %5727 = vmatprep.subr.mxu0 0.0
    %5728 = vmatpush2.xpose.msra.mxu0 0.0
    %5729 = vmatprep.subr.mxu0 0.0
    %5730 = vmatpush2.xpose.msra.mxu0 0.0
    %5731 = vmatprep.subr.mxu0 0.0
    %5732 = vmatpush2.xpose.msra.mxu0 0.0
    %5733 = vmatprep.subr.mxu0 0.0
    %5734 = vmatpush2.xpose.msra.mxu0 0.0
    %5735 = vmatprep.subr.mxu0 0.0
    %5736 = vmatpush2.xpose.msra.mxu0 0.0
    %5737 = vmatprep.subr.mxu0 0.0
    %5738 = vmatpush2.xpose.msra.mxu0 0.0
    %5739 = vmatprep.subr.mxu0 0.0
    %5740 = vmatpush2.xpose.msra.mxu0 0.0
    %5741 = vmatprep.subr.mxu0 0.0
    %5742 = vmatpush2.xpose.msra.mxu0 0.0
    %5743 = vmatprep.subr.mxu0 0.0
    %5744 = vmatpush2.xpose.msra.mxu0 0.0
    %5745 = vmatprep.subr.mxu0 0.0
    %5746 = vmatpush2.xpose.msra.mxu0 0.0
    %5747 = vmatprep.mubr.f32.mxu0 0.0
    %5748 = vmatmul.mubr.f32.gmra.mxu0 %v5669
    %v5749 = vpop.f32.mrf.mxu0
    %v5750 = vadd.f32 %v246, %v5749
    %v5751 = vpop.f32.mrf.mxu0
    %5752 = vmatprep.mubr.f32.mxu0 0.0
    %5753 = vmatmul.mubr.f32.gmra.mxu0 %v5672
    %v5754 = vpop.f32.mrf.mxu0
    %v5755 = vadd.f32 %v247, %v5754
    %v5756 = vpop.f32.mrf.mxu0
    %5757 = vmatprep.mubr.f32.mxu0 0.0
    %5758 = vmatmul.mubr.f32.gmra.mxu0 %v5675
    %v5759 = vpop.f32.mrf.mxu0
    %v5760 = vadd.f32 %v248, %v5759
    %v5761 = vpop.f32.mrf.mxu0
    %5762 = vmatprep.mubr.f32.mxu0 0.0
    %5763 = vmatmul.mubr.f32.gmra.mxu0 %v5678
    %v5764 = vpop.f32.mrf.mxu0
    %v5765 = vadd.f32 %v249, %v5764
    %v5766 = vpop.f32.mrf.mxu0
    %5767 = vmatprep.mubr.f32.mxu0 0.0
    %5768 = vmatmul.mubr.f32.gmra.mxu0 %v5681
    %v5769 = vpop.f32.mrf.mxu0
    %v5770 = vadd.f32 %v250, %v5769
    %v5771 = vpop.f32.mrf.mxu0
    %5772 = vdwg.mxu0
    %v5773 = vsel %vm794, %v5750, -inf
    %5774 = vmax.xlane.f32.xlu0 %v5773
    %v5775 = vpop.xlane.xlu0 %5774
    %v5776 = vsel %vm794, %v5755, -inf
    %5777 = vmax.xlane.f32.xlu0 %v5776
    %v5778 = vpop.xlane.xlu0 %5777
    %v5779 = vsel %vm794, %v5760, -inf
    %5780 = vmax.xlane.f32.xlu0 %v5779
    %v5781 = vpop.xlane.xlu0 %5780
    %v5782 = vsel %vm794, %v5765, -inf
    %5783 = vmax.xlane.f32.xlu0 %v5782
    %v5784 = vpop.xlane.xlu0 %5783
    %v5785 = vsel %vm794, %v5770, -inf
    %5786 = vmax.xlane.f32.xlu0 %v5785
    %v5787 = vpop.xlane.xlu0 %5786
    %v5788 = vsub.f32 %v5750, %v5775
    %v5789 = vsub.f32 %v5755, %v5778
    %v5790 = vsub.f32 %v5760, %v5781
    %v5791 = vsub.f32 %v5765, %v5784
    %v5792 = vsub.f32 %v5770, %v5787
    %v5793 = vmul.f32 %v5788, 1.442695
    %v5794 = vpow.pop %v5793
    %v5795 = vmul.f32 %v5789, 1.442695
    %v5796 = vpow.pop %v5795
    %v5797 = vmul.f32 %v5790, 1.442695
    %v5798 = vpow.pop %v5797
    %v5799 = vmul.f32 %v5791, 1.442695
    %v5800 = vpow.pop %v5799
    %v5801 = vmul.f32 %v5792, 1.442695
    %v5802 = vpow.pop %v5801
    %v5803 = vsel %vm794, %v5794, 0.0
    %5804 = vadd.xlane.f32.xlu0 %v5803
    %v5805 = vpop.xlane.xlu0 %5804
    %v5806 = vsel %vm794, %v5796, 0.0
    %5807 = vadd.xlane.f32.xlu0 %v5806
    %v5808 = vpop.xlane.xlu0 %5807
    %v5809 = vsel %vm794, %v5798, 0.0
    %5810 = vadd.xlane.f32.xlu0 %v5809
    %v5811 = vpop.xlane.xlu0 %5810
    %v5812 = vsel %vm794, %v5800, 0.0
    %5813 = vadd.xlane.f32.xlu0 %v5812
    %v5814 = vpop.xlane.xlu0 %5813
    %v5815 = vsel %vm794, %v5802, 0.0
    %5816 = vadd.xlane.f32.xlu0 %v5815
    %v5817 = vpop.xlane.xlu0 %5816
    %v5818 = vrcp.pop %v5805
    %v5819 = vrcp.pop %v5808
    %v5820 = vrcp.pop %v5811
    %v5821 = vrcp.pop %v5814
    %v5822 = vrcp.pop %v5817
    %v5823 = vmul.f32 %v5794, %v5818
    %v5824 = vmul.f32 %v5796, %v5819
    %v5825 = vmul.f32 %v5798, %v5820
    %v5826 = vmul.f32 %v5800, %v5821
    %v5827 = vmul.f32 %v5802, %v5822
    %v5828 = vmul.f32 %v4795, %v1529
    %v5829 = vmul.f32 %v4800, %v1529
    %v5830 = vmul.f32 %v4805, %v1529
    %v5831 = vmul.f32 %v4810, %v1529
    %v5832 = vmul.f32 %v4815, %v1529
    %v5834 = vsel %vm794, %v5823, 0
    %v5837 = vsel %vm794, %v5824, 0
    %v5840 = vsel %vm794, %v5825, 0
    %v5843 = vsel %vm794, %v5826, 0
    %v5846 = vsel %vm794, %v5827, 0
    %5848 = vmatprep.subr.mxu0 0.0
    %5849 = vmatpush1.msra.mxu0 0.0
    %5850 = vmatprep.subr.mxu0 0.0
    %5851 = vmatpush1.msra.mxu0 0.0
    %5852 = vmatprep.subr.mxu0 0.0
    %5853 = vmatpush1.msra.mxu0 0.0
    %5854 = vmatprep.subr.mxu0 0.0
    %5855 = vmatpush1.msra.mxu0 0.0
    %5856 = vmatprep.subr.mxu0 0.0
    %5857 = vmatpush1.msra.mxu0 0.0
    %5858 = vmatprep.subr.mxu0 0.0
    %5859 = vmatpush1.msra.mxu0 0.0
    %5860 = vmatprep.subr.mxu0 0.0
    %5861 = vmatpush1.msra.mxu0 0.0
    %5862 = vmatprep.subr.mxu0 0.0
    %5863 = vmatpush1.msra.mxu0 0.0
    %5864 = vmatprep.subr.mxu0 0.0
    %5865 = vmatpush1.msra.mxu0 0.0
    %5866 = vmatprep.subr.mxu0 0.0
    %5867 = vmatpush1.msra.mxu0 0.0
    %5868 = vmatprep.subr.mxu0 0.0
    %5869 = vmatpush1.msra.mxu0 0.0
    %5870 = vmatprep.subr.mxu0 0.0
    %5871 = vmatpush1.msra.mxu0 %v5832
    %5872 = vmatprep.subr.mxu0 0.0
    %5873 = vmatpush1.msra.mxu0 %v5831
    %5874 = vmatprep.subr.mxu0 0.0
    %5875 = vmatpush1.msra.mxu0 %v5830
    %5876 = vmatprep.subr.mxu0 0.0
    %5877 = vmatpush1.msra.mxu0 %v5829
    %5878 = vmatprep.subr.mxu0 0.0
    %5879 = vmatpush1.msra.mxu0 %v5828
    %5880 = vmatprep.subr.mxu0 0.0
    %5881 = vmatpush2.msra.mxu0 0.0
    %5882 = vmatprep.subr.mxu0 0.0
    %5883 = vmatpush2.msra.mxu0 0.0
    %5884 = vmatprep.subr.mxu0 0.0
    %5885 = vmatpush2.msra.mxu0 0.0
    %5886 = vmatprep.subr.mxu0 0.0
    %5887 = vmatpush2.msra.mxu0 0.0
    %5888 = vmatprep.subr.mxu0 0.0
    %5889 = vmatpush2.msra.mxu0 0.0
    %5890 = vmatprep.subr.mxu0 0.0
    %5891 = vmatpush2.msra.mxu0 0.0
    %5892 = vmatprep.subr.mxu0 0.0
    %5893 = vmatpush2.msra.mxu0 0.0
    %5894 = vmatprep.subr.mxu0 0.0
    %5895 = vmatpush2.msra.mxu0 0.0
    %5896 = vmatprep.subr.mxu0 0.0
    %5897 = vmatpush2.msra.mxu0 0.0
    %5898 = vmatprep.subr.mxu0 0.0
    %5899 = vmatpush2.msra.mxu0 0.0
    %5900 = vmatprep.subr.mxu0 0.0
    %5901 = vmatpush2.msra.mxu0 0.0
    %5902 = vmatprep.subr.mxu0 0.0
    %5903 = vmatpush2.msra.mxu0 0.0
    %5904 = vmatprep.subr.mxu0 0.0
    %5905 = vmatpush2.msra.mxu0 0.0
    %5906 = vmatprep.subr.mxu0 0.0
    %5907 = vmatpush2.msra.mxu0 0.0
    %5908 = vmatprep.subr.mxu0 0.0
    %5909 = vmatpush2.msra.mxu0 0.0
    %5910 = vmatprep.subr.mxu0 0.0
    %5911 = vmatpush2.msra.mxu0 0.0
    %5912 = vmatprep.mubr.f32.mxu0 0.0
    %5913 = vmatmul.mubr.f32.gmra.mxu0 %v5834
    %v5914 = vpop.f32.mrf.mxu0
    %v5915 = vadd.f32 0.0, %v5914
    %v5916 = vpop.f32.mrf.mxu0
    %5917 = vmatprep.mubr.f32.mxu0 0.0
    %5918 = vmatmul.mubr.f32.gmra.mxu0 %v5837
    %v5919 = vpop.f32.mrf.mxu0
    %v5920 = vadd.f32 0.0, %v5919
    %v5921 = vpop.f32.mrf.mxu0
    %5922 = vmatprep.mubr.f32.mxu0 0.0
    %5923 = vmatmul.mubr.f32.gmra.mxu0 %v5840
    %v5924 = vpop.f32.mrf.mxu0
    %v5925 = vadd.f32 0.0, %v5924
    %v5926 = vpop.f32.mrf.mxu0
    %5927 = vmatprep.mubr.f32.mxu0 0.0
    %5928 = vmatmul.mubr.f32.gmra.mxu0 %v5843
    %v5929 = vpop.f32.mrf.mxu0
    %v5930 = vadd.f32 0.0, %v5929
    %v5931 = vpop.f32.mrf.mxu0
    %5932 = vmatprep.mubr.f32.mxu0 0.0
    %5933 = vmatmul.mubr.f32.gmra.mxu0 %v5846
    %v5934 = vpop.f32.mrf.mxu0
    %v5935 = vadd.f32 0.0, %v5934
    %v5936 = vpop.f32.mrf.mxu0
    %5937 = vdwg.mxu0
    %v5938 = vadd.f32 %v5658, %v5915
    %v5939 = vadd.f32 %v5659, %v5920
    %v5940 = vadd.f32 %v5660, %v5925
    %v5941 = vadd.f32 %v5661, %v5930
    %v5942 = vadd.f32 %v5662, %v5935
    %s5943 = scalar_lea.vmem %s25, 64
    %v5944 = vld [vmem:[%s5943] sm:$0xff]
    %v5945 = vld [vmem:[%s5943 + $0x8] sm:$0xff]
    %v5946 = vld [vmem:[%s5943 + $0x10] sm:$0xff]
    %v5947 = vld [vmem:[%s5943 + $0x18] sm:$0xff]
    %v5949 = vsel %vm257, %v5938, 0
    %v5952 = vsel %vm257, %v5939, 0
    %v5955 = vsel %vm257, %v5940, 0
    %v5958 = vsel %vm257, %v5941, 0
    %v5961 = vsel %vm257, %v5942, 0
    %5963 = vmatprep.subr.mxu0 0.0
    %5964 = vmatpush1.msra.mxu0 0.0
    %5965 = vmatprep.subr.mxu0 0.0
    %5966 = vmatpush1.msra.mxu0 0.0
    %5967 = vmatprep.subr.mxu0 0.0
    %5968 = vmatpush1.msra.mxu0 0.0
    %5969 = vmatprep.subr.mxu0 0.0
    %5970 = vmatpush1.msra.mxu0 0.0
    %5971 = vmatprep.subr.mxu0 0.0
    %5972 = vmatpush1.msra.mxu0 0.0
    %5973 = vmatprep.subr.mxu0 0.0
    %5974 = vmatpush1.msra.mxu0 0.0
    %5975 = vmatprep.subr.mxu0 0.0
    %5976 = vmatpush1.msra.mxu0 0.0
    %5977 = vmatprep.subr.mxu0 0.0
    %5978 = vmatpush1.msra.mxu0 0.0
    %5979 = vmatprep.subr.mxu0 0.0
    %5980 = vmatpush1.msra.mxu0 0.0
    %5981 = vmatprep.subr.mxu0 0.0
    %5982 = vmatpush1.msra.mxu0 0.0
    %5983 = vmatprep.subr.mxu0 0.0
    %5984 = vmatpush1.msra.mxu0 0.0
    %5985 = vmatprep.subr.mxu0 0.0
    %5986 = vmatpush1.msra.mxu0 0.0
    %5987 = vmatprep.subr.mxu0 0.0
    %5988 = vmatpush1.msra.mxu0 %v5947
    %5989 = vmatprep.subr.mxu0 0.0
    %5990 = vmatpush1.msra.mxu0 %v5946
    %5991 = vmatprep.subr.mxu0 0.0
    %5992 = vmatpush1.msra.mxu0 %v5945
    %5993 = vmatprep.subr.mxu0 0.0
    %5994 = vmatpush1.msra.mxu0 %v5944
    %5995 = vmatprep.subr.mxu0 0.0
    %5996 = vmatpush2.msra.mxu0 0.0
    %5997 = vmatprep.subr.mxu0 0.0
    %5998 = vmatpush2.msra.mxu0 0.0
    %5999 = vmatprep.subr.mxu0 0.0
    %6000 = vmatpush2.msra.mxu0 0.0
    %6001 = vmatprep.subr.mxu0 0.0
    %6002 = vmatpush2.msra.mxu0 0.0
    %6003 = vmatprep.subr.mxu0 0.0
    %6004 = vmatpush2.msra.mxu0 0.0
    %6005 = vmatprep.subr.mxu0 0.0
    %6006 = vmatpush2.msra.mxu0 0.0
    %6007 = vmatprep.subr.mxu0 0.0
    %6008 = vmatpush2.msra.mxu0 0.0
    %6009 = vmatprep.subr.mxu0 0.0
    %6010 = vmatpush2.msra.mxu0 0.0
    %6011 = vmatprep.subr.mxu0 0.0
    %6012 = vmatpush2.msra.mxu0 0.0
    %6013 = vmatprep.subr.mxu0 0.0
    %6014 = vmatpush2.msra.mxu0 0.0
    %6015 = vmatprep.subr.mxu0 0.0
    %6016 = vmatpush2.msra.mxu0 0.0
    %6017 = vmatprep.subr.mxu0 0.0
    %6018 = vmatpush2.msra.mxu0 0.0
    %6019 = vmatprep.subr.mxu0 0.0
    %6020 = vmatpush2.msra.mxu0 0.0
    %6021 = vmatprep.subr.mxu0 0.0
    %6022 = vmatpush2.msra.mxu0 0.0
    %6023 = vmatprep.subr.mxu0 0.0
    %6024 = vmatpush2.msra.mxu0 0.0
    %6025 = vmatprep.subr.mxu0 0.0
    %6026 = vmatpush2.msra.mxu0 0.0
    %6027 = vmatprep.mubr.f32.mxu0 0.0
    %6028 = vmatmul.mubr.f32.gmra.mxu0 %v5949
    %v6029 = vpop.f32.mrf.mxu0
    %v6030 = vadd.f32 0.0, %v6029
    %v6031 = vpop.f32.mrf.mxu0
    %6032 = vmatprep.mubr.f32.mxu0 0.0
    %6033 = vmatmul.mubr.f32.gmra.mxu0 %v5952
    %v6034 = vpop.f32.mrf.mxu0
    %v6035 = vadd.f32 0.0, %v6034
    %v6036 = vpop.f32.mrf.mxu0
    %6037 = vmatprep.mubr.f32.mxu0 0.0
    %6038 = vmatmul.mubr.f32.gmra.mxu0 %v5955
    %v6039 = vpop.f32.mrf.mxu0
    %v6040 = vadd.f32 0.0, %v6039
    %v6041 = vpop.f32.mrf.mxu0
    %6042 = vmatprep.mubr.f32.mxu0 0.0
    %6043 = vmatmul.mubr.f32.gmra.mxu0 %v5958
    %v6044 = vpop.f32.mrf.mxu0
    %v6045 = vadd.f32 0.0, %v6044
    %v6046 = vpop.f32.mrf.mxu0
    %6047 = vmatprep.mubr.f32.mxu0 0.0
    %6048 = vmatmul.mubr.f32.gmra.mxu0 %v5961
    %v6049 = vpop.f32.mrf.mxu0
    %v6050 = vadd.f32 0.0, %v6049
    %v6051 = vpop.f32.mrf.mxu0
    %6052 = vdwg.mxu0
    %v6053 = vadd.f32 %v4388, %v6030
    %v6054 = vadd.f32 %v4389, %v6035
    %v6055 = vadd.f32 %v4390, %v6040
    %v6056 = vadd.f32 %v4391, %v6045
    %v6057 = vadd.f32 %v4392, %v6050
    %s6058 = scalar_lea.vmem %s27, 2
    %v6059 = vld [vmem:[%s6058] sm:$0x1]
    %v6061 = vlaneseq
    %v6062 = vshrl.u32 %v6061, 7
    %v6063 = vsub.s32 0, %v6062
    %v6064 = vrot.slane %v6059, %v6063
    %v6066 = vadd.f32 %v6053, %v6064
    %v6067 = vadd.f32 %v6054, %v6064
    %v6068 = vadd.f32 %v6055, %v6064
    %v6069 = vadd.f32 %v6056, %v6064
    %v6070 = vadd.f32 %v6057, %v6064
    %s6071 = scalar_lea.vmem %s29, 2
    %v6072 = vld [vmem:[%s6071] sm:$0x1]
    %s6073 = scalar_lea.vmem %s31, 2
    %v6074 = vld [vmem:[%s6073] sm:$0x1]
    %v6075 = vsel %vm257, %v6066, 0.0
    %6076 = vadd.xlane.f32.xlu0 %v6075
    %v6077 = vpop.xlane.xlu0 %6076
    %v6078 = vsel %vm257, %v6067, 0.0
    %6079 = vadd.xlane.f32.xlu0 %v6078
    %v6080 = vpop.xlane.xlu0 %6079
    %v6081 = vsel %vm257, %v6068, 0.0
    %6082 = vadd.xlane.f32.xlu0 %v6081
    %v6083 = vpop.xlane.xlu0 %6082
    %v6084 = vsel %vm257, %v6069, 0.0
    %6085 = vadd.xlane.f32.xlu0 %v6084
    %v6086 = vpop.xlane.xlu0 %6085
    %v6087 = vsel %vm257, %v6070, 0.0
    %6088 = vadd.xlane.f32.xlu0 %v6087
    %v6089 = vpop.xlane.xlu0 %6088
    %v6090 = vmul.f32 %v6077, %v273
    %v6091 = vmul.f32 %v6080, %v273
    %v6092 = vmul.f32 %v6083, %v273
    %v6093 = vmul.f32 %v6086, %v273
    %v6094 = vmul.f32 %v6089, %v273
    %v6095 = vsub.f32 %v6066, %v6090
    %v6096 = vsub.f32 %v6067, %v6091
    %v6097 = vsub.f32 %v6068, %v6092
    %v6098 = vsub.f32 %v6069, %v6093
    %v6099 = vsub.f32 %v6070, %v6094
    %v6100 = vmul.f32 %v6095, %v6095
    %v6101 = vmul.f32 %v6096, %v6096
    %v6102 = vmul.f32 %v6097, %v6097
    %v6103 = vmul.f32 %v6098, %v6098
    %v6104 = vmul.f32 %v6099, %v6099
    %v6105 = vsel %vm257, %v6100, 0.0
    %6106 = vadd.xlane.f32.xlu0 %v6105
    %v6107 = vpop.xlane.xlu0 %6106
    %v6108 = vsel %vm257, %v6101, 0.0
    %6109 = vadd.xlane.f32.xlu0 %v6108
    %v6110 = vpop.xlane.xlu0 %6109
    %v6111 = vsel %vm257, %v6102, 0.0
    %6112 = vadd.xlane.f32.xlu0 %v6111
    %v6113 = vpop.xlane.xlu0 %6112
    %v6114 = vsel %vm257, %v6103, 0.0
    %6115 = vadd.xlane.f32.xlu0 %v6114
    %v6116 = vpop.xlane.xlu0 %6115
    %v6117 = vsel %vm257, %v6104, 0.0
    %6118 = vadd.xlane.f32.xlu0 %v6117
    %v6119 = vpop.xlane.xlu0 %6118
    %v6120 = vmul.f32 %v6107, %v273
    %v6121 = vmul.f32 %v6110, %v273
    %v6122 = vmul.f32 %v6113, %v273
    %v6123 = vmul.f32 %v6116, %v273
    %v6124 = vmul.f32 %v6119, %v273
    %v6125 = vadd.f32 %v6120, 1e-06
    %v6126 = vadd.f32 %v6121, 1e-06
    %v6127 = vadd.f32 %v6122, 1e-06
    %v6128 = vadd.f32 %v6123, 1e-06
    %v6129 = vadd.f32 %v6124, 1e-06
    %v6130 = vrsqrt.pop %v6125
    %v6131 = vrsqrt.pop %v6126
    %v6132 = vrsqrt.pop %v6127
    %v6133 = vrsqrt.pop %v6128
    %v6134 = vrsqrt.pop %v6129
    %v6135 = vmul.f32 %v6095, %v6130
    %v6136 = vmul.f32 %v6096, %v6131
    %v6137 = vmul.f32 %v6097, %v6132
    %v6138 = vmul.f32 %v6098, %v6133
    %v6139 = vmul.f32 %v6099, %v6134
    %v6141 = vlaneseq
    %v6142 = vshrl.u32 %v6141, 7
    %v6143 = vsub.s32 0, %v6142
    %v6144 = vrot.slane %v6072, %v6143
    %v6146 = vmul.f32 %v6135, %v6144
    %v6147 = vmul.f32 %v6136, %v6144
    %v6148 = vmul.f32 %v6137, %v6144
    %v6149 = vmul.f32 %v6138, %v6144
    %v6150 = vmul.f32 %v6139, %v6144
    %v6152 = vlaneseq
    %v6153 = vshrl.u32 %v6152, 7
    %v6154 = vsub.s32 0, %v6153
    %v6155 = vrot.slane %v6074, %v6154
    %v6157 = vadd.f32 %v6146, %v6155
    %v6158 = vadd.f32 %v6147, %v6155
    %v6159 = vadd.f32 %v6148, %v6155
    %v6160 = vadd.f32 %v6149, %v6155
    %v6161 = vadd.f32 %v6150, %v6155
    %s6162 = scalar_lea.vmem %s33, 64
    %v6163 = vld [vmem:[%s6162] sm:$0xff]
    %v6164 = vld [vmem:[%s6162 + $0x8] sm:$0xff]
    %v6165 = vld [vmem:[%s6162 + $0x10] sm:$0xff]
    %v6166 = vld [vmem:[%s6162 + $0x18] sm:$0xff]
    %s6167 = scalar_lea.vmem %s35, 2
    %v6168 = vld [vmem:[%s6167] sm:$0x1]
    %v6170 = vlaneseq
    %v6171 = vshrl.u32 %v6170, 7
    %v6172 = vsub.s32 0, %v6171
    %v6173 = vrot.slane %v6168, %v6172
    %v6176 = vsel %vm257, %v6157, 0
    %v6179 = vsel %vm257, %v6158, 0
    %v6182 = vsel %vm257, %v6159, 0
    %v6185 = vsel %vm257, %v6160, 0
    %v6188 = vsel %vm257, %v6161, 0
    %6190 = vmatprep.subr.mxu0 0.0
    %6191 = vmatpush1.msra.mxu0 0.0
    %6192 = vmatprep.subr.mxu0 0.0
    %6193 = vmatpush1.msra.mxu0 0.0
    %6194 = vmatprep.subr.mxu0 0.0
    %6195 = vmatpush1.msra.mxu0 0.0
    %6196 = vmatprep.subr.mxu0 0.0
    %6197 = vmatpush1.msra.mxu0 0.0
    %6198 = vmatprep.subr.mxu0 0.0
    %6199 = vmatpush1.msra.mxu0 0.0
    %6200 = vmatprep.subr.mxu0 0.0
    %6201 = vmatpush1.msra.mxu0 0.0
    %6202 = vmatprep.subr.mxu0 0.0
    %6203 = vmatpush1.msra.mxu0 0.0
    %6204 = vmatprep.subr.mxu0 0.0
    %6205 = vmatpush1.msra.mxu0 0.0
    %6206 = vmatprep.subr.mxu0 0.0
    %6207 = vmatpush1.msra.mxu0 0.0
    %6208 = vmatprep.subr.mxu0 0.0
    %6209 = vmatpush1.msra.mxu0 0.0
    %6210 = vmatprep.subr.mxu0 0.0
    %6211 = vmatpush1.msra.mxu0 0.0
    %6212 = vmatprep.subr.mxu0 0.0
    %6213 = vmatpush1.msra.mxu0 0.0
    %6214 = vmatprep.subr.mxu0 0.0
    %6215 = vmatpush1.msra.mxu0 %v6166
    %6216 = vmatprep.subr.mxu0 0.0
    %6217 = vmatpush1.msra.mxu0 %v6165
    %6218 = vmatprep.subr.mxu0 0.0
    %6219 = vmatpush1.msra.mxu0 %v6164
    %6220 = vmatprep.subr.mxu0 0.0
    %6221 = vmatpush1.msra.mxu0 %v6163
    %6222 = vmatprep.subr.mxu0 0.0
    %6223 = vmatpush2.msra.mxu0 0.0
    %6224 = vmatprep.subr.mxu0 0.0
    %6225 = vmatpush2.msra.mxu0 0.0
    %6226 = vmatprep.subr.mxu0 0.0
    %6227 = vmatpush2.msra.mxu0 0.0
    %6228 = vmatprep.subr.mxu0 0.0
    %6229 = vmatpush2.msra.mxu0 0.0
    %6230 = vmatprep.subr.mxu0 0.0
    %6231 = vmatpush2.msra.mxu0 0.0
    %6232 = vmatprep.subr.mxu0 0.0
    %6233 = vmatpush2.msra.mxu0 0.0
    %6234 = vmatprep.subr.mxu0 0.0
    %6235 = vmatpush2.msra.mxu0 0.0
    %6236 = vmatprep.subr.mxu0 0.0
    %6237 = vmatpush2.msra.mxu0 0.0
    %6238 = vmatprep.subr.mxu0 0.0
    %6239 = vmatpush2.msra.mxu0 0.0
    %6240 = vmatprep.subr.mxu0 0.0
    %6241 = vmatpush2.msra.mxu0 0.0
    %6242 = vmatprep.subr.mxu0 0.0
    %6243 = vmatpush2.msra.mxu0 0.0
    %6244 = vmatprep.subr.mxu0 0.0
    %6245 = vmatpush2.msra.mxu0 0.0
    %6246 = vmatprep.subr.mxu0 0.0
    %6247 = vmatpush2.msra.mxu0 0.0
    %6248 = vmatprep.subr.mxu0 0.0
    %6249 = vmatpush2.msra.mxu0 0.0
    %6250 = vmatprep.subr.mxu0 0.0
    %6251 = vmatpush2.msra.mxu0 0.0
    %6252 = vmatprep.subr.mxu0 0.0
    %6253 = vmatpush2.msra.mxu0 0.0
    %6254 = vmatprep.mubr.f32.mxu0 0.0
    %6255 = vmatmul.mubr.f32.gmra.mxu0 %v6176
    %v6256 = vpop.f32.mrf.mxu0
    %v6257 = vadd.f32 %v6173, %v6256
    %v6258 = vpop.f32.mrf.mxu0
    %6259 = vmatprep.mubr.f32.mxu0 0.0
    %6260 = vmatmul.mubr.f32.gmra.mxu0 %v6179
    %v6261 = vpop.f32.mrf.mxu0
    %v6262 = vadd.f32 %v6173, %v6261
    %v6263 = vpop.f32.mrf.mxu0
    %6264 = vmatprep.mubr.f32.mxu0 0.0
    %6265 = vmatmul.mubr.f32.gmra.mxu0 %v6182
    %v6266 = vpop.f32.mrf.mxu0
    %v6267 = vadd.f32 %v6173, %v6266
    %v6268 = vpop.f32.mrf.mxu0
    %6269 = vmatprep.mubr.f32.mxu0 0.0
    %6270 = vmatmul.mubr.f32.gmra.mxu0 %v6185
    %v6271 = vpop.f32.mrf.mxu0
    %v6272 = vadd.f32 %v6173, %v6271
    %v6273 = vpop.f32.mrf.mxu0
    %6274 = vmatprep.mubr.f32.mxu0 0.0
    %6275 = vmatmul.mubr.f32.gmra.mxu0 %v6188
    %v6276 = vpop.f32.mrf.mxu0
    %v6277 = vadd.f32 %v6173, %v6276
    %v6278 = vpop.f32.mrf.mxu0
    %6279 = vdwg.mxu0
    %v6280 = vmul.f32 %v6257, %v6257
    %v6281 = vmul.f32 %v6262, %v6262
    %v6282 = vmul.f32 %v6267, %v6267
    %v6283 = vmul.f32 %v6272, %v6272
    %v6284 = vmul.f32 %v6277, %v6277
    %v6285 = vmul.f32 %v6257, %v6280
    %v6286 = vmul.f32 %v6262, %v6281
    %v6287 = vmul.f32 %v6267, %v6282
    %v6288 = vmul.f32 %v6272, %v6283
    %v6289 = vmul.f32 %v6277, %v6284
    %v6290 = vmul.f32 %v6285, 0.044715
    %v6291 = vmul.f32 %v6286, 0.044715
    %v6292 = vmul.f32 %v6287, 0.044715
    %v6293 = vmul.f32 %v6288, 0.044715
    %v6294 = vmul.f32 %v6289, 0.044715
    %v6295 = vadd.f32 %v6257, %v6290
    %v6296 = vadd.f32 %v6262, %v6291
    %v6297 = vadd.f32 %v6267, %v6292
    %v6298 = vadd.f32 %v6272, %v6293
    %v6299 = vadd.f32 %v6277, %v6294
    %v6300 = vmul.f32 %v6295, 0.7978846
    %v6301 = vmul.f32 %v6296, 0.7978846
    %v6302 = vmul.f32 %v6297, 0.7978846
    %v6303 = vmul.f32 %v6298, 0.7978846
    %v6304 = vmul.f32 %v6299, 0.7978846
    %v6305 = vtanh.pop %v6300
    %v6306 = vtanh.pop %v6301
    %v6307 = vtanh.pop %v6302
    %v6308 = vtanh.pop %v6303
    %v6309 = vtanh.pop %v6304
    %v6310 = vadd.f32 %v6305, 1.0
    %v6311 = vadd.f32 %v6306, 1.0
    %v6312 = vadd.f32 %v6307, 1.0
    %v6313 = vadd.f32 %v6308, 1.0
    %v6314 = vadd.f32 %v6309, 1.0
    %v6315 = vmul.f32 %v6310, 0.5
    %v6316 = vmul.f32 %v6311, 0.5
    %v6317 = vmul.f32 %v6312, 0.5
    %v6318 = vmul.f32 %v6313, 0.5
    %v6319 = vmul.f32 %v6314, 0.5
    %v6320 = vmul.f32 %v6257, %v6315
    %v6321 = vmul.f32 %v6262, %v6316
    %v6322 = vmul.f32 %v6267, %v6317
    %v6323 = vmul.f32 %v6272, %v6318
    %v6324 = vmul.f32 %v6277, %v6319
    %s6325 = scalar_lea.vmem %s37, 128
    %v6326 = vld [vmem:[%s6325] sm:$0xff]
    %v6327 = vld [vmem:[%s6325 + $0x8] sm:$0xff]
    %v6328 = vld [vmem:[%s6325 + $0x10] sm:$0xff]
    %v6329 = vld [vmem:[%s6325 + $0x18] sm:$0xff]
    %v6330 = vld [vmem:[%s6325 + $0x20] sm:$0xff]
    %v6331 = vld [vmem:[%s6325 + $0x28] sm:$0xff]
    %v6332 = vld [vmem:[%s6325 + $0x30] sm:$0xff]
    %v6333 = vld [vmem:[%s6325 + $0x38] sm:$0xff]
    %v6335 = vsel %vm2194, %v6320, 0
    %v6338 = vsel %vm2194, %v6321, 0
    %v6341 = vsel %vm2194, %v6322, 0
    %v6344 = vsel %vm2194, %v6323, 0
    %v6347 = vsel %vm2194, %v6324, 0
    %6349 = vmatprep.subr.mxu0 0.0
    %6350 = vmatpush1.msra.mxu0 0.0
    %6351 = vmatprep.subr.mxu0 0.0
    %6352 = vmatpush1.msra.mxu0 0.0
    %6353 = vmatprep.subr.mxu0 0.0
    %6354 = vmatpush1.msra.mxu0 0.0
    %6355 = vmatprep.subr.mxu0 0.0
    %6356 = vmatpush1.msra.mxu0 0.0
    %6357 = vmatprep.subr.mxu0 0.0
    %6358 = vmatpush1.msra.mxu0 0.0
    %6359 = vmatprep.subr.mxu0 0.0
    %6360 = vmatpush1.msra.mxu0 0.0
    %6361 = vmatprep.subr.mxu0 0.0
    %6362 = vmatpush1.msra.mxu0 0.0
    %6363 = vmatprep.subr.mxu0 0.0
    %6364 = vmatpush1.msra.mxu0 0.0
    %6365 = vmatprep.subr.mxu0 0.0
    %6366 = vmatpush1.msra.mxu0 %v6333
    %6367 = vmatprep.subr.mxu0 0.0
    %6368 = vmatpush1.msra.mxu0 %v6332
    %6369 = vmatprep.subr.mxu0 0.0
    %6370 = vmatpush1.msra.mxu0 %v6331
    %6371 = vmatprep.subr.mxu0 0.0
    %6372 = vmatpush1.msra.mxu0 %v6330
    %6373 = vmatprep.subr.mxu0 0.0
    %6374 = vmatpush1.msra.mxu0 %v6329
    %6375 = vmatprep.subr.mxu0 0.0
    %6376 = vmatpush1.msra.mxu0 %v6328
    %6377 = vmatprep.subr.mxu0 0.0
    %6378 = vmatpush1.msra.mxu0 %v6327
    %6379 = vmatprep.subr.mxu0 0.0
    %6380 = vmatpush1.msra.mxu0 %v6326
    %6381 = vmatprep.subr.mxu0 0.0
    %6382 = vmatpush2.msra.mxu0 0.0
    %6383 = vmatprep.subr.mxu0 0.0
    %6384 = vmatpush2.msra.mxu0 0.0
    %6385 = vmatprep.subr.mxu0 0.0
    %6386 = vmatpush2.msra.mxu0 0.0
    %6387 = vmatprep.subr.mxu0 0.0
    %6388 = vmatpush2.msra.mxu0 0.0
    %6389 = vmatprep.subr.mxu0 0.0
    %6390 = vmatpush2.msra.mxu0 0.0
    %6391 = vmatprep.subr.mxu0 0.0
    %6392 = vmatpush2.msra.mxu0 0.0
    %6393 = vmatprep.subr.mxu0 0.0
    %6394 = vmatpush2.msra.mxu0 0.0
    %6395 = vmatprep.subr.mxu0 0.0
    %6396 = vmatpush2.msra.mxu0 0.0
    %6397 = vmatprep.subr.mxu0 0.0
    %6398 = vmatpush2.msra.mxu0 0.0
    %6399 = vmatprep.subr.mxu0 0.0
    %6400 = vmatpush2.msra.mxu0 0.0
    %6401 = vmatprep.subr.mxu0 0.0
    %6402 = vmatpush2.msra.mxu0 0.0
    %6403 = vmatprep.subr.mxu0 0.0
    %6404 = vmatpush2.msra.mxu0 0.0
    %6405 = vmatprep.subr.mxu0 0.0
    %6406 = vmatpush2.msra.mxu0 0.0
    %6407 = vmatprep.subr.mxu0 0.0
    %6408 = vmatpush2.msra.mxu0 0.0
    %6409 = vmatprep.subr.mxu0 0.0
    %6410 = vmatpush2.msra.mxu0 0.0
    %6411 = vmatprep.subr.mxu0 0.0
    %6412 = vmatpush2.msra.mxu0 0.0
    %6413 = vmatprep.mubr.f32.mxu0 0.0
    %6414 = vmatmul.mubr.f32.gmra.mxu0 %v6335
    %v6415 = vpop.f32.mrf.mxu0
    %v6416 = vadd.f32 0.0, %v6415
    %v6417 = vpop.f32.mrf.mxu0
    %6418 = vmatprep.mubr.f32.mxu0 0.0
    %6419 = vmatmul.mubr.f32.gmra.mxu0 %v6338
    %v6420 = vpop.f32.mrf.mxu0
    %v6421 = vadd.f32 0.0, %v6420
    %v6422 = vpop.f32.mrf.mxu0
    %6423 = vmatprep.mubr.f32.mxu0 0.0
    %6424 = vmatmul.mubr.f32.gmra.mxu0 %v6341
    %v6425 = vpop.f32.mrf.mxu0
    %v6426 = vadd.f32 0.0, %v6425
    %v6427 = vpop.f32.mrf.mxu0
    %6428 = vmatprep.mubr.f32.mxu0 0.0
    %6429 = vmatmul.mubr.f32.gmra.mxu0 %v6344
    %v6430 = vpop.f32.mrf.mxu0
    %v6431 = vadd.f32 0.0, %v6430
    %v6432 = vpop.f32.mrf.mxu0
    %6433 = vmatprep.mubr.f32.mxu0 0.0
    %6434 = vmatmul.mubr.f32.gmra.mxu0 %v6347
    %v6435 = vpop.f32.mrf.mxu0
    %v6436 = vadd.f32 0.0, %v6435
    %v6437 = vpop.f32.mrf.mxu0
    %6438 = vdwg.mxu0
    %v6439 = vadd.f32 %v6066, %v6416
    %v6440 = vadd.f32 %v6067, %v6421
    %v6441 = vadd.f32 %v6068, %v6426
    %v6442 = vadd.f32 %v6069, %v6431
    %v6443 = vadd.f32 %v6070, %v6436
    %s6444 = scalar_lea.vmem %s39, 2
    %v6445 = vld [vmem:[%s6444] sm:$0x1]
    %v6447 = vlaneseq
    %v6448 = vshrl.u32 %v6447, 7
    %v6449 = vsub.s32 0, %v6448
    %v6450 = vrot.slane %v6445, %v6449
    %v6452 = vadd.f32 %v6439, %v6450
    %v6453 = vadd.f32 %v6440, %v6450
    %v6454 = vadd.f32 %v6441, %v6450
    %v6455 = vadd.f32 %v6442, %v6450
    %v6456 = vadd.f32 %v6443, %v6450
    %v6457 = vsel %vm257, %v6452, 0.0
    %6458 = vadd.xlane.f32.xlu0 %v6457
    %v6459 = vpop.xlane.xlu0 %6458
    %v6460 = vsel %vm257, %v6453, 0.0
    %6461 = vadd.xlane.f32.xlu0 %v6460
    %v6462 = vpop.xlane.xlu0 %6461
    %v6463 = vsel %vm257, %v6454, 0.0
    %6464 = vadd.xlane.f32.xlu0 %v6463
    %v6465 = vpop.xlane.xlu0 %6464
    %v6466 = vsel %vm257, %v6455, 0.0
    %6467 = vadd.xlane.f32.xlu0 %v6466
    %v6468 = vpop.xlane.xlu0 %6467
    %v6469 = vsel %vm257, %v6456, 0.0
    %6470 = vadd.xlane.f32.xlu0 %v6469
    %v6471 = vpop.xlane.xlu0 %6470
    %v6472 = vmul.f32 %v6459, %v273
    %v6473 = vmul.f32 %v6462, %v273
    %v6474 = vmul.f32 %v6465, %v273
    %v6475 = vmul.f32 %v6468, %v273
    %v6476 = vmul.f32 %v6471, %v273
    %v6477 = vsub.f32 %v6452, %v6472
    %v6478 = vsub.f32 %v6453, %v6473
    %v6479 = vsub.f32 %v6454, %v6474
    %v6480 = vsub.f32 %v6455, %v6475
    %v6481 = vsub.f32 %v6456, %v6476
    %v6482 = vmul.f32 %v6477, %v6477
    %v6483 = vmul.f32 %v6478, %v6478
    %v6484 = vmul.f32 %v6479, %v6479
    %v6485 = vmul.f32 %v6480, %v6480
    %v6486 = vmul.f32 %v6481, %v6481
    %v6487 = vsel %vm257, %v6482, 0.0
    %6488 = vadd.xlane.f32.xlu0 %v6487
    %v6489 = vpop.xlane.xlu0 %6488
    %v6490 = vsel %vm257, %v6483, 0.0
    %6491 = vadd.xlane.f32.xlu0 %v6490
    %v6492 = vpop.xlane.xlu0 %6491
    %v6493 = vsel %vm257, %v6484, 0.0
    %6494 = vadd.xlane.f32.xlu0 %v6493
    %v6495 = vpop.xlane.xlu0 %6494
    %v6496 = vsel %vm257, %v6485, 0.0
    %6497 = vadd.xlane.f32.xlu0 %v6496
    %v6498 = vpop.xlane.xlu0 %6497
    %v6499 = vsel %vm257, %v6486, 0.0
    %6500 = vadd.xlane.f32.xlu0 %v6499
    %v6501 = vpop.xlane.xlu0 %6500
    %v6502 = vmul.f32 %v6489, %v273
    %v6503 = vmul.f32 %v6492, %v273
    %v6504 = vmul.f32 %v6495, %v273
    %v6505 = vmul.f32 %v6498, %v273
    %v6506 = vmul.f32 %v6501, %v273
    %v6507 = vadd.f32 %v6502, 1e-06
    %v6508 = vadd.f32 %v6503, 1e-06
    %v6509 = vadd.f32 %v6504, 1e-06
    %v6510 = vadd.f32 %v6505, 1e-06
    %v6511 = vadd.f32 %v6506, 1e-06
    %v6512 = vrsqrt.pop %v6507
    %v6513 = vrsqrt.pop %v6508
    %v6514 = vrsqrt.pop %v6509
    %v6515 = vrsqrt.pop %v6510
    %v6516 = vrsqrt.pop %v6511
    %v6517 = vmul.f32 %v6477, %v6512
    %v6518 = vmul.f32 %v6478, %v6513
    %v6519 = vmul.f32 %v6479, %v6514
    %v6520 = vmul.f32 %v6480, %v6515
    %v6521 = vmul.f32 %v6481, %v6516
    %v6522 = vmul.f32 %v6517, %v2386
    %v6523 = vmul.f32 %v6518, %v2386
    %v6524 = vmul.f32 %v6519, %v2386
    %v6525 = vmul.f32 %v6520, %v2386
    %v6526 = vmul.f32 %v6521, %v2386
    %v6527 = vadd.f32 %v6522, %v2397
    %v6528 = vadd.f32 %v6523, %v2397
    %v6529 = vadd.f32 %v6524, %v2397
    %v6530 = vadd.f32 %v6525, %v2397
    %v6531 = vadd.f32 %v6526, %v2397
    %s6532 = scalar_lea.vmem %s9, 3
    %v6533 = vld [vmem:[%s6532] sm:$0x1]
    %s6534 = scalar_lea.vmem %s11, 3
    %v6535 = vld [vmem:[%s6534] sm:$0x1]
    %v6537 = vlaneseq
    %v6538 = vshrl.u32 %v6537, 7
    %v6539 = vsub.s32 0, %v6538
    %v6540 = vrot.slane %v6533, %v6539
    %v6542 = vmul.f32 %v6517, %v6540
    %v6543 = vmul.f32 %v6518, %v6540
    %v6544 = vmul.f32 %v6519, %v6540
    %v6545 = vmul.f32 %v6520, %v6540
    %v6546 = vmul.f32 %v6521, %v6540
    %v6548 = vlaneseq
    %v6549 = vshrl.u32 %v6548, 7
    %v6550 = vsub.s32 0, %v6549
    %v6551 = vrot.slane %v6535, %v6550
    %v6553 = vadd.f32 %v6542, %v6551
    %v6554 = vadd.f32 %v6543, %v6551
    %v6555 = vadd.f32 %v6544, %v6551
    %v6556 = vadd.f32 %v6545, %v6551
    %v6557 = vadd.f32 %v6546, %v6551
    %s6558 = scalar_lea.vmem %s13, 96
    %v6559 = vld [vmem:[%s6558] sm:$0xff]
    %v6560 = vld [vmem:[%s6558 + $0x8] sm:$0xff]
    %v6561 = vld [vmem:[%s6558 + $0x10] sm:$0xff]
    %v6562 = vld [vmem:[%s6558 + $0x18] sm:$0xff]
    %s6563 = scalar_lea.vmem %s15, 3
    %v6564 = vld [vmem:[%s6563] sm:$0x1]
    %v6566 = vlaneseq
    %v6567 = vshrl.u32 %v6566, 7
    %v6568 = vsub.s32 0, %v6567
    %v6569 = vrot.slane %v6564, %v6568
    %v6572 = vsel %vm257, %v6553, 0
    %v6575 = vsel %vm257, %v6554, 0
    %v6578 = vsel %vm257, %v6555, 0
    %v6581 = vsel %vm257, %v6556, 0
    %v6584 = vsel %vm257, %v6557, 0
    %6586 = vmatprep.subr.mxu0 0.0
    %6587 = vmatpush1.msra.mxu0 0.0
    %6588 = vmatprep.subr.mxu0 0.0
    %6589 = vmatpush1.msra.mxu0 0.0
    %6590 = vmatprep.subr.mxu0 0.0
    %6591 = vmatpush1.msra.mxu0 0.0
    %6592 = vmatprep.subr.mxu0 0.0
    %6593 = vmatpush1.msra.mxu0 0.0
    %6594 = vmatprep.subr.mxu0 0.0
    %6595 = vmatpush1.msra.mxu0 0.0
    %6596 = vmatprep.subr.mxu0 0.0
    %6597 = vmatpush1.msra.mxu0 0.0
    %6598 = vmatprep.subr.mxu0 0.0
    %6599 = vmatpush1.msra.mxu0 0.0
    %6600 = vmatprep.subr.mxu0 0.0
    %6601 = vmatpush1.msra.mxu0 0.0
    %6602 = vmatprep.subr.mxu0 0.0
    %6603 = vmatpush1.msra.mxu0 0.0
    %6604 = vmatprep.subr.mxu0 0.0
    %6605 = vmatpush1.msra.mxu0 0.0
    %6606 = vmatprep.subr.mxu0 0.0
    %6607 = vmatpush1.msra.mxu0 0.0
    %6608 = vmatprep.subr.mxu0 0.0
    %6609 = vmatpush1.msra.mxu0 0.0
    %6610 = vmatprep.subr.mxu0 0.0
    %6611 = vmatpush1.msra.mxu0 %v6562
    %6612 = vmatprep.subr.mxu0 0.0
    %6613 = vmatpush1.msra.mxu0 %v6561
    %6614 = vmatprep.subr.mxu0 0.0
    %6615 = vmatpush1.msra.mxu0 %v6560
    %6616 = vmatprep.subr.mxu0 0.0
    %6617 = vmatpush1.msra.mxu0 %v6559
    %6618 = vmatprep.subr.mxu0 0.0
    %6619 = vmatpush2.msra.mxu0 0.0
    %6620 = vmatprep.subr.mxu0 0.0
    %6621 = vmatpush2.msra.mxu0 0.0
    %6622 = vmatprep.subr.mxu0 0.0
    %6623 = vmatpush2.msra.mxu0 0.0
    %6624 = vmatprep.subr.mxu0 0.0
    %6625 = vmatpush2.msra.mxu0 0.0
    %6626 = vmatprep.subr.mxu0 0.0
    %6627 = vmatpush2.msra.mxu0 0.0
    %6628 = vmatprep.subr.mxu0 0.0
    %6629 = vmatpush2.msra.mxu0 0.0
    %6630 = vmatprep.subr.mxu0 0.0
    %6631 = vmatpush2.msra.mxu0 0.0
    %6632 = vmatprep.subr.mxu0 0.0
    %6633 = vmatpush2.msra.mxu0 0.0
    %6634 = vmatprep.subr.mxu0 0.0
    %6635 = vmatpush2.msra.mxu0 0.0
    %6636 = vmatprep.subr.mxu0 0.0
    %6637 = vmatpush2.msra.mxu0 0.0
    %6638 = vmatprep.subr.mxu0 0.0
    %6639 = vmatpush2.msra.mxu0 0.0
    %6640 = vmatprep.subr.mxu0 0.0
    %6641 = vmatpush2.msra.mxu0 0.0
    %6642 = vmatprep.subr.mxu0 0.0
    %6643 = vmatpush2.msra.mxu0 0.0
    %6644 = vmatprep.subr.mxu0 0.0
    %6645 = vmatpush2.msra.mxu0 0.0
    %6646 = vmatprep.subr.mxu0 0.0
    %6647 = vmatpush2.msra.mxu0 0.0
    %6648 = vmatprep.subr.mxu0 0.0
    %6649 = vmatpush2.msra.mxu0 0.0
    %6650 = vmatprep.mubr.f32.mxu0 0.0
    %6651 = vmatmul.mubr.f32.gmra.mxu0 %v6572
    %v6652 = vpop.f32.mrf.mxu0
    %v6653 = vadd.f32 %v6569, %v6652
    %v6654 = vpop.f32.mrf.mxu0
    %6655 = vmatprep.mubr.f32.mxu0 0.0
    %6656 = vmatmul.mubr.f32.gmra.mxu0 %v6575
    %v6657 = vpop.f32.mrf.mxu0
    %v6658 = vadd.f32 %v6569, %v6657
    %v6659 = vpop.f32.mrf.mxu0
    %6660 = vmatprep.mubr.f32.mxu0 0.0
    %6661 = vmatmul.mubr.f32.gmra.mxu0 %v6578
    %v6662 = vpop.f32.mrf.mxu0
    %v6663 = vadd.f32 %v6569, %v6662
    %v6664 = vpop.f32.mrf.mxu0
    %6665 = vmatprep.mubr.f32.mxu0 0.0
    %6666 = vmatmul.mubr.f32.gmra.mxu0 %v6581
    %v6667 = vpop.f32.mrf.mxu0
    %v6668 = vadd.f32 %v6569, %v6667
    %v6669 = vpop.f32.mrf.mxu0
    %6670 = vmatprep.mubr.f32.mxu0 0.0
    %6671 = vmatmul.mubr.f32.gmra.mxu0 %v6584
    %v6672 = vpop.f32.mrf.mxu0
    %v6673 = vadd.f32 %v6569, %v6672
    %v6674 = vpop.f32.mrf.mxu0
    %6675 = vdwg.mxu0
    %s6676 = scalar_lea.vmem %s17, 96
    %v6677 = vld [vmem:[%s6676] sm:$0xff]
    %v6678 = vld [vmem:[%s6676 + $0x8] sm:$0xff]
    %v6679 = vld [vmem:[%s6676 + $0x10] sm:$0xff]
    %v6680 = vld [vmem:[%s6676 + $0x18] sm:$0xff]
    %s6681 = scalar_lea.vmem %s19, 3
    %v6682 = vld [vmem:[%s6681] sm:$0x1]
    %v6684 = vlaneseq
    %v6685 = vshrl.u32 %v6684, 7
    %v6686 = vsub.s32 0, %v6685
    %v6687 = vrot.slane %v6682, %v6686
    %6689 = vmatprep.subr.mxu0 0.0
    %6690 = vmatpush1.msra.mxu0 0.0
    %6691 = vmatprep.subr.mxu0 0.0
    %6692 = vmatpush1.msra.mxu0 0.0
    %6693 = vmatprep.subr.mxu0 0.0
    %6694 = vmatpush1.msra.mxu0 0.0
    %6695 = vmatprep.subr.mxu0 0.0
    %6696 = vmatpush1.msra.mxu0 0.0
    %6697 = vmatprep.subr.mxu0 0.0
    %6698 = vmatpush1.msra.mxu0 0.0
    %6699 = vmatprep.subr.mxu0 0.0
    %6700 = vmatpush1.msra.mxu0 0.0
    %6701 = vmatprep.subr.mxu0 0.0
    %6702 = vmatpush1.msra.mxu0 0.0
    %6703 = vmatprep.subr.mxu0 0.0
    %6704 = vmatpush1.msra.mxu0 0.0
    %6705 = vmatprep.subr.mxu0 0.0
    %6706 = vmatpush1.msra.mxu0 0.0
    %6707 = vmatprep.subr.mxu0 0.0
    %6708 = vmatpush1.msra.mxu0 0.0
    %6709 = vmatprep.subr.mxu0 0.0
    %6710 = vmatpush1.msra.mxu0 0.0
    %6711 = vmatprep.subr.mxu0 0.0
    %6712 = vmatpush1.msra.mxu0 0.0
    %6713 = vmatprep.subr.mxu0 0.0
    %6714 = vmatpush1.msra.mxu0 %v6680
    %6715 = vmatprep.subr.mxu0 0.0
    %6716 = vmatpush1.msra.mxu0 %v6679
    %6717 = vmatprep.subr.mxu0 0.0
    %6718 = vmatpush1.msra.mxu0 %v6678
    %6719 = vmatprep.subr.mxu0 0.0
    %6720 = vmatpush1.msra.mxu0 %v6677
    %6721 = vmatprep.subr.mxu0 0.0
    %6722 = vmatpush2.msra.mxu0 0.0
    %6723 = vmatprep.subr.mxu0 0.0
    %6724 = vmatpush2.msra.mxu0 0.0
    %6725 = vmatprep.subr.mxu0 0.0
    %6726 = vmatpush2.msra.mxu0 0.0
    %6727 = vmatprep.subr.mxu0 0.0
    %6728 = vmatpush2.msra.mxu0 0.0
    %6729 = vmatprep.subr.mxu0 0.0
    %6730 = vmatpush2.msra.mxu0 0.0
    %6731 = vmatprep.subr.mxu0 0.0
    %6732 = vmatpush2.msra.mxu0 0.0
    %6733 = vmatprep.subr.mxu0 0.0
    %6734 = vmatpush2.msra.mxu0 0.0
    %6735 = vmatprep.subr.mxu0 0.0
    %6736 = vmatpush2.msra.mxu0 0.0
    %6737 = vmatprep.subr.mxu0 0.0
    %6738 = vmatpush2.msra.mxu0 0.0
    %6739 = vmatprep.subr.mxu0 0.0
    %6740 = vmatpush2.msra.mxu0 0.0
    %6741 = vmatprep.subr.mxu0 0.0
    %6742 = vmatpush2.msra.mxu0 0.0
    %6743 = vmatprep.subr.mxu0 0.0
    %6744 = vmatpush2.msra.mxu0 0.0
    %6745 = vmatprep.subr.mxu0 0.0
    %6746 = vmatpush2.msra.mxu0 0.0
    %6747 = vmatprep.subr.mxu0 0.0
    %6748 = vmatpush2.msra.mxu0 0.0
    %6749 = vmatprep.subr.mxu0 0.0
    %6750 = vmatpush2.msra.mxu0 0.0
    %6751 = vmatprep.subr.mxu0 0.0
    %6752 = vmatpush2.msra.mxu0 0.0
    %6753 = vmatprep.mubr.f32.mxu0 0.0
    %6754 = vmatmul.mubr.f32.gmra.mxu0 %v6572
    %v6755 = vpop.f32.mrf.mxu0
    %v6756 = vadd.f32 %v6687, %v6755
    %v6757 = vpop.f32.mrf.mxu0
    %6758 = vmatprep.mubr.f32.mxu0 0.0
    %6759 = vmatmul.mubr.f32.gmra.mxu0 %v6575
    %v6760 = vpop.f32.mrf.mxu0
    %v6761 = vadd.f32 %v6687, %v6760
    %v6762 = vpop.f32.mrf.mxu0
    %6763 = vmatprep.mubr.f32.mxu0 0.0
    %6764 = vmatmul.mubr.f32.gmra.mxu0 %v6578
    %v6765 = vpop.f32.mrf.mxu0
    %v6766 = vadd.f32 %v6687, %v6765
    %v6767 = vpop.f32.mrf.mxu0
    %6768 = vmatprep.mubr.f32.mxu0 0.0
    %6769 = vmatmul.mubr.f32.gmra.mxu0 %v6581
    %v6770 = vpop.f32.mrf.mxu0
    %v6771 = vadd.f32 %v6687, %v6770
    %v6772 = vpop.f32.mrf.mxu0
    %6773 = vmatprep.mubr.f32.mxu0 0.0
    %6774 = vmatmul.mubr.f32.gmra.mxu0 %v6584
    %v6775 = vpop.f32.mrf.mxu0
    %v6776 = vadd.f32 %v6687, %v6775
    %v6777 = vpop.f32.mrf.mxu0
    %6778 = vdwg.mxu0
    %s6779 = scalar_lea.vmem %s21, 96
    %v6780 = vld [vmem:[%s6779] sm:$0xff]
    %v6781 = vld [vmem:[%s6779 + $0x8] sm:$0xff]
    %v6782 = vld [vmem:[%s6779 + $0x10] sm:$0xff]
    %v6783 = vld [vmem:[%s6779 + $0x18] sm:$0xff]
    %s6784 = scalar_lea.vmem %s23, 3
    %v6785 = vld [vmem:[%s6784] sm:$0x1]
    %v6787 = vlaneseq
    %v6788 = vshrl.u32 %v6787, 7
    %v6789 = vsub.s32 0, %v6788
    %v6790 = vrot.slane %v6785, %v6789
    %6792 = vmatprep.subr.mxu0 0.0
    %6793 = vmatpush1.msra.mxu0 0.0
    %6794 = vmatprep.subr.mxu0 0.0
    %6795 = vmatpush1.msra.mxu0 0.0
    %6796 = vmatprep.subr.mxu0 0.0
    %6797 = vmatpush1.msra.mxu0 0.0
    %6798 = vmatprep.subr.mxu0 0.0
    %6799 = vmatpush1.msra.mxu0 0.0
    %6800 = vmatprep.subr.mxu0 0.0
    %6801 = vmatpush1.msra.mxu0 0.0
    %6802 = vmatprep.subr.mxu0 0.0
    %6803 = vmatpush1.msra.mxu0 0.0
    %6804 = vmatprep.subr.mxu0 0.0
    %6805 = vmatpush1.msra.mxu0 0.0
    %6806 = vmatprep.subr.mxu0 0.0
    %6807 = vmatpush1.msra.mxu0 0.0
    %6808 = vmatprep.subr.mxu0 0.0
    %6809 = vmatpush1.msra.mxu0 0.0
    %6810 = vmatprep.subr.mxu0 0.0
    %6811 = vmatpush1.msra.mxu0 0.0
    %6812 = vmatprep.subr.mxu0 0.0
    %6813 = vmatpush1.msra.mxu0 0.0
    %6814 = vmatprep.subr.mxu0 0.0
    %6815 = vmatpush1.msra.mxu0 0.0
    %6816 = vmatprep.subr.mxu0 0.0
    %6817 = vmatpush1.msra.mxu0 %v6783
    %6818 = vmatprep.subr.mxu0 0.0
    %6819 = vmatpush1.msra.mxu0 %v6782
    %6820 = vmatprep.subr.mxu0 0.0
    %6821 = vmatpush1.msra.mxu0 %v6781
    %6822 = vmatprep.subr.mxu0 0.0
    %6823 = vmatpush1.msra.mxu0 %v6780
    %6824 = vmatprep.subr.mxu0 0.0
    %6825 = vmatpush2.msra.mxu0 0.0
    %6826 = vmatprep.subr.mxu0 0.0
    %6827 = vmatpush2.msra.mxu0 0.0
    %6828 = vmatprep.subr.mxu0 0.0
    %6829 = vmatpush2.msra.mxu0 0.0
    %6830 = vmatprep.subr.mxu0 0.0
    %6831 = vmatpush2.msra.mxu0 0.0
    %6832 = vmatprep.subr.mxu0 0.0
    %6833 = vmatpush2.msra.mxu0 0.0
    %6834 = vmatprep.subr.mxu0 0.0
    %6835 = vmatpush2.msra.mxu0 0.0
    %6836 = vmatprep.subr.mxu0 0.0
    %6837 = vmatpush2.msra.mxu0 0.0
    %6838 = vmatprep.subr.mxu0 0.0
    %6839 = vmatpush2.msra.mxu0 0.0
    %6840 = vmatprep.subr.mxu0 0.0
    %6841 = vmatpush2.msra.mxu0 0.0
    %6842 = vmatprep.subr.mxu0 0.0
    %6843 = vmatpush2.msra.mxu0 0.0
    %6844 = vmatprep.subr.mxu0 0.0
    %6845 = vmatpush2.msra.mxu0 0.0
    %6846 = vmatprep.subr.mxu0 0.0
    %6847 = vmatpush2.msra.mxu0 0.0
    %6848 = vmatprep.subr.mxu0 0.0
    %6849 = vmatpush2.msra.mxu0 0.0
    %6850 = vmatprep.subr.mxu0 0.0
    %6851 = vmatpush2.msra.mxu0 0.0
    %6852 = vmatprep.subr.mxu0 0.0
    %6853 = vmatpush2.msra.mxu0 0.0
    %6854 = vmatprep.subr.mxu0 0.0
    %6855 = vmatpush2.msra.mxu0 0.0
    %6856 = vmatprep.mubr.f32.mxu0 0.0
    %6857 = vmatmul.mubr.f32.gmra.mxu0 %v6572
    %v6858 = vpop.f32.mrf.mxu0
    %v6859 = vadd.f32 %v6790, %v6858
    %v6860 = vpop.f32.mrf.mxu0
    %6861 = vmatprep.mubr.f32.mxu0 0.0
    %6862 = vmatmul.mubr.f32.gmra.mxu0 %v6575
    %v6863 = vpop.f32.mrf.mxu0
    %v6864 = vadd.f32 %v6790, %v6863
    %v6865 = vpop.f32.mrf.mxu0
    %6866 = vmatprep.mubr.f32.mxu0 0.0
    %6867 = vmatmul.mubr.f32.gmra.mxu0 %v6578
    %v6868 = vpop.f32.mrf.mxu0
    %v6869 = vadd.f32 %v6790, %v6868
    %v6870 = vpop.f32.mrf.mxu0
    %6871 = vmatprep.mubr.f32.mxu0 0.0
    %6872 = vmatmul.mubr.f32.gmra.mxu0 %v6581
    %v6873 = vpop.f32.mrf.mxu0
    %v6874 = vadd.f32 %v6790, %v6873
    %v6875 = vpop.f32.mrf.mxu0
    %6876 = vmatprep.mubr.f32.mxu0 0.0
    %6877 = vmatmul.mubr.f32.gmra.mxu0 %v6584
    %v6878 = vpop.f32.mrf.mxu0
    %v6879 = vadd.f32 %v6790, %v6878
    %v6880 = vpop.f32.mrf.mxu0
    %6881 = vdwg.mxu0
    %v6882 = vmul.f32 %v6653, %v668
    %v6883 = vmul.f32 %v6658, %v668
    %v6884 = vmul.f32 %v6663, %v668
    %v6885 = vmul.f32 %v6668, %v668
    %v6886 = vmul.f32 %v6673, %v668
    %v6888 = vsel %vm257, %v6882, 0
    %v6891 = vsel %vm257, %v6883, 0
    %v6894 = vsel %vm257, %v6884, 0
    %v6897 = vsel %vm257, %v6885, 0
    %v6900 = vsel %vm257, %v6886, 0
    %v6903 = vsel %vm257, %v6756, 0
    %v6906 = vsel %vm257, %v6761, 0
    %v6909 = vsel %vm257, %v6766, 0
    %v6912 = vsel %vm257, %v6771, 0
    %v6915 = vsel %vm257, %v6776, 0
    %6917 = vmatprep.subr.mxu0 0.0
    %6918 = vmatpush1.xpose.msra.mxu0 0.0
    %6919 = vmatprep.subr.mxu0 0.0
    %6920 = vmatpush1.xpose.msra.mxu0 0.0
    %6921 = vmatprep.subr.mxu0 0.0
    %6922 = vmatpush1.xpose.msra.mxu0 0.0
    %6923 = vmatprep.subr.mxu0 0.0
    %6924 = vmatpush1.xpose.msra.mxu0 0.0
    %6925 = vmatprep.subr.mxu0 0.0
    %6926 = vmatpush1.xpose.msra.mxu0 0.0
    %6927 = vmatprep.subr.mxu0 0.0
    %6928 = vmatpush1.xpose.msra.mxu0 0.0
    %6929 = vmatprep.subr.mxu0 0.0
    %6930 = vmatpush1.xpose.msra.mxu0 0.0
    %6931 = vmatprep.subr.mxu0 0.0
    %6932 = vmatpush1.xpose.msra.mxu0 0.0
    %6933 = vmatprep.subr.mxu0 0.0
    %6934 = vmatpush1.xpose.msra.mxu0 0.0
    %6935 = vmatprep.subr.mxu0 0.0
    %6936 = vmatpush1.xpose.msra.mxu0 0.0
    %6937 = vmatprep.subr.mxu0 0.0
    %6938 = vmatpush1.xpose.msra.mxu0 0.0
    %6939 = vmatprep.subr.mxu0 0.0
    %6940 = vmatpush1.xpose.msra.mxu0 %v6915
    %6941 = vmatprep.subr.mxu0 0.0
    %6942 = vmatpush1.xpose.msra.mxu0 %v6912
    %6943 = vmatprep.subr.mxu0 0.0
    %6944 = vmatpush1.xpose.msra.mxu0 %v6909
    %6945 = vmatprep.subr.mxu0 0.0
    %6946 = vmatpush1.xpose.msra.mxu0 %v6906
    %6947 = vmatprep.subr.mxu0 0.0
    %6948 = vmatpush1.xpose.msra.mxu0 %v6903
    %6949 = vmatprep.subr.mxu0 0.0
    %6950 = vmatpush2.xpose.msra.mxu0 0.0
    %6951 = vmatprep.subr.mxu0 0.0
    %6952 = vmatpush2.xpose.msra.mxu0 0.0
    %6953 = vmatprep.subr.mxu0 0.0
    %6954 = vmatpush2.xpose.msra.mxu0 0.0
    %6955 = vmatprep.subr.mxu0 0.0
    %6956 = vmatpush2.xpose.msra.mxu0 0.0
    %6957 = vmatprep.subr.mxu0 0.0
    %6958 = vmatpush2.xpose.msra.mxu0 0.0
    %6959 = vmatprep.subr.mxu0 0.0
    %6960 = vmatpush2.xpose.msra.mxu0 0.0
    %6961 = vmatprep.subr.mxu0 0.0
    %6962 = vmatpush2.xpose.msra.mxu0 0.0
    %6963 = vmatprep.subr.mxu0 0.0
    %6964 = vmatpush2.xpose.msra.mxu0 0.0
    %6965 = vmatprep.subr.mxu0 0.0
    %6966 = vmatpush2.xpose.msra.mxu0 0.0
    %6967 = vmatprep.subr.mxu0 0.0
    %6968 = vmatpush2.xpose.msra.mxu0 0.0
    %6969 = vmatprep.subr.mxu0 0.0
    %6970 = vmatpush2.xpose.msra.mxu0 0.0
    %6971 = vmatprep.subr.mxu0 0.0
    %6972 = vmatpush2.xpose.msra.mxu0 0.0
    %6973 = vmatprep.subr.mxu0 0.0
    %6974 = vmatpush2.xpose.msra.mxu0 0.0
    %6975 = vmatprep.subr.mxu0 0.0
    %6976 = vmatpush2.xpose.msra.mxu0 0.0
    %6977 = vmatprep.subr.mxu0 0.0
    %6978 = vmatpush2.xpose.msra.mxu0 0.0
    %6979 = vmatprep.subr.mxu0 0.0
    %6980 = vmatpush2.xpose.msra.mxu0 0.0
    %6981 = vmatprep.mubr.f32.mxu0 0.0
    %6982 = vmatmul.mubr.f32.gmra.mxu0 %v6888
    %v6983 = vpop.f32.mrf.mxu0
    %v6984 = vadd.f32 %v246, %v6983
    %v6985 = vpop.f32.mrf.mxu0
    %6986 = vmatprep.mubr.f32.mxu0 0.0
    %6987 = vmatmul.mubr.f32.gmra.mxu0 %v6891
    %v6988 = vpop.f32.mrf.mxu0
    %v6989 = vadd.f32 %v247, %v6988
    %v6990 = vpop.f32.mrf.mxu0
    %6991 = vmatprep.mubr.f32.mxu0 0.0
    %6992 = vmatmul.mubr.f32.gmra.mxu0 %v6894
    %v6993 = vpop.f32.mrf.mxu0
    %v6994 = vadd.f32 %v248, %v6993
    %v6995 = vpop.f32.mrf.mxu0
    %6996 = vmatprep.mubr.f32.mxu0 0.0
    %6997 = vmatmul.mubr.f32.gmra.mxu0 %v6897
    %v6998 = vpop.f32.mrf.mxu0
    %v6999 = vadd.f32 %v249, %v6998
    %v7000 = vpop.f32.mrf.mxu0
    %7001 = vmatprep.mubr.f32.mxu0 0.0
    %7002 = vmatmul.mubr.f32.gmra.mxu0 %v6900
    %v7003 = vpop.f32.mrf.mxu0
    %v7004 = vadd.f32 %v250, %v7003
    %v7005 = vpop.f32.mrf.mxu0
    %7006 = vdwg.mxu0
    %v7007 = vsel %vm794, %v6984, -inf
    %7008 = vmax.xlane.f32.xlu0 %v7007
    %v7009 = vpop.xlane.xlu0 %7008
    %v7010 = vsel %vm794, %v6989, -inf
    %7011 = vmax.xlane.f32.xlu0 %v7010
    %v7012 = vpop.xlane.xlu0 %7011
    %v7013 = vsel %vm794, %v6994, -inf
    %7014 = vmax.xlane.f32.xlu0 %v7013
    %v7015 = vpop.xlane.xlu0 %7014
    %v7016 = vsel %vm794, %v6999, -inf
    %7017 = vmax.xlane.f32.xlu0 %v7016
    %v7018 = vpop.xlane.xlu0 %7017
    %v7019 = vsel %vm794, %v7004, -inf
    %7020 = vmax.xlane.f32.xlu0 %v7019
    %v7021 = vpop.xlane.xlu0 %7020
    %v7022 = vsub.f32 %v6984, %v7009
    %v7023 = vsub.f32 %v6989, %v7012
    %v7024 = vsub.f32 %v6994, %v7015
    %v7025 = vsub.f32 %v6999, %v7018
    %v7026 = vsub.f32 %v7004, %v7021
    %v7027 = vmul.f32 %v7022, 1.442695
    %v7028 = vpow.pop %v7027
    %v7029 = vmul.f32 %v7023, 1.442695
    %v7030 = vpow.pop %v7029
    %v7031 = vmul.f32 %v7024, 1.442695
    %v7032 = vpow.pop %v7031
    %v7033 = vmul.f32 %v7025, 1.442695
    %v7034 = vpow.pop %v7033
    %v7035 = vmul.f32 %v7026, 1.442695
    %v7036 = vpow.pop %v7035
    %v7037 = vsel %vm794, %v7028, 0.0
    %7038 = vadd.xlane.f32.xlu0 %v7037
    %v7039 = vpop.xlane.xlu0 %7038
    %v7040 = vsel %vm794, %v7030, 0.0
    %7041 = vadd.xlane.f32.xlu0 %v7040
    %v7042 = vpop.xlane.xlu0 %7041
    %v7043 = vsel %vm794, %v7032, 0.0
    %7044 = vadd.xlane.f32.xlu0 %v7043
    %v7045 = vpop.xlane.xlu0 %7044
    %v7046 = vsel %vm794, %v7034, 0.0
    %7047 = vadd.xlane.f32.xlu0 %v7046
    %v7048 = vpop.xlane.xlu0 %7047
    %v7049 = vsel %vm794, %v7036, 0.0
    %7050 = vadd.xlane.f32.xlu0 %v7049
    %v7051 = vpop.xlane.xlu0 %7050
    %v7052 = vrcp.pop %v7039
    %v7053 = vrcp.pop %v7042
    %v7054 = vrcp.pop %v7045
    %v7055 = vrcp.pop %v7048
    %v7056 = vrcp.pop %v7051
    %v7057 = vmul.f32 %v7028, %v7052
    %v7058 = vmul.f32 %v7030, %v7053
    %v7059 = vmul.f32 %v7032, %v7054
    %v7060 = vmul.f32 %v7034, %v7055
    %v7061 = vmul.f32 %v7036, %v7056
    %v7062 = vmul.f32 %v6859, %v668
    %v7063 = vmul.f32 %v6864, %v668
    %v7064 = vmul.f32 %v6869, %v668
    %v7065 = vmul.f32 %v6874, %v668
    %v7066 = vmul.f32 %v6879, %v668
    %v7067 = vmul.f32 %v6653, %v859
    %v7068 = vmul.f32 %v6658, %v859
    %v7069 = vmul.f32 %v6663, %v859
    %v7070 = vmul.f32 %v6668, %v859
    %v7071 = vmul.f32 %v6673, %v859
    %v7073 = vsel %vm257, %v7067, 0
    %v7076 = vsel %vm257, %v7068, 0
    %v7079 = vsel %vm257, %v7069, 0
    %v7082 = vsel %vm257, %v7070, 0
    %v7085 = vsel %vm257, %v7071, 0
    %7087 = vmatprep.subr.mxu0 0.0
    %7088 = vmatpush1.xpose.msra.mxu0 0.0
    %7089 = vmatprep.subr.mxu0 0.0
    %7090 = vmatpush1.xpose.msra.mxu0 0.0
    %7091 = vmatprep.subr.mxu0 0.0
    %7092 = vmatpush1.xpose.msra.mxu0 0.0
    %7093 = vmatprep.subr.mxu0 0.0
    %7094 = vmatpush1.xpose.msra.mxu0 0.0
    %7095 = vmatprep.subr.mxu0 0.0
    %7096 = vmatpush1.xpose.msra.mxu0 0.0
    %7097 = vmatprep.subr.mxu0 0.0
    %7098 = vmatpush1.xpose.msra.mxu0 0.0
    %7099 = vmatprep.subr.mxu0 0.0
    %7100 = vmatpush1.xpose.msra.mxu0 0.0
    %7101 = vmatprep.subr.mxu0 0.0
    %7102 = vmatpush1.xpose.msra.mxu0 0.0
    %7103 = vmatprep.subr.mxu0 0.0
    %7104 = vmatpush1.xpose.msra.mxu0 0.0
    %7105 = vmatprep.subr.mxu0 0.0
    %7106 = vmatpush1.xpose.msra.mxu0 0.0
    %7107 = vmatprep.subr.mxu0 0.0
    %7108 = vmatpush1.xpose.msra.mxu0 0.0
    %7109 = vmatprep.subr.mxu0 0.0
    %7110 = vmatpush1.xpose.msra.mxu0 %v6915
    %7111 = vmatprep.subr.mxu0 0.0
    %7112 = vmatpush1.xpose.msra.mxu0 %v6912
    %7113 = vmatprep.subr.mxu0 0.0
    %7114 = vmatpush1.xpose.msra.mxu0 %v6909
    %7115 = vmatprep.subr.mxu0 0.0
    %7116 = vmatpush1.xpose.msra.mxu0 %v6906
    %7117 = vmatprep.subr.mxu0 0.0
    %7118 = vmatpush1.xpose.msra.mxu0 %v6903
    %7119 = vmatprep.subr.mxu0 0.0
    %7120 = vmatpush2.xpose.msra.mxu0 0.0
    %7121 = vmatprep.subr.mxu0 0.0
    %7122 = vmatpush2.xpose.msra.mxu0 0.0
    %7123 = vmatprep.subr.mxu0 0.0
    %7124 = vmatpush2.xpose.msra.mxu0 0.0
    %7125 = vmatprep.subr.mxu0 0.0
    %7126 = vmatpush2.xpose.msra.mxu0 0.0
    %7127 = vmatprep.subr.mxu0 0.0
    %7128 = vmatpush2.xpose.msra.mxu0 0.0
    %7129 = vmatprep.subr.mxu0 0.0
    %7130 = vmatpush2.xpose.msra.mxu0 0.0
    %7131 = vmatprep.subr.mxu0 0.0
    %7132 = vmatpush2.xpose.msra.mxu0 0.0
    %7133 = vmatprep.subr.mxu0 0.0
    %7134 = vmatpush2.xpose.msra.mxu0 0.0
    %7135 = vmatprep.subr.mxu0 0.0
    %7136 = vmatpush2.xpose.msra.mxu0 0.0
    %7137 = vmatprep.subr.mxu0 0.0
    %7138 = vmatpush2.xpose.msra.mxu0 0.0
    %7139 = vmatprep.subr.mxu0 0.0
    %7140 = vmatpush2.xpose.msra.mxu0 0.0
    %7141 = vmatprep.subr.mxu0 0.0
    %7142 = vmatpush2.xpose.msra.mxu0 0.0
    %7143 = vmatprep.subr.mxu0 0.0
    %7144 = vmatpush2.xpose.msra.mxu0 0.0
    %7145 = vmatprep.subr.mxu0 0.0
    %7146 = vmatpush2.xpose.msra.mxu0 0.0
    %7147 = vmatprep.subr.mxu0 0.0
    %7148 = vmatpush2.xpose.msra.mxu0 0.0
    %7149 = vmatprep.subr.mxu0 0.0
    %7150 = vmatpush2.xpose.msra.mxu0 0.0
    %7151 = vmatprep.mubr.f32.mxu0 0.0
    %7152 = vmatmul.mubr.f32.gmra.mxu0 %v7073
    %v7153 = vpop.f32.mrf.mxu0
    %v7154 = vadd.f32 %v246, %v7153
    %v7155 = vpop.f32.mrf.mxu0
    %7156 = vmatprep.mubr.f32.mxu0 0.0
    %7157 = vmatmul.mubr.f32.gmra.mxu0 %v7076
    %v7158 = vpop.f32.mrf.mxu0
    %v7159 = vadd.f32 %v247, %v7158
    %v7160 = vpop.f32.mrf.mxu0
    %7161 = vmatprep.mubr.f32.mxu0 0.0
    %7162 = vmatmul.mubr.f32.gmra.mxu0 %v7079
    %v7163 = vpop.f32.mrf.mxu0
    %v7164 = vadd.f32 %v248, %v7163
    %v7165 = vpop.f32.mrf.mxu0
    %7166 = vmatprep.mubr.f32.mxu0 0.0
    %7167 = vmatmul.mubr.f32.gmra.mxu0 %v7082
    %v7168 = vpop.f32.mrf.mxu0
    %v7169 = vadd.f32 %v249, %v7168
    %v7170 = vpop.f32.mrf.mxu0
    %7171 = vmatprep.mubr.f32.mxu0 0.0
    %7172 = vmatmul.mubr.f32.gmra.mxu0 %v7085
    %v7173 = vpop.f32.mrf.mxu0
    %v7174 = vadd.f32 %v250, %v7173
    %v7175 = vpop.f32.mrf.mxu0
    %7176 = vdwg.mxu0
    %v7177 = vsel %vm794, %v7154, -inf
    %7178 = vmax.xlane.f32.xlu0 %v7177
    %v7179 = vpop.xlane.xlu0 %7178
    %v7180 = vsel %vm794, %v7159, -inf
    %7181 = vmax.xlane.f32.xlu0 %v7180
    %v7182 = vpop.xlane.xlu0 %7181
    %v7183 = vsel %vm794, %v7164, -inf
    %7184 = vmax.xlane.f32.xlu0 %v7183
    %v7185 = vpop.xlane.xlu0 %7184
    %v7186 = vsel %vm794, %v7169, -inf
    %7187 = vmax.xlane.f32.xlu0 %v7186
    %v7188 = vpop.xlane.xlu0 %7187
    %v7189 = vsel %vm794, %v7174, -inf
    %7190 = vmax.xlane.f32.xlu0 %v7189
    %v7191 = vpop.xlane.xlu0 %7190
    %v7192 = vsub.f32 %v7154, %v7179
    %v7193 = vsub.f32 %v7159, %v7182
    %v7194 = vsub.f32 %v7164, %v7185
    %v7195 = vsub.f32 %v7169, %v7188
    %v7196 = vsub.f32 %v7174, %v7191
    %v7197 = vmul.f32 %v7192, 1.442695
    %v7198 = vpow.pop %v7197
    %v7199 = vmul.f32 %v7193, 1.442695
    %v7200 = vpow.pop %v7199
    %v7201 = vmul.f32 %v7194, 1.442695
    %v7202 = vpow.pop %v7201
    %v7203 = vmul.f32 %v7195, 1.442695
    %v7204 = vpow.pop %v7203
    %v7205 = vmul.f32 %v7196, 1.442695
    %v7206 = vpow.pop %v7205
    %v7207 = vsel %vm794, %v7198, 0.0
    %7208 = vadd.xlane.f32.xlu0 %v7207
    %v7209 = vpop.xlane.xlu0 %7208
    %v7210 = vsel %vm794, %v7200, 0.0
    %7211 = vadd.xlane.f32.xlu0 %v7210
    %v7212 = vpop.xlane.xlu0 %7211
    %v7213 = vsel %vm794, %v7202, 0.0
    %7214 = vadd.xlane.f32.xlu0 %v7213
    %v7215 = vpop.xlane.xlu0 %7214
    %v7216 = vsel %vm794, %v7204, 0.0
    %7217 = vadd.xlane.f32.xlu0 %v7216
    %v7218 = vpop.xlane.xlu0 %7217
    %v7219 = vsel %vm794, %v7206, 0.0
    %7220 = vadd.xlane.f32.xlu0 %v7219
    %v7221 = vpop.xlane.xlu0 %7220
    %v7222 = vrcp.pop %v7209
    %v7223 = vrcp.pop %v7212
    %v7224 = vrcp.pop %v7215
    %v7225 = vrcp.pop %v7218
    %v7226 = vrcp.pop %v7221
    %v7227 = vmul.f32 %v7198, %v7222
    %v7228 = vmul.f32 %v7200, %v7223
    %v7229 = vmul.f32 %v7202, %v7224
    %v7230 = vmul.f32 %v7204, %v7225
    %v7231 = vmul.f32 %v7206, %v7226
    %v7232 = vmul.f32 %v6859, %v859
    %v7233 = vmul.f32 %v6864, %v859
    %v7234 = vmul.f32 %v6869, %v859
    %v7235 = vmul.f32 %v6874, %v859
    %v7236 = vmul.f32 %v6879, %v859
    %v7238 = vsel %vm794, %v7227, 0
    %v7241 = vsel %vm794, %v7228, 0
    %v7244 = vsel %vm794, %v7229, 0
    %v7247 = vsel %vm794, %v7230, 0
    %v7250 = vsel %vm794, %v7231, 0
    %7252 = vmatprep.subr.mxu0 0.0
    %7253 = vmatpush1.msra.mxu0 0.0
    %7254 = vmatprep.subr.mxu0 0.0
    %7255 = vmatpush1.msra.mxu0 0.0
    %7256 = vmatprep.subr.mxu0 0.0
    %7257 = vmatpush1.msra.mxu0 0.0
    %7258 = vmatprep.subr.mxu0 0.0
    %7259 = vmatpush1.msra.mxu0 0.0
    %7260 = vmatprep.subr.mxu0 0.0
    %7261 = vmatpush1.msra.mxu0 0.0
    %7262 = vmatprep.subr.mxu0 0.0
    %7263 = vmatpush1.msra.mxu0 0.0
    %7264 = vmatprep.subr.mxu0 0.0
    %7265 = vmatpush1.msra.mxu0 0.0
    %7266 = vmatprep.subr.mxu0 0.0
    %7267 = vmatpush1.msra.mxu0 0.0
    %7268 = vmatprep.subr.mxu0 0.0
    %7269 = vmatpush1.msra.mxu0 0.0
    %7270 = vmatprep.subr.mxu0 0.0
    %7271 = vmatpush1.msra.mxu0 0.0
    %7272 = vmatprep.subr.mxu0 0.0
    %7273 = vmatpush1.msra.mxu0 0.0
    %7274 = vmatprep.subr.mxu0 0.0
    %7275 = vmatpush1.msra.mxu0 %v7236
    %7276 = vmatprep.subr.mxu0 0.0
    %7277 = vmatpush1.msra.mxu0 %v7235
    %7278 = vmatprep.subr.mxu0 0.0
    %7279 = vmatpush1.msra.mxu0 %v7234
    %7280 = vmatprep.subr.mxu0 0.0
    %7281 = vmatpush1.msra.mxu0 %v7233
    %7282 = vmatprep.subr.mxu0 0.0
    %7283 = vmatpush1.msra.mxu0 %v7232
    %7284 = vmatprep.subr.mxu0 0.0
    %7285 = vmatpush2.msra.mxu0 0.0
    %7286 = vmatprep.subr.mxu0 0.0
    %7287 = vmatpush2.msra.mxu0 0.0
    %7288 = vmatprep.subr.mxu0 0.0
    %7289 = vmatpush2.msra.mxu0 0.0
    %7290 = vmatprep.subr.mxu0 0.0
    %7291 = vmatpush2.msra.mxu0 0.0
    %7292 = vmatprep.subr.mxu0 0.0
    %7293 = vmatpush2.msra.mxu0 0.0
    %7294 = vmatprep.subr.mxu0 0.0
    %7295 = vmatpush2.msra.mxu0 0.0
    %7296 = vmatprep.subr.mxu0 0.0
    %7297 = vmatpush2.msra.mxu0 0.0
    %7298 = vmatprep.subr.mxu0 0.0
    %7299 = vmatpush2.msra.mxu0 0.0
    %7300 = vmatprep.subr.mxu0 0.0
    %7301 = vmatpush2.msra.mxu0 0.0
    %7302 = vmatprep.subr.mxu0 0.0
    %7303 = vmatpush2.msra.mxu0 0.0
    %7304 = vmatprep.subr.mxu0 0.0
    %7305 = vmatpush2.msra.mxu0 0.0
    %7306 = vmatprep.subr.mxu0 0.0
    %7307 = vmatpush2.msra.mxu0 0.0
    %7308 = vmatprep.subr.mxu0 0.0
    %7309 = vmatpush2.msra.mxu0 0.0
    %7310 = vmatprep.subr.mxu0 0.0
    %7311 = vmatpush2.msra.mxu0 0.0
    %7312 = vmatprep.subr.mxu0 0.0
    %7313 = vmatpush2.msra.mxu0 0.0
    %7314 = vmatprep.subr.mxu0 0.0
    %7315 = vmatpush2.msra.mxu0 0.0
    %7316 = vmatprep.mubr.f32.mxu0 0.0
    %7317 = vmatmul.mubr.f32.gmra.mxu0 %v7238
    %v7318 = vpop.f32.mrf.mxu0
    %v7319 = vadd.f32 0.0, %v7318
    %v7320 = vpop.f32.mrf.mxu0
    %7321 = vmatprep.mubr.f32.mxu0 0.0
    %7322 = vmatmul.mubr.f32.gmra.mxu0 %v7241
    %v7323 = vpop.f32.mrf.mxu0
    %v7324 = vadd.f32 0.0, %v7323
    %v7325 = vpop.f32.mrf.mxu0
    %7326 = vmatprep.mubr.f32.mxu0 0.0
    %7327 = vmatmul.mubr.f32.gmra.mxu0 %v7244
    %v7328 = vpop.f32.mrf.mxu0
    %v7329 = vadd.f32 0.0, %v7328
    %v7330 = vpop.f32.mrf.mxu0
    %7331 = vmatprep.mubr.f32.mxu0 0.0
    %7332 = vmatmul.mubr.f32.gmra.mxu0 %v7247
    %v7333 = vpop.f32.mrf.mxu0
    %v7334 = vadd.f32 0.0, %v7333
    %v7335 = vpop.f32.mrf.mxu0
    %7336 = vmatprep.mubr.f32.mxu0 0.0
    %7337 = vmatmul.mubr.f32.gmra.mxu0 %v7250
    %v7338 = vpop.f32.mrf.mxu0
    %v7339 = vadd.f32 0.0, %v7338
    %v7340 = vpop.f32.mrf.mxu0
    %7341 = vdwg.mxu0
    %v7343 = vsel %vm794, %v7057, 0
    %v7346 = vsel %vm794, %v7058, 0
    %v7349 = vsel %vm794, %v7059, 0
    %v7352 = vsel %vm794, %v7060, 0
    %v7355 = vsel %vm794, %v7061, 0
    %7357 = vmatprep.subr.mxu0 0.0
    %7358 = vmatpush1.msra.mxu0 0.0
    %7359 = vmatprep.subr.mxu0 0.0
    %7360 = vmatpush1.msra.mxu0 0.0
    %7361 = vmatprep.subr.mxu0 0.0
    %7362 = vmatpush1.msra.mxu0 0.0
    %7363 = vmatprep.subr.mxu0 0.0
    %7364 = vmatpush1.msra.mxu0 0.0
    %7365 = vmatprep.subr.mxu0 0.0
    %7366 = vmatpush1.msra.mxu0 0.0
    %7367 = vmatprep.subr.mxu0 0.0
    %7368 = vmatpush1.msra.mxu0 0.0
    %7369 = vmatprep.subr.mxu0 0.0
    %7370 = vmatpush1.msra.mxu0 0.0
    %7371 = vmatprep.subr.mxu0 0.0
    %7372 = vmatpush1.msra.mxu0 0.0
    %7373 = vmatprep.subr.mxu0 0.0
    %7374 = vmatpush1.msra.mxu0 0.0
    %7375 = vmatprep.subr.mxu0 0.0
    %7376 = vmatpush1.msra.mxu0 0.0
    %7377 = vmatprep.subr.mxu0 0.0
    %7378 = vmatpush1.msra.mxu0 0.0
    %7379 = vmatprep.subr.mxu0 0.0
    %7380 = vmatpush1.msra.mxu0 %v7066
    %7381 = vmatprep.subr.mxu0 0.0
    %7382 = vmatpush1.msra.mxu0 %v7065
    %7383 = vmatprep.subr.mxu0 0.0
    %7384 = vmatpush1.msra.mxu0 %v7064
    %7385 = vmatprep.subr.mxu0 0.0
    %7386 = vmatpush1.msra.mxu0 %v7063
    %7387 = vmatprep.subr.mxu0 0.0
    %7388 = vmatpush1.msra.mxu0 %v7062
    %7389 = vmatprep.subr.mxu0 0.0
    %7390 = vmatpush2.msra.mxu0 0.0
    %7391 = vmatprep.subr.mxu0 0.0
    %7392 = vmatpush2.msra.mxu0 0.0
    %7393 = vmatprep.subr.mxu0 0.0
    %7394 = vmatpush2.msra.mxu0 0.0
    %7395 = vmatprep.subr.mxu0 0.0
    %7396 = vmatpush2.msra.mxu0 0.0
    %7397 = vmatprep.subr.mxu0 0.0
    %7398 = vmatpush2.msra.mxu0 0.0
    %7399 = vmatprep.subr.mxu0 0.0
    %7400 = vmatpush2.msra.mxu0 0.0
    %7401 = vmatprep.subr.mxu0 0.0
    %7402 = vmatpush2.msra.mxu0 0.0
    %7403 = vmatprep.subr.mxu0 0.0
    %7404 = vmatpush2.msra.mxu0 0.0
    %7405 = vmatprep.subr.mxu0 0.0
    %7406 = vmatpush2.msra.mxu0 0.0
    %7407 = vmatprep.subr.mxu0 0.0
    %7408 = vmatpush2.msra.mxu0 0.0
    %7409 = vmatprep.subr.mxu0 0.0
    %7410 = vmatpush2.msra.mxu0 0.0
    %7411 = vmatprep.subr.mxu0 0.0
    %7412 = vmatpush2.msra.mxu0 0.0
    %7413 = vmatprep.subr.mxu0 0.0
    %7414 = vmatpush2.msra.mxu0 0.0
    %7415 = vmatprep.subr.mxu0 0.0
    %7416 = vmatpush2.msra.mxu0 0.0
    %7417 = vmatprep.subr.mxu0 0.0
    %7418 = vmatpush2.msra.mxu0 0.0
    %7419 = vmatprep.subr.mxu0 0.0
    %7420 = vmatpush2.msra.mxu0 0.0
    %7421 = vmatprep.mubr.f32.mxu0 0.0
    %7422 = vmatmul.mubr.f32.gmra.mxu0 %v7343
    %v7423 = vpop.f32.mrf.mxu0
    %v7424 = vadd.f32 %v7319, %v7423
    %v7425 = vpop.f32.mrf.mxu0
    %7426 = vmatprep.mubr.f32.mxu0 0.0
    %7427 = vmatmul.mubr.f32.gmra.mxu0 %v7346
    %v7428 = vpop.f32.mrf.mxu0
    %v7429 = vadd.f32 %v7324, %v7428
    %v7430 = vpop.f32.mrf.mxu0
    %7431 = vmatprep.mubr.f32.mxu0 0.0
    %7432 = vmatmul.mubr.f32.gmra.mxu0 %v7349
    %v7433 = vpop.f32.mrf.mxu0
    %v7434 = vadd.f32 %v7329, %v7433
    %v7435 = vpop.f32.mrf.mxu0
    %7436 = vmatprep.mubr.f32.mxu0 0.0
    %7437 = vmatmul.mubr.f32.gmra.mxu0 %v7352
    %v7438 = vpop.f32.mrf.mxu0
    %v7439 = vadd.f32 %v7334, %v7438
    %v7440 = vpop.f32.mrf.mxu0
    %7441 = vmatprep.mubr.f32.mxu0 0.0
    %7442 = vmatmul.mubr.f32.gmra.mxu0 %v7355
    %v7443 = vpop.f32.mrf.mxu0
    %v7444 = vadd.f32 %v7339, %v7443
    %v7445 = vpop.f32.mrf.mxu0
    %7446 = vdwg.mxu0
    %v7447 = vmul.f32 %v6653, %v1244
    %v7448 = vmul.f32 %v6658, %v1244
    %v7449 = vmul.f32 %v6663, %v1244
    %v7450 = vmul.f32 %v6668, %v1244
    %v7451 = vmul.f32 %v6673, %v1244
    %v7453 = vsel %vm257, %v7447, 0
    %v7456 = vsel %vm257, %v7448, 0
    %v7459 = vsel %vm257, %v7449, 0
    %v7462 = vsel %vm257, %v7450, 0
    %v7465 = vsel %vm257, %v7451, 0
    %7467 = vmatprep.subr.mxu0 0.0
    %7468 = vmatpush1.xpose.msra.mxu0 0.0
    %7469 = vmatprep.subr.mxu0 0.0
    %7470 = vmatpush1.xpose.msra.mxu0 0.0
    %7471 = vmatprep.subr.mxu0 0.0
    %7472 = vmatpush1.xpose.msra.mxu0 0.0
    %7473 = vmatprep.subr.mxu0 0.0
    %7474 = vmatpush1.xpose.msra.mxu0 0.0
    %7475 = vmatprep.subr.mxu0 0.0
    %7476 = vmatpush1.xpose.msra.mxu0 0.0
    %7477 = vmatprep.subr.mxu0 0.0
    %7478 = vmatpush1.xpose.msra.mxu0 0.0
    %7479 = vmatprep.subr.mxu0 0.0
    %7480 = vmatpush1.xpose.msra.mxu0 0.0
    %7481 = vmatprep.subr.mxu0 0.0
    %7482 = vmatpush1.xpose.msra.mxu0 0.0
    %7483 = vmatprep.subr.mxu0 0.0
    %7484 = vmatpush1.xpose.msra.mxu0 0.0
    %7485 = vmatprep.subr.mxu0 0.0
    %7486 = vmatpush1.xpose.msra.mxu0 0.0
    %7487 = vmatprep.subr.mxu0 0.0
    %7488 = vmatpush1.xpose.msra.mxu0 0.0
    %7489 = vmatprep.subr.mxu0 0.0
    %7490 = vmatpush1.xpose.msra.mxu0 %v6915
    %7491 = vmatprep.subr.mxu0 0.0
    %7492 = vmatpush1.xpose.msra.mxu0 %v6912
    %7493 = vmatprep.subr.mxu0 0.0
    %7494 = vmatpush1.xpose.msra.mxu0 %v6909
    %7495 = vmatprep.subr.mxu0 0.0
    %7496 = vmatpush1.xpose.msra.mxu0 %v6906
    %7497 = vmatprep.subr.mxu0 0.0
    %7498 = vmatpush1.xpose.msra.mxu0 %v6903
    %7499 = vmatprep.subr.mxu0 0.0
    %7500 = vmatpush2.xpose.msra.mxu0 0.0
    %7501 = vmatprep.subr.mxu0 0.0
    %7502 = vmatpush2.xpose.msra.mxu0 0.0
    %7503 = vmatprep.subr.mxu0 0.0
    %7504 = vmatpush2.xpose.msra.mxu0 0.0
    %7505 = vmatprep.subr.mxu0 0.0
    %7506 = vmatpush2.xpose.msra.mxu0 0.0
    %7507 = vmatprep.subr.mxu0 0.0
    %7508 = vmatpush2.xpose.msra.mxu0 0.0
    %7509 = vmatprep.subr.mxu0 0.0
    %7510 = vmatpush2.xpose.msra.mxu0 0.0
    %7511 = vmatprep.subr.mxu0 0.0
    %7512 = vmatpush2.xpose.msra.mxu0 0.0
    %7513 = vmatprep.subr.mxu0 0.0
    %7514 = vmatpush2.xpose.msra.mxu0 0.0
    %7515 = vmatprep.subr.mxu0 0.0
    %7516 = vmatpush2.xpose.msra.mxu0 0.0
    %7517 = vmatprep.subr.mxu0 0.0
    %7518 = vmatpush2.xpose.msra.mxu0 0.0
    %7519 = vmatprep.subr.mxu0 0.0
    %7520 = vmatpush2.xpose.msra.mxu0 0.0
    %7521 = vmatprep.subr.mxu0 0.0
    %7522 = vmatpush2.xpose.msra.mxu0 0.0
    %7523 = vmatprep.subr.mxu0 0.0
    %7524 = vmatpush2.xpose.msra.mxu0 0.0
    %7525 = vmatprep.subr.mxu0 0.0
    %7526 = vmatpush2.xpose.msra.mxu0 0.0
    %7527 = vmatprep.subr.mxu0 0.0
    %7528 = vmatpush2.xpose.msra.mxu0 0.0
    %7529 = vmatprep.subr.mxu0 0.0
    %7530 = vmatpush2.xpose.msra.mxu0 0.0
    %7531 = vmatprep.mubr.f32.mxu0 0.0
    %7532 = vmatmul.mubr.f32.gmra.mxu0 %v7453
    %v7533 = vpop.f32.mrf.mxu0
    %v7534 = vadd.f32 %v246, %v7533
    %v7535 = vpop.f32.mrf.mxu0
    %7536 = vmatprep.mubr.f32.mxu0 0.0
    %7537 = vmatmul.mubr.f32.gmra.mxu0 %v7456
    %v7538 = vpop.f32.mrf.mxu0
    %v7539 = vadd.f32 %v247, %v7538
    %v7540 = vpop.f32.mrf.mxu0
    %7541 = vmatprep.mubr.f32.mxu0 0.0
    %7542 = vmatmul.mubr.f32.gmra.mxu0 %v7459
    %v7543 = vpop.f32.mrf.mxu0
    %v7544 = vadd.f32 %v248, %v7543
    %v7545 = vpop.f32.mrf.mxu0
    %7546 = vmatprep.mubr.f32.mxu0 0.0
    %7547 = vmatmul.mubr.f32.gmra.mxu0 %v7462
    %v7548 = vpop.f32.mrf.mxu0
    %v7549 = vadd.f32 %v249, %v7548
    %v7550 = vpop.f32.mrf.mxu0
    %7551 = vmatprep.mubr.f32.mxu0 0.0
    %7552 = vmatmul.mubr.f32.gmra.mxu0 %v7465
    %v7553 = vpop.f32.mrf.mxu0
    %v7554 = vadd.f32 %v250, %v7553
    %v7555 = vpop.f32.mrf.mxu0
    %7556 = vdwg.mxu0
    %v7557 = vsel %vm794, %v7534, -inf
    %7558 = vmax.xlane.f32.xlu0 %v7557
    %v7559 = vpop.xlane.xlu0 %7558
    %v7560 = vsel %vm794, %v7539, -inf
    %7561 = vmax.xlane.f32.xlu0 %v7560
    %v7562 = vpop.xlane.xlu0 %7561
    %v7563 = vsel %vm794, %v7544, -inf
    %7564 = vmax.xlane.f32.xlu0 %v7563
    %v7565 = vpop.xlane.xlu0 %7564
    %v7566 = vsel %vm794, %v7549, -inf
    %7567 = vmax.xlane.f32.xlu0 %v7566
    %v7568 = vpop.xlane.xlu0 %7567
    %v7569 = vsel %vm794, %v7554, -inf
    %7570 = vmax.xlane.f32.xlu0 %v7569
    %v7571 = vpop.xlane.xlu0 %7570
    %v7572 = vsub.f32 %v7534, %v7559
    %v7573 = vsub.f32 %v7539, %v7562
    %v7574 = vsub.f32 %v7544, %v7565
    %v7575 = vsub.f32 %v7549, %v7568
    %v7576 = vsub.f32 %v7554, %v7571
    %v7577 = vmul.f32 %v7572, 1.442695
    %v7578 = vpow.pop %v7577
    %v7579 = vmul.f32 %v7573, 1.442695
    %v7580 = vpow.pop %v7579
    %v7581 = vmul.f32 %v7574, 1.442695
    %v7582 = vpow.pop %v7581
    %v7583 = vmul.f32 %v7575, 1.442695
    %v7584 = vpow.pop %v7583
    %v7585 = vmul.f32 %v7576, 1.442695
    %v7586 = vpow.pop %v7585
    %v7587 = vsel %vm794, %v7578, 0.0
    %7588 = vadd.xlane.f32.xlu0 %v7587
    %v7589 = vpop.xlane.xlu0 %7588
    %v7590 = vsel %vm794, %v7580, 0.0
    %7591 = vadd.xlane.f32.xlu0 %v7590
    %v7592 = vpop.xlane.xlu0 %7591
    %v7593 = vsel %vm794, %v7582, 0.0
    %7594 = vadd.xlane.f32.xlu0 %v7593
    %v7595 = vpop.xlane.xlu0 %7594
    %v7596 = vsel %vm794, %v7584, 0.0
    %7597 = vadd.xlane.f32.xlu0 %v7596
    %v7598 = vpop.xlane.xlu0 %7597
    %v7599 = vsel %vm794, %v7586, 0.0
    %7600 = vadd.xlane.f32.xlu0 %v7599
    %v7601 = vpop.xlane.xlu0 %7600
    %v7602 = vrcp.pop %v7589
    %v7603 = vrcp.pop %v7592
    %v7604 = vrcp.pop %v7595
    %v7605 = vrcp.pop %v7598
    %v7606 = vrcp.pop %v7601
    %v7607 = vmul.f32 %v7578, %v7602
    %v7608 = vmul.f32 %v7580, %v7603
    %v7609 = vmul.f32 %v7582, %v7604
    %v7610 = vmul.f32 %v7584, %v7605
    %v7611 = vmul.f32 %v7586, %v7606
    %v7612 = vmul.f32 %v6859, %v1244
    %v7613 = vmul.f32 %v6864, %v1244
    %v7614 = vmul.f32 %v6869, %v1244
    %v7615 = vmul.f32 %v6874, %v1244
    %v7616 = vmul.f32 %v6879, %v1244
    %v7618 = vsel %vm794, %v7607, 0
    %v7621 = vsel %vm794, %v7608, 0
    %v7624 = vsel %vm794, %v7609, 0
    %v7627 = vsel %vm794, %v7610, 0
    %v7630 = vsel %vm794, %v7611, 0
    %7632 = vmatprep.subr.mxu0 0.0
    %7633 = vmatpush1.msra.mxu0 0.0
    %7634 = vmatprep.subr.mxu0 0.0
    %7635 = vmatpush1.msra.mxu0 0.0
    %7636 = vmatprep.subr.mxu0 0.0
    %7637 = vmatpush1.msra.mxu0 0.0
    %7638 = vmatprep.subr.mxu0 0.0
    %7639 = vmatpush1.msra.mxu0 0.0
    %7640 = vmatprep.subr.mxu0 0.0
    %7641 = vmatpush1.msra.mxu0 0.0
    %7642 = vmatprep.subr.mxu0 0.0
    %7643 = vmatpush1.msra.mxu0 0.0
    %7644 = vmatprep.subr.mxu0 0.0
    %7645 = vmatpush1.msra.mxu0 0.0
    %7646 = vmatprep.subr.mxu0 0.0
    %7647 = vmatpush1.msra.mxu0 0.0
    %7648 = vmatprep.subr.mxu0 0.0
    %7649 = vmatpush1.msra.mxu0 0.0
    %7650 = vmatprep.subr.mxu0 0.0
    %7651 = vmatpush1.msra.mxu0 0.0
    %7652 = vmatprep.subr.mxu0 0.0
    %7653 = vmatpush1.msra.mxu0 0.0
    %7654 = vmatprep.subr.mxu0 0.0
    %7655 = vmatpush1.msra.mxu0 %v7616
    %7656 = vmatprep.subr.mxu0 0.0
    %7657 = vmatpush1.msra.mxu0 %v7615
    %7658 = vmatprep.subr.mxu0 0.0
    %7659 = vmatpush1.msra.mxu0 %v7614
    %7660 = vmatprep.subr.mxu0 0.0
    %7661 = vmatpush1.msra.mxu0 %v7613
    %7662 = vmatprep.subr.mxu0 0.0
    %7663 = vmatpush1.msra.mxu0 %v7612
    %7664 = vmatprep.subr.mxu0 0.0
    %7665 = vmatpush2.msra.mxu0 0.0
    %7666 = vmatprep.subr.mxu0 0.0
    %7667 = vmatpush2.msra.mxu0 0.0
    %7668 = vmatprep.subr.mxu0 0.0
    %7669 = vmatpush2.msra.mxu0 0.0
    %7670 = vmatprep.subr.mxu0 0.0
    %7671 = vmatpush2.msra.mxu0 0.0
    %7672 = vmatprep.subr.mxu0 0.0
    %7673 = vmatpush2.msra.mxu0 0.0
    %7674 = vmatprep.subr.mxu0 0.0
    %7675 = vmatpush2.msra.mxu0 0.0
    %7676 = vmatprep.subr.mxu0 0.0
    %7677 = vmatpush2.msra.mxu0 0.0
    %7678 = vmatprep.subr.mxu0 0.0
    %7679 = vmatpush2.msra.mxu0 0.0
    %7680 = vmatprep.subr.mxu0 0.0
    %7681 = vmatpush2.msra.mxu0 0.0
    %7682 = vmatprep.subr.mxu0 0.0
    %7683 = vmatpush2.msra.mxu0 0.0
    %7684 = vmatprep.subr.mxu0 0.0
    %7685 = vmatpush2.msra.mxu0 0.0
    %7686 = vmatprep.subr.mxu0 0.0
    %7687 = vmatpush2.msra.mxu0 0.0
    %7688 = vmatprep.subr.mxu0 0.0
    %7689 = vmatpush2.msra.mxu0 0.0
    %7690 = vmatprep.subr.mxu0 0.0
    %7691 = vmatpush2.msra.mxu0 0.0
    %7692 = vmatprep.subr.mxu0 0.0
    %7693 = vmatpush2.msra.mxu0 0.0
    %7694 = vmatprep.subr.mxu0 0.0
    %7695 = vmatpush2.msra.mxu0 0.0
    %7696 = vmatprep.mubr.f32.mxu0 0.0
    %7697 = vmatmul.mubr.f32.gmra.mxu0 %v7618
    %v7698 = vpop.f32.mrf.mxu0
    %v7699 = vadd.f32 0.0, %v7698
    %v7700 = vpop.f32.mrf.mxu0
    %7701 = vmatprep.mubr.f32.mxu0 0.0
    %7702 = vmatmul.mubr.f32.gmra.mxu0 %v7621
    %v7703 = vpop.f32.mrf.mxu0
    %v7704 = vadd.f32 0.0, %v7703
    %v7705 = vpop.f32.mrf.mxu0
    %7706 = vmatprep.mubr.f32.mxu0 0.0
    %7707 = vmatmul.mubr.f32.gmra.mxu0 %v7624
    %v7708 = vpop.f32.mrf.mxu0
    %v7709 = vadd.f32 0.0, %v7708
    %v7710 = vpop.f32.mrf.mxu0
    %7711 = vmatprep.mubr.f32.mxu0 0.0
    %7712 = vmatmul.mubr.f32.gmra.mxu0 %v7627
    %v7713 = vpop.f32.mrf.mxu0
    %v7714 = vadd.f32 0.0, %v7713
    %v7715 = vpop.f32.mrf.mxu0
    %7716 = vmatprep.mubr.f32.mxu0 0.0
    %7717 = vmatmul.mubr.f32.gmra.mxu0 %v7630
    %v7718 = vpop.f32.mrf.mxu0
    %v7719 = vadd.f32 0.0, %v7718
    %v7720 = vpop.f32.mrf.mxu0
    %7721 = vdwg.mxu0
    %v7722 = vadd.f32 %v7424, %v7699
    %v7723 = vadd.f32 %v7429, %v7704
    %v7724 = vadd.f32 %v7434, %v7709
    %v7725 = vadd.f32 %v7439, %v7714
    %v7726 = vadd.f32 %v7444, %v7719
    %v7727 = vmul.f32 %v6653, %v1529
    %v7728 = vmul.f32 %v6658, %v1529
    %v7729 = vmul.f32 %v6663, %v1529
    %v7730 = vmul.f32 %v6668, %v1529
    %v7731 = vmul.f32 %v6673, %v1529
    %v7733 = vsel %vm257, %v7727, 0
    %v7736 = vsel %vm257, %v7728, 0
    %v7739 = vsel %vm257, %v7729, 0
    %v7742 = vsel %vm257, %v7730, 0
    %v7745 = vsel %vm257, %v7731, 0
    %7747 = vmatprep.subr.mxu0 0.0
    %7748 = vmatpush1.xpose.msra.mxu0 0.0
    %7749 = vmatprep.subr.mxu0 0.0
    %7750 = vmatpush1.xpose.msra.mxu0 0.0
    %7751 = vmatprep.subr.mxu0 0.0
    %7752 = vmatpush1.xpose.msra.mxu0 0.0
    %7753 = vmatprep.subr.mxu0 0.0
    %7754 = vmatpush1.xpose.msra.mxu0 0.0
    %7755 = vmatprep.subr.mxu0 0.0
    %7756 = vmatpush1.xpose.msra.mxu0 0.0
    %7757 = vmatprep.subr.mxu0 0.0
    %7758 = vmatpush1.xpose.msra.mxu0 0.0
    %7759 = vmatprep.subr.mxu0 0.0
    %7760 = vmatpush1.xpose.msra.mxu0 0.0
    %7761 = vmatprep.subr.mxu0 0.0
    %7762 = vmatpush1.xpose.msra.mxu0 0.0
    %7763 = vmatprep.subr.mxu0 0.0
    %7764 = vmatpush1.xpose.msra.mxu0 0.0
    %7765 = vmatprep.subr.mxu0 0.0
    %7766 = vmatpush1.xpose.msra.mxu0 0.0
    %7767 = vmatprep.subr.mxu0 0.0
    %7768 = vmatpush1.xpose.msra.mxu0 0.0
    %7769 = vmatprep.subr.mxu0 0.0
    %7770 = vmatpush1.xpose.msra.mxu0 %v6915
    %7771 = vmatprep.subr.mxu0 0.0
    %7772 = vmatpush1.xpose.msra.mxu0 %v6912
    %7773 = vmatprep.subr.mxu0 0.0
    %7774 = vmatpush1.xpose.msra.mxu0 %v6909
    %7775 = vmatprep.subr.mxu0 0.0
    %7776 = vmatpush1.xpose.msra.mxu0 %v6906
    %7777 = vmatprep.subr.mxu0 0.0
    %7778 = vmatpush1.xpose.msra.mxu0 %v6903
    %7779 = vmatprep.subr.mxu0 0.0
    %7780 = vmatpush2.xpose.msra.mxu0 0.0
    %7781 = vmatprep.subr.mxu0 0.0
    %7782 = vmatpush2.xpose.msra.mxu0 0.0
    %7783 = vmatprep.subr.mxu0 0.0
    %7784 = vmatpush2.xpose.msra.mxu0 0.0
    %7785 = vmatprep.subr.mxu0 0.0
    %7786 = vmatpush2.xpose.msra.mxu0 0.0
    %7787 = vmatprep.subr.mxu0 0.0
    %7788 = vmatpush2.xpose.msra.mxu0 0.0
    %7789 = vmatprep.subr.mxu0 0.0
    %7790 = vmatpush2.xpose.msra.mxu0 0.0
    %7791 = vmatprep.subr.mxu0 0.0
    %7792 = vmatpush2.xpose.msra.mxu0 0.0
    %7793 = vmatprep.subr.mxu0 0.0
    %7794 = vmatpush2.xpose.msra.mxu0 0.0
    %7795 = vmatprep.subr.mxu0 0.0
    %7796 = vmatpush2.xpose.msra.mxu0 0.0
    %7797 = vmatprep.subr.mxu0 0.0
    %7798 = vmatpush2.xpose.msra.mxu0 0.0
    %7799 = vmatprep.subr.mxu0 0.0
    %7800 = vmatpush2.xpose.msra.mxu0 0.0
    %7801 = vmatprep.subr.mxu0 0.0
    %7802 = vmatpush2.xpose.msra.mxu0 0.0
    %7803 = vmatprep.subr.mxu0 0.0
    %7804 = vmatpush2.xpose.msra.mxu0 0.0
    %7805 = vmatprep.subr.mxu0 0.0
    %7806 = vmatpush2.xpose.msra.mxu0 0.0
    %7807 = vmatprep.subr.mxu0 0.0
    %7808 = vmatpush2.xpose.msra.mxu0 0.0
    %7809 = vmatprep.subr.mxu0 0.0
    %7810 = vmatpush2.xpose.msra.mxu0 0.0
    %7811 = vmatprep.mubr.f32.mxu0 0.0
    %7812 = vmatmul.mubr.f32.gmra.mxu0 %v7733
    %v7813 = vpop.f32.mrf.mxu0
    %v7814 = vadd.f32 %v246, %v7813
    %v7815 = vpop.f32.mrf.mxu0
    %7816 = vmatprep.mubr.f32.mxu0 0.0
    %7817 = vmatmul.mubr.f32.gmra.mxu0 %v7736
    %v7818 = vpop.f32.mrf.mxu0
    %v7819 = vadd.f32 %v247, %v7818
    %v7820 = vpop.f32.mrf.mxu0
    %7821 = vmatprep.mubr.f32.mxu0 0.0
    %7822 = vmatmul.mubr.f32.gmra.mxu0 %v7739
    %v7823 = vpop.f32.mrf.mxu0
    %v7824 = vadd.f32 %v248, %v7823
    %v7825 = vpop.f32.mrf.mxu0
    %7826 = vmatprep.mubr.f32.mxu0 0.0
    %7827 = vmatmul.mubr.f32.gmra.mxu0 %v7742
    %v7828 = vpop.f32.mrf.mxu0
    %v7829 = vadd.f32 %v249, %v7828
    %v7830 = vpop.f32.mrf.mxu0
    %7831 = vmatprep.mubr.f32.mxu0 0.0
    %7832 = vmatmul.mubr.f32.gmra.mxu0 %v7745
    %v7833 = vpop.f32.mrf.mxu0
    %v7834 = vadd.f32 %v250, %v7833
    %v7835 = vpop.f32.mrf.mxu0
    %7836 = vdwg.mxu0
    %v7837 = vsel %vm794, %v7814, -inf
    %7838 = vmax.xlane.f32.xlu0 %v7837
    %v7839 = vpop.xlane.xlu0 %7838
    %v7840 = vsel %vm794, %v7819, -inf
    %7841 = vmax.xlane.f32.xlu0 %v7840
    %v7842 = vpop.xlane.xlu0 %7841
    %v7843 = vsel %vm794, %v7824, -inf
    %7844 = vmax.xlane.f32.xlu0 %v7843
    %v7845 = vpop.xlane.xlu0 %7844
    %v7846 = vsel %vm794, %v7829, -inf
    %7847 = vmax.xlane.f32.xlu0 %v7846
    %v7848 = vpop.xlane.xlu0 %7847
    %v7849 = vsel %vm794, %v7834, -inf
    %7850 = vmax.xlane.f32.xlu0 %v7849
    %v7851 = vpop.xlane.xlu0 %7850
    %v7852 = vsub.f32 %v7814, %v7839
    %v7853 = vsub.f32 %v7819, %v7842
    %v7854 = vsub.f32 %v7824, %v7845
    %v7855 = vsub.f32 %v7829, %v7848
    %v7856 = vsub.f32 %v7834, %v7851
    %v7857 = vmul.f32 %v7852, 1.442695
    %v7858 = vpow.pop %v7857
    %v7859 = vmul.f32 %v7853, 1.442695
    %v7860 = vpow.pop %v7859
    %v7861 = vmul.f32 %v7854, 1.442695
    %v7862 = vpow.pop %v7861
    %v7863 = vmul.f32 %v7855, 1.442695
    %v7864 = vpow.pop %v7863
    %v7865 = vmul.f32 %v7856, 1.442695
    %v7866 = vpow.pop %v7865
    %v7867 = vsel %vm794, %v7858, 0.0
    %7868 = vadd.xlane.f32.xlu0 %v7867
    %v7869 = vpop.xlane.xlu0 %7868
    %v7870 = vsel %vm794, %v7860, 0.0
    %7871 = vadd.xlane.f32.xlu0 %v7870
    %v7872 = vpop.xlane.xlu0 %7871
    %v7873 = vsel %vm794, %v7862, 0.0
    %7874 = vadd.xlane.f32.xlu0 %v7873
    %v7875 = vpop.xlane.xlu0 %7874
    %v7876 = vsel %vm794, %v7864, 0.0
    %7877 = vadd.xlane.f32.xlu0 %v7876
    %v7878 = vpop.xlane.xlu0 %7877
    %v7879 = vsel %vm794, %v7866, 0.0
    %7880 = vadd.xlane.f32.xlu0 %v7879
    %v7881 = vpop.xlane.xlu0 %7880
    %v7882 = vrcp.pop %v7869
    %v7883 = vrcp.pop %v7872
    %v7884 = vrcp.pop %v7875
    %v7885 = vrcp.pop %v7878
    %v7886 = vrcp.pop %v7881
    %v7887 = vmul.f32 %v7858, %v7882
    %v7888 = vmul.f32 %v7860, %v7883
    %v7889 = vmul.f32 %v7862, %v7884
    %v7890 = vmul.f32 %v7864, %v7885
    %v7891 = vmul.f32 %v7866, %v7886
    %v7892 = vmul.f32 %v6859, %v1529
    %v7893 = vmul.f32 %v6864, %v1529
    %v7894 = vmul.f32 %v6869, %v1529
    %v7895 = vmul.f32 %v6874, %v1529
    %v7896 = vmul.f32 %v6879, %v1529
    %v7898 = vsel %vm794, %v7887, 0
    %v7901 = vsel %vm794, %v7888, 0
    %v7904 = vsel %vm794, %v7889, 0
    %v7907 = vsel %vm794, %v7890, 0
    %v7910 = vsel %vm794, %v7891, 0
    %7912 = vmatprep.subr.mxu0 0.0
    %7913 = vmatpush1.msra.mxu0 0.0
    %7914 = vmatprep.subr.mxu0 0.0
    %7915 = vmatpush1.msra.mxu0 0.0
    %7916 = vmatprep.subr.mxu0 0.0
    %7917 = vmatpush1.msra.mxu0 0.0
    %7918 = vmatprep.subr.mxu0 0.0
    %7919 = vmatpush1.msra.mxu0 0.0
    %7920 = vmatprep.subr.mxu0 0.0
    %7921 = vmatpush1.msra.mxu0 0.0
    %7922 = vmatprep.subr.mxu0 0.0
    %7923 = vmatpush1.msra.mxu0 0.0
    %7924 = vmatprep.subr.mxu0 0.0
    %7925 = vmatpush1.msra.mxu0 0.0
    %7926 = vmatprep.subr.mxu0 0.0
    %7927 = vmatpush1.msra.mxu0 0.0
    %7928 = vmatprep.subr.mxu0 0.0
    %7929 = vmatpush1.msra.mxu0 0.0
    %7930 = vmatprep.subr.mxu0 0.0
    %7931 = vmatpush1.msra.mxu0 0.0
    %7932 = vmatprep.subr.mxu0 0.0
    %7933 = vmatpush1.msra.mxu0 0.0
    %7934 = vmatprep.subr.mxu0 0.0
    %7935 = vmatpush1.msra.mxu0 %v7896
    %7936 = vmatprep.subr.mxu0 0.0
    %7937 = vmatpush1.msra.mxu0 %v7895
    %7938 = vmatprep.subr.mxu0 0.0
    %7939 = vmatpush1.msra.mxu0 %v7894
    %7940 = vmatprep.subr.mxu0 0.0
    %7941 = vmatpush1.msra.mxu0 %v7893
    %7942 = vmatprep.subr.mxu0 0.0
    %7943 = vmatpush1.msra.mxu0 %v7892
    %7944 = vmatprep.subr.mxu0 0.0
    %7945 = vmatpush2.msra.mxu0 0.0
    %7946 = vmatprep.subr.mxu0 0.0
    %7947 = vmatpush2.msra.mxu0 0.0
    %7948 = vmatprep.subr.mxu0 0.0
    %7949 = vmatpush2.msra.mxu0 0.0
    %7950 = vmatprep.subr.mxu0 0.0
    %7951 = vmatpush2.msra.mxu0 0.0
    %7952 = vmatprep.subr.mxu0 0.0
    %7953 = vmatpush2.msra.mxu0 0.0
    %7954 = vmatprep.subr.mxu0 0.0
    %7955 = vmatpush2.msra.mxu0 0.0
    %7956 = vmatprep.subr.mxu0 0.0
    %7957 = vmatpush2.msra.mxu0 0.0
    %7958 = vmatprep.subr.mxu0 0.0
    %7959 = vmatpush2.msra.mxu0 0.0
    %7960 = vmatprep.subr.mxu0 0.0
    %7961 = vmatpush2.msra.mxu0 0.0
    %7962 = vmatprep.subr.mxu0 0.0
    %7963 = vmatpush2.msra.mxu0 0.0
    %7964 = vmatprep.subr.mxu0 0.0
    %7965 = vmatpush2.msra.mxu0 0.0
    %7966 = vmatprep.subr.mxu0 0.0
    %7967 = vmatpush2.msra.mxu0 0.0
    %7968 = vmatprep.subr.mxu0 0.0
    %7969 = vmatpush2.msra.mxu0 0.0
    %7970 = vmatprep.subr.mxu0 0.0
    %7971 = vmatpush2.msra.mxu0 0.0
    %7972 = vmatprep.subr.mxu0 0.0
    %7973 = vmatpush2.msra.mxu0 0.0
    %7974 = vmatprep.subr.mxu0 0.0
    %7975 = vmatpush2.msra.mxu0 0.0
    %7976 = vmatprep.mubr.f32.mxu0 0.0
    %7977 = vmatmul.mubr.f32.gmra.mxu0 %v7898
    %v7978 = vpop.f32.mrf.mxu0
    %v7979 = vadd.f32 0.0, %v7978
    %v7980 = vpop.f32.mrf.mxu0
    %7981 = vmatprep.mubr.f32.mxu0 0.0
    %7982 = vmatmul.mubr.f32.gmra.mxu0 %v7901
    %v7983 = vpop.f32.mrf.mxu0
    %v7984 = vadd.f32 0.0, %v7983
    %v7985 = vpop.f32.mrf.mxu0
    %7986 = vmatprep.mubr.f32.mxu0 0.0
    %7987 = vmatmul.mubr.f32.gmra.mxu0 %v7904
    %v7988 = vpop.f32.mrf.mxu0
    %v7989 = vadd.f32 0.0, %v7988
    %v7990 = vpop.f32.mrf.mxu0
    %7991 = vmatprep.mubr.f32.mxu0 0.0
    %7992 = vmatmul.mubr.f32.gmra.mxu0 %v7907
    %v7993 = vpop.f32.mrf.mxu0
    %v7994 = vadd.f32 0.0, %v7993
    %v7995 = vpop.f32.mrf.mxu0
    %7996 = vmatprep.mubr.f32.mxu0 0.0
    %7997 = vmatmul.mubr.f32.gmra.mxu0 %v7910
    %v7998 = vpop.f32.mrf.mxu0
    %v7999 = vadd.f32 0.0, %v7998
    %v8000 = vpop.f32.mrf.mxu0
    %8001 = vdwg.mxu0
    %v8002 = vadd.f32 %v7722, %v7979
    %v8003 = vadd.f32 %v7723, %v7984
    %v8004 = vadd.f32 %v7724, %v7989
    %v8005 = vadd.f32 %v7725, %v7994
    %v8006 = vadd.f32 %v7726, %v7999
    %s8007 = scalar_lea.vmem %s25, 96
    %v8008 = vld [vmem:[%s8007] sm:$0xff]
    %v8009 = vld [vmem:[%s8007 + $0x8] sm:$0xff]
    %v8010 = vld [vmem:[%s8007 + $0x10] sm:$0xff]
    %v8011 = vld [vmem:[%s8007 + $0x18] sm:$0xff]
    %v8013 = vsel %vm257, %v8002, 0
    %v8016 = vsel %vm257, %v8003, 0
    %v8019 = vsel %vm257, %v8004, 0
    %v8022 = vsel %vm257, %v8005, 0
    %v8025 = vsel %vm257, %v8006, 0
    %8027 = vmatprep.subr.mxu0 0.0
    %8028 = vmatpush1.msra.mxu0 0.0
    %8029 = vmatprep.subr.mxu0 0.0
    %8030 = vmatpush1.msra.mxu0 0.0
    %8031 = vmatprep.subr.mxu0 0.0
    %8032 = vmatpush1.msra.mxu0 0.0
    %8033 = vmatprep.subr.mxu0 0.0
    %8034 = vmatpush1.msra.mxu0 0.0
    %8035 = vmatprep.subr.mxu0 0.0
    %8036 = vmatpush1.msra.mxu0 0.0
    %8037 = vmatprep.subr.mxu0 0.0
    %8038 = vmatpush1.msra.mxu0 0.0
    %8039 = vmatprep.subr.mxu0 0.0
    %8040 = vmatpush1.msra.mxu0 0.0
    %8041 = vmatprep.subr.mxu0 0.0
    %8042 = vmatpush1.msra.mxu0 0.0
    %8043 = vmatprep.subr.mxu0 0.0
    %8044 = vmatpush1.msra.mxu0 0.0
    %8045 = vmatprep.subr.mxu0 0.0
    %8046 = vmatpush1.msra.mxu0 0.0
    %8047 = vmatprep.subr.mxu0 0.0
    %8048 = vmatpush1.msra.mxu0 0.0
    %8049 = vmatprep.subr.mxu0 0.0
    %8050 = vmatpush1.msra.mxu0 0.0
    %8051 = vmatprep.subr.mxu0 0.0
    %8052 = vmatpush1.msra.mxu0 %v8011
    %8053 = vmatprep.subr.mxu0 0.0
    %8054 = vmatpush1.msra.mxu0 %v8010
    %8055 = vmatprep.subr.mxu0 0.0
    %8056 = vmatpush1.msra.mxu0 %v8009
    %8057 = vmatprep.subr.mxu0 0.0
    %8058 = vmatpush1.msra.mxu0 %v8008
    %8059 = vmatprep.subr.mxu0 0.0
    %8060 = vmatpush2.msra.mxu0 0.0
    %8061 = vmatprep.subr.mxu0 0.0
    %8062 = vmatpush2.msra.mxu0 0.0
    %8063 = vmatprep.subr.mxu0 0.0
    %8064 = vmatpush2.msra.mxu0 0.0
    %8065 = vmatprep.subr.mxu0 0.0
    %8066 = vmatpush2.msra.mxu0 0.0
    %8067 = vmatprep.subr.mxu0 0.0
    %8068 = vmatpush2.msra.mxu0 0.0
    %8069 = vmatprep.subr.mxu0 0.0
    %8070 = vmatpush2.msra.mxu0 0.0
    %8071 = vmatprep.subr.mxu0 0.0
    %8072 = vmatpush2.msra.mxu0 0.0
    %8073 = vmatprep.subr.mxu0 0.0
    %8074 = vmatpush2.msra.mxu0 0.0
    %8075 = vmatprep.subr.mxu0 0.0
    %8076 = vmatpush2.msra.mxu0 0.0
    %8077 = vmatprep.subr.mxu0 0.0
    %8078 = vmatpush2.msra.mxu0 0.0
    %8079 = vmatprep.subr.mxu0 0.0
    %8080 = vmatpush2.msra.mxu0 0.0
    %8081 = vmatprep.subr.mxu0 0.0
    %8082 = vmatpush2.msra.mxu0 0.0
    %8083 = vmatprep.subr.mxu0 0.0
    %8084 = vmatpush2.msra.mxu0 0.0
    %8085 = vmatprep.subr.mxu0 0.0
    %8086 = vmatpush2.msra.mxu0 0.0
    %8087 = vmatprep.subr.mxu0 0.0
    %8088 = vmatpush2.msra.mxu0 0.0
    %8089 = vmatprep.subr.mxu0 0.0
    %8090 = vmatpush2.msra.mxu0 0.0
    %8091 = vmatprep.mubr.f32.mxu0 0.0
    %8092 = vmatmul.mubr.f32.gmra.mxu0 %v8013
    %v8093 = vpop.f32.mrf.mxu0
    %v8094 = vadd.f32 0.0, %v8093
    %v8095 = vpop.f32.mrf.mxu0
    %8096 = vmatprep.mubr.f32.mxu0 0.0
    %8097 = vmatmul.mubr.f32.gmra.mxu0 %v8016
    %v8098 = vpop.f32.mrf.mxu0
    %v8099 = vadd.f32 0.0, %v8098
    %v8100 = vpop.f32.mrf.mxu0
    %8101 = vmatprep.mubr.f32.mxu0 0.0
    %8102 = vmatmul.mubr.f32.gmra.mxu0 %v8019
    %v8103 = vpop.f32.mrf.mxu0
    %v8104 = vadd.f32 0.0, %v8103
    %v8105 = vpop.f32.mrf.mxu0
    %8106 = vmatprep.mubr.f32.mxu0 0.0
    %8107 = vmatmul.mubr.f32.gmra.mxu0 %v8022
    %v8108 = vpop.f32.mrf.mxu0
    %v8109 = vadd.f32 0.0, %v8108
    %v8110 = vpop.f32.mrf.mxu0
    %8111 = vmatprep.mubr.f32.mxu0 0.0
    %8112 = vmatmul.mubr.f32.gmra.mxu0 %v8025
    %v8113 = vpop.f32.mrf.mxu0
    %v8114 = vadd.f32 0.0, %v8113
    %v8115 = vpop.f32.mrf.mxu0
    %8116 = vdwg.mxu0
    %v8117 = vadd.f32 %v6452, %v8094
    %v8118 = vadd.f32 %v6453, %v8099
    %v8119 = vadd.f32 %v6454, %v8104
    %v8120 = vadd.f32 %v6455, %v8109
    %v8121 = vadd.f32 %v6456, %v8114
    %s8122 = scalar_lea.vmem %s27, 3
    %v8123 = vld [vmem:[%s8122] sm:$0x1]
    %v8125 = vlaneseq
    %v8126 = vshrl.u32 %v8125, 7
    %v8127 = vsub.s32 0, %v8126
    %v8128 = vrot.slane %v8123, %v8127
    %v8130 = vadd.f32 %v8117, %v8128
    %v8131 = vadd.f32 %v8118, %v8128
    %v8132 = vadd.f32 %v8119, %v8128
    %v8133 = vadd.f32 %v8120, %v8128
    %v8134 = vadd.f32 %v8121, %v8128
    %s8135 = scalar_lea.vmem %s29, 3
    %v8136 = vld [vmem:[%s8135] sm:$0x1]
    %s8137 = scalar_lea.vmem %s31, 3
    %v8138 = vld [vmem:[%s8137] sm:$0x1]
    %v8139 = vsel %vm257, %v8130, 0.0
    %8140 = vadd.xlane.f32.xlu0 %v8139
    %v8141 = vpop.xlane.xlu0 %8140
    %v8142 = vsel %vm257, %v8131, 0.0
    %8143 = vadd.xlane.f32.xlu0 %v8142
    %v8144 = vpop.xlane.xlu0 %8143
    %v8145 = vsel %vm257, %v8132, 0.0
    %8146 = vadd.xlane.f32.xlu0 %v8145
    %v8147 = vpop.xlane.xlu0 %8146
    %v8148 = vsel %vm257, %v8133, 0.0
    %8149 = vadd.xlane.f32.xlu0 %v8148
    %v8150 = vpop.xlane.xlu0 %8149
    %v8151 = vsel %vm257, %v8134, 0.0
    %8152 = vadd.xlane.f32.xlu0 %v8151
    %v8153 = vpop.xlane.xlu0 %8152
    %v8154 = vmul.f32 %v8141, %v273
    %v8155 = vmul.f32 %v8144, %v273
    %v8156 = vmul.f32 %v8147, %v273
    %v8157 = vmul.f32 %v8150, %v273
    %v8158 = vmul.f32 %v8153, %v273
    %v8159 = vsub.f32 %v8130, %v8154
    %v8160 = vsub.f32 %v8131, %v8155
    %v8161 = vsub.f32 %v8132, %v8156
    %v8162 = vsub.f32 %v8133, %v8157
    %v8163 = vsub.f32 %v8134, %v8158
    %v8164 = vmul.f32 %v8159, %v8159
    %v8165 = vmul.f32 %v8160, %v8160
    %v8166 = vmul.f32 %v8161, %v8161
    %v8167 = vmul.f32 %v8162, %v8162
    %v8168 = vmul.f32 %v8163, %v8163
    %v8169 = vsel %vm257, %v8164, 0.0
    %8170 = vadd.xlane.f32.xlu0 %v8169
    %v8171 = vpop.xlane.xlu0 %8170
    %v8172 = vsel %vm257, %v8165, 0.0
    %8173 = vadd.xlane.f32.xlu0 %v8172
    %v8174 = vpop.xlane.xlu0 %8173
    %v8175 = vsel %vm257, %v8166, 0.0
    %8176 = vadd.xlane.f32.xlu0 %v8175
    %v8177 = vpop.xlane.xlu0 %8176
    %v8178 = vsel %vm257, %v8167, 0.0
    %8179 = vadd.xlane.f32.xlu0 %v8178
    %v8180 = vpop.xlane.xlu0 %8179
    %v8181 = vsel %vm257, %v8168, 0.0
    %8182 = vadd.xlane.f32.xlu0 %v8181
    %v8183 = vpop.xlane.xlu0 %8182
    %v8184 = vmul.f32 %v8171, %v273
    %v8185 = vmul.f32 %v8174, %v273
    %v8186 = vmul.f32 %v8177, %v273
    %v8187 = vmul.f32 %v8180, %v273
    %v8188 = vmul.f32 %v8183, %v273
    %v8189 = vadd.f32 %v8184, 1e-06
    %v8190 = vadd.f32 %v8185, 1e-06
    %v8191 = vadd.f32 %v8186, 1e-06
    %v8192 = vadd.f32 %v8187, 1e-06
    %v8193 = vadd.f32 %v8188, 1e-06
    %v8194 = vrsqrt.pop %v8189
    %v8195 = vrsqrt.pop %v8190
    %v8196 = vrsqrt.pop %v8191
    %v8197 = vrsqrt.pop %v8192
    %v8198 = vrsqrt.pop %v8193
    %v8199 = vmul.f32 %v8159, %v8194
    %v8200 = vmul.f32 %v8160, %v8195
    %v8201 = vmul.f32 %v8161, %v8196
    %v8202 = vmul.f32 %v8162, %v8197
    %v8203 = vmul.f32 %v8163, %v8198
    %v8205 = vlaneseq
    %v8206 = vshrl.u32 %v8205, 7
    %v8207 = vsub.s32 0, %v8206
    %v8208 = vrot.slane %v8136, %v8207
    %v8210 = vmul.f32 %v8199, %v8208
    %v8211 = vmul.f32 %v8200, %v8208
    %v8212 = vmul.f32 %v8201, %v8208
    %v8213 = vmul.f32 %v8202, %v8208
    %v8214 = vmul.f32 %v8203, %v8208
    %v8216 = vlaneseq
    %v8217 = vshrl.u32 %v8216, 7
    %v8218 = vsub.s32 0, %v8217
    %v8219 = vrot.slane %v8138, %v8218
    %v8221 = vadd.f32 %v8210, %v8219
    %v8222 = vadd.f32 %v8211, %v8219
    %v8223 = vadd.f32 %v8212, %v8219
    %v8224 = vadd.f32 %v8213, %v8219
    %v8225 = vadd.f32 %v8214, %v8219
    %s8226 = scalar_lea.vmem %s33, 96
    %v8227 = vld [vmem:[%s8226] sm:$0xff]
    %v8228 = vld [vmem:[%s8226 + $0x8] sm:$0xff]
    %v8229 = vld [vmem:[%s8226 + $0x10] sm:$0xff]
    %v8230 = vld [vmem:[%s8226 + $0x18] sm:$0xff]
    %s8231 = scalar_lea.vmem %s35, 3
    %v8232 = vld [vmem:[%s8231] sm:$0x1]
    %v8234 = vlaneseq
    %v8235 = vshrl.u32 %v8234, 7
    %v8236 = vsub.s32 0, %v8235
    %v8237 = vrot.slane %v8232, %v8236
    %v8240 = vsel %vm257, %v8221, 0
    %v8243 = vsel %vm257, %v8222, 0
    %v8246 = vsel %vm257, %v8223, 0
    %v8249 = vsel %vm257, %v8224, 0
    %v8252 = vsel %vm257, %v8225, 0
    %8254 = vmatprep.subr.mxu0 0.0
    %8255 = vmatpush1.msra.mxu0 0.0
    %8256 = vmatprep.subr.mxu0 0.0
    %8257 = vmatpush1.msra.mxu0 0.0
    %8258 = vmatprep.subr.mxu0 0.0
    %8259 = vmatpush1.msra.mxu0 0.0
    %8260 = vmatprep.subr.mxu0 0.0
    %8261 = vmatpush1.msra.mxu0 0.0
    %8262 = vmatprep.subr.mxu0 0.0
    %8263 = vmatpush1.msra.mxu0 0.0
    %8264 = vmatprep.subr.mxu0 0.0
    %8265 = vmatpush1.msra.mxu0 0.0
    %8266 = vmatprep.subr.mxu0 0.0
    %8267 = vmatpush1.msra.mxu0 0.0
    %8268 = vmatprep.subr.mxu0 0.0
    %8269 = vmatpush1.msra.mxu0 0.0
    %8270 = vmatprep.subr.mxu0 0.0
    %8271 = vmatpush1.msra.mxu0 0.0
    %8272 = vmatprep.subr.mxu0 0.0
    %8273 = vmatpush1.msra.mxu0 0.0
    %8274 = vmatprep.subr.mxu0 0.0
    %8275 = vmatpush1.msra.mxu0 0.0
    %8276 = vmatprep.subr.mxu0 0.0
    %8277 = vmatpush1.msra.mxu0 0.0
    %8278 = vmatprep.subr.mxu0 0.0
    %8279 = vmatpush1.msra.mxu0 %v8230
    %8280 = vmatprep.subr.mxu0 0.0
    %8281 = vmatpush1.msra.mxu0 %v8229
    %8282 = vmatprep.subr.mxu0 0.0
    %8283 = vmatpush1.msra.mxu0 %v8228
    %8284 = vmatprep.subr.mxu0 0.0
    %8285 = vmatpush1.msra.mxu0 %v8227
    %8286 = vmatprep.subr.mxu0 0.0
    %8287 = vmatpush2.msra.mxu0 0.0
    %8288 = vmatprep.subr.mxu0 0.0
    %8289 = vmatpush2.msra.mxu0 0.0
    %8290 = vmatprep.subr.mxu0 0.0
    %8291 = vmatpush2.msra.mxu0 0.0
    %8292 = vmatprep.subr.mxu0 0.0
    %8293 = vmatpush2.msra.mxu0 0.0
    %8294 = vmatprep.subr.mxu0 0.0
    %8295 = vmatpush2.msra.mxu0 0.0
    %8296 = vmatprep.subr.mxu0 0.0
    %8297 = vmatpush2.msra.mxu0 0.0
    %8298 = vmatprep.subr.mxu0 0.0
    %8299 = vmatpush2.msra.mxu0 0.0
    %8300 = vmatprep.subr.mxu0 0.0
    %8301 = vmatpush2.msra.mxu0 0.0
    %8302 = vmatprep.subr.mxu0 0.0
    %8303 = vmatpush2.msra.mxu0 0.0
    %8304 = vmatprep.subr.mxu0 0.0
    %8305 = vmatpush2.msra.mxu0 0.0
    %8306 = vmatprep.subr.mxu0 0.0
    %8307 = vmatpush2.msra.mxu0 0.0
    %8308 = vmatprep.subr.mxu0 0.0
    %8309 = vmatpush2.msra.mxu0 0.0
    %8310 = vmatprep.subr.mxu0 0.0
    %8311 = vmatpush2.msra.mxu0 0.0
    %8312 = vmatprep.subr.mxu0 0.0
    %8313 = vmatpush2.msra.mxu0 0.0
    %8314 = vmatprep.subr.mxu0 0.0
    %8315 = vmatpush2.msra.mxu0 0.0
    %8316 = vmatprep.subr.mxu0 0.0
    %8317 = vmatpush2.msra.mxu0 0.0
    %8318 = vmatprep.mubr.f32.mxu0 0.0
    %8319 = vmatmul.mubr.f32.gmra.mxu0 %v8240
    %v8320 = vpop.f32.mrf.mxu0
    %v8321 = vadd.f32 %v8237, %v8320
    %v8322 = vpop.f32.mrf.mxu0
    %8323 = vmatprep.mubr.f32.mxu0 0.0
    %8324 = vmatmul.mubr.f32.gmra.mxu0 %v8243
    %v8325 = vpop.f32.mrf.mxu0
    %v8326 = vadd.f32 %v8237, %v8325
    %v8327 = vpop.f32.mrf.mxu0
    %8328 = vmatprep.mubr.f32.mxu0 0.0
    %8329 = vmatmul.mubr.f32.gmra.mxu0 %v8246
    %v8330 = vpop.f32.mrf.mxu0
    %v8331 = vadd.f32 %v8237, %v8330
    %v8332 = vpop.f32.mrf.mxu0
    %8333 = vmatprep.mubr.f32.mxu0 0.0
    %8334 = vmatmul.mubr.f32.gmra.mxu0 %v8249
    %v8335 = vpop.f32.mrf.mxu0
    %v8336 = vadd.f32 %v8237, %v8335
    %v8337 = vpop.f32.mrf.mxu0
    %8338 = vmatprep.mubr.f32.mxu0 0.0
    %8339 = vmatmul.mubr.f32.gmra.mxu0 %v8252
    %v8340 = vpop.f32.mrf.mxu0
    %v8341 = vadd.f32 %v8237, %v8340
    %v8342 = vpop.f32.mrf.mxu0
    %8343 = vdwg.mxu0
    %v8344 = vmul.f32 %v8321, %v8321
    %v8345 = vmul.f32 %v8326, %v8326
    %v8346 = vmul.f32 %v8331, %v8331
    %v8347 = vmul.f32 %v8336, %v8336
    %v8348 = vmul.f32 %v8341, %v8341
    %v8349 = vmul.f32 %v8321, %v8344
    %v8350 = vmul.f32 %v8326, %v8345
    %v8351 = vmul.f32 %v8331, %v8346
    %v8352 = vmul.f32 %v8336, %v8347
    %v8353 = vmul.f32 %v8341, %v8348
    %v8354 = vmul.f32 %v8349, 0.044715
    %v8355 = vmul.f32 %v8350, 0.044715
    %v8356 = vmul.f32 %v8351, 0.044715
    %v8357 = vmul.f32 %v8352, 0.044715
    %v8358 = vmul.f32 %v8353, 0.044715
    %v8359 = vadd.f32 %v8321, %v8354
    %v8360 = vadd.f32 %v8326, %v8355
    %v8361 = vadd.f32 %v8331, %v8356
    %v8362 = vadd.f32 %v8336, %v8357
    %v8363 = vadd.f32 %v8341, %v8358
    %v8364 = vmul.f32 %v8359, 0.7978846
    %v8365 = vmul.f32 %v8360, 0.7978846
    %v8366 = vmul.f32 %v8361, 0.7978846
    %v8367 = vmul.f32 %v8362, 0.7978846
    %v8368 = vmul.f32 %v8363, 0.7978846
    %v8369 = vtanh.pop %v8364
    %v8370 = vtanh.pop %v8365
    %v8371 = vtanh.pop %v8366
    %v8372 = vtanh.pop %v8367
    %v8373 = vtanh.pop %v8368
    %v8374 = vadd.f32 %v8369, 1.0
    %v8375 = vadd.f32 %v8370, 1.0
    %v8376 = vadd.f32 %v8371, 1.0
    %v8377 = vadd.f32 %v8372, 1.0
    %v8378 = vadd.f32 %v8373, 1.0
    %v8379 = vmul.f32 %v8374, 0.5
    %v8380 = vmul.f32 %v8375, 0.5
    %v8381 = vmul.f32 %v8376, 0.5
    %v8382 = vmul.f32 %v8377, 0.5
    %v8383 = vmul.f32 %v8378, 0.5
    %v8384 = vmul.f32 %v8321, %v8379
    %v8385 = vmul.f32 %v8326, %v8380
    %v8386 = vmul.f32 %v8331, %v8381
    %v8387 = vmul.f32 %v8336, %v8382
    %v8388 = vmul.f32 %v8341, %v8383
    %s8389 = scalar_lea.vmem %s37, 192
    %v8390 = vld [vmem:[%s8389] sm:$0xff]
    %v8391 = vld [vmem:[%s8389 + $0x8] sm:$0xff]
    %v8392 = vld [vmem:[%s8389 + $0x10] sm:$0xff]
    %v8393 = vld [vmem:[%s8389 + $0x18] sm:$0xff]
    %v8394 = vld [vmem:[%s8389 + $0x20] sm:$0xff]
    %v8395 = vld [vmem:[%s8389 + $0x28] sm:$0xff]
    %v8396 = vld [vmem:[%s8389 + $0x30] sm:$0xff]
    %v8397 = vld [vmem:[%s8389 + $0x38] sm:$0xff]
    %v8399 = vsel %vm2194, %v8384, 0
    %v8402 = vsel %vm2194, %v8385, 0
    %v8405 = vsel %vm2194, %v8386, 0
    %v8408 = vsel %vm2194, %v8387, 0
    %v8411 = vsel %vm2194, %v8388, 0
    %8413 = vmatprep.subr.mxu0 0.0
    %8414 = vmatpush1.msra.mxu0 0.0
    %8415 = vmatprep.subr.mxu0 0.0
    %8416 = vmatpush1.msra.mxu0 0.0
    %8417 = vmatprep.subr.mxu0 0.0
    %8418 = vmatpush1.msra.mxu0 0.0
    %8419 = vmatprep.subr.mxu0 0.0
    %8420 = vmatpush1.msra.mxu0 0.0
    %8421 = vmatprep.subr.mxu0 0.0
    %8422 = vmatpush1.msra.mxu0 0.0
    %8423 = vmatprep.subr.mxu0 0.0
    %8424 = vmatpush1.msra.mxu0 0.0
    %8425 = vmatprep.subr.mxu0 0.0
    %8426 = vmatpush1.msra.mxu0 0.0
    %8427 = vmatprep.subr.mxu0 0.0
    %8428 = vmatpush1.msra.mxu0 0.0
    %8429 = vmatprep.subr.mxu0 0.0
    %8430 = vmatpush1.msra.mxu0 %v8397
    %8431 = vmatprep.subr.mxu0 0.0
    %8432 = vmatpush1.msra.mxu0 %v8396
    %8433 = vmatprep.subr.mxu0 0.0
    %8434 = vmatpush1.msra.mxu0 %v8395
    %8435 = vmatprep.subr.mxu0 0.0
    %8436 = vmatpush1.msra.mxu0 %v8394
    %8437 = vmatprep.subr.mxu0 0.0
    %8438 = vmatpush1.msra.mxu0 %v8393
    %8439 = vmatprep.subr.mxu0 0.0
    %8440 = vmatpush1.msra.mxu0 %v8392
    %8441 = vmatprep.subr.mxu0 0.0
    %8442 = vmatpush1.msra.mxu0 %v8391
    %8443 = vmatprep.subr.mxu0 0.0
    %8444 = vmatpush1.msra.mxu0 %v8390
    %8445 = vmatprep.subr.mxu0 0.0
    %8446 = vmatpush2.msra.mxu0 0.0
    %8447 = vmatprep.subr.mxu0 0.0
    %8448 = vmatpush2.msra.mxu0 0.0
    %8449 = vmatprep.subr.mxu0 0.0
    %8450 = vmatpush2.msra.mxu0 0.0
    %8451 = vmatprep.subr.mxu0 0.0
    %8452 = vmatpush2.msra.mxu0 0.0
    %8453 = vmatprep.subr.mxu0 0.0
    %8454 = vmatpush2.msra.mxu0 0.0
    %8455 = vmatprep.subr.mxu0 0.0
    %8456 = vmatpush2.msra.mxu0 0.0
    %8457 = vmatprep.subr.mxu0 0.0
    %8458 = vmatpush2.msra.mxu0 0.0
    %8459 = vmatprep.subr.mxu0 0.0
    %8460 = vmatpush2.msra.mxu0 0.0
    %8461 = vmatprep.subr.mxu0 0.0
    %8462 = vmatpush2.msra.mxu0 0.0
    %8463 = vmatprep.subr.mxu0 0.0
    %8464 = vmatpush2.msra.mxu0 0.0
    %8465 = vmatprep.subr.mxu0 0.0
    %8466 = vmatpush2.msra.mxu0 0.0
    %8467 = vmatprep.subr.mxu0 0.0
    %8468 = vmatpush2.msra.mxu0 0.0
    %8469 = vmatprep.subr.mxu0 0.0
    %8470 = vmatpush2.msra.mxu0 0.0
    %8471 = vmatprep.subr.mxu0 0.0
    %8472 = vmatpush2.msra.mxu0 0.0
    %8473 = vmatprep.subr.mxu0 0.0
    %8474 = vmatpush2.msra.mxu0 0.0
    %8475 = vmatprep.subr.mxu0 0.0
    %8476 = vmatpush2.msra.mxu0 0.0
    %8477 = vmatprep.mubr.f32.mxu0 0.0
    %8478 = vmatmul.mubr.f32.gmra.mxu0 %v8399
    %v8479 = vpop.f32.mrf.mxu0
    %v8480 = vadd.f32 0.0, %v8479
    %v8481 = vpop.f32.mrf.mxu0
    %8482 = vmatprep.mubr.f32.mxu0 0.0
    %8483 = vmatmul.mubr.f32.gmra.mxu0 %v8402
    %v8484 = vpop.f32.mrf.mxu0
    %v8485 = vadd.f32 0.0, %v8484
    %v8486 = vpop.f32.mrf.mxu0
    %8487 = vmatprep.mubr.f32.mxu0 0.0
    %8488 = vmatmul.mubr.f32.gmra.mxu0 %v8405
    %v8489 = vpop.f32.mrf.mxu0
    %v8490 = vadd.f32 0.0, %v8489
    %v8491 = vpop.f32.mrf.mxu0
    %8492 = vmatprep.mubr.f32.mxu0 0.0
    %8493 = vmatmul.mubr.f32.gmra.mxu0 %v8408
    %v8494 = vpop.f32.mrf.mxu0
    %v8495 = vadd.f32 0.0, %v8494
    %v8496 = vpop.f32.mrf.mxu0
    %8497 = vmatprep.mubr.f32.mxu0 0.0
    %8498 = vmatmul.mubr.f32.gmra.mxu0 %v8411
    %v8499 = vpop.f32.mrf.mxu0
    %v8500 = vadd.f32 0.0, %v8499
    %v8501 = vpop.f32.mrf.mxu0
    %8502 = vdwg.mxu0
    %v8503 = vadd.f32 %v8130, %v8480
    %v8504 = vadd.f32 %v8131, %v8485
    %v8505 = vadd.f32 %v8132, %v8490
    %v8506 = vadd.f32 %v8133, %v8495
    %v8507 = vadd.f32 %v8134, %v8500
    %s8508 = scalar_lea.vmem %s39, 3
    %v8509 = vld [vmem:[%s8508] sm:$0x1]
    %v8511 = vlaneseq
    %v8512 = vshrl.u32 %v8511, 7
    %v8513 = vsub.s32 0, %v8512
    %v8514 = vrot.slane %v8509, %v8513
    %v8516 = vadd.f32 %v8503, %v8514
    %v8517 = vadd.f32 %v8504, %v8514
    %v8518 = vadd.f32 %v8505, %v8514
    %v8519 = vadd.f32 %v8506, %v8514
    %v8520 = vadd.f32 %v8507, %v8514
    %v8521 = vsel %vm257, %v8516, 0.0
    %8522 = vadd.xlane.f32.xlu0 %v8521
    %v8523 = vpop.xlane.xlu0 %8522
    %v8524 = vsel %vm257, %v8517, 0.0
    %8525 = vadd.xlane.f32.xlu0 %v8524
    %v8526 = vpop.xlane.xlu0 %8525
    %v8527 = vsel %vm257, %v8518, 0.0
    %8528 = vadd.xlane.f32.xlu0 %v8527
    %v8529 = vpop.xlane.xlu0 %8528
    %v8530 = vsel %vm257, %v8519, 0.0
    %8531 = vadd.xlane.f32.xlu0 %v8530
    %v8532 = vpop.xlane.xlu0 %8531
    %v8533 = vsel %vm257, %v8520, 0.0
    %8534 = vadd.xlane.f32.xlu0 %v8533
    %v8535 = vpop.xlane.xlu0 %8534
    %v8536 = vmul.f32 %v8523, %v273
    %v8537 = vmul.f32 %v8526, %v273
    %v8538 = vmul.f32 %v8529, %v273
    %v8539 = vmul.f32 %v8532, %v273
    %v8540 = vmul.f32 %v8535, %v273
    %v8541 = vsub.f32 %v8516, %v8536
    %v8542 = vsub.f32 %v8517, %v8537
    %v8543 = vsub.f32 %v8518, %v8538
    %v8544 = vsub.f32 %v8519, %v8539
    %v8545 = vsub.f32 %v8520, %v8540
    %v8546 = vmul.f32 %v8541, %v8541
    %v8547 = vmul.f32 %v8542, %v8542
    %v8548 = vmul.f32 %v8543, %v8543
    %v8549 = vmul.f32 %v8544, %v8544
    %v8550 = vmul.f32 %v8545, %v8545
    %v8551 = vsel %vm257, %v8546, 0.0
    %8552 = vadd.xlane.f32.xlu0 %v8551
    %v8553 = vpop.xlane.xlu0 %8552
    %v8554 = vsel %vm257, %v8547, 0.0
    %8555 = vadd.xlane.f32.xlu0 %v8554
    %v8556 = vpop.xlane.xlu0 %8555
    %v8557 = vsel %vm257, %v8548, 0.0
    %8558 = vadd.xlane.f32.xlu0 %v8557
    %v8559 = vpop.xlane.xlu0 %8558
    %v8560 = vsel %vm257, %v8549, 0.0
    %8561 = vadd.xlane.f32.xlu0 %v8560
    %v8562 = vpop.xlane.xlu0 %8561
    %v8563 = vsel %vm257, %v8550, 0.0
    %8564 = vadd.xlane.f32.xlu0 %v8563
    %v8565 = vpop.xlane.xlu0 %8564
    %v8566 = vmul.f32 %v8553, %v273
    %v8567 = vmul.f32 %v8556, %v273
    %v8568 = vmul.f32 %v8559, %v273
    %v8569 = vmul.f32 %v8562, %v273
    %v8570 = vmul.f32 %v8565, %v273
    %v8571 = vadd.f32 %v8566, 1e-06
    %v8572 = vadd.f32 %v8567, 1e-06
    %v8573 = vadd.f32 %v8568, 1e-06
    %v8574 = vadd.f32 %v8569, 1e-06
    %v8575 = vadd.f32 %v8570, 1e-06
    %v8576 = vrsqrt.pop %v8571
    %v8577 = vrsqrt.pop %v8572
    %v8578 = vrsqrt.pop %v8573
    %v8579 = vrsqrt.pop %v8574
    %v8580 = vrsqrt.pop %v8575
    %v8581 = vmul.f32 %v8541, %v8576
    %v8582 = vmul.f32 %v8542, %v8577
    %v8583 = vmul.f32 %v8543, %v8578
    %v8584 = vmul.f32 %v8544, %v8579
    %v8585 = vmul.f32 %v8545, %v8580
    %v8586 = vmul.f32 %v8581, %v2386
    %v8587 = vmul.f32 %v8582, %v2386
    %v8588 = vmul.f32 %v8583, %v2386
    %v8589 = vmul.f32 %v8584, %v2386
    %v8590 = vmul.f32 %v8585, %v2386
    %v8591 = vadd.f32 %v8586, %v2397
    %v8592 = vadd.f32 %v8587, %v2397
    %v8593 = vadd.f32 %v8588, %v2397
    %v8594 = vadd.f32 %v8589, %v2397
    %v8595 = vadd.f32 %v8590, %v2397
    %v8596 = vld [vmem:[%s45] sm:$0xff]
    %v8597 = vld [vmem:[%s45 + $0x8] sm:$0xff]
    %v8598 = vld [vmem:[%s45 + $0x10] sm:$0xff]
    %v8599 = vld [vmem:[%s45 + $0x18] sm:$0xff]
    %v8600 = vld [vmem:[%s45 + $0x20] sm:$0xff]
    %v8601 = vld [vmem:[%s45 + $0x28] sm:$0xff]
    %v8602 = vld [vmem:[%s45 + $0x30] sm:$0xff]
    %v8603 = vld [vmem:[%s45 + $0x38] sm:$0xff]
    %v8604 = vld [vmem:[%s45 + $0x40] sm:$0xff]
    %v8605 = vld [vmem:[%s45 + $0x48] sm:$0xff]
    %v8606 = vld [vmem:[%s45 + $0x50] sm:$0xff]
    %v8607 = vld [vmem:[%s45 + $0x58] sm:$0xff]
    %v8608 = vld [vmem:[%s45 + $0x60] sm:$0xff]
    %v8609 = vld [vmem:[%s45 + $0x68] sm:$0xff]
    %v8610 = vld [vmem:[%s45 + $0x70] sm:$0xff]
    %v8611 = vld [vmem:[%s45 + $0x78] sm:$0xff]
    %v8612 = vld [vmem:[%s47] sm:$0xf]
    %v8614 = vlaneseq
    %v8615 = vshrl.u32 %v8614, 7
    %v8616 = vsub.s32 0, %v8615
    %v8617 = vrot.slane %v8612, %v8616
    %v8618 = vlaneseq
    %v8619 = vshrl.u32 %v8618, 7
    %v8620 = vsub.s32 1, %v8619
    %v8621 = vrot.slane %v8612, %v8620
    %v8622 = vlaneseq
    %v8623 = vshrl.u32 %v8622, 7
    %v8624 = vsub.s32 2, %v8623
    %v8625 = vrot.slane %v8612, %v8624
    %v8626 = vlaneseq
    %v8627 = vshrl.u32 %v8626, 7
    %v8628 = vsub.s32 3, %v8627
    %v8629 = vrot.slane %v8612, %v8628
    %v8635 = vsel %vm257, %v2399, 0
    %v8638 = vsel %vm257, %v2400, 0
    %v8641 = vsel %vm257, %v2401, 0
    %v8644 = vsel %vm257, %v2402, 0
    %v8647 = vsel %vm257, %v2403, 0
    %8649 = vmatprep.subr.mxu0 0.0
    %8650 = vmatpush1.msra.mxu0 0.0
    %8651 = vmatprep.subr.mxu0 0.0
    %8652 = vmatpush1.msra.mxu0 0.0
    %8653 = vmatprep.subr.mxu0 0.0
    %8654 = vmatpush1.msra.mxu0 0.0
    %8655 = vmatprep.subr.mxu0 0.0
    %8656 = vmatpush1.msra.mxu0 0.0
    %8657 = vmatprep.subr.mxu0 0.0
    %8658 = vmatpush1.msra.mxu0 0.0
    %8659 = vmatprep.subr.mxu0 0.0
    %8660 = vmatpush1.msra.mxu0 0.0
    %8661 = vmatprep.subr.mxu0 0.0
    %8662 = vmatpush1.msra.mxu0 0.0
    %8663 = vmatprep.subr.mxu0 0.0
    %8664 = vmatpush1.msra.mxu0 0.0
    %8665 = vmatprep.subr.mxu0 0.0
    %8666 = vmatpush1.msra.mxu0 0.0
    %8667 = vmatprep.subr.mxu0 0.0
    %8668 = vmatpush1.msra.mxu0 0.0
    %8669 = vmatprep.subr.mxu0 0.0
    %8670 = vmatpush1.msra.mxu0 0.0
    %8671 = vmatprep.subr.mxu0 0.0
    %8672 = vmatpush1.msra.mxu0 0.0
    %8673 = vmatprep.subr.mxu0 %v8609
    %8674 = vmatpush1.msra.mxu0 %v8608
    %8675 = vmatprep.subr.mxu0 %v8605
    %8676 = vmatpush1.msra.mxu0 %v8604
    %8677 = vmatprep.subr.mxu0 %v8601
    %8678 = vmatpush1.msra.mxu0 %v8600
    %8679 = vmatprep.subr.mxu0 %v8597
    %8680 = vmatpush1.msra.mxu0 %v8596
    %8681 = vmatprep.subr.mxu0 0.0
    %8682 = vmatpush2.msra.mxu0 0.0
    %8683 = vmatprep.subr.mxu0 0.0
    %8684 = vmatpush2.msra.mxu0 0.0
    %8685 = vmatprep.subr.mxu0 0.0
    %8686 = vmatpush2.msra.mxu0 0.0
    %8687 = vmatprep.subr.mxu0 0.0
    %8688 = vmatpush2.msra.mxu0 0.0
    %8689 = vmatprep.subr.mxu0 0.0
    %8690 = vmatpush2.msra.mxu0 0.0
    %8691 = vmatprep.subr.mxu0 0.0
    %8692 = vmatpush2.msra.mxu0 0.0
    %8693 = vmatprep.subr.mxu0 0.0
    %8694 = vmatpush2.msra.mxu0 0.0
    %8695 = vmatprep.subr.mxu0 0.0
    %8696 = vmatpush2.msra.mxu0 0.0
    %8697 = vmatprep.subr.mxu0 0.0
    %8698 = vmatpush2.msra.mxu0 0.0
    %8699 = vmatprep.subr.mxu0 0.0
    %8700 = vmatpush2.msra.mxu0 0.0
    %8701 = vmatprep.subr.mxu0 0.0
    %8702 = vmatpush2.msra.mxu0 0.0
    %8703 = vmatprep.subr.mxu0 0.0
    %8704 = vmatpush2.msra.mxu0 0.0
    %8705 = vmatprep.subr.mxu0 0.0
    %8706 = vmatpush2.msra.mxu0 0.0
    %8707 = vmatprep.subr.mxu0 0.0
    %8708 = vmatpush2.msra.mxu0 0.0
    %8709 = vmatprep.subr.mxu0 0.0
    %8710 = vmatpush2.msra.mxu0 0.0
    %8711 = vmatprep.subr.mxu0 0.0
    %8712 = vmatpush2.msra.mxu0 0.0
    %8713 = vmatprep.mubr.f32.mxu0 0.0
    %8714 = vmatmul.mubr.f32.gmra.mxu0 %v8635
    %v8715 = vpop.f32.mrf.mxu0
    %v8716 = vadd.f32 %v8617, %v8715
    %v8717 = vpop.f32.mrf.mxu0
    %v8718 = vadd.f32 %v8621, %v8717
    %8719 = vmatprep.mubr.f32.mxu0 0.0
    %8720 = vmatmul.mubr.f32.gmra.mxu0 %v8638
    %v8721 = vpop.f32.mrf.mxu0
    %v8722 = vadd.f32 %v8617, %v8721
    %v8723 = vpop.f32.mrf.mxu0
    %v8724 = vadd.f32 %v8621, %v8723
    %8725 = vmatprep.mubr.f32.mxu0 0.0
    %8726 = vmatmul.mubr.f32.gmra.mxu0 %v8641
    %v8727 = vpop.f32.mrf.mxu0
    %v8728 = vadd.f32 %v8617, %v8727
    %v8729 = vpop.f32.mrf.mxu0
    %v8730 = vadd.f32 %v8621, %v8729
    %8731 = vmatprep.mubr.f32.mxu0 0.0
    %8732 = vmatmul.mubr.f32.gmra.mxu0 %v8644
    %v8733 = vpop.f32.mrf.mxu0
    %v8734 = vadd.f32 %v8617, %v8733
    %v8735 = vpop.f32.mrf.mxu0
    %v8736 = vadd.f32 %v8621, %v8735
    %8737 = vmatprep.mubr.f32.mxu0 0.0
    %8738 = vmatmul.mubr.f32.gmra.mxu0 %v8647
    %v8739 = vpop.f32.mrf.mxu0
    %v8740 = vadd.f32 %v8617, %v8739
    %v8741 = vpop.f32.mrf.mxu0
    %v8742 = vadd.f32 %v8621, %v8741
    %8743 = vdwg.mxu0
    %8744 = vmatprep.subr.mxu0 0.0
    %8745 = vmatpush1.msra.mxu0 0.0
    %8746 = vmatprep.subr.mxu0 0.0
    %8747 = vmatpush1.msra.mxu0 0.0
    %8748 = vmatprep.subr.mxu0 0.0
    %8749 = vmatpush1.msra.mxu0 0.0
    %8750 = vmatprep.subr.mxu0 0.0
    %8751 = vmatpush1.msra.mxu0 0.0
    %8752 = vmatprep.subr.mxu0 0.0
    %8753 = vmatpush1.msra.mxu0 0.0
    %8754 = vmatprep.subr.mxu0 0.0
    %8755 = vmatpush1.msra.mxu0 0.0
    %8756 = vmatprep.subr.mxu0 0.0
    %8757 = vmatpush1.msra.mxu0 0.0
    %8758 = vmatprep.subr.mxu0 0.0
    %8759 = vmatpush1.msra.mxu0 0.0
    %8760 = vmatprep.subr.mxu0 0.0
    %8761 = vmatpush1.msra.mxu0 0.0
    %8762 = vmatprep.subr.mxu0 0.0
    %8763 = vmatpush1.msra.mxu0 0.0
    %8764 = vmatprep.subr.mxu0 0.0
    %8765 = vmatpush1.msra.mxu0 0.0
    %8766 = vmatprep.subr.mxu0 0.0
    %8767 = vmatpush1.msra.mxu0 0.0
    %8768 = vmatprep.subr.mxu0 %v8611
    %8769 = vmatpush1.msra.mxu0 %v8610
    %8770 = vmatprep.subr.mxu0 %v8607
    %8771 = vmatpush1.msra.mxu0 %v8606
    %8772 = vmatprep.subr.mxu0 %v8603
    %8773 = vmatpush1.msra.mxu0 %v8602
    %8774 = vmatprep.subr.mxu0 %v8599
    %8775 = vmatpush1.msra.mxu0 %v8598
    %8776 = vmatprep.subr.mxu0 0.0
    %8777 = vmatpush2.msra.mxu0 0.0
    %8778 = vmatprep.subr.mxu0 0.0
    %8779 = vmatpush2.msra.mxu0 0.0
    %8780 = vmatprep.subr.mxu0 0.0
    %8781 = vmatpush2.msra.mxu0 0.0
    %8782 = vmatprep.subr.mxu0 0.0
    %8783 = vmatpush2.msra.mxu0 0.0
    %8784 = vmatprep.subr.mxu0 0.0
    %8785 = vmatpush2.msra.mxu0 0.0
    %8786 = vmatprep.subr.mxu0 0.0
    %8787 = vmatpush2.msra.mxu0 0.0
    %8788 = vmatprep.subr.mxu0 0.0
    %8789 = vmatpush2.msra.mxu0 0.0
    %8790 = vmatprep.subr.mxu0 0.0
    %8791 = vmatpush2.msra.mxu0 0.0
    %8792 = vmatprep.subr.mxu0 0.0
    %8793 = vmatpush2.msra.mxu0 0.0
    %8794 = vmatprep.subr.mxu0 0.0
    %8795 = vmatpush2.msra.mxu0 0.0
    %8796 = vmatprep.subr.mxu0 0.0
    %8797 = vmatpush2.msra.mxu0 0.0
    %8798 = vmatprep.subr.mxu0 0.0
    %8799 = vmatpush2.msra.mxu0 0.0
    %8800 = vmatprep.subr.mxu0 0.0
    %8801 = vmatpush2.msra.mxu0 0.0
    %8802 = vmatprep.subr.mxu0 0.0
    %8803 = vmatpush2.msra.mxu0 0.0
    %8804 = vmatprep.subr.mxu0 0.0
    %8805 = vmatpush2.msra.mxu0 0.0
    %8806 = vmatprep.subr.mxu0 0.0
    %8807 = vmatpush2.msra.mxu0 0.0
    %8808 = vmatprep.mubr.f32.mxu0 0.0
    %8809 = vmatmul.mubr.f32.gmra.mxu0 %v8635
    %v8810 = vpop.f32.mrf.mxu0
    %v8811 = vadd.f32 %v8625, %v8810
    %v8812 = vpop.f32.mrf.mxu0
    %v8813 = vadd.f32 %v8629, %v8812
    %8814 = vmatprep.mubr.f32.mxu0 0.0
    %8815 = vmatmul.mubr.f32.gmra.mxu0 %v8638
    %v8816 = vpop.f32.mrf.mxu0
    %v8817 = vadd.f32 %v8625, %v8816
    %v8818 = vpop.f32.mrf.mxu0
    %v8819 = vadd.f32 %v8629, %v8818
    %8820 = vmatprep.mubr.f32.mxu0 0.0
    %8821 = vmatmul.mubr.f32.gmra.mxu0 %v8641
    %v8822 = vpop.f32.mrf.mxu0
    %v8823 = vadd.f32 %v8625, %v8822
    %v8824 = vpop.f32.mrf.mxu0
    %v8825 = vadd.f32 %v8629, %v8824
    %8826 = vmatprep.mubr.f32.mxu0 0.0
    %8827 = vmatmul.mubr.f32.gmra.mxu0 %v8644
    %v8828 = vpop.f32.mrf.mxu0
    %v8829 = vadd.f32 %v8625, %v8828
    %v8830 = vpop.f32.mrf.mxu0
    %v8831 = vadd.f32 %v8629, %v8830
    %8832 = vmatprep.mubr.f32.mxu0 0.0
    %8833 = vmatmul.mubr.f32.gmra.mxu0 %v8647
    %v8834 = vpop.f32.mrf.mxu0
    %v8835 = vadd.f32 %v8625, %v8834
    %v8836 = vpop.f32.mrf.mxu0
    %v8837 = vadd.f32 %v8629, %v8836
    %8838 = vdwg.mxu0
    %8839 = vst [vmem:[%s59] sm:$0xff] %v8716
    %8840 = vst [vmem:[%s59 + $0x8] sm:$0xff] %v8718
    %8841 = vst [vmem:[%s59 + $0x10] sm:$0xff] %v8811
    %8842 = vst [vmem:[%s59 + $0x18] sm:$0xff] %v8813
    %8843 = vst [vmem:[%s59 + $0x20] sm:$0xff] %v8722
    %8844 = vst [vmem:[%s59 + $0x28] sm:$0xff] %v8724
    %8845 = vst [vmem:[%s59 + $0x30] sm:$0xff] %v8817
    %8846 = vst [vmem:[%s59 + $0x38] sm:$0xff] %v8819
    %8847 = vst [vmem:[%s59 + $0x40] sm:$0xff] %v8728
    %8848 = vst [vmem:[%s59 + $0x48] sm:$0xff] %v8730
    %8849 = vst [vmem:[%s59 + $0x50] sm:$0xff] %v8823
    %8850 = vst [vmem:[%s59 + $0x58] sm:$0xff] %v8825
    %8851 = vst [vmem:[%s59 + $0x60] sm:$0xff] %v8734
    %8852 = vst [vmem:[%s59 + $0x68] sm:$0xff] %v8736
    %8853 = vst [vmem:[%s59 + $0x70] sm:$0xff] %v8829
    %8854 = vst [vmem:[%s59 + $0x78] sm:$0xff] %v8831
    %8855 = vst [vmem:[%s59 + $0x80] sm:$0xff] %v8740
    %8856 = vst [vmem:[%s59 + $0x88] sm:$0xff] %v8742
    %8857 = vst [vmem:[%s59 + $0x90] sm:$0xff] %v8835
    %8858 = vst [vmem:[%s59 + $0x98] sm:$0xff] %v8837
    %v8859 = vld [vmem:[%s49] sm:$0xff]
    %v8860 = vld [vmem:[%s49 + $0x8] sm:$0xff]
    %v8861 = vld [vmem:[%s49 + $0x10] sm:$0xff]
    %v8862 = vld [vmem:[%s49 + $0x18] sm:$0xff]
    %v8863 = vld [vmem:[%s51] sm:$0x1]
    %v8865 = vlaneseq
    %v8866 = vshrl.u32 %v8865, 7
    %v8867 = vsub.s32 0, %v8866
    %v8868 = vrot.slane %v8863, %v8867
    %v8871 = vsel %vm257, %v4463, 0
    %v8874 = vsel %vm257, %v4464, 0
    %v8877 = vsel %vm257, %v4465, 0
    %v8880 = vsel %vm257, %v4466, 0
    %v8883 = vsel %vm257, %v4467, 0
    %8885 = vmatprep.subr.mxu0 0.0
    %8886 = vmatpush1.msra.mxu0 0.0
    %8887 = vmatprep.subr.mxu0 0.0
    %8888 = vmatpush1.msra.mxu0 0.0
    %8889 = vmatprep.subr.mxu0 0.0
    %8890 = vmatpush1.msra.mxu0 0.0
    %8891 = vmatprep.subr.mxu0 0.0
    %8892 = vmatpush1.msra.mxu0 0.0
    %8893 = vmatprep.subr.mxu0 0.0
    %8894 = vmatpush1.msra.mxu0 0.0
    %8895 = vmatprep.subr.mxu0 0.0
    %8896 = vmatpush1.msra.mxu0 0.0
    %8897 = vmatprep.subr.mxu0 0.0
    %8898 = vmatpush1.msra.mxu0 0.0
    %8899 = vmatprep.subr.mxu0 0.0
    %8900 = vmatpush1.msra.mxu0 0.0
    %8901 = vmatprep.subr.mxu0 0.0
    %8902 = vmatpush1.msra.mxu0 0.0
    %8903 = vmatprep.subr.mxu0 0.0
    %8904 = vmatpush1.msra.mxu0 0.0
    %8905 = vmatprep.subr.mxu0 0.0
    %8906 = vmatpush1.msra.mxu0 0.0
    %8907 = vmatprep.subr.mxu0 0.0
    %8908 = vmatpush1.msra.mxu0 0.0
    %8909 = vmatprep.subr.mxu0 0.0
    %8910 = vmatpush1.msra.mxu0 %v8862
    %8911 = vmatprep.subr.mxu0 0.0
    %8912 = vmatpush1.msra.mxu0 %v8861
    %8913 = vmatprep.subr.mxu0 0.0
    %8914 = vmatpush1.msra.mxu0 %v8860
    %8915 = vmatprep.subr.mxu0 0.0
    %8916 = vmatpush1.msra.mxu0 %v8859
    %8917 = vmatprep.subr.mxu0 0.0
    %8918 = vmatpush2.msra.mxu0 0.0
    %8919 = vmatprep.subr.mxu0 0.0
    %8920 = vmatpush2.msra.mxu0 0.0
    %8921 = vmatprep.subr.mxu0 0.0
    %8922 = vmatpush2.msra.mxu0 0.0
    %8923 = vmatprep.subr.mxu0 0.0
    %8924 = vmatpush2.msra.mxu0 0.0
    %8925 = vmatprep.subr.mxu0 0.0
    %8926 = vmatpush2.msra.mxu0 0.0
    %8927 = vmatprep.subr.mxu0 0.0
    %8928 = vmatpush2.msra.mxu0 0.0
    %8929 = vmatprep.subr.mxu0 0.0
    %8930 = vmatpush2.msra.mxu0 0.0
    %8931 = vmatprep.subr.mxu0 0.0
    %8932 = vmatpush2.msra.mxu0 0.0
    %8933 = vmatprep.subr.mxu0 0.0
    %8934 = vmatpush2.msra.mxu0 0.0
    %8935 = vmatprep.subr.mxu0 0.0
    %8936 = vmatpush2.msra.mxu0 0.0
    %8937 = vmatprep.subr.mxu0 0.0
    %8938 = vmatpush2.msra.mxu0 0.0
    %8939 = vmatprep.subr.mxu0 0.0
    %8940 = vmatpush2.msra.mxu0 0.0
    %8941 = vmatprep.subr.mxu0 0.0
    %8942 = vmatpush2.msra.mxu0 0.0
    %8943 = vmatprep.subr.mxu0 0.0
    %8944 = vmatpush2.msra.mxu0 0.0
    %8945 = vmatprep.subr.mxu0 0.0
    %8946 = vmatpush2.msra.mxu0 0.0
    %8947 = vmatprep.subr.mxu0 0.0
    %8948 = vmatpush2.msra.mxu0 0.0
    %8949 = vmatprep.mubr.f32.mxu0 0.0
    %8950 = vmatmul.mubr.f32.gmra.mxu0 %v8871
    %v8951 = vpop.f32.mrf.mxu0
    %v8952 = vadd.f32 %v8868, %v8951
    %v8953 = vpop.f32.mrf.mxu0
    %8954 = vmatprep.mubr.f32.mxu0 0.0
    %8955 = vmatmul.mubr.f32.gmra.mxu0 %v8874
    %v8956 = vpop.f32.mrf.mxu0
    %v8957 = vadd.f32 %v8868, %v8956
    %v8958 = vpop.f32.mrf.mxu0
    %8959 = vmatprep.mubr.f32.mxu0 0.0
    %8960 = vmatmul.mubr.f32.gmra.mxu0 %v8877
    %v8961 = vpop.f32.mrf.mxu0
    %v8962 = vadd.f32 %v8868, %v8961
    %v8963 = vpop.f32.mrf.mxu0
    %8964 = vmatprep.mubr.f32.mxu0 0.0
    %8965 = vmatmul.mubr.f32.gmra.mxu0 %v8880
    %v8966 = vpop.f32.mrf.mxu0
    %v8967 = vadd.f32 %v8868, %v8966
    %v8968 = vpop.f32.mrf.mxu0
    %8969 = vmatprep.mubr.f32.mxu0 0.0
    %8970 = vmatmul.mubr.f32.gmra.mxu0 %v8883
    %v8971 = vpop.f32.mrf.mxu0
    %v8972 = vadd.f32 %v8868, %v8971
    %v8973 = vpop.f32.mrf.mxu0
    %8974 = vdwg.mxu0
    %8975 = vst [vmem:[%s61] sm:$0xff] %v8952
    %8976 = vst [vmem:[%s61 + $0x8] sm:$0xff] %v8957
    %8977 = vst [vmem:[%s61 + $0x10] sm:$0xff] %v8962
    %8978 = vst [vmem:[%s61 + $0x18] sm:$0xff] %v8967
    %8979 = vst [vmem:[%s61 + $0x20] sm:$0xff] %v8972
    %8980 = vst.msk [vmem:[%s63] sm:$0xff] %vm257, %v6527
    %8981 = vst.msk [vmem:[%s63 + $0x8] sm:$0xff] %vm257, %v6528
    %8982 = vst.msk [vmem:[%s63 + $0x10] sm:$0xff] %vm257, %v6529
    %8983 = vst.msk [vmem:[%s63 + $0x18] sm:$0xff] %vm257, %v6530
    %8984 = vst.msk [vmem:[%s63 + $0x20] sm:$0xff] %vm257, %v6531
    %v8985 = vld [vmem:[%s53] sm:$0xff]
    %v8987 = vsel %vm794, %v8985, 0
    %8989 = vmatprep.subr.mxu0 0.0
    %8990 = vmatpush1.msra.mxu0 0.0
    %8991 = vmatprep.subr.mxu0 0.0
    %8992 = vmatpush1.msra.mxu0 0.0
    %8993 = vmatprep.subr.mxu0 0.0
    %8994 = vmatpush1.msra.mxu0 0.0
    %8995 = vmatprep.subr.mxu0 0.0
    %8996 = vmatpush1.msra.mxu0 0.0
    %8997 = vmatprep.subr.mxu0 0.0
    %8998 = vmatpush1.msra.mxu0 0.0
    %8999 = vmatprep.subr.mxu0 0.0
    %9000 = vmatpush1.msra.mxu0 0.0
    %9001 = vmatprep.subr.mxu0 0.0
    %9002 = vmatpush1.msra.mxu0 0.0
    %9003 = vmatprep.subr.mxu0 0.0
    %9004 = vmatpush1.msra.mxu0 0.0
    %9005 = vmatprep.subr.mxu0 0.0
    %9006 = vmatpush1.msra.mxu0 0.0
    %9007 = vmatprep.subr.mxu0 0.0
    %9008 = vmatpush1.msra.mxu0 0.0
    %9009 = vmatprep.subr.mxu0 0.0
    %9010 = vmatpush1.msra.mxu0 0.0
    %9011 = vmatprep.subr.mxu0 0.0
    %9012 = vmatpush1.msra.mxu0 %v8595
    %9013 = vmatprep.subr.mxu0 0.0
    %9014 = vmatpush1.msra.mxu0 %v8594
    %9015 = vmatprep.subr.mxu0 0.0
    %9016 = vmatpush1.msra.mxu0 %v8593
    %9017 = vmatprep.subr.mxu0 0.0
    %9018 = vmatpush1.msra.mxu0 %v8592
    %9019 = vmatprep.subr.mxu0 0.0
    %9020 = vmatpush1.msra.mxu0 %v8591
    %9021 = vmatprep.subr.mxu0 0.0
    %9022 = vmatpush2.msra.mxu0 0.0
    %9023 = vmatprep.subr.mxu0 0.0
    %9024 = vmatpush2.msra.mxu0 0.0
    %9025 = vmatprep.subr.mxu0 0.0
    %9026 = vmatpush2.msra.mxu0 0.0
    %9027 = vmatprep.subr.mxu0 0.0
    %9028 = vmatpush2.msra.mxu0 0.0
    %9029 = vmatprep.subr.mxu0 0.0
    %9030 = vmatpush2.msra.mxu0 0.0
    %9031 = vmatprep.subr.mxu0 0.0
    %9032 = vmatpush2.msra.mxu0 0.0
    %9033 = vmatprep.subr.mxu0 0.0
    %9034 = vmatpush2.msra.mxu0 0.0
    %9035 = vmatprep.subr.mxu0 0.0
    %9036 = vmatpush2.msra.mxu0 0.0
    %9037 = vmatprep.subr.mxu0 0.0
    %9038 = vmatpush2.msra.mxu0 0.0
    %9039 = vmatprep.subr.mxu0 0.0
    %9040 = vmatpush2.msra.mxu0 0.0
    %9041 = vmatprep.subr.mxu0 0.0
    %9042 = vmatpush2.msra.mxu0 0.0
    %9043 = vmatprep.subr.mxu0 0.0
    %9044 = vmatpush2.msra.mxu0 0.0
    %9045 = vmatprep.subr.mxu0 0.0
    %9046 = vmatpush2.msra.mxu0 0.0
    %9047 = vmatprep.subr.mxu0 0.0
    %9048 = vmatpush2.msra.mxu0 0.0
    %9049 = vmatprep.subr.mxu0 0.0
    %9050 = vmatpush2.msra.mxu0 0.0
    %9051 = vmatprep.subr.mxu0 0.0
    %9052 = vmatpush2.msra.mxu0 0.0
    %9053 = vmatprep.mubr.f32.mxu0 0.0
    %9054 = vmatmul.mubr.f32.gmra.mxu0 %v8987
    %v9055 = vpop.f32.mrf.mxu0
    %v9056 = vadd.f32 0.0, %v9055
    %v9057 = vpop.f32.mrf.mxu0
    %9058 = vdwg.mxu0
    %v9059 = vld [vmem:[%s55] sm:$0xff]
    %v9060 = vld [vmem:[%s55 + $0x8] sm:$0xff]
    %v9061 = vld [vmem:[%s55 + $0x10] sm:$0xff]
    %v9062 = vld [vmem:[%s55 + $0x18] sm:$0xff]
    %s9063 = scalar_lea.vmem %s53, 8
    %v9064 = vld [vmem:[%s9063] sm:$0xff]
    %v9066 = vsel %vm794, %v9064, 0
    %9068 = vmatprep.subr.mxu0 0.0
    %9069 = vmatpush1.msra.mxu0 0.0
    %9070 = vmatprep.subr.mxu0 0.0
    %9071 = vmatpush1.msra.mxu0 0.0
    %9072 = vmatprep.subr.mxu0 0.0
    %9073 = vmatpush1.msra.mxu0 0.0
    %9074 = vmatprep.subr.mxu0 0.0
    %9075 = vmatpush1.msra.mxu0 0.0
    %9076 = vmatprep.subr.mxu0 0.0
    %9077 = vmatpush1.msra.mxu0 0.0
    %9078 = vmatprep.subr.mxu0 0.0
    %9079 = vmatpush1.msra.mxu0 0.0
    %9080 = vmatprep.subr.mxu0 0.0
    %9081 = vmatpush1.msra.mxu0 0.0
    %9082 = vmatprep.subr.mxu0 0.0
    %9083 = vmatpush1.msra.mxu0 0.0
    %9084 = vmatprep.subr.mxu0 0.0
    %9085 = vmatpush1.msra.mxu0 0.0
    %9086 = vmatprep.subr.mxu0 0.0
    %9087 = vmatpush1.msra.mxu0 0.0
    %9088 = vmatprep.subr.mxu0 0.0
    %9089 = vmatpush1.msra.mxu0 0.0
    %9090 = vmatprep.subr.mxu0 0.0
    %9091 = vmatpush1.msra.mxu0 %v8595
    %9092 = vmatprep.subr.mxu0 0.0
    %9093 = vmatpush1.msra.mxu0 %v8594
    %9094 = vmatprep.subr.mxu0 0.0
    %9095 = vmatpush1.msra.mxu0 %v8593
    %9096 = vmatprep.subr.mxu0 0.0
    %9097 = vmatpush1.msra.mxu0 %v8592
    %9098 = vmatprep.subr.mxu0 0.0
    %9099 = vmatpush1.msra.mxu0 %v8591
    %9100 = vmatprep.subr.mxu0 0.0
    %9101 = vmatpush2.msra.mxu0 0.0
    %9102 = vmatprep.subr.mxu0 0.0
    %9103 = vmatpush2.msra.mxu0 0.0
    %9104 = vmatprep.subr.mxu0 0.0
    %9105 = vmatpush2.msra.mxu0 0.0
    %9106 = vmatprep.subr.mxu0 0.0
    %9107 = vmatpush2.msra.mxu0 0.0
    %9108 = vmatprep.subr.mxu0 0.0
    %9109 = vmatpush2.msra.mxu0 0.0
    %9110 = vmatprep.subr.mxu0 0.0
    %9111 = vmatpush2.msra.mxu0 0.0
    %9112 = vmatprep.subr.mxu0 0.0
    %9113 = vmatpush2.msra.mxu0 0.0
    %9114 = vmatprep.subr.mxu0 0.0
    %9115 = vmatpush2.msra.mxu0 0.0
    %9116 = vmatprep.subr.mxu0 0.0
    %9117 = vmatpush2.msra.mxu0 0.0
    %9118 = vmatprep.subr.mxu0 0.0
    %9119 = vmatpush2.msra.mxu0 0.0
    %9120 = vmatprep.subr.mxu0 0.0
    %9121 = vmatpush2.msra.mxu0 0.0
    %9122 = vmatprep.subr.mxu0 0.0
    %9123 = vmatpush2.msra.mxu0 0.0
    %9124 = vmatprep.subr.mxu0 0.0
    %9125 = vmatpush2.msra.mxu0 0.0
    %9126 = vmatprep.subr.mxu0 0.0
    %9127 = vmatpush2.msra.mxu0 0.0
    %9128 = vmatprep.subr.mxu0 0.0
    %9129 = vmatpush2.msra.mxu0 0.0
    %9130 = vmatprep.subr.mxu0 0.0
    %9131 = vmatpush2.msra.mxu0 0.0
    %9132 = vmatprep.mubr.f32.mxu0 0.0
    %9133 = vmatmul.mubr.f32.gmra.mxu0 %v9066
    %v9134 = vpop.f32.mrf.mxu0
    %v9135 = vadd.f32 0.0, %v9134
    %v9136 = vpop.f32.mrf.mxu0
    %9137 = vdwg.mxu0
    %s9138 = scalar_lea.vmem %s55, 32
    %v9139 = vld [vmem:[%s9138] sm:$0xff]
    %v9140 = vld [vmem:[%s9138 + $0x8] sm:$0xff]
    %v9141 = vld [vmem:[%s9138 + $0x10] sm:$0xff]
    %v9142 = vld [vmem:[%s9138 + $0x18] sm:$0xff]
    %v9144 = vsel %vm257, %v9135, 0
    %9146 = vmatprep.subr.mxu0 0.0
    %9147 = vmatpush1.msra.mxu0 0.0
    %9148 = vmatprep.subr.mxu0 0.0
    %9149 = vmatpush1.msra.mxu0 0.0
    %9150 = vmatprep.subr.mxu0 0.0
    %9151 = vmatpush1.msra.mxu0 0.0
    %9152 = vmatprep.subr.mxu0 0.0
    %9153 = vmatpush1.msra.mxu0 0.0
    %9154 = vmatprep.subr.mxu0 0.0
    %9155 = vmatpush1.msra.mxu0 0.0
    %9156 = vmatprep.subr.mxu0 0.0
    %9157 = vmatpush1.msra.mxu0 0.0
    %9158 = vmatprep.subr.mxu0 0.0
    %9159 = vmatpush1.msra.mxu0 0.0
    %9160 = vmatprep.subr.mxu0 0.0
    %9161 = vmatpush1.msra.mxu0 0.0
    %9162 = vmatprep.subr.mxu0 0.0
    %9163 = vmatpush1.msra.mxu0 0.0
    %9164 = vmatprep.subr.mxu0 0.0
    %9165 = vmatpush1.msra.mxu0 0.0
    %9166 = vmatprep.subr.mxu0 0.0
    %9167 = vmatpush1.msra.mxu0 0.0
    %9168 = vmatprep.subr.mxu0 0.0
    %9169 = vmatpush1.msra.mxu0 0.0
    %9170 = vmatprep.subr.mxu0 0.0
    %9171 = vmatpush1.msra.mxu0 %v9142
    %9172 = vmatprep.subr.mxu0 0.0
    %9173 = vmatpush1.msra.mxu0 %v9141
    %9174 = vmatprep.subr.mxu0 0.0
    %9175 = vmatpush1.msra.mxu0 %v9140
    %9176 = vmatprep.subr.mxu0 0.0
    %9177 = vmatpush1.msra.mxu0 %v9139
    %9178 = vmatprep.subr.mxu0 0.0
    %9179 = vmatpush2.msra.mxu0 0.0
    %9180 = vmatprep.subr.mxu0 0.0
    %9181 = vmatpush2.msra.mxu0 0.0
    %9182 = vmatprep.subr.mxu0 0.0
    %9183 = vmatpush2.msra.mxu0 0.0
    %9184 = vmatprep.subr.mxu0 0.0
    %9185 = vmatpush2.msra.mxu0 0.0
    %9186 = vmatprep.subr.mxu0 0.0
    %9187 = vmatpush2.msra.mxu0 0.0
    %9188 = vmatprep.subr.mxu0 0.0
    %9189 = vmatpush2.msra.mxu0 0.0
    %9190 = vmatprep.subr.mxu0 0.0
    %9191 = vmatpush2.msra.mxu0 0.0
    %9192 = vmatprep.subr.mxu0 0.0
    %9193 = vmatpush2.msra.mxu0 0.0
    %9194 = vmatprep.subr.mxu0 0.0
    %9195 = vmatpush2.msra.mxu0 0.0
    %9196 = vmatprep.subr.mxu0 0.0
    %9197 = vmatpush2.msra.mxu0 0.0
    %9198 = vmatprep.subr.mxu0 0.0
    %9199 = vmatpush2.msra.mxu0 0.0
    %9200 = vmatprep.subr.mxu0 0.0
    %9201 = vmatpush2.msra.mxu0 0.0
    %9202 = vmatprep.subr.mxu0 0.0
    %9203 = vmatpush2.msra.mxu0 0.0
    %9204 = vmatprep.subr.mxu0 0.0
    %9205 = vmatpush2.msra.mxu0 0.0
    %9206 = vmatprep.subr.mxu0 0.0
    %9207 = vmatpush2.msra.mxu0 0.0
    %9208 = vmatprep.subr.mxu0 0.0
    %9209 = vmatpush2.msra.mxu0 0.0
    %9210 = vmatprep.mubr.f32.mxu0 0.0
    %9211 = vmatmul.mubr.f32.gmra.mxu0 %v9144
    %v9212 = vpop.f32.mrf.mxu0
    %v9213 = vadd.f32 0.0, %v9212
    %v9214 = vpop.f32.mrf.mxu0
    %9215 = vdwg.mxu0
    %v9217 = vsel %vm257, %v9056, 0
    %9219 = vmatprep.subr.mxu0 0.0
    %9220 = vmatpush1.msra.mxu0 0.0
    %9221 = vmatprep.subr.mxu0 0.0
    %9222 = vmatpush1.msra.mxu0 0.0
    %9223 = vmatprep.subr.mxu0 0.0
    %9224 = vmatpush1.msra.mxu0 0.0
    %9225 = vmatprep.subr.mxu0 0.0
    %9226 = vmatpush1.msra.mxu0 0.0
    %9227 = vmatprep.subr.mxu0 0.0
    %9228 = vmatpush1.msra.mxu0 0.0
    %9229 = vmatprep.subr.mxu0 0.0
    %9230 = vmatpush1.msra.mxu0 0.0
    %9231 = vmatprep.subr.mxu0 0.0
    %9232 = vmatpush1.msra.mxu0 0.0
    %9233 = vmatprep.subr.mxu0 0.0
    %9234 = vmatpush1.msra.mxu0 0.0
    %9235 = vmatprep.subr.mxu0 0.0
    %9236 = vmatpush1.msra.mxu0 0.0
    %9237 = vmatprep.subr.mxu0 0.0
    %9238 = vmatpush1.msra.mxu0 0.0
    %9239 = vmatprep.subr.mxu0 0.0
    %9240 = vmatpush1.msra.mxu0 0.0
    %9241 = vmatprep.subr.mxu0 0.0
    %9242 = vmatpush1.msra.mxu0 0.0
    %9243 = vmatprep.subr.mxu0 0.0
    %9244 = vmatpush1.msra.mxu0 %v9062
    %9245 = vmatprep.subr.mxu0 0.0
    %9246 = vmatpush1.msra.mxu0 %v9061
    %9247 = vmatprep.subr.mxu0 0.0
    %9248 = vmatpush1.msra.mxu0 %v9060
    %9249 = vmatprep.subr.mxu0 0.0
    %9250 = vmatpush1.msra.mxu0 %v9059
    %9251 = vmatprep.subr.mxu0 0.0
    %9252 = vmatpush2.msra.mxu0 0.0
    %9253 = vmatprep.subr.mxu0 0.0
    %9254 = vmatpush2.msra.mxu0 0.0
    %9255 = vmatprep.subr.mxu0 0.0
    %9256 = vmatpush2.msra.mxu0 0.0
    %9257 = vmatprep.subr.mxu0 0.0
    %9258 = vmatpush2.msra.mxu0 0.0
    %9259 = vmatprep.subr.mxu0 0.0
    %9260 = vmatpush2.msra.mxu0 0.0
    %9261 = vmatprep.subr.mxu0 0.0
    %9262 = vmatpush2.msra.mxu0 0.0
    %9263 = vmatprep.subr.mxu0 0.0
    %9264 = vmatpush2.msra.mxu0 0.0
    %9265 = vmatprep.subr.mxu0 0.0
    %9266 = vmatpush2.msra.mxu0 0.0
    %9267 = vmatprep.subr.mxu0 0.0
    %9268 = vmatpush2.msra.mxu0 0.0
    %9269 = vmatprep.subr.mxu0 0.0
    %9270 = vmatpush2.msra.mxu0 0.0
    %9271 = vmatprep.subr.mxu0 0.0
    %9272 = vmatpush2.msra.mxu0 0.0
    %9273 = vmatprep.subr.mxu0 0.0
    %9274 = vmatpush2.msra.mxu0 0.0
    %9275 = vmatprep.subr.mxu0 0.0
    %9276 = vmatpush2.msra.mxu0 0.0
    %9277 = vmatprep.subr.mxu0 0.0
    %9278 = vmatpush2.msra.mxu0 0.0
    %9279 = vmatprep.subr.mxu0 0.0
    %9280 = vmatpush2.msra.mxu0 0.0
    %9281 = vmatprep.subr.mxu0 0.0
    %9282 = vmatpush2.msra.mxu0 0.0
    %9283 = vmatprep.mubr.f32.mxu0 0.0
    %9284 = vmatmul.mubr.f32.gmra.mxu0 %v9217
    %v9285 = vpop.f32.mrf.mxu0
    %v9286 = vadd.f32 %v9213, %v9285
    %v9287 = vpop.f32.mrf.mxu0
    %9288 = vdwg.mxu0
    %s9289 = scalar_lea.vmem %s53, 16
    %v9290 = vld [vmem:[%s9289] sm:$0xff]
    %v9292 = vsel %vm794, %v9290, 0
    %9294 = vmatprep.subr.mxu0 0.0
    %9295 = vmatpush1.msra.mxu0 0.0
    %9296 = vmatprep.subr.mxu0 0.0
    %9297 = vmatpush1.msra.mxu0 0.0
    %9298 = vmatprep.subr.mxu0 0.0
    %9299 = vmatpush1.msra.mxu0 0.0
    %9300 = vmatprep.subr.mxu0 0.0
    %9301 = vmatpush1.msra.mxu0 0.0
    %9302 = vmatprep.subr.mxu0 0.0
    %9303 = vmatpush1.msra.mxu0 0.0
    %9304 = vmatprep.subr.mxu0 0.0
    %9305 = vmatpush1.msra.mxu0 0.0
    %9306 = vmatprep.subr.mxu0 0.0
    %9307 = vmatpush1.msra.mxu0 0.0
    %9308 = vmatprep.subr.mxu0 0.0
    %9309 = vmatpush1.msra.mxu0 0.0
    %9310 = vmatprep.subr.mxu0 0.0
    %9311 = vmatpush1.msra.mxu0 0.0
    %9312 = vmatprep.subr.mxu0 0.0
    %9313 = vmatpush1.msra.mxu0 0.0
    %9314 = vmatprep.subr.mxu0 0.0
    %9315 = vmatpush1.msra.mxu0 0.0
    %9316 = vmatprep.subr.mxu0 0.0
    %9317 = vmatpush1.msra.mxu0 %v8595
    %9318 = vmatprep.subr.mxu0 0.0
    %9319 = vmatpush1.msra.mxu0 %v8594
    %9320 = vmatprep.subr.mxu0 0.0
    %9321 = vmatpush1.msra.mxu0 %v8593
    %9322 = vmatprep.subr.mxu0 0.0
    %9323 = vmatpush1.msra.mxu0 %v8592
    %9324 = vmatprep.subr.mxu0 0.0
    %9325 = vmatpush1.msra.mxu0 %v8591
    %9326 = vmatprep.subr.mxu0 0.0
    %9327 = vmatpush2.msra.mxu0 0.0
    %9328 = vmatprep.subr.mxu0 0.0
    %9329 = vmatpush2.msra.mxu0 0.0
    %9330 = vmatprep.subr.mxu0 0.0
    %9331 = vmatpush2.msra.mxu0 0.0
    %9332 = vmatprep.subr.mxu0 0.0
    %9333 = vmatpush2.msra.mxu0 0.0
    %9334 = vmatprep.subr.mxu0 0.0
    %9335 = vmatpush2.msra.mxu0 0.0
    %9336 = vmatprep.subr.mxu0 0.0
    %9337 = vmatpush2.msra.mxu0 0.0
    %9338 = vmatprep.subr.mxu0 0.0
    %9339 = vmatpush2.msra.mxu0 0.0
    %9340 = vmatprep.subr.mxu0 0.0
    %9341 = vmatpush2.msra.mxu0 0.0
    %9342 = vmatprep.subr.mxu0 0.0
    %9343 = vmatpush2.msra.mxu0 0.0
    %9344 = vmatprep.subr.mxu0 0.0
    %9345 = vmatpush2.msra.mxu0 0.0
    %9346 = vmatprep.subr.mxu0 0.0
    %9347 = vmatpush2.msra.mxu0 0.0
    %9348 = vmatprep.subr.mxu0 0.0
    %9349 = vmatpush2.msra.mxu0 0.0
    %9350 = vmatprep.subr.mxu0 0.0
    %9351 = vmatpush2.msra.mxu0 0.0
    %9352 = vmatprep.subr.mxu0 0.0
    %9353 = vmatpush2.msra.mxu0 0.0
    %9354 = vmatprep.subr.mxu0 0.0
    %9355 = vmatpush2.msra.mxu0 0.0
    %9356 = vmatprep.subr.mxu0 0.0
    %9357 = vmatpush2.msra.mxu0 0.0
    %9358 = vmatprep.mubr.f32.mxu0 0.0
    %9359 = vmatmul.mubr.f32.gmra.mxu0 %v9292
    %v9360 = vpop.f32.mrf.mxu0
    %v9361 = vadd.f32 0.0, %v9360
    %v9362 = vpop.f32.mrf.mxu0
    %9363 = vdwg.mxu0
    %s9364 = scalar_lea.vmem %s55, 64
    %v9365 = vld [vmem:[%s9364] sm:$0xff]
    %v9366 = vld [vmem:[%s9364 + $0x8] sm:$0xff]
    %v9367 = vld [vmem:[%s9364 + $0x10] sm:$0xff]
    %v9368 = vld [vmem:[%s9364 + $0x18] sm:$0xff]
    %v9370 = vsel %vm257, %v9361, 0
    %9372 = vmatprep.subr.mxu0 0.0
    %9373 = vmatpush1.msra.mxu0 0.0
    %9374 = vmatprep.subr.mxu0 0.0
    %9375 = vmatpush1.msra.mxu0 0.0
    %9376 = vmatprep.subr.mxu0 0.0
    %9377 = vmatpush1.msra.mxu0 0.0
    %9378 = vmatprep.subr.mxu0 0.0
    %9379 = vmatpush1.msra.mxu0 0.0
    %9380 = vmatprep.subr.mxu0 0.0
    %9381 = vmatpush1.msra.mxu0 0.0
    %9382 = vmatprep.subr.mxu0 0.0
    %9383 = vmatpush1.msra.mxu0 0.0
    %9384 = vmatprep.subr.mxu0 0.0
    %9385 = vmatpush1.msra.mxu0 0.0
    %9386 = vmatprep.subr.mxu0 0.0
    %9387 = vmatpush1.msra.mxu0 0.0
    %9388 = vmatprep.subr.mxu0 0.0
    %9389 = vmatpush1.msra.mxu0 0.0
    %9390 = vmatprep.subr.mxu0 0.0
    %9391 = vmatpush1.msra.mxu0 0.0
    %9392 = vmatprep.subr.mxu0 0.0
    %9393 = vmatpush1.msra.mxu0 0.0
    %9394 = vmatprep.subr.mxu0 0.0
    %9395 = vmatpush1.msra.mxu0 0.0
    %9396 = vmatprep.subr.mxu0 0.0
    %9397 = vmatpush1.msra.mxu0 %v9368
    %9398 = vmatprep.subr.mxu0 0.0
    %9399 = vmatpush1.msra.mxu0 %v9367
    %9400 = vmatprep.subr.mxu0 0.0
    %9401 = vmatpush1.msra.mxu0 %v9366
    %9402 = vmatprep.subr.mxu0 0.0
    %9403 = vmatpush1.msra.mxu0 %v9365
    %9404 = vmatprep.subr.mxu0 0.0
    %9405 = vmatpush2.msra.mxu0 0.0
    %9406 = vmatprep.subr.mxu0 0.0
    %9407 = vmatpush2.msra.mxu0 0.0
    %9408 = vmatprep.subr.mxu0 0.0
    %9409 = vmatpush2.msra.mxu0 0.0
    %9410 = vmatprep.subr.mxu0 0.0
    %9411 = vmatpush2.msra.mxu0 0.0
    %9412 = vmatprep.subr.mxu0 0.0
    %9413 = vmatpush2.msra.mxu0 0.0
    %9414 = vmatprep.subr.mxu0 0.0
    %9415 = vmatpush2.msra.mxu0 0.0
    %9416 = vmatprep.subr.mxu0 0.0
    %9417 = vmatpush2.msra.mxu0 0.0
    %9418 = vmatprep.subr.mxu0 0.0
    %9419 = vmatpush2.msra.mxu0 0.0
    %9420 = vmatprep.subr.mxu0 0.0
    %9421 = vmatpush2.msra.mxu0 0.0
    %9422 = vmatprep.subr.mxu0 0.0
    %9423 = vmatpush2.msra.mxu0 0.0
    %9424 = vmatprep.subr.mxu0 0.0
    %9425 = vmatpush2.msra.mxu0 0.0
    %9426 = vmatprep.subr.mxu0 0.0
    %9427 = vmatpush2.msra.mxu0 0.0
    %9428 = vmatprep.subr.mxu0 0.0
    %9429 = vmatpush2.msra.mxu0 0.0
    %9430 = vmatprep.subr.mxu0 0.0
    %9431 = vmatpush2.msra.mxu0 0.0
    %9432 = vmatprep.subr.mxu0 0.0
    %9433 = vmatpush2.msra.mxu0 0.0
    %9434 = vmatprep.subr.mxu0 0.0
    %9435 = vmatpush2.msra.mxu0 0.0
    %9436 = vmatprep.mubr.f32.mxu0 0.0
    %9437 = vmatmul.mubr.f32.gmra.mxu0 %v9370
    %v9438 = vpop.f32.mrf.mxu0
    %v9439 = vadd.f32 0.0, %v9438
    %v9440 = vpop.f32.mrf.mxu0
    %9441 = vdwg.mxu0
    %v9442 = vadd.f32 %v9286, %v9439
    %s9443 = scalar_lea.vmem %s53, 24
    %v9444 = vld [vmem:[%s9443] sm:$0xff]
    %v9446 = vsel %vm794, %v9444, 0
    %9448 = vmatprep.subr.mxu0 0.0
    %9449 = vmatpush1.msra.mxu0 0.0
    %9450 = vmatprep.subr.mxu0 0.0
    %9451 = vmatpush1.msra.mxu0 0.0
    %9452 = vmatprep.subr.mxu0 0.0
    %9453 = vmatpush1.msra.mxu0 0.0
    %9454 = vmatprep.subr.mxu0 0.0
    %9455 = vmatpush1.msra.mxu0 0.0
    %9456 = vmatprep.subr.mxu0 0.0
    %9457 = vmatpush1.msra.mxu0 0.0
    %9458 = vmatprep.subr.mxu0 0.0
    %9459 = vmatpush1.msra.mxu0 0.0
    %9460 = vmatprep.subr.mxu0 0.0
    %9461 = vmatpush1.msra.mxu0 0.0
    %9462 = vmatprep.subr.mxu0 0.0
    %9463 = vmatpush1.msra.mxu0 0.0
    %9464 = vmatprep.subr.mxu0 0.0
    %9465 = vmatpush1.msra.mxu0 0.0
    %9466 = vmatprep.subr.mxu0 0.0
    %9467 = vmatpush1.msra.mxu0 0.0
    %9468 = vmatprep.subr.mxu0 0.0
    %9469 = vmatpush1.msra.mxu0 0.0
    %9470 = vmatprep.subr.mxu0 0.0
    %9471 = vmatpush1.msra.mxu0 %v8595
    %9472 = vmatprep.subr.mxu0 0.0
    %9473 = vmatpush1.msra.mxu0 %v8594
    %9474 = vmatprep.subr.mxu0 0.0
    %9475 = vmatpush1.msra.mxu0 %v8593
    %9476 = vmatprep.subr.mxu0 0.0
    %9477 = vmatpush1.msra.mxu0 %v8592
    %9478 = vmatprep.subr.mxu0 0.0
    %9479 = vmatpush1.msra.mxu0 %v8591
    %9480 = vmatprep.subr.mxu0 0.0
    %9481 = vmatpush2.msra.mxu0 0.0
    %9482 = vmatprep.subr.mxu0 0.0
    %9483 = vmatpush2.msra.mxu0 0.0
    %9484 = vmatprep.subr.mxu0 0.0
    %9485 = vmatpush2.msra.mxu0 0.0
    %9486 = vmatprep.subr.mxu0 0.0
    %9487 = vmatpush2.msra.mxu0 0.0
    %9488 = vmatprep.subr.mxu0 0.0
    %9489 = vmatpush2.msra.mxu0 0.0
    %9490 = vmatprep.subr.mxu0 0.0
    %9491 = vmatpush2.msra.mxu0 0.0
    %9492 = vmatprep.subr.mxu0 0.0
    %9493 = vmatpush2.msra.mxu0 0.0
    %9494 = vmatprep.subr.mxu0 0.0
    %9495 = vmatpush2.msra.mxu0 0.0
    %9496 = vmatprep.subr.mxu0 0.0
    %9497 = vmatpush2.msra.mxu0 0.0
    %9498 = vmatprep.subr.mxu0 0.0
    %9499 = vmatpush2.msra.mxu0 0.0
    %9500 = vmatprep.subr.mxu0 0.0
    %9501 = vmatpush2.msra.mxu0 0.0
    %9502 = vmatprep.subr.mxu0 0.0
    %9503 = vmatpush2.msra.mxu0 0.0
    %9504 = vmatprep.subr.mxu0 0.0
    %9505 = vmatpush2.msra.mxu0 0.0
    %9506 = vmatprep.subr.mxu0 0.0
    %9507 = vmatpush2.msra.mxu0 0.0
    %9508 = vmatprep.subr.mxu0 0.0
    %9509 = vmatpush2.msra.mxu0 0.0
    %9510 = vmatprep.subr.mxu0 0.0
    %9511 = vmatpush2.msra.mxu0 0.0
    %9512 = vmatprep.mubr.f32.mxu0 0.0
    %9513 = vmatmul.mubr.f32.gmra.mxu0 %v9446
    %v9514 = vpop.f32.mrf.mxu0
    %v9515 = vadd.f32 0.0, %v9514
    %v9516 = vpop.f32.mrf.mxu0
    %9517 = vdwg.mxu0
    %s9518 = scalar_lea.vmem %s55, 96
    %v9519 = vld [vmem:[%s9518] sm:$0xff]
    %v9520 = vld [vmem:[%s9518 + $0x8] sm:$0xff]
    %v9521 = vld [vmem:[%s9518 + $0x10] sm:$0xff]
    %v9522 = vld [vmem:[%s9518 + $0x18] sm:$0xff]
    %v9524 = vsel %vm257, %v9515, 0
    %9526 = vmatprep.subr.mxu0 0.0
    %9527 = vmatpush1.msra.mxu0 0.0
    %9528 = vmatprep.subr.mxu0 0.0
    %9529 = vmatpush1.msra.mxu0 0.0
    %9530 = vmatprep.subr.mxu0 0.0
    %9531 = vmatpush1.msra.mxu0 0.0
    %9532 = vmatprep.subr.mxu0 0.0
    %9533 = vmatpush1.msra.mxu0 0.0
    %9534 = vmatprep.subr.mxu0 0.0
    %9535 = vmatpush1.msra.mxu0 0.0
    %9536 = vmatprep.subr.mxu0 0.0
    %9537 = vmatpush1.msra.mxu0 0.0
    %9538 = vmatprep.subr.mxu0 0.0
    %9539 = vmatpush1.msra.mxu0 0.0
    %9540 = vmatprep.subr.mxu0 0.0
    %9541 = vmatpush1.msra.mxu0 0.0
    %9542 = vmatprep.subr.mxu0 0.0
    %9543 = vmatpush1.msra.mxu0 0.0
    %9544 = vmatprep.subr.mxu0 0.0
    %9545 = vmatpush1.msra.mxu0 0.0
    %9546 = vmatprep.subr.mxu0 0.0
    %9547 = vmatpush1.msra.mxu0 0.0
    %9548 = vmatprep.subr.mxu0 0.0
    %9549 = vmatpush1.msra.mxu0 0.0
    %9550 = vmatprep.subr.mxu0 0.0
    %9551 = vmatpush1.msra.mxu0 %v9522
    %9552 = vmatprep.subr.mxu0 0.0
    %9553 = vmatpush1.msra.mxu0 %v9521
    %9554 = vmatprep.subr.mxu0 0.0
    %9555 = vmatpush1.msra.mxu0 %v9520
    %9556 = vmatprep.subr.mxu0 0.0
    %9557 = vmatpush1.msra.mxu0 %v9519
    %9558 = vmatprep.subr.mxu0 0.0
    %9559 = vmatpush2.msra.mxu0 0.0
    %9560 = vmatprep.subr.mxu0 0.0
    %9561 = vmatpush2.msra.mxu0 0.0
    %9562 = vmatprep.subr.mxu0 0.0
    %9563 = vmatpush2.msra.mxu0 0.0
    %9564 = vmatprep.subr.mxu0 0.0
    %9565 = vmatpush2.msra.mxu0 0.0
    %9566 = vmatprep.subr.mxu0 0.0
    %9567 = vmatpush2.msra.mxu0 0.0
    %9568 = vmatprep.subr.mxu0 0.0
    %9569 = vmatpush2.msra.mxu0 0.0
    %9570 = vmatprep.subr.mxu0 0.0
    %9571 = vmatpush2.msra.mxu0 0.0
    %9572 = vmatprep.subr.mxu0 0.0
    %9573 = vmatpush2.msra.mxu0 0.0
    %9574 = vmatprep.subr.mxu0 0.0
    %9575 = vmatpush2.msra.mxu0 0.0
    %9576 = vmatprep.subr.mxu0 0.0
    %9577 = vmatpush2.msra.mxu0 0.0
    %9578 = vmatprep.subr.mxu0 0.0
    %9579 = vmatpush2.msra.mxu0 0.0
    %9580 = vmatprep.subr.mxu0 0.0
    %9581 = vmatpush2.msra.mxu0 0.0
    %9582 = vmatprep.subr.mxu0 0.0
    %9583 = vmatpush2.msra.mxu0 0.0
    %9584 = vmatprep.subr.mxu0 0.0
    %9585 = vmatpush2.msra.mxu0 0.0
    %9586 = vmatprep.subr.mxu0 0.0
    %9587 = vmatpush2.msra.mxu0 0.0
    %9588 = vmatprep.subr.mxu0 0.0
    %9589 = vmatpush2.msra.mxu0 0.0
    %9590 = vmatprep.mubr.f32.mxu0 0.0
    %9591 = vmatmul.mubr.f32.gmra.mxu0 %v9524
    %v9592 = vpop.f32.mrf.mxu0
    %v9593 = vadd.f32 0.0, %v9592
    %v9594 = vpop.f32.mrf.mxu0
    %9595 = vdwg.mxu0
    %v9596 = vadd.f32 %v9442, %v9593
    %v9597 = vld [vmem:[%s57] sm:$0x1]
    %v9599 = vlaneseq
    %v9600 = vshrl.u32 %v9599, 7
    %v9601 = vsub.s32 0, %v9600
    %v9602 = vrot.slane %v9597, %v9601
    %v9604 = vadd.f32 %v9596, %v9602
    %9605 = vst.msk [vmem:[#allocation2] sm:$0xff] %vm257, %v9604
    // Predicated region
    $region118: #{selfsup_vit_forward.1} parent=1 // pred_check
      _
    $region119: #{selfsup_vit_forward.1} parent=1 // pred_check_branch
      %9607 = sbr.rel (0) target = $region121
    $region120: #{selfsup_vit_forward.1} parent=1 // pred_region
      _
    $region121: #{selfsup_vit_forward.1} parent=1 // pred_fallthru
      _
    // Predicated region
    $region122: #{selfsup_vit_forward.1} parent=1 // pred_check
      _
    $region123: #{selfsup_vit_forward.1} parent=1 // pred_check_branch
      %9609 = sbr.rel (0) target = $region125
    $region124: #{selfsup_vit_forward.1} parent=1 // pred_region
      _
    $region125: #{selfsup_vit_forward.1} parent=1 // pred_fallthru
      _
    // Predicated region
    $region126: #{selfsup_vit_forward.1} parent=1 // pred_check
      _
    $region127: #{selfsup_vit_forward.1} parent=1 // pred_check_branch
      %9611 = sbr.rel (0) target = $region129
    $region128: #{selfsup_vit_forward.1} parent=1 // pred_region
      _
    $region129: #{selfsup_vit_forward.1} parent=1 // pred_fallthru
      _
    // Predicated region
    $region130: #{selfsup_vit_forward.1} parent=1 // pred_check
      _
    $region131: #{selfsup_vit_forward.1} parent=1 // pred_check_branch
      %9613 = sbr.rel (0) target = $region133
    $region132: #{selfsup_vit_forward.1} parent=1 // pred_region
      %s9615 = ssub.s32 128, 128
      %9616 = vsyncadd [#allocation3], %s9615
      %s9618 = sshll.u32 [#allocation2], 4
      %s9619 = int_to_ptr.vmem [resolvable:$true] %s9618
      %9621 = dma.vmem_to_hbm [thread:$0]  %s9619, 128, %s65, [#allocation3]
    $region133: #{selfsup_vit_forward.1} parent=1 // pred_fallthru
      _
    // Predicated region
    $region134: #{selfsup_vit_forward.1} parent=1 // pred_check
      _
    $region135: #{selfsup_vit_forward.1} parent=1 // pred_check_branch
      %9623 = sbr.rel (0) target = $region137
    $region136: #{selfsup_vit_forward.1} parent=1 // pred_region
      _
    $region137: #{selfsup_vit_forward.1} parent=1 // pred_fallthru
      _
    // Predicated region
    $region138: #{selfsup_vit_forward.1} parent=1 // pred_check
      _
    $region139: #{selfsup_vit_forward.1} parent=1 // pred_check_branch
      %9625 = sbr.rel (0) target = $region141
    $region140: #{selfsup_vit_forward.1} parent=1 // pred_region
      _
    $region141: #{selfsup_vit_forward.1} parent=1 // pred_fallthru
      _
    // Predicated region
    $region142: #{selfsup_vit_forward.1} parent=1 // pred_check
      _
    $region143: #{selfsup_vit_forward.1} parent=1 // pred_check_branch
      %9627 = sbr.rel (0) target = $region145
    $region144: #{selfsup_vit_forward.1} parent=1 // pred_region
      _
    $region145: #{selfsup_vit_forward.1} parent=1 // pred_fallthru
      _
    // Predicated region
    $region146: #{selfsup_vit_forward.1} parent=1 // pred_check
      _
    $region147: #{selfsup_vit_forward.1} parent=1 // pred_check_branch
      %9629 = sbr.rel (0) target = $region149
    $region148: #{selfsup_vit_forward.1} parent=1 // pred_region
      %9630 = dma.done [#allocation3], 128
    $region149: #{selfsup_vit_forward.1} parent=1 // pred_fallthru
      _
    %9631 = vsyncpa [#allocation3], 1

</llo_original>
